<compile_context>
chip_gen: v7x
topology: tpu7x:2x2x1
jax: 0.10.0
libtpu: 0.0.40
codegen_flags: <defaults>
</compile_context>

<pallas_src>
import numpy as np
import jax
import jax.numpy as jnp
from jax.experimental import pallas as pl
from jax.experimental.pallas import tpu as pltpu


def _make_double_conv_kernel(SB, D, H, W, C):
    Dp, Hp = D + 2, H + 2
    WC = W * C
    M = SB * D * H           # matmul M (rows per step)

    def kernel(x_ref, w1_ref, s1_ref, b1_ref, w2_ref, s2_ref, b2_ref,
               o_ref, pad_ref):
        # pad_ref: (SB, Dp, Hp, W*C) bf16 scratch = activations zero-padded in
        # D/H.  Only the halo faces are zeroed (the interior is fully
        # overwritten below), and they are re-zeroed every grid step so steps
        # stay independent under "parallel" / megacore partitioning.
        zeros = lambda s: jnp.zeros(s, pad_ref.dtype)
        pad_ref[:, 0:1, :, :] = zeros((SB, 1, Hp, WC))
        pad_ref[:, D + 1:D + 2, :, :] = zeros((SB, 1, Hp, WC))
        pad_ref[:, :, 0:1, :] = zeros((SB, Dp, 1, WC))
        pad_ref[:, :, H + 1:H + 2, :] = zeros((SB, Dp, 1, WC))

        def conv_bn_relu(w_ref, s_ref, b_ref):
            # 9 MXU matmuls of (M, WC) @ (WC, WC); kw taps and the W zero
            # padding are folded into the banded weight, so K = N = W*C.
            # NOTE: kh=1,2 slices hit the packed-bf16 sublane dim at an offset;
            # if the bundle shows per-tap relayout copies dominating, derive the
            # kh shifts once per kd with pltpu.roll (XLU) instead.
            acc = jnp.zeros((M, WC), jnp.float32)
            for kd in range(3):
                for kh in range(3):
                    slab = pad_ref[:, kd:kd + D, kh:kh + H, :].reshape(M, WC)
                    acc = acc + jnp.dot(slab, w_ref[kd, kh],
                                        preferred_element_type=jnp.float32)
            # Folded eval-mode BatchNorm (+ conv bias) and ReLU, in f32.
            return jnp.maximum(acc * s_ref[...] + b_ref[...], 0.0)

        # ---- conv1 + BN1 + ReLU ----
        pad_ref[:, 1:D + 1, 1:H + 1, :] = x_ref[...]          # bf16, no cast
        y1 = conv_bn_relu(w1_ref, s1_ref, b1_ref)

        # ---- conv2 + BN2 + ReLU (re-pad intermediate; single bf16 cast) ----
        pad_ref[:, 1:D + 1, 1:H + 1, :] = (
            y1.astype(jnp.bfloat16).reshape(SB, D, H, WC))
        y2 = conv_bn_relu(w2_ref, s2_ref, b2_ref)

        # Lane-dense store: y2 is already (M, W*C) with a 256-wide last dim.
        o_ref[...] = y2.reshape(SB, D * H, WC)

    return kernel


def band_weights(w_dhwio, C, W):
    """Fold the kw taps + W-boundary zero padding of a (3,3,3,Cin,Cout) DHWIO
    conv weight into a banded (3, 3, W*C, W*C) bf16 matmul RHS.

    Pure numpy, done ONCE outside the jitted per-call path (the v2 version
    traced 128 .at[].set ops every call)."""
    w = np.asarray(w_dhwio, np.float32)
    B = np.zeros((3, 3, W * C, W * C), np.float32)
    for wo in range(W):                  # output w position
        for kw in range(3):              # tap along W
            wi = wo + kw - 1             # input w position (padding = 1)
            if 0 <= wi < W:
                B[:, :, wi * C:(wi + 1) * C, wo * C:(wo + 1) * C] = w[:, :, kw]
    return jnp.asarray(B, jnp.bfloat16)


@jax.jit
def double_conv_block(x_ncdhw, w1b, scale1, bias1, w2b, scale2, bias2):
    """conv3d(3,pad=1) -> BN(eval) -> ReLU -> conv3d(3,pad=1) -> BN(eval) -> ReLU.

    w1b, w2b: banded bf16 weights from band_weights(); scale/bias: per-channel
    affine terms of the folded inference-mode BatchNorm (+ conv bias), shape (C,).
    """
    N, C, D, H, W = x_ncdhw.shape
    WC, DH = W * C, D * H
    assert WC % 128 == 0, "lane-dense layout requires W*C to be a multiple of 128"
    # TODO(synk): W*C not a multiple of 128 needs channel padding / masked
    # stores; not implemented here.
    SB = 2 if N % 2 == 0 else 1      # samples per grid step -> matmul M = SB*D*H
    M = SB * DH

    # TODO(synk): if the surrounding model keeps activations channels-last
    # (NDHWC), this transpose (a full HBM relayout) and the one at the end
    # disappear entirely; kept here because the module interface is NCDHW.
    x = jnp.transpose(x_ncdhw, (0, 2, 3, 4, 1))          # NDHWC
    x = x.reshape(N, D, H, WC).astype(jnp.bfloat16)      # lane-dense rows, bf16 DMA

    # Tile per-channel scale/bias across the W positions of a lane row.
    tile = lambda v: jnp.tile(jnp.reshape(v, (1, C)).astype(jnp.float32), (1, W))
    s1, b1, s2, b2 = tile(scale1), tile(bias1), tile(scale2), tile(bias2)

    # --- VMEM budget (bytes), sized from the actual buffers + headroom. ---
    x_blk = SB * D * H * WC * 2                 # bf16 input block
    out_blk = SB * DH * WC * 4                  # f32 output block
    w_bytes = 2 * 9 * WC * WC * 2               # both banded weight sets, bf16
    pad_bytes = SB * (D + 2) * (H + 2) * WC * 2 # bf16 scratch
    vec_bytes = 4 * WC * 4                      # scales / biases
    # Inputs/outputs are double-buffered by the pipeline; weights are
    # loop-invariant (constant index_map) so they are fetched once, but budget
    # their double buffer too.  For larger C, single-buffer them
    # (pipeline_mode=pl.Buffered(1)) or keep them in HBM with a one-time manual
    # DMA to protect v7x's 64 MiB VMEM.
    vmem_limit = int(2 * (x_blk + out_blk + vec_bytes) + 2 * w_bytes
                     + pad_bytes + (16 << 20))

    # Advisory cost estimate (banded matmul FLOPs + HBM bytes actually moved).
    flops = 2 * 2 * (N * DH) * (9 * WC) * WC
    bytes_accessed = (N * D * H * WC * 2) + w_bytes + vec_bytes + (N * DH * WC * 4)
    cost = pl.CostEstimate(flops=flops, transcendentals=0,
                           bytes_accessed=bytes_accessed)

    kernel = _make_double_conv_kernel(SB, D, H, W, C)
    grid_spec = pltpu.PrefetchScalarGridSpec(
        num_scalar_prefetch=0,
        # SB=2 samples per step (M=128) fills the MXU row stream while keeping
        # grid >= 2 so v7x megacore can shard the batch across both TCs.
        # TODO(synk): for large volumes, add a D-tile grid axis (halo=2 for the
        # fused double conv) and re-derive tiles against v7x's 64 MiB VMEM.
        grid=(N // SB,),
        in_specs=[
            pl.BlockSpec((SB, D, H, WC), lambda n: (n, 0, 0, 0)),   # x (bf16)
            pl.BlockSpec((3, 3, WC, WC), lambda n: (0, 0, 0, 0)),   # w1 banded
            pl.BlockSpec((1, WC), lambda n: (0, 0)),                # scale1
            pl.BlockSpec((1, WC), lambda n: (0, 0)),                # bias1
            pl.BlockSpec((3, 3, WC, WC), lambda n: (0, 0, 0, 0)),   # w2 banded
            pl.BlockSpec((1, WC), lambda n: (0, 0)),                # scale2
            pl.BlockSpec((1, WC), lambda n: (0, 0)),                # bias2
        ],
        out_specs=pl.BlockSpec((SB, DH, WC), lambda n: (n, 0, 0)),
        scratch_shapes=[pltpu.VMEM((SB, D + 2, H + 2, WC), jnp.bfloat16)],
    )
    out = pl.pallas_call(
        kernel,
        out_shape=jax.ShapeDtypeStruct((N, DH, WC), jnp.float32),
        grid_spec=grid_spec,
        compiler_params=pltpu.CompilerParams(
            dimension_semantics=("parallel",),       # v7x megacore: shard batch
            vmem_limit_bytes=vmem_limit),
        cost_estimate=cost,
    )(x, w1b, s1, b1, w2b, s2, b2)

    out = out.reshape(N, D, H, W, C)
    return jnp.transpose(out, (0, 4, 1, 2, 3))           # back to NCDHW


def _reference(x_ncdhw, w1, cb1, g1, be1, m1, v1, w2, cb2, g2, be2, m2, v2, eps):
    """Pure-JAX f32 reference (XLA conv), eval-mode BatchNorm."""
    x = jnp.transpose(x_ncdhw, (0, 2, 3, 4, 1))

    def block(x, w, cb, g, be, m, v):
        y = jax.lax.conv_general_dilated(
            x, w, window_strides=(1, 1, 1), padding="SAME",
            dimension_numbers=("NDHWC", "DHWIO", "NDHWC"))
        y = (y + cb - m) * jax.lax.rsqrt(v + eps) * g + be
        return jnp.maximum(y, 0.0)

    y = block(x, w1, cb1, g1, be1, m1, v1)
    y = block(y, w2, cb2, g2, be2, m2, v2)
    return jnp.transpose(y, (0, 4, 1, 2, 3))


if __name__ == "__main__":
    N, C, D, H, W = 4, 32, 8, 8, 8       # module default in_channels=32
    eps = 1e-5

    key = jax.random.PRNGKey(0)
    ks = jax.random.split(key, 13)
    x = jax.random.normal(ks[0], (N, C, D, H, W), jnp.float32)

    # Conv weights in DHWIO layout == PyTorch (Cout,Cin,kD,kH,kW).transpose(2,3,4,1,0)
    w1 = 0.05 * jax.random.normal(ks[1], (3, 3, 3, C, C), jnp.float32)
    cb1 = 0.05 * jax.random.normal(ks[2], (C,), jnp.float32)
    g1 = 1.0 + 0.1 * jax.random.normal(ks[3], (C,), jnp.float32)
    be1 = 0.1 * jax.random.normal(ks[4], (C,), jnp.float32)
    m1 = 0.1 * jax.random.normal(ks[5], (C,), jnp.float32)
    v1 = 0.9 + 0.2 * jax.random.uniform(ks[6], (C,), jnp.float32)

    w2 = 0.05 * jax.random.normal(ks[7], (3, 3, 3, C, C), jnp.float32)
    cb2 = 0.05 * jax.random.normal(ks[8], (C,), jnp.float32)
    g2 = 1.0 + 0.1 * jax.random.normal(ks[9], (C,), jnp.float32)
    be2 = 0.1 * jax.random.normal(ks[10], (C,), jnp.float32)
    m2 = 0.1 * jax.random.normal(ks[11], (C,), jnp.float32)
    v2 = 0.9 + 0.2 * jax.random.uniform(ks[12], (C,), jnp.float32)

    # Fold inference-mode BatchNorm (+ conv bias) into per-channel scale/bias.
    # TODO(synk): training-mode BatchNorm (batch statistics) is not implemented;
    # this reproduces the PyTorch module in .eval() mode.
    def fold(cb, g, be, m, v):
        s = g * jax.lax.rsqrt(v + eps)
        return s, be + (cb - m) * s

    s1, b1 = fold(cb1, g1, be1, m1, v1)
    s2, b2 = fold(cb2, g2, be2, m2, v2)

    # Banded weights: built once, outside the jitted per-call path.
    w1b = band_weights(w1, C, W)
    w2b = band_weights(w2, C, W)

    out = jax.block_until_ready(double_conv_block(x, w1b, s1, b1, w2b, s2, b2))
    ref = jax.block_until_ready(
        _reference(x, w1, cb1, g1, be1, m1, v1, w2, cb2, g2, be2, m2, v2, eps))

    assert out.shape == (N, C, D, H, W) and out.dtype == jnp.float32
    # bf16 inputs/weights on the MXU (f32 accumulation) vs. an all-f32 XLA
    # reference -> ~1e-2-scale absolute error; 5e-2 is a safe, non-masking bound.
    np.testing.assert_allclose(np.asarray(out), np.asarray(ref),
                               rtol=5e-2, atol=5e-2)
    print("KERNEL_OK")
</pallas_src>

<mosaic_0001>
module attributes {stable_mosaic.version = 11 : i64} {
  func.func @kernel(%arg0: i32, %arg1: memref<2x8x8x256xbf16, #tpu.memory_space<vmem>>, %arg2: memref<3x3x256x256xbf16, #tpu.memory_space<vmem>>, %arg3: memref<1x256xf32, #tpu.memory_space<vmem>>, %arg4: memref<1x256xf32, #tpu.memory_space<vmem>>, %arg5: memref<3x3x256x256xbf16, #tpu.memory_space<vmem>>, %arg6: memref<1x256xf32, #tpu.memory_space<vmem>>, %arg7: memref<1x256xf32, #tpu.memory_space<vmem>>, %arg8: memref<2x64x256xf32, #tpu.memory_space<vmem>>, %arg9: memref<2x10x10x256xbf16, #tpu.memory_space<vmem>>) attributes {dimension_semantics = [#tpu.dimension_semantics<parallel>], iteration_bounds = array<i64: 2>, scalar_prefetch = 0 : i64, scratch_operands = 1 : i64, tpu.core_type = #tpu.core_type<tc>, window_params = [{transform_indices = @transform_0, window_bounds = array<i64: 2, 8, 8, 256>}, {pipeline_mode = #tpu.pipeline_mode<synchronous>, transform_indices = @transform_1, window_bounds = array<i64: 3, 3, 256, 256>}, {pipeline_mode = #tpu.pipeline_mode<synchronous>, transform_indices = @transform_2, window_bounds = array<i64: 1, 256>}, {pipeline_mode = #tpu.pipeline_mode<synchronous>, transform_indices = @transform_3, window_bounds = array<i64: 1, 256>}, {pipeline_mode = #tpu.pipeline_mode<synchronous>, transform_indices = @transform_4, window_bounds = array<i64: 3, 3, 256, 256>}, {pipeline_mode = #tpu.pipeline_mode<synchronous>, transform_indices = @transform_5, window_bounds = array<i64: 1, 256>}, {pipeline_mode = #tpu.pipeline_mode<synchronous>, transform_indices = @transform_6, window_bounds = array<i64: 1, 256>}, {transform_indices = @transform_7, window_bounds = array<i64: 2, 64, 256>}]} {
    %cst = arith.constant 0.000000e+00 : bf16
    %0 = vector.broadcast %cst : bf16 to vector<2x1x10x256xbf16>
    %c0 = arith.constant 0 : index
    %c0_0 = arith.constant 0 : index
    %c0_1 = arith.constant 0 : index
    %c0_2 = arith.constant 0 : index
    %1 = vector.load %arg9[%c0, %c0_0, %c0_1, %c0_2] : memref<2x10x10x256xbf16, #tpu.memory_space<vmem>>, vector<2x1x10x256xbf16>
    tpu.vector_store %arg9[%c0, %c0_0, %c0_1, %c0_2], %0 {strides = array<i32>} : memref<2x10x10x256xbf16, #tpu.memory_space<vmem>>, vector<2x1x10x256xbf16>,
    %cst_3 = arith.constant 0.000000e+00 : bf16
    %2 = vector.broadcast %cst_3 : bf16 to vector<2x1x10x256xbf16>
    %c0_4 = arith.constant 0 : index
    %c9 = arith.constant 9 : index
    %c0_5 = arith.constant 0 : index
    %c0_6 = arith.constant 0 : index
    %3 = vector.load %arg9[%c0_4, %c9, %c0_5, %c0_6] : memref<2x10x10x256xbf16, #tpu.memory_space<vmem>>, vector<2x1x10x256xbf16>
    tpu.vector_store %arg9[%c0_4, %c9, %c0_5, %c0_6], %2 {strides = array<i32>} : memref<2x10x10x256xbf16, #tpu.memory_space<vmem>>, vector<2x1x10x256xbf16>,
    %cst_7 = arith.constant 0.000000e+00 : bf16
    %4 = vector.broadcast %cst_7 : bf16 to vector<2x10x1x256xbf16>
    %c0_8 = arith.constant 0 : index
    %c0_9 = arith.constant 0 : index
    %c0_10 = arith.constant 0 : index
    %c0_11 = arith.constant 0 : index
    %5 = vector.load %arg9[%c0_8, %c0_9, %c0_10, %c0_11] : memref<2x10x10x256xbf16, #tpu.memory_space<vmem>>, vector<2x10x1x256xbf16>
    tpu.vector_store %arg9[%c0_8, %c0_9, %c0_10, %c0_11], %4 {strides = array<i32>} : memref<2x10x10x256xbf16, #tpu.memory_space<vmem>>, vector<2x10x1x256xbf16>,
    %cst_12 = arith.constant 0.000000e+00 : bf16
    %6 = vector.broadcast %cst_12 : bf16 to vector<2x10x1x256xbf16>
    %c0_13 = arith.constant 0 : index
    %c0_14 = arith.constant 0 : index
    %c9_15 = arith.constant 9 : index
    %c0_16 = arith.constant 0 : index
    %7 = vector.load %arg9[%c0_13, %c0_14, %c9_15, %c0_16] : memref<2x10x10x256xbf16, #tpu.memory_space<vmem>>, vector<2x10x1x256xbf16>
    tpu.vector_store %arg9[%c0_13, %c0_14, %c9_15, %c0_16], %6 {strides = array<i32>} : memref<2x10x10x256xbf16, #tpu.memory_space<vmem>>, vector<2x10x1x256xbf16>,
    %c0_17 = arith.constant 0 : index
    %c0_18 = arith.constant 0 : index
    %c0_19 = arith.constant 0 : index
    %c0_20 = arith.constant 0 : index
    %8 = vector.load %arg1[%c0_17, %c0_18, %c0_19, %c0_20] : memref<2x8x8x256xbf16, #tpu.memory_space<vmem>>, vector<2x8x8x256xbf16>
    %c0_21 = arith.constant 0 : index
    %c1 = arith.constant 1 : index
    %c1_22 = arith.constant 1 : index
    %c0_23 = arith.constant 0 : index
    %9 = vector.load %arg9[%c0_21, %c1, %c1_22, %c0_23] : memref<2x10x10x256xbf16, #tpu.memory_space<vmem>>, vector<2x8x8x256xbf16>
    tpu.vector_store %arg9[%c0_21, %c1, %c1_22, %c0_23], %8 {strides = array<i32>} : memref<2x10x10x256xbf16, #tpu.memory_space<vmem>>, vector<2x8x8x256xbf16>,
    %cst_24 = arith.constant 0.000000e+00 : f32
    %10 = vector.broadcast %cst_24 : f32 to vector<128x256xf32>
    %c0_25 = arith.constant 0 : index
    %c0_26 = arith.constant 0 : index
    %c0_27 = arith.constant 0 : index
    %c0_28 = arith.constant 0 : index
    %11 = vector.load %arg9[%c0_25, %c0_26, %c0_27, %c0_28] : memref<2x10x10x256xbf16, #tpu.memory_space<vmem>>, vector<2x8x8x256xbf16>
    %12 = vector.shape_cast %11 : vector<2x8x8x256xbf16> to vector<128x256xbf16>
    %c0_29 = arith.constant 0 : index
    %c0_30 = arith.constant 0 : index
    %c0_31 = arith.constant 0 : index
    %c0_32 = arith.constant 0 : index
    %13 = vector.load %arg2[%c0_29, %c0_30, %c0_31, %c0_32] : memref<3x3x256x256xbf16, #tpu.memory_space<vmem>>, vector<1x1x256x256xbf16>
    %14 = vector.shape_cast %13 : vector<1x1x256x256xbf16> to vector<256x256xbf16>
    %cst_33 = arith.constant dense<0.000000e+00> : vector<128x256xf32>
    %15 = tpu.matmul %12, %14, %cst_33 {dimension_numbers = #tpu.dot_dimension_numbers<[1], [0], [0], [1], [0, 0, 1, 1], [], []>} : vector<128x256xbf16>, vector<256x256xbf16>, vector<128x256xf32> -> vector<128x256xf32>
    %16 = arith.addf %10, %15 : vector<128x256xf32>
    %c0_34 = arith.constant 0 : index
    %c0_35 = arith.constant 0 : index
    %c1_36 = arith.constant 1 : index
    %c0_37 = arith.constant 0 : index
    %17 = vector.load %arg9[%c0_34, %c0_35, %c1_36, %c0_37] : memref<2x10x10x256xbf16, #tpu.memory_space<vmem>>, vector<2x8x8x256xbf16>
    %18 = vector.shape_cast %17 : vector<2x8x8x256xbf16> to vector<128x256xbf16>
    %c0_38 = arith.constant 0 : index
    %c1_39 = arith.constant 1 : index
    %c0_40 = arith.constant 0 : index
    %c0_41 = arith.constant 0 : index
    %19 = vector.load %arg2[%c0_38, %c1_39, %c0_40, %c0_41] : memref<3x3x256x256xbf16, #tpu.memory_space<vmem>>, vector<1x1x256x256xbf16>
    %20 = vector.shape_cast %19 : vector<1x1x256x256xbf16> to vector<256x256xbf16>
    %cst_42 = arith.constant dense<0.000000e+00> : vector<128x256xf32>
    %21 = tpu.matmul %18, %20, %cst_42 {dimension_numbers = #tpu.dot_dimension_numbers<[1], [0], [0], [1], [0, 0, 1, 1], [], []>} : vector<128x256xbf16>, vector<256x256xbf16>, vector<128x256xf32> -> vector<128x256xf32>
    %22 = arith.addf %16, %21 : vector<128x256xf32>
    %c0_43 = arith.constant 0 : index
    %c0_44 = arith.constant 0 : index
    %c2 = arith.constant 2 : index
    %c0_45 = arith.constant 0 : index
    %23 = vector.load %arg9[%c0_43, %c0_44, %c2, %c0_45] : memref<2x10x10x256xbf16, #tpu.memory_space<vmem>>, vector<2x8x8x256xbf16>
    %24 = vector.shape_cast %23 : vector<2x8x8x256xbf16> to vector<128x256xbf16>
    %c0_46 = arith.constant 0 : index
    %c2_47 = arith.constant 2 : index
    %c0_48 = arith.constant 0 : index
    %c0_49 = arith.constant 0 : index
    %25 = vector.load %arg2[%c0_46, %c2_47, %c0_48, %c0_49] : memref<3x3x256x256xbf16, #tpu.memory_space<vmem>>, vector<1x1x256x256xbf16>
    %26 = vector.shape_cast %25 : vector<1x1x256x256xbf16> to vector<256x256xbf16>
    %cst_50 = arith.constant dense<0.000000e+00> : vector<128x256xf32>
    %27 = tpu.matmul %24, %26, %cst_50 {dimension_numbers = #tpu.dot_dimension_numbers<[1], [0], [0], [1], [0, 0, 1, 1], [], []>} : vector<128x256xbf16>, vector<256x256xbf16>, vector<128x256xf32> -> vector<128x256xf32>
    %28 = arith.addf %22, %27 : vector<128x256xf32>
    %c0_51 = arith.constant 0 : index
    %c1_52 = arith.constant 1 : index
    %c0_53 = arith.constant 0 : index
    %c0_54 = arith.constant 0 : index
    %29 = vector.load %arg9[%c0_51, %c1_52, %c0_53, %c0_54] : memref<2x10x10x256xbf16, #tpu.memory_space<vmem>>, vector<2x8x8x256xbf16>
    %30 = vector.shape_cast %29 : vector<2x8x8x256xbf16> to vector<128x256xbf16>
    %c1_55 = arith.constant 1 : index
    %c0_56 = arith.constant 0 : index
    %c0_57 = arith.constant 0 : index
    %c0_58 = arith.constant 0 : index
    %31 = vector.load %arg2[%c1_55, %c0_56, %c0_57, %c0_58] : memref<3x3x256x256xbf16, #tpu.memory_space<vmem>>, vector<1x1x256x256xbf16>
    %32 = vector.shape_cast %31 : vector<1x1x256x256xbf16> to vector<256x256xbf16>
    %cst_59 = arith.constant dense<0.000000e+00> : vector<128x256xf32>
    %33 = tpu.matmul %30, %32, %cst_59 {dimension_numbers = #tpu.dot_dimension_numbers<[1], [0], [0], [1], [0, 0, 1, 1], [], []>} : vector<128x256xbf16>, vector<256x256xbf16>, vector<128x256xf32> -> vector<128x256xf32>
    %34 = arith.addf %28, %33 : vector<128x256xf32>
    %c0_60 = arith.constant 0 : index
    %c1_61 = arith.constant 1 : index
    %c1_62 = arith.constant 1 : index
    %c0_63 = arith.constant 0 : index
    %35 = vector.load %arg9[%c0_60, %c1_61, %c1_62, %c0_63] : memref<2x10x10x256xbf16, #tpu.memory_space<vmem>>, vector<2x8x8x256xbf16>
    %36 = vector.shape_cast %35 : vector<2x8x8x256xbf16> to vector<128x256xbf16>
    %c1_64 = arith.constant 1 : index
    %c1_65 = arith.constant 1 : index
    %c0_66 = arith.constant 0 : index
    %c0_67 = arith.constant 0 : index
    %37 = vector.load %arg2[%c1_64, %c1_65, %c0_66, %c0_67] : memref<3x3x256x256xbf16, #tpu.memory_space<vmem>>, vector<1x1x256x256xbf16>
    %38 = vector.shape_cast %37 : vector<1x1x256x256xbf16> to vector<256x256xbf16>
    %cst_68 = arith.constant dense<0.000000e+00> : vector<128x256xf32>
    %39 = tpu.matmul %36, %38, %cst_68 {dimension_numbers = #tpu.dot_dimension_numbers<[1], [0], [0], [1], [0, 0, 1, 1], [], []>} : vector<128x256xbf16>, vector<256x256xbf16>, vector<128x256xf32> -> vector<128x256xf32>
    %40 = arith.addf %34, %39 : vector<128x256xf32>
    %c0_69 = arith.constant 0 : index
    %c1_70 = arith.constant 1 : index
    %c2_71 = arith.constant 2 : index
    %c0_72 = arith.constant 0 : index
    %41 = vector.load %arg9[%c0_69, %c1_70, %c2_71, %c0_72] : memref<2x10x10x256xbf16, #tpu.memory_space<vmem>>, vector<2x8x8x256xbf16>
    %42 = vector.shape_cast %41 : vector<2x8x8x256xbf16> to vector<128x256xbf16>
    %c1_73 = arith.constant 1 : index
    %c2_74 = arith.constant 2 : index
    %c0_75 = arith.constant 0 : index
    %c0_76 = arith.constant 0 : index
    %43 = vector.load %arg2[%c1_73, %c2_74, %c0_75, %c0_76] : memref<3x3x256x256xbf16, #tpu.memory_space<vmem>>, vector<1x1x256x256xbf16>
    %44 = vector.shape_cast %43 : vector<1x1x256x256xbf16> to vector<256x256xbf16>
    %cst_77 = arith.constant dense<0.000000e+00> : vector<128x256xf32>
    %45 = tpu.matmul %42, %44, %cst_77 {dimension_numbers = #tpu.dot_dimension_numbers<[1], [0], [0], [1], [0, 0, 1, 1], [], []>} : vector<128x256xbf16>, vector<256x256xbf16>, vector<128x256xf32> -> vector<128x256xf32>
    %46 = arith.addf %40, %45 : vector<128x256xf32>
    %c0_78 = arith.constant 0 : index
    %c2_79 = arith.constant 2 : index
    %c0_80 = arith.constant 0 : index
    %c0_81 = arith.constant 0 : index
    %47 = vector.load %arg9[%c0_78, %c2_79, %c0_80, %c0_81] : memref<2x10x10x256xbf16, #tpu.memory_space<vmem>>, vector<2x8x8x256xbf16>
    %48 = vector.shape_cast %47 : vector<2x8x8x256xbf16> to vector<128x256xbf16>
    %c2_82 = arith.constant 2 : index
    %c0_83 = arith.constant 0 : index
    %c0_84 = arith.constant 0 : index
    %c0_85 = arith.constant 0 : index
    %49 = vector.load %arg2[%c2_82, %c0_83, %c0_84, %c0_85] : memref<3x3x256x256xbf16, #tpu.memory_space<vmem>>, vector<1x1x256x256xbf16>
    %50 = vector.shape_cast %49 : vector<1x1x256x256xbf16> to vector<256x256xbf16>
    %cst_86 = arith.constant dense<0.000000e+00> : vector<128x256xf32>
    %51 = tpu.matmul %48, %50, %cst_86 {dimension_numbers = #tpu.dot_dimension_numbers<[1], [0], [0], [1], [0, 0, 1, 1], [], []>} : vector<128x256xbf16>, vector<256x256xbf16>, vector<128x256xf32> -> vector<128x256xf32>
    %52 = arith.addf %46, %51 : vector<128x256xf32>
    %c0_87 = arith.constant 0 : index
    %c2_88 = arith.constant 2 : index
    %c1_89 = arith.constant 1 : index
    %c0_90 = arith.constant 0 : index
    %53 = vector.load %arg9[%c0_87, %c2_88, %c1_89, %c0_90] : memref<2x10x10x256xbf16, #tpu.memory_space<vmem>>, vector<2x8x8x256xbf16>
    %54 = vector.shape_cast %53 : vector<2x8x8x256xbf16> to vector<128x256xbf16>
    %c2_91 = arith.constant 2 : index
    %c1_92 = arith.constant 1 : index
    %c0_93 = arith.constant 0 : index
    %c0_94 = arith.constant 0 : index
    %55 = vector.load %arg2[%c2_91, %c1_92, %c0_93, %c0_94] : memref<3x3x256x256xbf16, #tpu.memory_space<vmem>>, vector<1x1x256x256xbf16>
    %56 = vector.shape_cast %55 : vector<1x1x256x256xbf16> to vector<256x256xbf16>
    %cst_95 = arith.constant dense<0.000000e+00> : vector<128x256xf32>
    %57 = tpu.matmul %54, %56, %cst_95 {dimension_numbers = #tpu.dot_dimension_numbers<[1], [0], [0], [1], [0, 0, 1, 1], [], []>} : vector<128x256xbf16>, vector<256x256xbf16>, vector<128x256xf32> -> vector<128x256xf32>
    %58 = arith.addf %52, %57 : vector<128x256xf32>
    %c0_96 = arith.constant 0 : index
    %c2_97 = arith.constant 2 : index
    %c2_98 = arith.constant 2 : index
    %c0_99 = arith.constant 0 : index
    %59 = vector.load %arg9[%c0_96, %c2_97, %c2_98, %c0_99] : memref<2x10x10x256xbf16, #tpu.memory_space<vmem>>, vector<2x8x8x256xbf16>
    %60 = vector.shape_cast %59 : vector<2x8x8x256xbf16> to vector<128x256xbf16>
    %c2_100 = arith.constant 2 : index
    %c2_101 = arith.constant 2 : index
    %c0_102 = arith.constant 0 : index
    %c0_103 = arith.constant 0 : index
    %61 = vector.load %arg2[%c2_100, %c2_101, %c0_102, %c0_103] : memref<3x3x256x256xbf16, #tpu.memory_space<vmem>>, vector<1x1x256x256xbf16>
    %62 = vector.shape_cast %61 : vector<1x1x256x256xbf16> to vector<256x256xbf16>
    %cst_104 = arith.constant dense<0.000000e+00> : vector<128x256xf32>
    %63 = tpu.matmul %60, %62, %cst_104 {dimension_numbers = #tpu.dot_dimension_numbers<[1], [0], [0], [1], [0, 0, 1, 1], [], []>} : vector<128x256xbf16>, vector<256x256xbf16>, vector<128x256xf32> -> vector<128x256xf32>
    %64 = arith.addf %58, %63 : vector<128x256xf32>
    %c0_105 = arith.constant 0 : index
    %c0_106 = arith.constant 0 : index
    %65 = vector.load %arg3[%c0_105, %c0_106] : memref<1x256xf32, #tpu.memory_space<vmem>>, vector<1x256xf32>
    %66 = vector.broadcast %65 : vector<1x256xf32> to vector<128x256xf32>
    %67 = arith.mulf %64, %66 : vector<128x256xf32>
    %c0_107 = arith.constant 0 : index
    %c0_108 = arith.constant 0 : index
    %68 = vector.load %arg4[%c0_107, %c0_108] : memref<1x256xf32, #tpu.memory_space<vmem>>, vector<1x256xf32>
    %69 = vector.broadcast %68 : vector<1x256xf32> to vector<128x256xf32>
    %70 = arith.addf %67, %69 : vector<128x256xf32>
    %cst_109 = arith.constant 0.000000e+00 : f32
    %71 = vector.broadcast %cst_109 : f32 to vector<128x256xf32>
    %72 = arith.maximumf %70, %71 : vector<128x256xf32>
    %73 = arith.truncf %72 : vector<128x256xf32> to vector<128x256xbf16>
    %74 = vector.shape_cast %73 : vector<128x256xbf16> to vector<2x8x8x256xbf16>
    %c0_110 = arith.constant 0 : index
    %c1_111 = arith.constant 1 : index
    %c1_112 = arith.constant 1 : index
    %c0_113 = arith.constant 0 : index
    %75 = vector.load %arg9[%c0_110, %c1_111, %c1_112, %c0_113] : memref<2x10x10x256xbf16, #tpu.memory_space<vmem>>, vector<2x8x8x256xbf16>
    tpu.vector_store %arg9[%c0_110, %c1_111, %c1_112, %c0_113], %74 {strides = array<i32>} : memref<2x10x10x256xbf16, #tpu.memory_space<vmem>>, vector<2x8x8x256xbf16>,
    %cst_114 = arith.constant 0.000000e+00 : f32
    %76 = vector.broadcast %cst_114 : f32 to vector<128x256xf32>
    %c0_115 = arith.constant 0 : index
    %c0_116 = arith.constant 0 : index
    %c0_117 = arith.constant 0 : index
    %c0_118 = arith.constant 0 : index
    %77 = vector.load %arg9[%c0_115, %c0_116, %c0_117, %c0_118] : memref<2x10x10x256xbf16, #tpu.memory_space<vmem>>, vector<2x8x8x256xbf16>
    %78 = vector.shape_cast %77 : vector<2x8x8x256xbf16> to vector<128x256xbf16>
    %c0_119 = arith.constant 0 : index
    %c0_120 = arith.constant 0 : index
    %c0_121 = arith.constant 0 : index
    %c0_122 = arith.constant 0 : index
    %79 = vector.load %arg5[%c0_119, %c0_120, %c0_121, %c0_122] : memref<3x3x256x256xbf16, #tpu.memory_space<vmem>>, vector<1x1x256x256xbf16>
    %80 = vector.shape_cast %79 : vector<1x1x256x256xbf16> to vector<256x256xbf16>
    %cst_123 = arith.constant dense<0.000000e+00> : vector<128x256xf32>
    %81 = tpu.matmul %78, %80, %cst_123 {dimension_numbers = #tpu.dot_dimension_numbers<[1], [0], [0], [1], [0, 0, 1, 1], [], []>} : vector<128x256xbf16>, vector<256x256xbf16>, vector<128x256xf32> -> vector<128x256xf32>
    %82 = arith.addf %76, %81 : vector<128x256xf32>
    %c0_124 = arith.constant 0 : index
    %c0_125 = arith.constant 0 : index
    %c1_126 = arith.constant 1 : index
    %c0_127 = arith.constant 0 : index
    %83 = vector.load %arg9[%c0_124, %c0_125, %c1_126, %c0_127] : memref<2x10x10x256xbf16, #tpu.memory_space<vmem>>, vector<2x8x8x256xbf16>
    %84 = vector.shape_cast %83 : vector<2x8x8x256xbf16> to vector<128x256xbf16>
    %c0_128 = arith.constant 0 : index
    %c1_129 = arith.constant 1 : index
    %c0_130 = arith.constant 0 : index
    %c0_131 = arith.constant 0 : index
    %85 = vector.load %arg5[%c0_128, %c1_129, %c0_130, %c0_131] : memref<3x3x256x256xbf16, #tpu.memory_space<vmem>>, vector<1x1x256x256xbf16>
    %86 = vector.shape_cast %85 : vector<1x1x256x256xbf16> to vector<256x256xbf16>
    %cst_132 = arith.constant dense<0.000000e+00> : vector<128x256xf32>
    %87 = tpu.matmul %84, %86, %cst_132 {dimension_numbers = #tpu.dot_dimension_numbers<[1], [0], [0], [1], [0, 0, 1, 1], [], []>} : vector<128x256xbf16>, vector<256x256xbf16>, vector<128x256xf32> -> vector<128x256xf32>
    %88 = arith.addf %82, %87 : vector<128x256xf32>
    %c0_133 = arith.constant 0 : index
    %c0_134 = arith.constant 0 : index
    %c2_135 = arith.constant 2 : index
    %c0_136 = arith.constant 0 : index
    %89 = vector.load %arg9[%c0_133, %c0_134, %c2_135, %c0_136] : memref<2x10x10x256xbf16, #tpu.memory_space<vmem>>, vector<2x8x8x256xbf16>
    %90 = vector.shape_cast %89 : vector<2x8x8x256xbf16> to vector<128x256xbf16>
    %c0_137 = arith.constant 0 : index
    %c2_138 = arith.constant 2 : index
    %c0_139 = arith.constant 0 : index
    %c0_140 = arith.constant 0 : index
    %91 = vector.load %arg5[%c0_137, %c2_138, %c0_139, %c0_140] : memref<3x3x256x256xbf16, #tpu.memory_space<vmem>>, vector<1x1x256x256xbf16>
    %92 = vector.shape_cast %91 : vector<1x1x256x256xbf16> to vector<256x256xbf16>
    %cst_141 = arith.constant dense<0.000000e+00> : vector<128x256xf32>
    %93 = tpu.matmul %90, %92, %cst_141 {dimension_numbers = #tpu.dot_dimension_numbers<[1], [0], [0], [1], [0, 0, 1, 1], [], []>} : vector<128x256xbf16>, vector<256x256xbf16>, vector<128x256xf32> -> vector<128x256xf32>
    %94 = arith.addf %88, %93 : vector<128x256xf32>
    %c0_142 = arith.constant 0 : index
    %c1_143 = arith.constant 1 : index
    %c0_144 = arith.constant 0 : index
    %c0_145 = arith.constant 0 : index
    %95 = vector.load %arg9[%c0_142, %c1_143, %c0_144, %c0_145] : memref<2x10x10x256xbf16, #tpu.memory_space<vmem>>, vector<2x8x8x256xbf16>
    %96 = vector.shape_cast %95 : vector<2x8x8x256xbf16> to vector<128x256xbf16>
    %c1_146 = arith.constant 1 : index
    %c0_147 = arith.constant 0 : index
    %c0_148 = arith.constant 0 : index
    %c0_149 = arith.constant 0 : index
    %97 = vector.load %arg5[%c1_146, %c0_147, %c0_148, %c0_149] : memref<3x3x256x256xbf16, #tpu.memory_space<vmem>>, vector<1x1x256x256xbf16>
    %98 = vector.shape_cast %97 : vector<1x1x256x256xbf16> to vector<256x256xbf16>
    %cst_150 = arith.constant dense<0.000000e+00> : vector<128x256xf32>
    %99 = tpu.matmul %96, %98, %cst_150 {dimension_numbers = #tpu.dot_dimension_numbers<[1], [0], [0], [1], [0, 0, 1, 1], [], []>} : vector<128x256xbf16>, vector<256x256xbf16>, vector<128x256xf32> -> vector<128x256xf32>
    %100 = arith.addf %94, %99 : vector<128x256xf32>
    %c0_151 = arith.constant 0 : index
    %c1_152 = arith.constant 1 : index
    %c1_153 = arith.constant 1 : index
    %c0_154 = arith.constant 0 : index
    %101 = vector.load %arg9[%c0_151, %c1_152, %c1_153, %c0_154] : memref<2x10x10x256xbf16, #tpu.memory_space<vmem>>, vector<2x8x8x256xbf16>
    %102 = vector.shape_cast %101 : vector<2x8x8x256xbf16> to vector<128x256xbf16>
    %c1_155 = arith.constant 1 : index
    %c1_156 = arith.constant 1 : index
    %c0_157 = arith.constant 0 : index
    %c0_158 = arith.constant 0 : index
    %103 = vector.load %arg5[%c1_155, %c1_156, %c0_157, %c0_158] : memref<3x3x256x256xbf16, #tpu.memory_space<vmem>>, vector<1x1x256x256xbf16>
    %104 = vector.shape_cast %103 : vector<1x1x256x256xbf16> to vector<256x256xbf16>
    %cst_159 = arith.constant dense<0.000000e+00> : vector<128x256xf32>
    %105 = tpu.matmul %102, %104, %cst_159 {dimension_numbers = #tpu.dot_dimension_numbers<[1], [0], [0], [1], [0, 0, 1, 1], [], []>} : vector<128x256xbf16>, vector<256x256xbf16>, vector<128x256xf32> -> vector<128x256xf32>
    %106 = arith.addf %100, %105 : vector<128x256xf32>
    %c0_160 = arith.constant 0 : index
    %c1_161 = arith.constant 1 : index
    %c2_162 = arith.constant 2 : index
    %c0_163 = arith.constant 0 : index
    %107 = vector.load %arg9[%c0_160, %c1_161, %c2_162, %c0_163] : memref<2x10x10x256xbf16, #tpu.memory_space<vmem>>, vector<2x8x8x256xbf16>
    %108 = vector.shape_cast %107 : vector<2x8x8x256xbf16> to vector<128x256xbf16>
    %c1_164 = arith.constant 1 : index
    %c2_165 = arith.constant 2 : index
    %c0_166 = arith.constant 0 : index
    %c0_167 = arith.constant 0 : index
    %109 = vector.load %arg5[%c1_164, %c2_165, %c0_166, %c0_167] : memref<3x3x256x256xbf16, #tpu.memory_space<vmem>>, vector<1x1x256x256xbf16>
    %110 = vector.shape_cast %109 : vector<1x1x256x256xbf16> to vector<256x256xbf16>
    %cst_168 = arith.constant dense<0.000000e+00> : vector<128x256xf32>
    %111 = tpu.matmul %108, %110, %cst_168 {dimension_numbers = #tpu.dot_dimension_numbers<[1], [0], [0], [1], [0, 0, 1, 1], [], []>} : vector<128x256xbf16>, vector<256x256xbf16>, vector<128x256xf32> -> vector<128x256xf32>
    %112 = arith.addf %106, %111 : vector<128x256xf32>
    %c0_169 = arith.constant 0 : index
    %c2_170 = arith.constant 2 : index
    %c0_171 = arith.constant 0 : index
    %c0_172 = arith.constant 0 : index
    %113 = vector.load %arg9[%c0_169, %c2_170, %c0_171, %c0_172] : memref<2x10x10x256xbf16, #tpu.memory_space<vmem>>, vector<2x8x8x256xbf16>
    %114 = vector.shape_cast %113 : vector<2x8x8x256xbf16> to vector<128x256xbf16>
    %c2_173 = arith.constant 2 : index
    %c0_174 = arith.constant 0 : index
    %c0_175 = arith.constant 0 : index
    %c0_176 = arith.constant 0 : index
    %115 = vector.load %arg5[%c2_173, %c0_174, %c0_175, %c0_176] : memref<3x3x256x256xbf16, #tpu.memory_space<vmem>>, vector<1x1x256x256xbf16>
    %116 = vector.shape_cast %115 : vector<1x1x256x256xbf16> to vector<256x256xbf16>
    %cst_177 = arith.constant dense<0.000000e+00> : vector<128x256xf32>
    %117 = tpu.matmul %114, %116, %cst_177 {dimension_numbers = #tpu.dot_dimension_numbers<[1], [0], [0], [1], [0, 0, 1, 1], [], []>} : vector<128x256xbf16>, vector<256x256xbf16>, vector<128x256xf32> -> vector<128x256xf32>
    %118 = arith.addf %112, %117 : vector<128x256xf32>
    %c0_178 = arith.constant 0 : index
    %c2_179 = arith.constant 2 : index
    %c1_180 = arith.constant 1 : index
    %c0_181 = arith.constant 0 : index
    %119 = vector.load %arg9[%c0_178, %c2_179, %c1_180, %c0_181] : memref<2x10x10x256xbf16, #tpu.memory_space<vmem>>, vector<2x8x8x256xbf16>
    %120 = vector.shape_cast %119 : vector<2x8x8x256xbf16> to vector<128x256xbf16>
    %c2_182 = arith.constant 2 : index
    %c1_183 = arith.constant 1 : index
    %c0_184 = arith.constant 0 : index
    %c0_185 = arith.constant 0 : index
    %121 = vector.load %arg5[%c2_182, %c1_183, %c0_184, %c0_185] : memref<3x3x256x256xbf16, #tpu.memory_space<vmem>>, vector<1x1x256x256xbf16>
    %122 = vector.shape_cast %121 : vector<1x1x256x256xbf16> to vector<256x256xbf16>
    %cst_186 = arith.constant dense<0.000000e+00> : vector<128x256xf32>
    %123 = tpu.matmul %120, %122, %cst_186 {dimension_numbers = #tpu.dot_dimension_numbers<[1], [0], [0], [1], [0, 0, 1, 1], [], []>} : vector<128x256xbf16>, vector<256x256xbf16>, vector<128x256xf32> -> vector<128x256xf32>
    %124 = arith.addf %118, %123 : vector<128x256xf32>
    %c0_187 = arith.constant 0 : index
    %c2_188 = arith.constant 2 : index
    %c2_189 = arith.constant 2 : index
    %c0_190 = arith.constant 0 : index
    %125 = vector.load %arg9[%c0_187, %c2_188, %c2_189, %c0_190] : memref<2x10x10x256xbf16, #tpu.memory_space<vmem>>, vector<2x8x8x256xbf16>
    %126 = vector.shape_cast %125 : vector<2x8x8x256xbf16> to vector<128x256xbf16>
    %c2_191 = arith.constant 2 : index
    %c2_192 = arith.constant 2 : index
    %c0_193 = arith.constant 0 : index
    %c0_194 = arith.constant 0 : index
    %127 = vector.load %arg5[%c2_191, %c2_192, %c0_193, %c0_194] : memref<3x3x256x256xbf16, #tpu.memory_space<vmem>>, vector<1x1x256x256xbf16>
    %128 = vector.shape_cast %127 : vector<1x1x256x256xbf16> to vector<256x256xbf16>
    %cst_195 = arith.constant dense<0.000000e+00> : vector<128x256xf32>
    %129 = tpu.matmul %126, %128, %cst_195 {dimension_numbers = #tpu.dot_dimension_numbers<[1], [0], [0], [1], [0, 0, 1, 1], [], []>} : vector<128x256xbf16>, vector<256x256xbf16>, vector<128x256xf32> -> vector<128x256xf32>
    %130 = arith.addf %124, %129 : vector<128x256xf32>
    %c0_196 = arith.constant 0 : index
    %c0_197 = arith.constant 0 : index
    %131 = vector.load %arg6[%c0_196, %c0_197] : memref<1x256xf32, #tpu.memory_space<vmem>>, vector<1x256xf32>
    %132 = vector.broadcast %131 : vector<1x256xf32> to vector<128x256xf32>
    %133 = arith.mulf %130, %132 : vector<128x256xf32>
    %c0_198 = arith.constant 0 : index
    %c0_199 = arith.constant 0 : index
    %134 = vector.load %arg7[%c0_198, %c0_199] : memref<1x256xf32, #tpu.memory_space<vmem>>, vector<1x256xf32>
    %135 = vector.broadcast %134 : vector<1x256xf32> to vector<128x256xf32>
    %136 = arith.addf %133, %135 : vector<128x256xf32>
    %cst_200 = arith.constant 0.000000e+00 : f32
    %137 = vector.broadcast %cst_200 : f32 to vector<128x256xf32>
    %138 = arith.maximumf %136, %137 : vector<128x256xf32>
    %139 = vector.shape_cast %138 : vector<128x256xf32> to vector<2x64x256xf32>
    %c0_201 = arith.constant 0 : index
    %c0_202 = arith.constant 0 : index
    %c0_203 = arith.constant 0 : index
    %140 = vector.load %arg8[%c0_201, %c0_202, %c0_203] : memref<2x64x256xf32, #tpu.memory_space<vmem>>, vector<2x64x256xf32>
    tpu.vector_store %arg8[%c0_201, %c0_202, %c0_203], %139 {strides = array<i32>} : memref<2x64x256xf32, #tpu.memory_space<vmem>>, vector<2x64x256xf32>,
    return
  }
  func.func @transform_0(%arg0: i32) -> (i32, i32, i32, i32) {
    %c0_i32 = arith.constant 0 : i32
    %c0_i32_0 = arith.constant 0 : i32
    %c0_i32_1 = arith.constant 0 : i32
    %c0_i32_2 = arith.constant 0 : i32
    return %arg0, %c0_i32, %c0_i32_0, %c0_i32_1 : i32, i32, i32, i32
  }
  func.func @transform_1(%arg0: i32) -> (i32, i32, i32, i32) {
    %c0_i32 = arith.constant 0 : i32
    %c0_i32_0 = arith.constant 0 : i32
    %c0_i32_1 = arith.constant 0 : i32
    %c0_i32_2 = arith.constant 0 : i32
    %c0_i32_3 = arith.constant 0 : i32
    return %c0_i32, %c0_i32_0, %c0_i32_1, %c0_i32_2 : i32, i32, i32, i32
  }
  func.func @transform_2(%arg0: i32) -> (i32, i32) {
    %c0_i32 = arith.constant 0 : i32
    %c0_i32_0 = arith.constant 0 : i32
    %c0_i32_1 = arith.constant 0 : i32
    return %c0_i32, %c0_i32_0 : i32, i32
  }
  func.func @transform_3(%arg0: i32) -> (i32, i32) {
    %c0_i32 = arith.constant 0 : i32
    %c0_i32_0 = arith.constant 0 : i32
    %c0_i32_1 = arith.constant 0 : i32
    return %c0_i32, %c0_i32_0 : i32, i32
  }
  func.func @transform_4(%arg0: i32) -> (i32, i32, i32, i32) {
    %c0_i32 = arith.constant 0 : i32
    %c0_i32_0 = arith.constant 0 : i32
    %c0_i32_1 = arith.constant 0 : i32
    %c0_i32_2 = arith.constant 0 : i32
    %c0_i32_3 = arith.constant 0 : i32
    return %c0_i32, %c0_i32_0, %c0_i32_1, %c0_i32_2 : i32, i32, i32, i32
  }
  func.func @transform_5(%arg0: i32) -> (i32, i32) {
    %c0_i32 = arith.constant 0 : i32
    %c0_i32_0 = arith.constant 0 : i32
    %c0_i32_1 = arith.constant 0 : i32
    return %c0_i32, %c0_i32_0 : i32, i32
  }
  func.func @transform_6(%arg0: i32) -> (i32, i32) {
    %c0_i32 = arith.constant 0 : i32
    %c0_i32_0 = arith.constant 0 : i32
    %c0_i32_1 = arith.constant 0 : i32
    return %c0_i32, %c0_i32_0 : i32, i32
  }
  func.func @transform_7(%arg0: i32) -> (i32, i32, i32) {
    %c0_i32 = arith.constant 0 : i32
    %c0_i32_0 = arith.constant 0 : i32
    %c0_i32_1 = arith.constant 0 : i32
    return %arg0, %c0_i32, %c0_i32_0 : i32, i32, i32
  }
}

</mosaic_0001>

<llo_original>
// kernel: double_conv_block.1
$region0: #{double_conv_block.1}
  #allocation0 [shape = 'u32[]', space=smem, size = 0x4, offset = 0x4, fixed_abs, tag = 'smem constant byte address 0x4 - core index']
  #allocation1 [shape = 'u32[144,128]{1,0:T(1,128)}', space=vmem, size = 0x12000, scoped, tag = 'internal scratch']
  #allocation2 [shape = 'bf16[2,10,10,256]{3,2,1,0:T(8,128)(2,1)}', space=vmem, size = 0x28000, scoped, tag = 'scratch operand']
  %s0 = inlined_call_operand.vmem [shape: bf16[4,8,8,256], index: 0, kind: input, shape index: {}]
  %s1 = inlined_call_operand.vmem [shape: bf16[3,3,256,256], index: 1, kind: input, shape index: {}]
  %s2 = inlined_call_operand.vmem [shape: f32[1,256], index: 2, kind: input, shape index: {}]
  %s3 = inlined_call_operand.vmem [shape: f32[1,256], index: 3, kind: input, shape index: {}]
  %s4 = inlined_call_operand.hbm [shape: bf16[3,3,256,256], index: 4, kind: input, shape index: {}]
  %s5 = inlined_call_operand.vmem [shape: f32[1,256], index: 5, kind: input, shape index: {}]
  %s6 = inlined_call_operand.vmem [shape: f32[1,256], index: 6, kind: input, shape index: {}]
  %s7 = inlined_call_operand.vmem [shape: f32[4,64,256], index: 7, kind: output, shape index: {}]
  %s8 = sld [smem:[#allocation0]]
  $region65: #{double_conv_block.1} parent=0
    _
  %s10 = ssub.s32 1, %s8
  %s11 = scalar_select 0, %s10, %s8
  $region1: #{double_conv_block.1} parent=0
    #allocation3 [shape = 'u8[1179648]{0}', space=vmem, size = 0x120000, scoped, tag = 'input window, operand 4, single buffered']
    #allocation4 [shape = 's32[2]{0}', space=sflag, size = 0x8, scoped, tag = 'scoped memory for double_conv_block.1']
    %12 = vsyncpa [#allocation4], 0
    loop: start=0, step=1, limit=4
    $region2: #{double_conv_block.1} parent=1 // loop_pre_header
      _
    $region3: #{double_conv_block.1} parent=1 // loop_header
      %s14 = sphi 0, %s18
      %p15 = scmp.ge.s32.totalorder %s14, 4
      %s24 = sphi 0, %s26
      %s27 = sphi 0, %s24
      %s28 = sphi 0, %s27
      %s44 = sphi 0, %s28
      %s48 = sphi 0, %s48
      %s50 = sphi 0, %s48
      %s51 = sphi 0, %s50
      %s65 = sphi 0, %s51
      %s69 = sphi 0, %s69
      %s71 = sphi 0, %s69
      %s72 = sphi 0, %s71
      %s86 = sphi 0, %s72
      %s90 = sphi 0, %s90
      %s92 = sphi 0, %s90
      %s93 = sphi 0, %s92
      %s107 = sphi 0, %s93
      %s111 = sphi 0, %s111
      %s113 = sphi 0, %s111
      %s114 = sphi 0, %s113
      %s128 = sphi 0, %s114
      %s132 = sphi 0, %s132
      %s134 = sphi 0, %s132
      %s135 = sphi 0, %s134
      %s149 = sphi 0, %s135
      %s153 = sphi 0, %s153
      %s155 = sphi 0, %s153
      %s156 = sphi 0, %s155
      %s170 = sphi 0, %s156
      %s176 = sphi 0, %s178
      %s179 = sphi 0, %s176
      %s180 = sphi 0, %s179
      %s196 = sphi 0, %s180
    $region4: #{double_conv_block.1} parent=1 // loop_header_branch
      %17 = sbr.rel (%p15) target = $region8
    $region5: #{double_conv_block.1} parent=1 // loop_body
      %s19 = ssub.s32 %s14, 1
      %s20 = ssub.s32 %s14, 2
      %s21 = sadd.s32 %s14, 1
      %s22 = ssub.s32 %s14, %s21
      %p23 = scmp.eq.s32.totalorder %s22, 0
      %s25 = sadd.s32 %s24, 1
      %s26 = scalar_select %p23, %s24, %s25
      %p29 = pneg %p23
      %p30 = scmp.eq.s32.totalorder %s14, 1
      %p31 = por %p29, %p30
      %p32 = scmp.ne.s32.totalorder %s24, %s27
      %p33 = scmp.eq.s32.totalorder %s14, 0
      %p34 = por %p32, %p33
      %p35 = scmp.ne.s32.totalorder %s24, %s27
      %p36 = scmp.eq.s32.totalorder %s19, 1
      %p37 = por %p35, %p36
      %p38 = scmp.ne.s32.totalorder %s27, %s28
      %p39 = scmp.eq.s32.totalorder %s19, 0
      %p40 = por %p38, %p39
      %p41 = scmp.ne.s32.totalorder %s27, %s28
      %p42 = scmp.eq.s32.totalorder %s20, 1
      %p43 = por %p41, %p42
      %p45 = scmp.ne.s32.totalorder %s28, %s44
      %p46 = scmp.eq.s32.totalorder %s20, 0
      %p47 = por %p45, %p46
      %s49 = sadd.s32 %s48, 1
      %p52 = scmp.eq.s32.totalorder %s14, 1
      %p53 = scmp.ne.s32.totalorder %s48, %s50
      %p54 = scmp.eq.s32.totalorder %s14, 0
      %p55 = por %p53, %p54
      %p56 = scmp.ne.s32.totalorder %s48, %s50
      %p57 = scmp.eq.s32.totalorder %s19, 1
      %p58 = por %p56, %p57
      %p59 = scmp.ne.s32.totalorder %s50, %s51
      %p60 = scmp.eq.s32.totalorder %s19, 0
      %p61 = por %p59, %p60
      %p62 = scmp.ne.s32.totalorder %s50, %s51
      %p63 = scmp.eq.s32.totalorder %s20, 1
      %p64 = por %p62, %p63
      %p66 = scmp.ne.s32.totalorder %s51, %s65
      %p67 = scmp.eq.s32.totalorder %s20, 0
      %p68 = por %p66, %p67
      %s70 = sadd.s32 %s69, 1
      %p73 = scmp.eq.s32.totalorder %s14, 1
      %p74 = scmp.ne.s32.totalorder %s69, %s71
      %p75 = scmp.eq.s32.totalorder %s14, 0
      %p76 = por %p74, %p75
      %p77 = scmp.ne.s32.totalorder %s69, %s71
      %p78 = scmp.eq.s32.totalorder %s19, 1
      %p79 = por %p77, %p78
      %p80 = scmp.ne.s32.totalorder %s71, %s72
      %p81 = scmp.eq.s32.totalorder %s19, 0
      %p82 = por %p80, %p81
      %p83 = scmp.ne.s32.totalorder %s71, %s72
      %p84 = scmp.eq.s32.totalorder %s20, 1
      %p85 = por %p83, %p84
      %p87 = scmp.ne.s32.totalorder %s72, %s86
      %p88 = scmp.eq.s32.totalorder %s20, 0
      %p89 = por %p87, %p88
      %s91 = sadd.s32 %s90, 1
      %p94 = scmp.eq.s32.totalorder %s14, 1
      %p95 = scmp.ne.s32.totalorder %s90, %s92
      %p96 = scmp.eq.s32.totalorder %s14, 0
      %p97 = por %p95, %p96
      %p98 = scmp.ne.s32.totalorder %s90, %s92
      %p99 = scmp.eq.s32.totalorder %s19, 1
      %p100 = por %p98, %p99
      %p101 = scmp.ne.s32.totalorder %s92, %s93
      %p102 = scmp.eq.s32.totalorder %s19, 0
      %p103 = por %p101, %p102
      %p104 = scmp.ne.s32.totalorder %s92, %s93
      %p105 = scmp.eq.s32.totalorder %s20, 1
      %p106 = por %p104, %p105
      %p108 = scmp.ne.s32.totalorder %s93, %s107
      %p109 = scmp.eq.s32.totalorder %s20, 0
      %p110 = por %p108, %p109
      %s112 = sadd.s32 %s111, 1
      %p115 = scmp.eq.s32.totalorder %s14, 1
      %p116 = scmp.ne.s32.totalorder %s111, %s113
      %p117 = scmp.eq.s32.totalorder %s14, 0
      %p118 = por %p116, %p117
      %p119 = scmp.ne.s32.totalorder %s111, %s113
      %p120 = scmp.eq.s32.totalorder %s19, 1
      %p121 = por %p119, %p120
      %p122 = scmp.ne.s32.totalorder %s113, %s114
      %p123 = scmp.eq.s32.totalorder %s19, 0
      %p124 = por %p122, %p123
      %p125 = scmp.ne.s32.totalorder %s113, %s114
      %p126 = scmp.eq.s32.totalorder %s20, 1
      %p127 = por %p125, %p126
      %p129 = scmp.ne.s32.totalorder %s114, %s128
      %p130 = scmp.eq.s32.totalorder %s20, 0
      %p131 = por %p129, %p130
      %s133 = sadd.s32 %s132, 1
      %p136 = scmp.eq.s32.totalorder %s14, 1
      %p137 = scmp.ne.s32.totalorder %s132, %s134
      %p138 = scmp.eq.s32.totalorder %s14, 0
      %p139 = por %p137, %p138
      %p140 = scmp.ne.s32.totalorder %s132, %s134
      %p141 = scmp.eq.s32.totalorder %s19, 1
      %p142 = por %p140, %p141
      %p143 = scmp.ne.s32.totalorder %s134, %s135
      %p144 = scmp.eq.s32.totalorder %s19, 0
      %p145 = por %p143, %p144
      %p146 = scmp.ne.s32.totalorder %s134, %s135
      %p147 = scmp.eq.s32.totalorder %s20, 1
      %p148 = por %p146, %p147
      %p150 = scmp.ne.s32.totalorder %s135, %s149
      %p151 = scmp.eq.s32.totalorder %s20, 0
      %p152 = por %p150, %p151
      %s154 = sadd.s32 %s153, 1
      %p157 = scmp.eq.s32.totalorder %s14, 1
      %p158 = scmp.ne.s32.totalorder %s153, %s155
      %p159 = scmp.eq.s32.totalorder %s14, 0
      %p160 = por %p158, %p159
      %p161 = scmp.ne.s32.totalorder %s153, %s155
      %p162 = scmp.eq.s32.totalorder %s19, 1
      %p163 = por %p161, %p162
      %p164 = scmp.ne.s32.totalorder %s155, %s156
      %p165 = scmp.eq.s32.totalorder %s19, 0
      %p166 = por %p164, %p165
      %p167 = scmp.ne.s32.totalorder %s155, %s156
      %p168 = scmp.eq.s32.totalorder %s20, 1
      %p169 = por %p167, %p168
      %p171 = scmp.ne.s32.totalorder %s156, %s170
      %p172 = scmp.eq.s32.totalorder %s20, 0
      %p173 = por %p171, %p172
      %s174 = ssub.s32 %s14, %s21
      %p175 = scmp.eq.s32.totalorder %s174, 0
      %s177 = sadd.s32 %s176, 1
      %s178 = scalar_select %p175, %s176, %s177
      %p181 = pneg %p175
      %p182 = scmp.eq.s32.totalorder %s14, 1
      %p183 = por %p181, %p182
      %p184 = scmp.ne.s32.totalorder %s176, %s179
      %p185 = scmp.eq.s32.totalorder %s14, 0
      %p186 = por %p184, %p185
      %p187 = scmp.ne.s32.totalorder %s176, %s179
      %p188 = scmp.eq.s32.totalorder %s19, 1
      %p189 = por %p187, %p188
      %p190 = scmp.ne.s32.totalorder %s179, %s180
      %p191 = scmp.eq.s32.totalorder %s19, 0
      %p192 = por %p190, %p191
      %p193 = scmp.ne.s32.totalorder %s179, %s180
      %p194 = scmp.eq.s32.totalorder %s20, 1
      %p195 = por %p193, %p194
      %p197 = scmp.ne.s32.totalorder %s180, %s196
      %p198 = scmp.eq.s32.totalorder %s20, 0
      %p199 = por %p197, %p198
      %p200 = scmp.le.s32.totalorder 1, %s14
      %p201 = scmp.lt.s32.totalorder %s14, 3
      %p202 = pnand %p200, %p201
      %p203 = pneg %p202
      // Predicated region
      $region9: #{double_conv_block.1} parent=5 // pred_check
        _
      $region10: #{double_conv_block.1} parent=5 // pred_check_branch
        %205 = sbr.rel (%p202) target = $region12
      $region11: #{double_conv_block.1} parent=5 // pred_region
        %s206 = ssub.s32 %s14, 1
        // Predicated region
        $region13: #{double_conv_block.1} parent=11 // pred_check
          %p207 = pneg %p61
        $region14: #{double_conv_block.1} parent=11 // pred_check_branch
          %209 = sbr.rel (%p207) target = $region16
        $region15: #{double_conv_block.1} parent=11 // pred_region
          _
        $region16: #{double_conv_block.1} parent=11 // pred_fallthru
          _
        // Predicated region
        $region17: #{double_conv_block.1} parent=11 // pred_check
          %p210 = pneg %p82
        $region18: #{double_conv_block.1} parent=11 // pred_check_branch
          %212 = sbr.rel (%p210) target = $region20
        $region19: #{double_conv_block.1} parent=11 // pred_region
          _
        $region20: #{double_conv_block.1} parent=11 // pred_fallthru
          _
        // Predicated region
        $region21: #{double_conv_block.1} parent=11 // pred_check
          %p213 = pneg %p103
        $region22: #{double_conv_block.1} parent=11 // pred_check_branch
          %215 = sbr.rel (%p213) target = $region24
        $region23: #{double_conv_block.1} parent=11 // pred_region
          _
        $region24: #{double_conv_block.1} parent=11 // pred_fallthru
          _
        // Predicated region
        $region25: #{double_conv_block.1} parent=11 // pred_check
          %p216 = pneg %p124
        $region26: #{double_conv_block.1} parent=11 // pred_check_branch
          %218 = sbr.rel (%p216) target = $region28
        $region27: #{double_conv_block.1} parent=11 // pred_region
          %s220 = ssub.s32 36864, 36864
          %221 = vsyncadd [#allocation4], %s220
          %s222 = sshll.u32 [#allocation3], 4
          %s223 = int_to_ptr.vmem [resolvable:$true] %s222
          %228 = dma.hbm_to_vmem [thread:$0]  %s4, 36864, %s223, [#allocation4], 128, 128, 8
        $region28: #{double_conv_block.1} parent=11 // pred_fallthru
          _
        // Predicated region
        $region29: #{double_conv_block.1} parent=11 // pred_check
          %p229 = pneg %p145
        $region30: #{double_conv_block.1} parent=11 // pred_check_branch
          %231 = sbr.rel (%p229) target = $region32
        $region31: #{double_conv_block.1} parent=11 // pred_region
          _
        $region32: #{double_conv_block.1} parent=11 // pred_fallthru
          _
        // Predicated region
        $region33: #{double_conv_block.1} parent=11 // pred_check
          %p232 = pneg %p166
        $region34: #{double_conv_block.1} parent=11 // pred_check_branch
          %234 = sbr.rel (%p232) target = $region36
        $region35: #{double_conv_block.1} parent=11 // pred_region
          _
        $region36: #{double_conv_block.1} parent=11 // pred_fallthru
          _
      $region12: #{double_conv_block.1} parent=5 // pred_fallthru
        _
      %p235 = scmp.lt.s32.totalorder %s14, 2
      // Predicated region
      $region37: #{double_conv_block.1} parent=5 // pred_check
        %p236 = pneg %p235
      $region38: #{double_conv_block.1} parent=5 // pred_check_branch
        %238 = sbr.rel (%p236) target = $region40
      $region39: #{double_conv_block.1} parent=5 // pred_region
        // Predicated region
        $region41: #{double_conv_block.1} parent=39 // pred_check
          %p239 = pneg %p34
        $region42: #{double_conv_block.1} parent=39 // pred_check_branch
          %241 = sbr.rel (%p239) target = $region44
        $region43: #{double_conv_block.1} parent=39 // pred_region
          %s242 = smul.u32 2, %s14
          %p243 = scmp.lt.s32.totalorder %s242, 3
          %s244 = scalar_select %p243, %s242, 3
          %s245 = smul.addr %s244, 16
          %s246 = smul.addr %s245, 4
          %s247 = scalar_lea.vmem %s0, %s246
          %s248 = smul.u32 2, %s14
        $region44: #{double_conv_block.1} parent=39 // pred_fallthru
          _
      $region40: #{double_conv_block.1} parent=5 // pred_fallthru
        _
      %p249 = scmp.le.s32.totalorder 1, %s14
      %p250 = scmp.lt.s32.totalorder %s14, 3
      %p251 = pnand %p249, %p250
      %p252 = pneg %p251
      // Predicated region
      $region45: #{double_conv_block.1} parent=5 // pred_check
        _
      $region46: #{double_conv_block.1} parent=5 // pred_check_branch
        %254 = sbr.rel (%p251) target = $region48
      $region47: #{double_conv_block.1} parent=5 // pred_region
        %s255 = ssub.s32 %s14, 1
        // Predicated region
        $region49: #{double_conv_block.1} parent=47 // pred_check
          %p256 = pneg %p124
        $region50: #{double_conv_block.1} parent=47 // pred_check_branch
          %258 = sbr.rel (%p256) target = $region52
        $region51: #{double_conv_block.1} parent=47 // pred_region
          %259 = dma.done [#allocation4], 36864
        $region52: #{double_conv_block.1} parent=47 // pred_fallthru
          _
        %s260 = smul.u32 2, %s19
        %p261 = scmp.lt.s32.totalorder %s260, 3
        %s262 = scalar_select %p261, %s260, 3
        %s263 = smul.addr %s262, 16
        %s264 = smul.addr %s263, 4
        %s265 = scalar_lea.vmem %s0, %s264
        %p266 = pneg %p40
        %p267 = pneg %p37
        %p268 = pneg %p61
        %p269 = pneg %p58
        %p270 = pneg %p82
        %p271 = pneg %p79
        %p272 = pneg %p103
        %p273 = pneg %p100
        %p274 = pneg %p124
        %p275 = pneg %p121
        %p276 = pneg %p145
        %p277 = pneg %p142
        %p278 = pneg %p166
        %p279 = pneg %p163
        %p280 = pneg %p192
        %p281 = pneg %p189
        %s282 = smul.u32 2, %s19
        %p283 = scmp.lt.s32.totalorder %s282, 3
        %s284 = scalar_select %p283, %s282, 3
        %s285 = smul.addr %s284, 16
        %s286 = smul.addr %s285, 8
        %s287 = scalar_lea.vmem %s7, %s286
        %s288 = smul.u32 2, %s19
        %p289 = scmp.lt.s32.totalorder %s288, 3
        %s290 = scalar_select %p289, %s288, 3
        %s291 = smul.addr %s290, 16
        %s292 = smul.addr %s291, 4
        %s293 = scalar_lea.vmem %s0, %s292
        %s294 = smul.u32 2, %s19
        %s295 = smul.u32 2, %s19
        %p296 = scmp.lt.s32.totalorder %s295, 3
        %s297 = scalar_select %p296, %s295, 3
        %s298 = smul.addr %s297, 16
        %s299 = smul.addr %s298, 8
        %s300 = scalar_lea.vmem %s7, %s299
        %s301 = smul.u32 2, %s19
        %303 = vst [vmem:[#allocation2] sm:$0xff] 0
        %304 = vst [vmem:[#allocation2 + $0x8] sm:$0x11] 0
        %305 = vst [vmem:[#allocation2 + $0xa0] sm:$0xff] 0
        %306 = vst [vmem:[#allocation2 + $0xa8] sm:$0x11] 0
        %s307 = scalar_lea.vmem [#allocation2], 144
        %308 = vst [vmem:[%s307] sm:$0xff] 0
        %309 = vst [vmem:[%s307 + $0x8] sm:$0x11] 0
        %310 = vst [vmem:[%s307 + $0xa0] sm:$0xff] 0
        %311 = vst [vmem:[%s307 + $0xa8] sm:$0x11] 0
        %vm312 = vcmask 1040384
        %vm313 = vsmask.f32 256
        %vm314 = vmand %vm312, %vm313
        %vm315 = vcmask 1044484
        %vm316 = vsmask.f32 4352
        %vm317 = vmand %vm315, %vm316
        %vm318 = vmor %vm317, %vm314
        %v319 = vld [vmem:[#allocation2] sm:$0x11]
        %v320 = vsel %vm318, 0, %v319
        %321 = vst [vmem:[#allocation2] sm:$0x11] %v320
        %v322 = vld [vmem:[#allocation2 + $0x10] sm:$0x11]
        %v323 = vsel %vm318, 0, %v322
        %324 = vst [vmem:[#allocation2 + $0x10] sm:$0x11] %v323
        %v325 = vld [vmem:[#allocation2 + $0x20] sm:$0x11]
        %v326 = vsel %vm318, 0, %v325
        %327 = vst [vmem:[#allocation2 + $0x20] sm:$0x11] %v326
        %v328 = vld [vmem:[#allocation2 + $0x30] sm:$0x11]
        %v329 = vsel %vm318, 0, %v328
        %330 = vst [vmem:[#allocation2 + $0x30] sm:$0x11] %v329
        %v331 = vld [vmem:[#allocation2 + $0x40] sm:$0x11]
        %v332 = vsel %vm318, 0, %v331
        %333 = vst [vmem:[#allocation2 + $0x40] sm:$0x11] %v332
        %v334 = vld [vmem:[#allocation2 + $0x50] sm:$0x11]
        %v335 = vsel %vm318, 0, %v334
        %336 = vst [vmem:[#allocation2 + $0x50] sm:$0x11] %v335
        %v337 = vld [vmem:[#allocation2 + $0x60] sm:$0x11]
        %v338 = vsel %vm318, 0, %v337
        %339 = vst [vmem:[#allocation2 + $0x60] sm:$0x11] %v338
        %v340 = vld [vmem:[#allocation2 + $0x70] sm:$0x11]
        %v341 = vsel %vm318, 0, %v340
        %342 = vst [vmem:[#allocation2 + $0x70] sm:$0x11] %v341
        %v343 = vld [vmem:[#allocation2 + $0x80] sm:$0x11]
        %v344 = vsel %vm318, 0, %v343
        %345 = vst [vmem:[#allocation2 + $0x80] sm:$0x11] %v344
        %v346 = vld [vmem:[#allocation2 + $0x90] sm:$0x11]
        %v347 = vsel %vm318, 0, %v346
        %348 = vst [vmem:[#allocation2 + $0x90] sm:$0x11] %v347
        %v349 = vld [vmem:[#allocation2 + $0xa0] sm:$0x11]
        %v350 = vsel %vm318, 0, %v349
        %351 = vst [vmem:[#allocation2 + $0xa0] sm:$0x11] %v350
        %v352 = vld [vmem:[#allocation2 + $0xb0] sm:$0x11]
        %v353 = vsel %vm318, 0, %v352
        %354 = vst [vmem:[#allocation2 + $0xb0] sm:$0x11] %v353
        %v355 = vld [vmem:[#allocation2 + $0xc0] sm:$0x11]
        %v356 = vsel %vm318, 0, %v355
        %357 = vst [vmem:[#allocation2 + $0xc0] sm:$0x11] %v356
        %v358 = vld [vmem:[#allocation2 + $0xd0] sm:$0x11]
        %v359 = vsel %vm318, 0, %v358
        %360 = vst [vmem:[#allocation2 + $0xd0] sm:$0x11] %v359
        %v361 = vld [vmem:[#allocation2 + $0xe0] sm:$0x11]
        %v362 = vsel %vm318, 0, %v361
        %363 = vst [vmem:[#allocation2 + $0xe0] sm:$0x11] %v362
        %v364 = vld [vmem:[#allocation2 + $0xf0] sm:$0x11]
        %v365 = vsel %vm318, 0, %v364
        %366 = vst [vmem:[#allocation2 + $0xf0] sm:$0x11] %v365
        %v367 = vld [vmem:[#allocation2 + $0x100] sm:$0x11]
        %v368 = vsel %vm318, 0, %v367
        %369 = vst [vmem:[#allocation2 + $0x100] sm:$0x11] %v368
        %v370 = vld [vmem:[#allocation2 + $0x110] sm:$0x11]
        %v371 = vsel %vm318, 0, %v370
        %372 = vst [vmem:[#allocation2 + $0x110] sm:$0x11] %v371
        %v373 = vld [vmem:[#allocation2 + $0x120] sm:$0x11]
        %v374 = vsel %vm318, 0, %v373
        %375 = vst [vmem:[#allocation2 + $0x120] sm:$0x11] %v374
        %v376 = vld [vmem:[#allocation2 + $0x130] sm:$0x11]
        %v377 = vsel %vm318, 0, %v376
        %378 = vst [vmem:[#allocation2 + $0x130] sm:$0x11] %v377
        %vm379 = vsmask.f32 7938
        %vm380 = vmand %vm312, %vm379
        %vm381 = vsmask.f32 7954
        %vm382 = vmand %vm315, %vm381
        %vm383 = vmor %vm382, %vm380
        %v384 = vld [vmem:[#allocation2 + $0x8] sm:$0x11]
        %v385 = vsel %vm383, 0, %v384
        %386 = vst [vmem:[#allocation2 + $0x8] sm:$0x11] %v385
        %v387 = vld [vmem:[#allocation2 + $0x18] sm:$0x11]
        %v388 = vsel %vm383, 0, %v387
        %389 = vst [vmem:[#allocation2 + $0x18] sm:$0x11] %v388
        %v390 = vld [vmem:[#allocation2 + $0x28] sm:$0x11]
        %v391 = vsel %vm383, 0, %v390
        %392 = vst [vmem:[#allocation2 + $0x28] sm:$0x11] %v391
        %v393 = vld [vmem:[#allocation2 + $0x38] sm:$0x11]
        %v394 = vsel %vm383, 0, %v393
        %395 = vst [vmem:[#allocation2 + $0x38] sm:$0x11] %v394
        %v396 = vld [vmem:[#allocation2 + $0x48] sm:$0x11]
        %v397 = vsel %vm383, 0, %v396
        %398 = vst [vmem:[#allocation2 + $0x48] sm:$0x11] %v397
        %v399 = vld [vmem:[#allocation2 + $0x58] sm:$0x11]
        %v400 = vsel %vm383, 0, %v399
        %401 = vst [vmem:[#allocation2 + $0x58] sm:$0x11] %v400
        %v402 = vld [vmem:[#allocation2 + $0x68] sm:$0x11]
        %v403 = vsel %vm383, 0, %v402
        %404 = vst [vmem:[#allocation2 + $0x68] sm:$0x11] %v403
        %v405 = vld [vmem:[#allocation2 + $0x78] sm:$0x11]
        %v406 = vsel %vm383, 0, %v405
        %407 = vst [vmem:[#allocation2 + $0x78] sm:$0x11] %v406
        %v408 = vld [vmem:[#allocation2 + $0x88] sm:$0x11]
        %v409 = vsel %vm383, 0, %v408
        %410 = vst [vmem:[#allocation2 + $0x88] sm:$0x11] %v409
        %v411 = vld [vmem:[#allocation2 + $0x98] sm:$0x11]
        %v412 = vsel %vm383, 0, %v411
        %413 = vst [vmem:[#allocation2 + $0x98] sm:$0x11] %v412
        %v414 = vld [vmem:[#allocation2 + $0xa8] sm:$0x11]
        %v415 = vsel %vm383, 0, %v414
        %416 = vst [vmem:[#allocation2 + $0xa8] sm:$0x11] %v415
        %v417 = vld [vmem:[#allocation2 + $0xb8] sm:$0x11]
        %v418 = vsel %vm383, 0, %v417
        %419 = vst [vmem:[#allocation2 + $0xb8] sm:$0x11] %v418
        %v420 = vld [vmem:[#allocation2 + $0xc8] sm:$0x11]
        %v421 = vsel %vm383, 0, %v420
        %422 = vst [vmem:[#allocation2 + $0xc8] sm:$0x11] %v421
        %v423 = vld [vmem:[#allocation2 + $0xd8] sm:$0x11]
        %v424 = vsel %vm383, 0, %v423
        %425 = vst [vmem:[#allocation2 + $0xd8] sm:$0x11] %v424
        %v426 = vld [vmem:[#allocation2 + $0xe8] sm:$0x11]
        %v427 = vsel %vm383, 0, %v426
        %428 = vst [vmem:[#allocation2 + $0xe8] sm:$0x11] %v427
        %v429 = vld [vmem:[#allocation2 + $0xf8] sm:$0x11]
        %v430 = vsel %vm383, 0, %v429
        %431 = vst [vmem:[#allocation2 + $0xf8] sm:$0x11] %v430
        %v432 = vld [vmem:[#allocation2 + $0x108] sm:$0x11]
        %v433 = vsel %vm383, 0, %v432
        %434 = vst [vmem:[#allocation2 + $0x108] sm:$0x11] %v433
        %v435 = vld [vmem:[#allocation2 + $0x118] sm:$0x11]
        %v436 = vsel %vm383, 0, %v435
        %437 = vst [vmem:[#allocation2 + $0x118] sm:$0x11] %v436
        %v438 = vld [vmem:[#allocation2 + $0x128] sm:$0x11]
        %v439 = vsel %vm383, 0, %v438
        %440 = vst [vmem:[#allocation2 + $0x128] sm:$0x11] %v439
        %v441 = vld [vmem:[#allocation2 + $0x138] sm:$0x11]
        %v442 = vsel %vm383, 0, %v441
        %443 = vst [vmem:[#allocation2 + $0x138] sm:$0x11] %v442
        %v444 = vld [vmem:[%s293] sm:$0xff]
        %v445 = vld [vmem:[%s293 + $0x8] sm:$0xff]
        %v446 = vld [vmem:[%s293 + $0x10] sm:$0xff]
        %v447 = vld [vmem:[%s293 + $0x18] sm:$0xff]
        %v448 = vld [vmem:[%s293 + $0x20] sm:$0xff]
        %v449 = vld [vmem:[%s293 + $0x28] sm:$0xff]
        %v450 = vld [vmem:[%s293 + $0x30] sm:$0xff]
        %v451 = vld [vmem:[%s293 + $0x38] sm:$0xff]
        %v452 = vld [vmem:[%s293 + $0x40] sm:$0xff]
        %v453 = vld [vmem:[%s293 + $0x48] sm:$0xff]
        %v454 = vld [vmem:[%s293 + $0x50] sm:$0xff]
        %v455 = vld [vmem:[%s293 + $0x58] sm:$0xff]
        %v456 = vld [vmem:[%s293 + $0x60] sm:$0xff]
        %v457 = vld [vmem:[%s293 + $0x68] sm:$0xff]
        %v458 = vld [vmem:[%s293 + $0x70] sm:$0xff]
        %v459 = vld [vmem:[%s293 + $0x78] sm:$0xff]
        %v461 = vshrl.u32 %v444, 16
        %v463 = vrot.slane %v461, 7
        %v464 = vshll.u32 %v444, 16
        %v466 = vor.u32 %v463, %v464
        %v467 = vrot.slane %v463, 4
        %v469 = vshrl.u32 %v445, 16
        %v471 = vrot.slane %v469, 7
        %v472 = vshll.u32 %v445, 16
        %v474 = vor.u32 %v471, %v472
        %v475 = vrot.slane %v471, 4
        %v477 = vshrl.u32 %v446, 16
        %v479 = vrot.slane %v477, 7
        %v480 = vshll.u32 %v446, 16
        %v482 = vor.u32 %v479, %v480
        %v483 = vrot.slane %v479, 4
        %v485 = vshrl.u32 %v447, 16
        %v487 = vrot.slane %v485, 7
        %v488 = vshll.u32 %v447, 16
        %v490 = vor.u32 %v487, %v488
        %v491 = vrot.slane %v487, 4
        %v493 = vshrl.u32 %v448, 16
        %v495 = vrot.slane %v493, 7
        %v496 = vshll.u32 %v448, 16
        %v498 = vor.u32 %v495, %v496
        %v499 = vrot.slane %v495, 4
        %v501 = vshrl.u32 %v449, 16
        %v503 = vrot.slane %v501, 7
        %v504 = vshll.u32 %v449, 16
        %v506 = vor.u32 %v503, %v504
        %v507 = vrot.slane %v503, 4
        %v509 = vshrl.u32 %v450, 16
        %v511 = vrot.slane %v509, 7
        %v512 = vshll.u32 %v450, 16
        %v514 = vor.u32 %v511, %v512
        %v515 = vrot.slane %v511, 4
        %v517 = vshrl.u32 %v451, 16
        %v519 = vrot.slane %v517, 7
        %v520 = vshll.u32 %v451, 16
        %v522 = vor.u32 %v519, %v520
        %v523 = vrot.slane %v519, 4
        %v525 = vshrl.u32 %v452, 16
        %v527 = vrot.slane %v525, 7
        %v528 = vshll.u32 %v452, 16
        %v530 = vor.u32 %v527, %v528
        %v531 = vrot.slane %v527, 4
        %v533 = vshrl.u32 %v453, 16
        %v535 = vrot.slane %v533, 7
        %v536 = vshll.u32 %v453, 16
        %v538 = vor.u32 %v535, %v536
        %v539 = vrot.slane %v535, 4
        %v541 = vshrl.u32 %v454, 16
        %v543 = vrot.slane %v541, 7
        %v544 = vshll.u32 %v454, 16
        %v546 = vor.u32 %v543, %v544
        %v547 = vrot.slane %v543, 4
        %v549 = vshrl.u32 %v455, 16
        %v551 = vrot.slane %v549, 7
        %v552 = vshll.u32 %v455, 16
        %v554 = vor.u32 %v551, %v552
        %v555 = vrot.slane %v551, 4
        %v557 = vshrl.u32 %v456, 16
        %v559 = vrot.slane %v557, 7
        %v560 = vshll.u32 %v456, 16
        %v562 = vor.u32 %v559, %v560
        %v563 = vrot.slane %v559, 4
        %v565 = vshrl.u32 %v457, 16
        %v567 = vrot.slane %v565, 7
        %v568 = vshll.u32 %v457, 16
        %v570 = vor.u32 %v567, %v568
        %v571 = vrot.slane %v567, 4
        %v573 = vshrl.u32 %v458, 16
        %v575 = vrot.slane %v573, 7
        %v576 = vshll.u32 %v458, 16
        %v578 = vor.u32 %v575, %v576
        %v579 = vrot.slane %v575, 4
        %v581 = vshrl.u32 %v459, 16
        %v583 = vrot.slane %v581, 7
        %v584 = vshll.u32 %v459, 16
        %v586 = vor.u32 %v583, %v584
        %v587 = vrot.slane %v583, 4
        %s620 = scalar_lea.vmem [#allocation2], 16
        %vm621 = vcmask 1043456
        %vm622 = vmand %vm621, %vm379
        %vm623 = vcmask 1047556
        %vm624 = vmand %vm623, %vm381
        %vm625 = vmor %vm624, %vm622
        %v626 = vld [vmem:[%s620] sm:$0xff]
        %v627 = vsel %vm625, %v466, %v626
        %628 = vst [vmem:[%s620] sm:$0xff] %v627
        %v629 = vld [vmem:[%s620 + $0x8] sm:$0x11]
        %v630 = vsel %vm318, %v467, %v629
        %631 = vst [vmem:[%s620 + $0x8] sm:$0x11] %v630
        %v632 = vld [vmem:[%s620 + $0x10] sm:$0xff]
        %v633 = vsel %vm625, %v474, %v632
        %634 = vst [vmem:[%s620 + $0x10] sm:$0xff] %v633
        %v635 = vld [vmem:[%s620 + $0x18] sm:$0x11]
        %v636 = vsel %vm318, %v475, %v635
        %637 = vst [vmem:[%s620 + $0x18] sm:$0x11] %v636
        %v638 = vld [vmem:[%s620 + $0x20] sm:$0xff]
        %v639 = vsel %vm625, %v482, %v638
        %640 = vst [vmem:[%s620 + $0x20] sm:$0xff] %v639
        %v641 = vld [vmem:[%s620 + $0x28] sm:$0x11]
        %v642 = vsel %vm318, %v483, %v641
        %643 = vst [vmem:[%s620 + $0x28] sm:$0x11] %v642
        %v644 = vld [vmem:[%s620 + $0x30] sm:$0xff]
        %v645 = vsel %vm625, %v490, %v644
        %646 = vst [vmem:[%s620 + $0x30] sm:$0xff] %v645
        %v647 = vld [vmem:[%s620 + $0x38] sm:$0x11]
        %v648 = vsel %vm318, %v491, %v647
        %649 = vst [vmem:[%s620 + $0x38] sm:$0x11] %v648
        %v650 = vld [vmem:[%s620 + $0x40] sm:$0xff]
        %v651 = vsel %vm625, %v498, %v650
        %652 = vst [vmem:[%s620 + $0x40] sm:$0xff] %v651
        %v653 = vld [vmem:[%s620 + $0x48] sm:$0x11]
        %v654 = vsel %vm318, %v499, %v653
        %655 = vst [vmem:[%s620 + $0x48] sm:$0x11] %v654
        %v656 = vld [vmem:[%s620 + $0x50] sm:$0xff]
        %v657 = vsel %vm625, %v506, %v656
        %658 = vst [vmem:[%s620 + $0x50] sm:$0xff] %v657
        %v659 = vld [vmem:[%s620 + $0x58] sm:$0x11]
        %v660 = vsel %vm318, %v507, %v659
        %661 = vst [vmem:[%s620 + $0x58] sm:$0x11] %v660
        %v662 = vld [vmem:[%s620 + $0x60] sm:$0xff]
        %v663 = vsel %vm625, %v514, %v662
        %664 = vst [vmem:[%s620 + $0x60] sm:$0xff] %v663
        %v665 = vld [vmem:[%s620 + $0x68] sm:$0x11]
        %v666 = vsel %vm318, %v515, %v665
        %667 = vst [vmem:[%s620 + $0x68] sm:$0x11] %v666
        %v668 = vld [vmem:[%s620 + $0x70] sm:$0xff]
        %v669 = vsel %vm625, %v522, %v668
        %670 = vst [vmem:[%s620 + $0x70] sm:$0xff] %v669
        %v671 = vld [vmem:[%s620 + $0x78] sm:$0x11]
        %v672 = vsel %vm318, %v523, %v671
        %673 = vst [vmem:[%s620 + $0x78] sm:$0x11] %v672
        %v674 = vld [vmem:[%s620 + $0xa0] sm:$0xff]
        %v675 = vsel %vm625, %v530, %v674
        %676 = vst [vmem:[%s620 + $0xa0] sm:$0xff] %v675
        %v677 = vld [vmem:[%s620 + $0xa8] sm:$0x11]
        %v678 = vsel %vm318, %v531, %v677
        %679 = vst [vmem:[%s620 + $0xa8] sm:$0x11] %v678
        %v680 = vld [vmem:[%s620 + $0xb0] sm:$0xff]
        %v681 = vsel %vm625, %v538, %v680
        %682 = vst [vmem:[%s620 + $0xb0] sm:$0xff] %v681
        %v683 = vld [vmem:[%s620 + $0xb8] sm:$0x11]
        %v684 = vsel %vm318, %v539, %v683
        %685 = vst [vmem:[%s620 + $0xb8] sm:$0x11] %v684
        %v686 = vld [vmem:[%s620 + $0xc0] sm:$0xff]
        %v687 = vsel %vm625, %v546, %v686
        %688 = vst [vmem:[%s620 + $0xc0] sm:$0xff] %v687
        %v689 = vld [vmem:[%s620 + $0xc8] sm:$0x11]
        %v690 = vsel %vm318, %v547, %v689
        %691 = vst [vmem:[%s620 + $0xc8] sm:$0x11] %v690
        %v692 = vld [vmem:[%s620 + $0xd0] sm:$0xff]
        %v693 = vsel %vm625, %v554, %v692
        %694 = vst [vmem:[%s620 + $0xd0] sm:$0xff] %v693
        %v695 = vld [vmem:[%s620 + $0xd8] sm:$0x11]
        %v696 = vsel %vm318, %v555, %v695
        %697 = vst [vmem:[%s620 + $0xd8] sm:$0x11] %v696
        %v698 = vld [vmem:[%s620 + $0xe0] sm:$0xff]
        %v699 = vsel %vm625, %v562, %v698
        %700 = vst [vmem:[%s620 + $0xe0] sm:$0xff] %v699
        %v701 = vld [vmem:[%s620 + $0xe8] sm:$0x11]
        %v702 = vsel %vm318, %v563, %v701
        %703 = vst [vmem:[%s620 + $0xe8] sm:$0x11] %v702
        %v704 = vld [vmem:[%s620 + $0xf0] sm:$0xff]
        %v705 = vsel %vm625, %v570, %v704
        %706 = vst [vmem:[%s620 + $0xf0] sm:$0xff] %v705
        %v707 = vld [vmem:[%s620 + $0xf8] sm:$0x11]
        %v708 = vsel %vm318, %v571, %v707
        %709 = vst [vmem:[%s620 + $0xf8] sm:$0x11] %v708
        %v710 = vld [vmem:[%s620 + $0x100] sm:$0xff]
        %v711 = vsel %vm625, %v578, %v710
        %712 = vst [vmem:[%s620 + $0x100] sm:$0xff] %v711
        %v713 = vld [vmem:[%s620 + $0x108] sm:$0x11]
        %v714 = vsel %vm318, %v579, %v713
        %715 = vst [vmem:[%s620 + $0x108] sm:$0x11] %v714
        %v716 = vld [vmem:[%s620 + $0x110] sm:$0xff]
        %v717 = vsel %vm625, %v586, %v716
        %718 = vst [vmem:[%s620 + $0x110] sm:$0xff] %v717
        %v719 = vld [vmem:[%s620 + $0x118] sm:$0x11]
        %v720 = vsel %vm318, %v587, %v719
        %721 = vst [vmem:[%s620 + $0x118] sm:$0x11] %v720
        %v722 = vld [vmem:[#allocation2] sm:$0xff]
        %v723 = vld [vmem:[#allocation2 + $0x10] sm:$0xff]
        %v724 = vld [vmem:[#allocation2 + $0x20] sm:$0xff]
        %v725 = vld [vmem:[#allocation2 + $0x30] sm:$0xff]
        %v726 = vld [vmem:[#allocation2 + $0x40] sm:$0xff]
        %v727 = vld [vmem:[#allocation2 + $0x50] sm:$0xff]
        %v728 = vld [vmem:[#allocation2 + $0x60] sm:$0xff]
        %v729 = vld [vmem:[#allocation2 + $0x70] sm:$0xff]
        %v730 = vld [vmem:[#allocation2 + $0xa0] sm:$0xff]
        %v731 = vld [vmem:[#allocation2 + $0xb0] sm:$0xff]
        %v732 = vld [vmem:[#allocation2 + $0xc0] sm:$0xff]
        %v733 = vld [vmem:[#allocation2 + $0xd0] sm:$0xff]
        %v734 = vld [vmem:[#allocation2 + $0xe0] sm:$0xff]
        %v735 = vld [vmem:[#allocation2 + $0xf0] sm:$0xff]
        %v736 = vld [vmem:[#allocation2 + $0x100] sm:$0xff]
        %v737 = vld [vmem:[#allocation2 + $0x110] sm:$0xff]
        %v738 = vld [vmem:[%s1] sm:$0xff]
        %v739 = vld [vmem:[%s1 + $0x8] sm:$0xff]
        %v740 = vld [vmem:[%s1 + $0x10] sm:$0xff]
        %v741 = vld [vmem:[%s1 + $0x18] sm:$0xff]
        %v742 = vld [vmem:[%s1 + $0x20] sm:$0xff]
        %v743 = vld [vmem:[%s1 + $0x28] sm:$0xff]
        %v744 = vld [vmem:[%s1 + $0x30] sm:$0xff]
        %v745 = vld [vmem:[%s1 + $0x38] sm:$0xff]
        %v746 = vld [vmem:[%s1 + $0x40] sm:$0xff]
        %v747 = vld [vmem:[%s1 + $0x48] sm:$0xff]
        %v748 = vld [vmem:[%s1 + $0x50] sm:$0xff]
        %v749 = vld [vmem:[%s1 + $0x58] sm:$0xff]
        %v750 = vld [vmem:[%s1 + $0x60] sm:$0xff]
        %v751 = vld [vmem:[%s1 + $0x68] sm:$0xff]
        %v752 = vld [vmem:[%s1 + $0x70] sm:$0xff]
        %v753 = vld [vmem:[%s1 + $0x78] sm:$0xff]
        %v754 = vld [vmem:[%s1 + $0x80] sm:$0xff]
        %v755 = vld [vmem:[%s1 + $0x88] sm:$0xff]
        %v756 = vld [vmem:[%s1 + $0x90] sm:$0xff]
        %v757 = vld [vmem:[%s1 + $0x98] sm:$0xff]
        %v758 = vld [vmem:[%s1 + $0xa0] sm:$0xff]
        %v759 = vld [vmem:[%s1 + $0xa8] sm:$0xff]
        %v760 = vld [vmem:[%s1 + $0xb0] sm:$0xff]
        %v761 = vld [vmem:[%s1 + $0xb8] sm:$0xff]
        %v762 = vld [vmem:[%s1 + $0xc0] sm:$0xff]
        %v763 = vld [vmem:[%s1 + $0xc8] sm:$0xff]
        %v764 = vld [vmem:[%s1 + $0xd0] sm:$0xff]
        %v765 = vld [vmem:[%s1 + $0xd8] sm:$0xff]
        %v766 = vld [vmem:[%s1 + $0xe0] sm:$0xff]
        %v767 = vld [vmem:[%s1 + $0xe8] sm:$0xff]
        %v768 = vld [vmem:[%s1 + $0xf0] sm:$0xff]
        %v769 = vld [vmem:[%s1 + $0xf8] sm:$0xff]
        %v770 = vld [vmem:[#allocation2 + $0x8] sm:$0x11]
        %v771 = vld [vmem:[#allocation2 + $0x18] sm:$0x11]
        %v772 = vld [vmem:[#allocation2 + $0x28] sm:$0x11]
        %v773 = vld [vmem:[#allocation2 + $0x38] sm:$0x11]
        %v774 = vld [vmem:[#allocation2 + $0x48] sm:$0x11]
        %v775 = vld [vmem:[#allocation2 + $0x58] sm:$0x11]
        %v776 = vld [vmem:[#allocation2 + $0x68] sm:$0x11]
        %v777 = vld [vmem:[#allocation2 + $0x78] sm:$0x11]
        %v778 = vld [vmem:[#allocation2 + $0xa8] sm:$0x11]
        %v779 = vld [vmem:[#allocation2 + $0xb8] sm:$0x11]
        %v780 = vld [vmem:[#allocation2 + $0xc8] sm:$0x11]
        %v781 = vld [vmem:[#allocation2 + $0xd8] sm:$0x11]
        %v782 = vld [vmem:[#allocation2 + $0xe8] sm:$0x11]
        %v783 = vld [vmem:[#allocation2 + $0xf8] sm:$0x11]
        %v784 = vld [vmem:[#allocation2 + $0x108] sm:$0x11]
        %v785 = vld [vmem:[#allocation2 + $0x118] sm:$0x11]
        %vm786 = vsmask.f32 3328
        %vm787 = vsmask.f32 7440
        %vm788 = vmor %vm786, %vm787
        %v790 = vshrl.u32 %v722, 16
        %v792 = vrot.slane %v790, 4
        %v793 = vshll.u32 %v722, 16
        %v795 = vrot.slane %v793, 5
        %v796 = vor.u32 %v792, %v795
        %v797 = vrot.slane %v796, 4
        %v799 = vshll.u32 %v770, 16
        %v801 = vrot.slane %v799, 5
        %v802 = vsel %vm788, %v797, %v801
        %v804 = vshrl.u32 %v723, 16
        %v806 = vrot.slane %v804, 4
        %v807 = vshll.u32 %v723, 16
        %v809 = vrot.slane %v807, 5
        %v810 = vor.u32 %v806, %v809
        %v811 = vrot.slane %v810, 4
        %v813 = vshll.u32 %v771, 16
        %v815 = vrot.slane %v813, 5
        %v816 = vsel %vm788, %v811, %v815
        %v818 = vshrl.u32 %v724, 16
        %v820 = vrot.slane %v818, 4
        %v821 = vshll.u32 %v724, 16
        %v823 = vrot.slane %v821, 5
        %v824 = vor.u32 %v820, %v823
        %v825 = vrot.slane %v824, 4
        %v827 = vshll.u32 %v772, 16
        %v829 = vrot.slane %v827, 5
        %v830 = vsel %vm788, %v825, %v829
        %v832 = vshrl.u32 %v725, 16
        %v834 = vrot.slane %v832, 4
        %v835 = vshll.u32 %v725, 16
        %v837 = vrot.slane %v835, 5
        %v838 = vor.u32 %v834, %v837
        %v839 = vrot.slane %v838, 4
        %v841 = vshll.u32 %v773, 16
        %v843 = vrot.slane %v841, 5
        %v844 = vsel %vm788, %v839, %v843
        %v846 = vshrl.u32 %v726, 16
        %v848 = vrot.slane %v846, 4
        %v849 = vshll.u32 %v726, 16
        %v851 = vrot.slane %v849, 5
        %v852 = vor.u32 %v848, %v851
        %v853 = vrot.slane %v852, 4
        %v855 = vshll.u32 %v774, 16
        %v857 = vrot.slane %v855, 5
        %v858 = vsel %vm788, %v853, %v857
        %v860 = vshrl.u32 %v727, 16
        %v862 = vrot.slane %v860, 4
        %v863 = vshll.u32 %v727, 16
        %v865 = vrot.slane %v863, 5
        %v866 = vor.u32 %v862, %v865
        %v867 = vrot.slane %v866, 4
        %v869 = vshll.u32 %v775, 16
        %v871 = vrot.slane %v869, 5
        %v872 = vsel %vm788, %v867, %v871
        %v874 = vshrl.u32 %v728, 16
        %v876 = vrot.slane %v874, 4
        %v877 = vshll.u32 %v728, 16
        %v879 = vrot.slane %v877, 5
        %v880 = vor.u32 %v876, %v879
        %v881 = vrot.slane %v880, 4
        %v883 = vshll.u32 %v776, 16
        %v885 = vrot.slane %v883, 5
        %v886 = vsel %vm788, %v881, %v885
        %v888 = vshrl.u32 %v729, 16
        %v890 = vrot.slane %v888, 4
        %v891 = vshll.u32 %v729, 16
        %v893 = vrot.slane %v891, 5
        %v894 = vor.u32 %v890, %v893
        %v895 = vrot.slane %v894, 4
        %v897 = vshll.u32 %v777, 16
        %v899 = vrot.slane %v897, 5
        %v900 = vsel %vm788, %v895, %v899
        %v902 = vshrl.u32 %v730, 16
        %v904 = vrot.slane %v902, 4
        %v905 = vshll.u32 %v730, 16
        %v907 = vrot.slane %v905, 5
        %v908 = vor.u32 %v904, %v907
        %v909 = vrot.slane %v908, 4
        %v911 = vshll.u32 %v778, 16
        %v913 = vrot.slane %v911, 5
        %v914 = vsel %vm788, %v909, %v913
        %v916 = vshrl.u32 %v731, 16
        %v918 = vrot.slane %v916, 4
        %v919 = vshll.u32 %v731, 16
        %v921 = vrot.slane %v919, 5
        %v922 = vor.u32 %v918, %v921
        %v923 = vrot.slane %v922, 4
        %v925 = vshll.u32 %v779, 16
        %v927 = vrot.slane %v925, 5
        %v928 = vsel %vm788, %v923, %v927
        %v930 = vshrl.u32 %v732, 16
        %v932 = vrot.slane %v930, 4
        %v933 = vshll.u32 %v732, 16
        %v935 = vrot.slane %v933, 5
        %v936 = vor.u32 %v932, %v935
        %v937 = vrot.slane %v936, 4
        %v939 = vshll.u32 %v780, 16
        %v941 = vrot.slane %v939, 5
        %v942 = vsel %vm788, %v937, %v941
        %v944 = vshrl.u32 %v733, 16
        %v946 = vrot.slane %v944, 4
        %v947 = vshll.u32 %v733, 16
        %v949 = vrot.slane %v947, 5
        %v950 = vor.u32 %v946, %v949
        %v951 = vrot.slane %v950, 4
        %v953 = vshll.u32 %v781, 16
        %v955 = vrot.slane %v953, 5
        %v956 = vsel %vm788, %v951, %v955
        %v958 = vshrl.u32 %v734, 16
        %v960 = vrot.slane %v958, 4
        %v961 = vshll.u32 %v734, 16
        %v963 = vrot.slane %v961, 5
        %v964 = vor.u32 %v960, %v963
        %v965 = vrot.slane %v964, 4
        %v967 = vshll.u32 %v782, 16
        %v969 = vrot.slane %v967, 5
        %v970 = vsel %vm788, %v965, %v969
        %v972 = vshrl.u32 %v735, 16
        %v974 = vrot.slane %v972, 4
        %v975 = vshll.u32 %v735, 16
        %v977 = vrot.slane %v975, 5
        %v978 = vor.u32 %v974, %v977
        %v979 = vrot.slane %v978, 4
        %v981 = vshll.u32 %v783, 16
        %v983 = vrot.slane %v981, 5
        %v984 = vsel %vm788, %v979, %v983
        %v986 = vshrl.u32 %v736, 16
        %v988 = vrot.slane %v986, 4
        %v989 = vshll.u32 %v736, 16
        %v991 = vrot.slane %v989, 5
        %v992 = vor.u32 %v988, %v991
        %v993 = vrot.slane %v992, 4
        %v995 = vshll.u32 %v784, 16
        %v997 = vrot.slane %v995, 5
        %v998 = vsel %vm788, %v993, %v997
        %v1000 = vshrl.u32 %v737, 16
        %v1002 = vrot.slane %v1000, 4
        %v1003 = vshll.u32 %v737, 16
        %v1005 = vrot.slane %v1003, 5
        %v1006 = vor.u32 %v1002, %v1005
        %v1007 = vrot.slane %v1006, 4
        %v1009 = vshll.u32 %v785, 16
        %v1011 = vrot.slane %v1009, 5
        %v1012 = vsel %vm788, %v1007, %v1011
        %s1013 = scalar_lea.vmem %s1, 256
        %v1014 = vld [vmem:[%s1013] sm:$0xff]
        %v1015 = vld [vmem:[%s1013 + $0x8] sm:$0xff]
        %v1016 = vld [vmem:[%s1013 + $0x10] sm:$0xff]
        %v1017 = vld [vmem:[%s1013 + $0x18] sm:$0xff]
        %v1018 = vld [vmem:[%s1013 + $0x20] sm:$0xff]
        %v1019 = vld [vmem:[%s1013 + $0x28] sm:$0xff]
        %v1020 = vld [vmem:[%s1013 + $0x30] sm:$0xff]
        %v1021 = vld [vmem:[%s1013 + $0x38] sm:$0xff]
        %v1022 = vld [vmem:[%s1013 + $0x40] sm:$0xff]
        %v1023 = vld [vmem:[%s1013 + $0x48] sm:$0xff]
        %v1024 = vld [vmem:[%s1013 + $0x50] sm:$0xff]
        %v1025 = vld [vmem:[%s1013 + $0x58] sm:$0xff]
        %v1026 = vld [vmem:[%s1013 + $0x60] sm:$0xff]
        %v1027 = vld [vmem:[%s1013 + $0x68] sm:$0xff]
        %v1028 = vld [vmem:[%s1013 + $0x70] sm:$0xff]
        %v1029 = vld [vmem:[%s1013 + $0x78] sm:$0xff]
        %v1030 = vld [vmem:[%s1013 + $0x80] sm:$0xff]
        %v1031 = vld [vmem:[%s1013 + $0x88] sm:$0xff]
        %v1032 = vld [vmem:[%s1013 + $0x90] sm:$0xff]
        %v1033 = vld [vmem:[%s1013 + $0x98] sm:$0xff]
        %v1034 = vld [vmem:[%s1013 + $0xa0] sm:$0xff]
        %v1035 = vld [vmem:[%s1013 + $0xa8] sm:$0xff]
        %v1036 = vld [vmem:[%s1013 + $0xb0] sm:$0xff]
        %v1037 = vld [vmem:[%s1013 + $0xb8] sm:$0xff]
        %v1038 = vld [vmem:[%s1013 + $0xc0] sm:$0xff]
        %v1039 = vld [vmem:[%s1013 + $0xc8] sm:$0xff]
        %v1040 = vld [vmem:[%s1013 + $0xd0] sm:$0xff]
        %v1041 = vld [vmem:[%s1013 + $0xd8] sm:$0xff]
        %v1042 = vld [vmem:[%s1013 + $0xe0] sm:$0xff]
        %v1043 = vld [vmem:[%s1013 + $0xe8] sm:$0xff]
        %v1044 = vld [vmem:[%s1013 + $0xf0] sm:$0xff]
        %v1045 = vld [vmem:[%s1013 + $0xf8] sm:$0xff]
        %v1046 = vunpack.c.l.b16 %v802
        %v1047 = vunpack.c.h.b16 %v802
        %v1048 = vunpack.c.l.b16 %v816
        %v1049 = vunpack.c.h.b16 %v816
        %v1050 = vunpack.c.l.b16 %v830
        %v1051 = vunpack.c.h.b16 %v830
        %v1052 = vunpack.c.l.b16 %v844
        %v1053 = vunpack.c.h.b16 %v844
        %v1054 = vunpack.c.l.b16 %v858
        %v1055 = vunpack.c.h.b16 %v858
        %v1056 = vunpack.c.l.b16 %v872
        %v1057 = vunpack.c.h.b16 %v872
        %v1058 = vunpack.c.l.b16 %v886
        %v1059 = vunpack.c.h.b16 %v886
        %v1060 = vunpack.c.l.b16 %v900
        %v1061 = vunpack.c.h.b16 %v900
        %v1062 = vunpack.c.l.b16 %v914
        %v1063 = vunpack.c.h.b16 %v914
        %v1064 = vunpack.c.l.b16 %v928
        %v1065 = vunpack.c.h.b16 %v928
        %v1066 = vunpack.c.l.b16 %v942
        %v1067 = vunpack.c.h.b16 %v942
        %v1068 = vunpack.c.l.b16 %v956
        %v1069 = vunpack.c.h.b16 %v956
        %v1070 = vunpack.c.l.b16 %v970
        %v1071 = vunpack.c.h.b16 %v970
        %v1072 = vunpack.c.l.b16 %v984
        %v1073 = vunpack.c.h.b16 %v984
        %v1074 = vunpack.c.l.b16 %v998
        %v1075 = vunpack.c.h.b16 %v998
        %v1076 = vunpack.c.l.b16 %v1012
        %v1077 = vunpack.c.h.b16 %v1012
        %v1078 = vpack.c.b16 %v1048, %v1046
        %v1079 = vpack.c.b16 %v1049, %v1047
        %v1080 = vpack.c.b16 %v1052, %v1050
        %v1081 = vpack.c.b16 %v1053, %v1051
        %v1082 = vpack.c.b16 %v1056, %v1054
        %v1083 = vpack.c.b16 %v1057, %v1055
        %v1084 = vpack.c.b16 %v1060, %v1058
        %v1085 = vpack.c.b16 %v1061, %v1059
        %v1086 = vpack.c.b16 %v1064, %v1062
        %v1087 = vpack.c.b16 %v1065, %v1063
        %v1088 = vpack.c.b16 %v1068, %v1066
        %v1089 = vpack.c.b16 %v1069, %v1067
        %v1090 = vpack.c.b16 %v1072, %v1070
        %v1091 = vpack.c.b16 %v1073, %v1071
        %v1092 = vpack.c.b16 %v1076, %v1074
        %v1093 = vpack.c.b16 %v1077, %v1075
        %v1142 = vunpack.c.l.b16 %v1014
        %v1143 = vunpack.c.h.b16 %v1014
        %v1144 = vunpack.c.l.b16 %v1015
        %v1145 = vunpack.c.h.b16 %v1015
        %v1146 = vunpack.c.l.b16 %v1016
        %v1147 = vunpack.c.h.b16 %v1016
        %v1148 = vunpack.c.l.b16 %v1017
        %v1149 = vunpack.c.h.b16 %v1017
        %v1150 = vunpack.c.l.b16 %v1018
        %v1151 = vunpack.c.h.b16 %v1018
        %v1152 = vunpack.c.l.b16 %v1019
        %v1153 = vunpack.c.h.b16 %v1019
        %v1154 = vunpack.c.l.b16 %v1020
        %v1155 = vunpack.c.h.b16 %v1020
        %v1156 = vunpack.c.l.b16 %v1021
        %v1157 = vunpack.c.h.b16 %v1021
        %v1158 = vunpack.c.l.b16 %v1022
        %v1159 = vunpack.c.h.b16 %v1022
        %v1160 = vunpack.c.l.b16 %v1023
        %v1161 = vunpack.c.h.b16 %v1023
        %v1162 = vunpack.c.l.b16 %v1024
        %v1163 = vunpack.c.h.b16 %v1024
        %v1164 = vunpack.c.l.b16 %v1025
        %v1165 = vunpack.c.h.b16 %v1025
        %v1166 = vunpack.c.l.b16 %v1026
        %v1167 = vunpack.c.h.b16 %v1026
        %v1168 = vunpack.c.l.b16 %v1027
        %v1169 = vunpack.c.h.b16 %v1027
        %v1170 = vunpack.c.l.b16 %v1028
        %v1171 = vunpack.c.h.b16 %v1028
        %v1172 = vunpack.c.l.b16 %v1029
        %v1173 = vunpack.c.h.b16 %v1029
        %v1174 = vunpack.c.l.b16 %v1030
        %v1175 = vunpack.c.h.b16 %v1030
        %v1176 = vunpack.c.l.b16 %v1031
        %v1177 = vunpack.c.h.b16 %v1031
        %v1178 = vunpack.c.l.b16 %v1032
        %v1179 = vunpack.c.h.b16 %v1032
        %v1180 = vunpack.c.l.b16 %v1033
        %v1181 = vunpack.c.h.b16 %v1033
        %v1182 = vunpack.c.l.b16 %v1034
        %v1183 = vunpack.c.h.b16 %v1034
        %v1184 = vunpack.c.l.b16 %v1035
        %v1185 = vunpack.c.h.b16 %v1035
        %v1186 = vunpack.c.l.b16 %v1036
        %v1187 = vunpack.c.h.b16 %v1036
        %v1188 = vunpack.c.l.b16 %v1037
        %v1189 = vunpack.c.h.b16 %v1037
        %v1190 = vunpack.c.l.b16 %v1038
        %v1191 = vunpack.c.h.b16 %v1038
        %v1192 = vunpack.c.l.b16 %v1039
        %v1193 = vunpack.c.h.b16 %v1039
        %v1194 = vunpack.c.l.b16 %v1040
        %v1195 = vunpack.c.h.b16 %v1040
        %v1196 = vunpack.c.l.b16 %v1041
        %v1197 = vunpack.c.h.b16 %v1041
        %v1198 = vunpack.c.l.b16 %v1042
        %v1199 = vunpack.c.h.b16 %v1042
        %v1200 = vunpack.c.l.b16 %v1043
        %v1201 = vunpack.c.h.b16 %v1043
        %v1202 = vunpack.c.l.b16 %v1044
        %v1203 = vunpack.c.h.b16 %v1044
        %v1204 = vunpack.c.l.b16 %v1045
        %v1205 = vunpack.c.h.b16 %v1045
        %v1206 = vpack.c.b16 %v1144, %v1142
        %v1207 = vpack.c.b16 %v1145, %v1143
        %v1208 = vpack.c.b16 %v1148, %v1146
        %v1209 = vpack.c.b16 %v1149, %v1147
        %v1210 = vpack.c.b16 %v1152, %v1150
        %v1211 = vpack.c.b16 %v1153, %v1151
        %v1212 = vpack.c.b16 %v1156, %v1154
        %v1213 = vpack.c.b16 %v1157, %v1155
        %v1214 = vpack.c.b16 %v1160, %v1158
        %v1215 = vpack.c.b16 %v1161, %v1159
        %v1216 = vpack.c.b16 %v1164, %v1162
        %v1217 = vpack.c.b16 %v1165, %v1163
        %v1218 = vpack.c.b16 %v1168, %v1166
        %v1219 = vpack.c.b16 %v1169, %v1167
        %v1220 = vpack.c.b16 %v1172, %v1170
        %v1221 = vpack.c.b16 %v1173, %v1171
        %v1222 = vpack.c.b16 %v1176, %v1174
        %v1223 = vpack.c.b16 %v1177, %v1175
        %v1224 = vpack.c.b16 %v1180, %v1178
        %v1225 = vpack.c.b16 %v1181, %v1179
        %v1226 = vpack.c.b16 %v1184, %v1182
        %v1227 = vpack.c.b16 %v1185, %v1183
        %v1228 = vpack.c.b16 %v1188, %v1186
        %v1229 = vpack.c.b16 %v1189, %v1187
        %v1230 = vpack.c.b16 %v1192, %v1190
        %v1231 = vpack.c.b16 %v1193, %v1191
        %v1232 = vpack.c.b16 %v1196, %v1194
        %v1233 = vpack.c.b16 %v1197, %v1195
        %v1234 = vpack.c.b16 %v1200, %v1198
        %v1235 = vpack.c.b16 %v1201, %v1199
        %v1236 = vpack.c.b16 %v1204, %v1202
        %v1237 = vpack.c.b16 %v1205, %v1203
        %1270 = vmatprep.subr.bf16.mxu0 %v1207
        %1271 = vmatpush1.bf16.msra.mxu0 %v1206
        %1272 = vmatprep.subr.bf16.mxu0 %v1209
        %1273 = vmatpush1.bf16.msra.mxu0 %v1208
        %1274 = vmatprep.subr.bf16.mxu0 %v1211
        %1275 = vmatpush1.bf16.msra.mxu0 %v1210
        %1276 = vmatprep.subr.bf16.mxu0 %v1213
        %1277 = vmatpush1.bf16.msra.mxu0 %v1212
        %1278 = vmatprep.subr.bf16.mxu0 %v1215
        %1279 = vmatpush1.bf16.msra.mxu0 %v1214
        %1280 = vmatprep.subr.bf16.mxu0 %v1217
        %1281 = vmatpush1.bf16.msra.mxu0 %v1216
        %1282 = vmatprep.subr.bf16.mxu0 %v1219
        %1283 = vmatpush1.bf16.msra.mxu0 %v1218
        %1284 = vmatprep.subr.bf16.mxu0 %v1221
        %1285 = vmatpush1.bf16.msra.mxu0 %v1220
        %1286 = vmatprep.subr.bf16.mxu0 %v1223
        %1287 = vmatpush1.bf16.msra.mxu0 %v1222
        %1288 = vmatprep.subr.bf16.mxu0 %v1225
        %1289 = vmatpush1.bf16.msra.mxu0 %v1224
        %1290 = vmatprep.subr.bf16.mxu0 %v1227
        %1291 = vmatpush1.bf16.msra.mxu0 %v1226
        %1292 = vmatprep.subr.bf16.mxu0 %v1229
        %1293 = vmatpush1.bf16.msra.mxu0 %v1228
        %1294 = vmatprep.subr.bf16.mxu0 %v1231
        %1295 = vmatpush1.bf16.msra.mxu0 %v1230
        %1296 = vmatprep.subr.bf16.mxu0 %v1233
        %1297 = vmatpush1.bf16.msra.mxu0 %v1232
        %1298 = vmatprep.subr.bf16.mxu0 %v1235
        %1299 = vmatpush1.bf16.msra.mxu0 %v1234
        %1300 = vmatprep.subr.bf16.mxu0 %v1237
        %1301 = vmatpush1.bf16.msra.mxu0 %v1236
        %1302 = vmatprep.mubr.bf16.mxu0 %v1079
        %1303 = vmatmul.mubr.bf16.gmra.mrb[0].mxu0 %v1078
        %v1304 = vpop.f32.mrb[0].mxu0
        %v1305 = vadd.f32 0.0, %v1304
        %v1306 = vpop.f32.mrb[0].mxu0
        %v1307 = vadd.f32 0.0, %v1306
        %v1308 = vpop.f32.mrb[0].mxu0
        %v1309 = vadd.f32 0.0, %v1308
        %v1310 = vpop.f32.mrb[0].mxu0
        %v1311 = vadd.f32 0.0, %v1310
        %1312 = vmatprep.mubr.bf16.mxu0 %v1081
        %1313 = vmatmul.mubr.bf16.gmra.mrb[0].mxu0 %v1080
        %v1314 = vpop.f32.mrb[0].mxu0
        %v1315 = vadd.f32 0.0, %v1314
        %v1316 = vpop.f32.mrb[0].mxu0
        %v1317 = vadd.f32 0.0, %v1316
        %v1318 = vpop.f32.mrb[0].mxu0
        %v1319 = vadd.f32 0.0, %v1318
        %v1320 = vpop.f32.mrb[0].mxu0
        %v1321 = vadd.f32 0.0, %v1320
        %1322 = vmatprep.mubr.bf16.mxu0 %v1083
        %1323 = vmatmul.mubr.bf16.gmra.mrb[0].mxu0 %v1082
        %v1324 = vpop.f32.mrb[0].mxu0
        %v1325 = vadd.f32 0.0, %v1324
        %v1326 = vpop.f32.mrb[0].mxu0
        %v1327 = vadd.f32 0.0, %v1326
        %v1328 = vpop.f32.mrb[0].mxu0
        %v1329 = vadd.f32 0.0, %v1328
        %v1330 = vpop.f32.mrb[0].mxu0
        %v1331 = vadd.f32 0.0, %v1330
        %1332 = vmatprep.mubr.bf16.mxu0 %v1085
        %1333 = vmatmul.mubr.bf16.gmra.mrb[0].mxu0 %v1084
        %v1334 = vpop.f32.mrb[0].mxu0
        %v1335 = vadd.f32 0.0, %v1334
        %v1336 = vpop.f32.mrb[0].mxu0
        %v1337 = vadd.f32 0.0, %v1336
        %v1338 = vpop.f32.mrb[0].mxu0
        %v1339 = vadd.f32 0.0, %v1338
        %v1340 = vpop.f32.mrb[0].mxu0
        %v1341 = vadd.f32 0.0, %v1340
        %1342 = vmatprep.mubr.bf16.mxu0 %v1087
        %1343 = vmatmul.mubr.bf16.gmra.mrb[0].mxu0 %v1086
        %v1344 = vpop.f32.mrb[0].mxu0
        %v1345 = vadd.f32 0.0, %v1344
        %v1346 = vpop.f32.mrb[0].mxu0
        %v1347 = vadd.f32 0.0, %v1346
        %v1348 = vpop.f32.mrb[0].mxu0
        %v1349 = vadd.f32 0.0, %v1348
        %v1350 = vpop.f32.mrb[0].mxu0
        %v1351 = vadd.f32 0.0, %v1350
        %1352 = vmatprep.mubr.bf16.mxu0 %v1089
        %1353 = vmatmul.mubr.bf16.gmra.mrb[0].mxu0 %v1088
        %v1354 = vpop.f32.mrb[0].mxu0
        %v1355 = vadd.f32 0.0, %v1354
        %v1356 = vpop.f32.mrb[0].mxu0
        %v1357 = vadd.f32 0.0, %v1356
        %v1358 = vpop.f32.mrb[0].mxu0
        %v1359 = vadd.f32 0.0, %v1358
        %v1360 = vpop.f32.mrb[0].mxu0
        %v1361 = vadd.f32 0.0, %v1360
        %1362 = vmatprep.mubr.bf16.mxu0 %v1091
        %1363 = vmatmul.mubr.bf16.gmra.mrb[0].mxu0 %v1090
        %v1364 = vpop.f32.mrb[0].mxu0
        %v1365 = vadd.f32 0.0, %v1364
        %v1366 = vpop.f32.mrb[0].mxu0
        %v1367 = vadd.f32 0.0, %v1366
        %v1368 = vpop.f32.mrb[0].mxu0
        %v1369 = vadd.f32 0.0, %v1368
        %v1370 = vpop.f32.mrb[0].mxu0
        %v1371 = vadd.f32 0.0, %v1370
        %1372 = vmatprep.mubr.bf16.mxu0 %v1093
        %1373 = vmatmul.mubr.bf16.gmra.mrb[0].mxu0 %v1092
        %v1374 = vpop.f32.mrb[0].mxu0
        %v1375 = vadd.f32 0.0, %v1374
        %v1376 = vpop.f32.mrb[0].mxu0
        %v1377 = vadd.f32 0.0, %v1376
        %v1378 = vpop.f32.mrb[0].mxu0
        %v1379 = vadd.f32 0.0, %v1378
        %v1380 = vpop.f32.mrb[0].mxu0
        %v1381 = vadd.f32 0.0, %v1380
        %1382 = vdwg.mxu0
        %v1399 = vunpack.c.l.b16 %v722
        %v1400 = vunpack.c.h.b16 %v722
        %v1401 = vunpack.c.l.b16 %v723
        %v1402 = vunpack.c.h.b16 %v723
        %v1403 = vunpack.c.l.b16 %v724
        %v1404 = vunpack.c.h.b16 %v724
        %v1405 = vunpack.c.l.b16 %v725
        %v1406 = vunpack.c.h.b16 %v725
        %v1407 = vunpack.c.l.b16 %v726
        %v1408 = vunpack.c.h.b16 %v726
        %v1409 = vunpack.c.l.b16 %v727
        %v1410 = vunpack.c.h.b16 %v727
        %v1411 = vunpack.c.l.b16 %v728
        %v1412 = vunpack.c.h.b16 %v728
        %v1413 = vunpack.c.l.b16 %v729
        %v1414 = vunpack.c.h.b16 %v729
        %v1415 = vunpack.c.l.b16 %v730
        %v1416 = vunpack.c.h.b16 %v730
        %v1417 = vunpack.c.l.b16 %v731
        %v1418 = vunpack.c.h.b16 %v731
        %v1419 = vunpack.c.l.b16 %v732
        %v1420 = vunpack.c.h.b16 %v732
        %v1421 = vunpack.c.l.b16 %v733
        %v1422 = vunpack.c.h.b16 %v733
        %v1423 = vunpack.c.l.b16 %v734
        %v1424 = vunpack.c.h.b16 %v734
        %v1425 = vunpack.c.l.b16 %v735
        %v1426 = vunpack.c.h.b16 %v735
        %v1427 = vunpack.c.l.b16 %v736
        %v1428 = vunpack.c.h.b16 %v736
        %v1429 = vunpack.c.l.b16 %v737
        %v1430 = vunpack.c.h.b16 %v737
        %v1431 = vpack.c.b16 %v1401, %v1399
        %v1432 = vpack.c.b16 %v1402, %v1400
        %v1433 = vpack.c.b16 %v1405, %v1403
        %v1434 = vpack.c.b16 %v1406, %v1404
        %v1435 = vpack.c.b16 %v1409, %v1407
        %v1436 = vpack.c.b16 %v1410, %v1408
        %v1437 = vpack.c.b16 %v1413, %v1411
        %v1438 = vpack.c.b16 %v1414, %v1412
        %v1439 = vpack.c.b16 %v1417, %v1415
        %v1440 = vpack.c.b16 %v1418, %v1416
        %v1441 = vpack.c.b16 %v1421, %v1419
        %v1442 = vpack.c.b16 %v1422, %v1420
        %v1443 = vpack.c.b16 %v1425, %v1423
        %v1444 = vpack.c.b16 %v1426, %v1424
        %v1445 = vpack.c.b16 %v1429, %v1427
        %v1446 = vpack.c.b16 %v1430, %v1428
        %v1495 = vunpack.c.l.b16 %v738
        %v1496 = vunpack.c.h.b16 %v738
        %v1497 = vunpack.c.l.b16 %v739
        %v1498 = vunpack.c.h.b16 %v739
        %v1499 = vunpack.c.l.b16 %v740
        %v1500 = vunpack.c.h.b16 %v740
        %v1501 = vunpack.c.l.b16 %v741
        %v1502 = vunpack.c.h.b16 %v741
        %v1503 = vunpack.c.l.b16 %v742
        %v1504 = vunpack.c.h.b16 %v742
        %v1505 = vunpack.c.l.b16 %v743
        %v1506 = vunpack.c.h.b16 %v743
        %v1507 = vunpack.c.l.b16 %v744
        %v1508 = vunpack.c.h.b16 %v744
        %v1509 = vunpack.c.l.b16 %v745
        %v1510 = vunpack.c.h.b16 %v745
        %v1511 = vunpack.c.l.b16 %v746
        %v1512 = vunpack.c.h.b16 %v746
        %v1513 = vunpack.c.l.b16 %v747
        %v1514 = vunpack.c.h.b16 %v747
        %v1515 = vunpack.c.l.b16 %v748
        %v1516 = vunpack.c.h.b16 %v748
        %v1517 = vunpack.c.l.b16 %v749
        %v1518 = vunpack.c.h.b16 %v749
        %v1519 = vunpack.c.l.b16 %v750
        %v1520 = vunpack.c.h.b16 %v750
        %v1521 = vunpack.c.l.b16 %v751
        %v1522 = vunpack.c.h.b16 %v751
        %v1523 = vunpack.c.l.b16 %v752
        %v1524 = vunpack.c.h.b16 %v752
        %v1525 = vunpack.c.l.b16 %v753
        %v1526 = vunpack.c.h.b16 %v753
        %v1527 = vunpack.c.l.b16 %v754
        %v1528 = vunpack.c.h.b16 %v754
        %v1529 = vunpack.c.l.b16 %v755
        %v1530 = vunpack.c.h.b16 %v755
        %v1531 = vunpack.c.l.b16 %v756
        %v1532 = vunpack.c.h.b16 %v756
        %v1533 = vunpack.c.l.b16 %v757
        %v1534 = vunpack.c.h.b16 %v757
        %v1535 = vunpack.c.l.b16 %v758
        %v1536 = vunpack.c.h.b16 %v758
        %v1537 = vunpack.c.l.b16 %v759
        %v1538 = vunpack.c.h.b16 %v759
        %v1539 = vunpack.c.l.b16 %v760
        %v1540 = vunpack.c.h.b16 %v760
        %v1541 = vunpack.c.l.b16 %v761
        %v1542 = vunpack.c.h.b16 %v761
        %v1543 = vunpack.c.l.b16 %v762
        %v1544 = vunpack.c.h.b16 %v762
        %v1545 = vunpack.c.l.b16 %v763
        %v1546 = vunpack.c.h.b16 %v763
        %v1547 = vunpack.c.l.b16 %v764
        %v1548 = vunpack.c.h.b16 %v764
        %v1549 = vunpack.c.l.b16 %v765
        %v1550 = vunpack.c.h.b16 %v765
        %v1551 = vunpack.c.l.b16 %v766
        %v1552 = vunpack.c.h.b16 %v766
        %v1553 = vunpack.c.l.b16 %v767
        %v1554 = vunpack.c.h.b16 %v767
        %v1555 = vunpack.c.l.b16 %v768
        %v1556 = vunpack.c.h.b16 %v768
        %v1557 = vunpack.c.l.b16 %v769
        %v1558 = vunpack.c.h.b16 %v769
        %v1559 = vpack.c.b16 %v1497, %v1495
        %v1560 = vpack.c.b16 %v1498, %v1496
        %v1561 = vpack.c.b16 %v1501, %v1499
        %v1562 = vpack.c.b16 %v1502, %v1500
        %v1563 = vpack.c.b16 %v1505, %v1503
        %v1564 = vpack.c.b16 %v1506, %v1504
        %v1565 = vpack.c.b16 %v1509, %v1507
        %v1566 = vpack.c.b16 %v1510, %v1508
        %v1567 = vpack.c.b16 %v1513, %v1511
        %v1568 = vpack.c.b16 %v1514, %v1512
        %v1569 = vpack.c.b16 %v1517, %v1515
        %v1570 = vpack.c.b16 %v1518, %v1516
        %v1571 = vpack.c.b16 %v1521, %v1519
        %v1572 = vpack.c.b16 %v1522, %v1520
        %v1573 = vpack.c.b16 %v1525, %v1523
        %v1574 = vpack.c.b16 %v1526, %v1524
        %v1575 = vpack.c.b16 %v1529, %v1527
        %v1576 = vpack.c.b16 %v1530, %v1528
        %v1577 = vpack.c.b16 %v1533, %v1531
        %v1578 = vpack.c.b16 %v1534, %v1532
        %v1579 = vpack.c.b16 %v1537, %v1535
        %v1580 = vpack.c.b16 %v1538, %v1536
        %v1581 = vpack.c.b16 %v1541, %v1539
        %v1582 = vpack.c.b16 %v1542, %v1540
        %v1583 = vpack.c.b16 %v1545, %v1543
        %v1584 = vpack.c.b16 %v1546, %v1544
        %v1585 = vpack.c.b16 %v1549, %v1547
        %v1586 = vpack.c.b16 %v1550, %v1548
        %v1587 = vpack.c.b16 %v1553, %v1551
        %v1588 = vpack.c.b16 %v1554, %v1552
        %v1589 = vpack.c.b16 %v1557, %v1555
        %v1590 = vpack.c.b16 %v1558, %v1556
        %1623 = vmatprep.subr.bf16.mxu0 %v1560
        %1624 = vmatpush1.bf16.msra.mxu0 %v1559
        %1625 = vmatprep.subr.bf16.mxu0 %v1562
        %1626 = vmatpush1.bf16.msra.mxu0 %v1561
        %1627 = vmatprep.subr.bf16.mxu0 %v1564
        %1628 = vmatpush1.bf16.msra.mxu0 %v1563
        %1629 = vmatprep.subr.bf16.mxu0 %v1566
        %1630 = vmatpush1.bf16.msra.mxu0 %v1565
        %1631 = vmatprep.subr.bf16.mxu0 %v1568
        %1632 = vmatpush1.bf16.msra.mxu0 %v1567
        %1633 = vmatprep.subr.bf16.mxu0 %v1570
        %1634 = vmatpush1.bf16.msra.mxu0 %v1569
        %1635 = vmatprep.subr.bf16.mxu0 %v1572
        %1636 = vmatpush1.bf16.msra.mxu0 %v1571
        %1637 = vmatprep.subr.bf16.mxu0 %v1574
        %1638 = vmatpush1.bf16.msra.mxu0 %v1573
        %1639 = vmatprep.subr.bf16.mxu0 %v1576
        %1640 = vmatpush1.bf16.msra.mxu0 %v1575
        %1641 = vmatprep.subr.bf16.mxu0 %v1578
        %1642 = vmatpush1.bf16.msra.mxu0 %v1577
        %1643 = vmatprep.subr.bf16.mxu0 %v1580
        %1644 = vmatpush1.bf16.msra.mxu0 %v1579
        %1645 = vmatprep.subr.bf16.mxu0 %v1582
        %1646 = vmatpush1.bf16.msra.mxu0 %v1581
        %1647 = vmatprep.subr.bf16.mxu0 %v1584
        %1648 = vmatpush1.bf16.msra.mxu0 %v1583
        %1649 = vmatprep.subr.bf16.mxu0 %v1586
        %1650 = vmatpush1.bf16.msra.mxu0 %v1585
        %1651 = vmatprep.subr.bf16.mxu0 %v1588
        %1652 = vmatpush1.bf16.msra.mxu0 %v1587
        %1653 = vmatprep.subr.bf16.mxu0 %v1590
        %1654 = vmatpush1.bf16.msra.mxu0 %v1589
        %1655 = vmatprep.mubr.bf16.mxu0 %v1432
        %1656 = vmatmul.mubr.bf16.gmra.mrb[0].mxu0 %v1431
        %v1657 = vpop.f32.mrb[0].mxu0
        %v1658 = vadd.f32 %v1305, %v1657
        %v1659 = vpop.f32.mrb[0].mxu0
        %v1660 = vadd.f32 %v1307, %v1659
        %v1661 = vpop.f32.mrb[0].mxu0
        %v1662 = vadd.f32 %v1309, %v1661
        %v1663 = vpop.f32.mrb[0].mxu0
        %v1664 = vadd.f32 %v1311, %v1663
        %1665 = vmatprep.mubr.bf16.mxu0 %v1434
        %1666 = vmatmul.mubr.bf16.gmra.mrb[0].mxu0 %v1433
        %v1667 = vpop.f32.mrb[0].mxu0
        %v1668 = vadd.f32 %v1315, %v1667
        %v1669 = vpop.f32.mrb[0].mxu0
        %v1670 = vadd.f32 %v1317, %v1669
        %v1671 = vpop.f32.mrb[0].mxu0
        %v1672 = vadd.f32 %v1319, %v1671
        %v1673 = vpop.f32.mrb[0].mxu0
        %v1674 = vadd.f32 %v1321, %v1673
        %1675 = vmatprep.mubr.bf16.mxu0 %v1436
        %1676 = vmatmul.mubr.bf16.gmra.mrb[0].mxu0 %v1435
        %v1677 = vpop.f32.mrb[0].mxu0
        %v1678 = vadd.f32 %v1325, %v1677
        %v1679 = vpop.f32.mrb[0].mxu0
        %v1680 = vadd.f32 %v1327, %v1679
        %v1681 = vpop.f32.mrb[0].mxu0
        %v1682 = vadd.f32 %v1329, %v1681
        %v1683 = vpop.f32.mrb[0].mxu0
        %v1684 = vadd.f32 %v1331, %v1683
        %1685 = vmatprep.mubr.bf16.mxu0 %v1438
        %1686 = vmatmul.mubr.bf16.gmra.mrb[0].mxu0 %v1437
        %v1687 = vpop.f32.mrb[0].mxu0
        %v1688 = vadd.f32 %v1335, %v1687
        %v1689 = vpop.f32.mrb[0].mxu0
        %v1690 = vadd.f32 %v1337, %v1689
        %v1691 = vpop.f32.mrb[0].mxu0
        %v1692 = vadd.f32 %v1339, %v1691
        %v1693 = vpop.f32.mrb[0].mxu0
        %v1694 = vadd.f32 %v1341, %v1693
        %1695 = vmatprep.mubr.bf16.mxu0 %v1440
        %1696 = vmatmul.mubr.bf16.gmra.mrb[0].mxu0 %v1439
        %v1697 = vpop.f32.mrb[0].mxu0
        %v1698 = vadd.f32 %v1345, %v1697
        %v1699 = vpop.f32.mrb[0].mxu0
        %v1700 = vadd.f32 %v1347, %v1699
        %v1701 = vpop.f32.mrb[0].mxu0
        %v1702 = vadd.f32 %v1349, %v1701
        %v1703 = vpop.f32.mrb[0].mxu0
        %v1704 = vadd.f32 %v1351, %v1703
        %1705 = vmatprep.mubr.bf16.mxu0 %v1442
        %1706 = vmatmul.mubr.bf16.gmra.mrb[0].mxu0 %v1441
        %v1707 = vpop.f32.mrb[0].mxu0
        %v1708 = vadd.f32 %v1355, %v1707
        %v1709 = vpop.f32.mrb[0].mxu0
        %v1710 = vadd.f32 %v1357, %v1709
        %v1711 = vpop.f32.mrb[0].mxu0
        %v1712 = vadd.f32 %v1359, %v1711
        %v1713 = vpop.f32.mrb[0].mxu0
        %v1714 = vadd.f32 %v1361, %v1713
        %1715 = vmatprep.mubr.bf16.mxu0 %v1444
        %1716 = vmatmul.mubr.bf16.gmra.mrb[0].mxu0 %v1443
        %v1717 = vpop.f32.mrb[0].mxu0
        %v1718 = vadd.f32 %v1365, %v1717
        %v1719 = vpop.f32.mrb[0].mxu0
        %v1720 = vadd.f32 %v1367, %v1719
        %v1721 = vpop.f32.mrb[0].mxu0
        %v1722 = vadd.f32 %v1369, %v1721
        %v1723 = vpop.f32.mrb[0].mxu0
        %v1724 = vadd.f32 %v1371, %v1723
        %1725 = vmatprep.mubr.bf16.mxu0 %v1446
        %1726 = vmatmul.mubr.bf16.gmra.mrb[0].mxu0 %v1445
        %v1727 = vpop.f32.mrb[0].mxu0
        %v1728 = vadd.f32 %v1375, %v1727
        %v1729 = vpop.f32.mrb[0].mxu0
        %v1730 = vadd.f32 %v1377, %v1729
        %v1731 = vpop.f32.mrb[0].mxu0
        %v1732 = vadd.f32 %v1379, %v1731
        %v1733 = vpop.f32.mrb[0].mxu0
        %v1734 = vadd.f32 %v1381, %v1733
        %1735 = vdwg.mxu0
        %v1736 = vld [vmem:[#allocation2] sm:$0xee]
        %v1737 = vld [vmem:[#allocation2 + $0x10] sm:$0xee]
        %v1738 = vld [vmem:[#allocation2 + $0x20] sm:$0xee]
        %v1739 = vld [vmem:[#allocation2 + $0x30] sm:$0xee]
        %v1740 = vld [vmem:[#allocation2 + $0x40] sm:$0xee]
        %v1741 = vld [vmem:[#allocation2 + $0x50] sm:$0xee]
        %v1742 = vld [vmem:[#allocation2 + $0x60] sm:$0xee]
        %v1743 = vld [vmem:[#allocation2 + $0x70] sm:$0xee]
        %v1744 = vld [vmem:[#allocation2 + $0xa0] sm:$0xee]
        %v1745 = vld [vmem:[#allocation2 + $0xb0] sm:$0xee]
        %v1746 = vld [vmem:[#allocation2 + $0xc0] sm:$0xee]
        %v1747 = vld [vmem:[#allocation2 + $0xd0] sm:$0xee]
        %v1748 = vld [vmem:[#allocation2 + $0xe0] sm:$0xee]
        %v1749 = vld [vmem:[#allocation2 + $0xf0] sm:$0xee]
        %v1750 = vld [vmem:[#allocation2 + $0x100] sm:$0xee]
        %v1751 = vld [vmem:[#allocation2 + $0x110] sm:$0xee]
        %vm1784 = vcmask 1042432
        %vm1785 = vcmask 1046532
        %vm1786 = vmor %vm1784, %vm1785
        %v1787 = vrot.slane %v1736, 5
        %v1788 = vrot.slane %v1787, 4
        %v1789 = vrot.slane %v770, 5
        %v1790 = vsel %vm1786, %v1788, %v1789
        %v1791 = vrot.slane %v1737, 5
        %v1792 = vrot.slane %v1791, 4
        %v1793 = vrot.slane %v771, 5
        %v1794 = vsel %vm1786, %v1792, %v1793
        %v1795 = vrot.slane %v1738, 5
        %v1796 = vrot.slane %v1795, 4
        %v1797 = vrot.slane %v772, 5
        %v1798 = vsel %vm1786, %v1796, %v1797
        %v1799 = vrot.slane %v1739, 5
        %v1800 = vrot.slane %v1799, 4
        %v1801 = vrot.slane %v773, 5
        %v1802 = vsel %vm1786, %v1800, %v1801
        %v1803 = vrot.slane %v1740, 5
        %v1804 = vrot.slane %v1803, 4
        %v1805 = vrot.slane %v774, 5
        %v1806 = vsel %vm1786, %v1804, %v1805
        %v1807 = vrot.slane %v1741, 5
        %v1808 = vrot.slane %v1807, 4
        %v1809 = vrot.slane %v775, 5
        %v1810 = vsel %vm1786, %v1808, %v1809
        %v1811 = vrot.slane %v1742, 5
        %v1812 = vrot.slane %v1811, 4
        %v1813 = vrot.slane %v776, 5
        %v1814 = vsel %vm1786, %v1812, %v1813
        %v1815 = vrot.slane %v1743, 5
        %v1816 = vrot.slane %v1815, 4
        %v1817 = vrot.slane %v777, 5
        %v1818 = vsel %vm1786, %v1816, %v1817
        %v1819 = vrot.slane %v1744, 5
        %v1820 = vrot.slane %v1819, 4
        %v1821 = vrot.slane %v778, 5
        %v1822 = vsel %vm1786, %v1820, %v1821
        %v1823 = vrot.slane %v1745, 5
        %v1824 = vrot.slane %v1823, 4
        %v1825 = vrot.slane %v779, 5
        %v1826 = vsel %vm1786, %v1824, %v1825
        %v1827 = vrot.slane %v1746, 5
        %v1828 = vrot.slane %v1827, 4
        %v1829 = vrot.slane %v780, 5
        %v1830 = vsel %vm1786, %v1828, %v1829
        %v1831 = vrot.slane %v1747, 5
        %v1832 = vrot.slane %v1831, 4
        %v1833 = vrot.slane %v781, 5
        %v1834 = vsel %vm1786, %v1832, %v1833
        %v1835 = vrot.slane %v1748, 5
        %v1836 = vrot.slane %v1835, 4
        %v1837 = vrot.slane %v782, 5
        %v1838 = vsel %vm1786, %v1836, %v1837
        %v1839 = vrot.slane %v1749, 5
        %v1840 = vrot.slane %v1839, 4
        %v1841 = vrot.slane %v783, 5
        %v1842 = vsel %vm1786, %v1840, %v1841
        %v1843 = vrot.slane %v1750, 5
        %v1844 = vrot.slane %v1843, 4
        %v1845 = vrot.slane %v784, 5
        %v1846 = vsel %vm1786, %v1844, %v1845
        %v1847 = vrot.slane %v1751, 5
        %v1848 = vrot.slane %v1847, 4
        %v1849 = vrot.slane %v785, 5
        %v1850 = vsel %vm1786, %v1848, %v1849
        %s1851 = scalar_lea.vmem %s1, 512
        %v1852 = vld [vmem:[%s1851] sm:$0xff]
        %v1853 = vld [vmem:[%s1851 + $0x8] sm:$0xff]
        %v1854 = vld [vmem:[%s1851 + $0x10] sm:$0xff]
        %v1855 = vld [vmem:[%s1851 + $0x18] sm:$0xff]
        %v1856 = vld [vmem:[%s1851 + $0x20] sm:$0xff]
        %v1857 = vld [vmem:[%s1851 + $0x28] sm:$0xff]
        %v1858 = vld [vmem:[%s1851 + $0x30] sm:$0xff]
        %v1859 = vld [vmem:[%s1851 + $0x38] sm:$0xff]
        %v1860 = vld [vmem:[%s1851 + $0x40] sm:$0xff]
        %v1861 = vld [vmem:[%s1851 + $0x48] sm:$0xff]
        %v1862 = vld [vmem:[%s1851 + $0x50] sm:$0xff]
        %v1863 = vld [vmem:[%s1851 + $0x58] sm:$0xff]
        %v1864 = vld [vmem:[%s1851 + $0x60] sm:$0xff]
        %v1865 = vld [vmem:[%s1851 + $0x68] sm:$0xff]
        %v1866 = vld [vmem:[%s1851 + $0x70] sm:$0xff]
        %v1867 = vld [vmem:[%s1851 + $0x78] sm:$0xff]
        %v1868 = vld [vmem:[%s1851 + $0x80] sm:$0xff]
        %v1869 = vld [vmem:[%s1851 + $0x88] sm:$0xff]
        %v1870 = vld [vmem:[%s1851 + $0x90] sm:$0xff]
        %v1871 = vld [vmem:[%s1851 + $0x98] sm:$0xff]
        %v1872 = vld [vmem:[%s1851 + $0xa0] sm:$0xff]
        %v1873 = vld [vmem:[%s1851 + $0xa8] sm:$0xff]
        %v1874 = vld [vmem:[%s1851 + $0xb0] sm:$0xff]
        %v1875 = vld [vmem:[%s1851 + $0xb8] sm:$0xff]
        %v1876 = vld [vmem:[%s1851 + $0xc0] sm:$0xff]
        %v1877 = vld [vmem:[%s1851 + $0xc8] sm:$0xff]
        %v1878 = vld [vmem:[%s1851 + $0xd0] sm:$0xff]
        %v1879 = vld [vmem:[%s1851 + $0xd8] sm:$0xff]
        %v1880 = vld [vmem:[%s1851 + $0xe0] sm:$0xff]
        %v1881 = vld [vmem:[%s1851 + $0xe8] sm:$0xff]
        %v1882 = vld [vmem:[%s1851 + $0xf0] sm:$0xff]
        %v1883 = vld [vmem:[%s1851 + $0xf8] sm:$0xff]
        %v1884 = vunpack.c.l.b16 %v1790
        %v1885 = vunpack.c.h.b16 %v1790
        %v1886 = vunpack.c.l.b16 %v1794
        %v1887 = vunpack.c.h.b16 %v1794
        %v1888 = vunpack.c.l.b16 %v1798
        %v1889 = vunpack.c.h.b16 %v1798
        %v1890 = vunpack.c.l.b16 %v1802
        %v1891 = vunpack.c.h.b16 %v1802
        %v1892 = vunpack.c.l.b16 %v1806
        %v1893 = vunpack.c.h.b16 %v1806
        %v1894 = vunpack.c.l.b16 %v1810
        %v1895 = vunpack.c.h.b16 %v1810
        %v1896 = vunpack.c.l.b16 %v1814
        %v1897 = vunpack.c.h.b16 %v1814
        %v1898 = vunpack.c.l.b16 %v1818
        %v1899 = vunpack.c.h.b16 %v1818
        %v1900 = vunpack.c.l.b16 %v1822
        %v1901 = vunpack.c.h.b16 %v1822
        %v1902 = vunpack.c.l.b16 %v1826
        %v1903 = vunpack.c.h.b16 %v1826
        %v1904 = vunpack.c.l.b16 %v1830
        %v1905 = vunpack.c.h.b16 %v1830
        %v1906 = vunpack.c.l.b16 %v1834
        %v1907 = vunpack.c.h.b16 %v1834
        %v1908 = vunpack.c.l.b16 %v1838
        %v1909 = vunpack.c.h.b16 %v1838
        %v1910 = vunpack.c.l.b16 %v1842
        %v1911 = vunpack.c.h.b16 %v1842
        %v1912 = vunpack.c.l.b16 %v1846
        %v1913 = vunpack.c.h.b16 %v1846
        %v1914 = vunpack.c.l.b16 %v1850
        %v1915 = vunpack.c.h.b16 %v1850
        %v1916 = vpack.c.b16 %v1886, %v1884
        %v1917 = vpack.c.b16 %v1887, %v1885
        %v1918 = vpack.c.b16 %v1890, %v1888
        %v1919 = vpack.c.b16 %v1891, %v1889
        %v1920 = vpack.c.b16 %v1894, %v1892
        %v1921 = vpack.c.b16 %v1895, %v1893
        %v1922 = vpack.c.b16 %v1898, %v1896
        %v1923 = vpack.c.b16 %v1899, %v1897
        %v1924 = vpack.c.b16 %v1902, %v1900
        %v1925 = vpack.c.b16 %v1903, %v1901
        %v1926 = vpack.c.b16 %v1906, %v1904
        %v1927 = vpack.c.b16 %v1907, %v1905
        %v1928 = vpack.c.b16 %v1910, %v1908
        %v1929 = vpack.c.b16 %v1911, %v1909
        %v1930 = vpack.c.b16 %v1914, %v1912
        %v1931 = vpack.c.b16 %v1915, %v1913
        %v1980 = vunpack.c.l.b16 %v1852
        %v1981 = vunpack.c.h.b16 %v1852
        %v1982 = vunpack.c.l.b16 %v1853
        %v1983 = vunpack.c.h.b16 %v1853
        %v1984 = vunpack.c.l.b16 %v1854
        %v1985 = vunpack.c.h.b16 %v1854
        %v1986 = vunpack.c.l.b16 %v1855
        %v1987 = vunpack.c.h.b16 %v1855
        %v1988 = vunpack.c.l.b16 %v1856
        %v1989 = vunpack.c.h.b16 %v1856
        %v1990 = vunpack.c.l.b16 %v1857
        %v1991 = vunpack.c.h.b16 %v1857
        %v1992 = vunpack.c.l.b16 %v1858
        %v1993 = vunpack.c.h.b16 %v1858
        %v1994 = vunpack.c.l.b16 %v1859
        %v1995 = vunpack.c.h.b16 %v1859
        %v1996 = vunpack.c.l.b16 %v1860
        %v1997 = vunpack.c.h.b16 %v1860
        %v1998 = vunpack.c.l.b16 %v1861
        %v1999 = vunpack.c.h.b16 %v1861
        %v2000 = vunpack.c.l.b16 %v1862
        %v2001 = vunpack.c.h.b16 %v1862
        %v2002 = vunpack.c.l.b16 %v1863
        %v2003 = vunpack.c.h.b16 %v1863
        %v2004 = vunpack.c.l.b16 %v1864
        %v2005 = vunpack.c.h.b16 %v1864
        %v2006 = vunpack.c.l.b16 %v1865
        %v2007 = vunpack.c.h.b16 %v1865
        %v2008 = vunpack.c.l.b16 %v1866
        %v2009 = vunpack.c.h.b16 %v1866
        %v2010 = vunpack.c.l.b16 %v1867
        %v2011 = vunpack.c.h.b16 %v1867
        %v2012 = vunpack.c.l.b16 %v1868
        %v2013 = vunpack.c.h.b16 %v1868
        %v2014 = vunpack.c.l.b16 %v1869
        %v2015 = vunpack.c.h.b16 %v1869
        %v2016 = vunpack.c.l.b16 %v1870
        %v2017 = vunpack.c.h.b16 %v1870
        %v2018 = vunpack.c.l.b16 %v1871
        %v2019 = vunpack.c.h.b16 %v1871
        %v2020 = vunpack.c.l.b16 %v1872
        %v2021 = vunpack.c.h.b16 %v1872
        %v2022 = vunpack.c.l.b16 %v1873
        %v2023 = vunpack.c.h.b16 %v1873
        %v2024 = vunpack.c.l.b16 %v1874
        %v2025 = vunpack.c.h.b16 %v1874
        %v2026 = vunpack.c.l.b16 %v1875
        %v2027 = vunpack.c.h.b16 %v1875
        %v2028 = vunpack.c.l.b16 %v1876
        %v2029 = vunpack.c.h.b16 %v1876
        %v2030 = vunpack.c.l.b16 %v1877
        %v2031 = vunpack.c.h.b16 %v1877
        %v2032 = vunpack.c.l.b16 %v1878
        %v2033 = vunpack.c.h.b16 %v1878
        %v2034 = vunpack.c.l.b16 %v1879
        %v2035 = vunpack.c.h.b16 %v1879
        %v2036 = vunpack.c.l.b16 %v1880
        %v2037 = vunpack.c.h.b16 %v1880
        %v2038 = vunpack.c.l.b16 %v1881
        %v2039 = vunpack.c.h.b16 %v1881
        %v2040 = vunpack.c.l.b16 %v1882
        %v2041 = vunpack.c.h.b16 %v1882
        %v2042 = vunpack.c.l.b16 %v1883
        %v2043 = vunpack.c.h.b16 %v1883
        %v2044 = vpack.c.b16 %v1982, %v1980
        %v2045 = vpack.c.b16 %v1983, %v1981
        %v2046 = vpack.c.b16 %v1986, %v1984
        %v2047 = vpack.c.b16 %v1987, %v1985
        %v2048 = vpack.c.b16 %v1990, %v1988
        %v2049 = vpack.c.b16 %v1991, %v1989
        %v2050 = vpack.c.b16 %v1994, %v1992
        %v2051 = vpack.c.b16 %v1995, %v1993
        %v2052 = vpack.c.b16 %v1998, %v1996
        %v2053 = vpack.c.b16 %v1999, %v1997
        %v2054 = vpack.c.b16 %v2002, %v2000
        %v2055 = vpack.c.b16 %v2003, %v2001
        %v2056 = vpack.c.b16 %v2006, %v2004
        %v2057 = vpack.c.b16 %v2007, %v2005
        %v2058 = vpack.c.b16 %v2010, %v2008
        %v2059 = vpack.c.b16 %v2011, %v2009
        %v2060 = vpack.c.b16 %v2014, %v2012
        %v2061 = vpack.c.b16 %v2015, %v2013
        %v2062 = vpack.c.b16 %v2018, %v2016
        %v2063 = vpack.c.b16 %v2019, %v2017
        %v2064 = vpack.c.b16 %v2022, %v2020
        %v2065 = vpack.c.b16 %v2023, %v2021
        %v2066 = vpack.c.b16 %v2026, %v2024
        %v2067 = vpack.c.b16 %v2027, %v2025
        %v2068 = vpack.c.b16 %v2030, %v2028
        %v2069 = vpack.c.b16 %v2031, %v2029
        %v2070 = vpack.c.b16 %v2034, %v2032
        %v2071 = vpack.c.b16 %v2035, %v2033
        %v2072 = vpack.c.b16 %v2038, %v2036
        %v2073 = vpack.c.b16 %v2039, %v2037
        %v2074 = vpack.c.b16 %v2042, %v2040
        %v2075 = vpack.c.b16 %v2043, %v2041
        %2108 = vmatprep.subr.bf16.mxu0 %v2045
        %2109 = vmatpush1.bf16.msra.mxu0 %v2044
        %2110 = vmatprep.subr.bf16.mxu0 %v2047
        %2111 = vmatpush1.bf16.msra.mxu0 %v2046
        %2112 = vmatprep.subr.bf16.mxu0 %v2049
        %2113 = vmatpush1.bf16.msra.mxu0 %v2048
        %2114 = vmatprep.subr.bf16.mxu0 %v2051
        %2115 = vmatpush1.bf16.msra.mxu0 %v2050
        %2116 = vmatprep.subr.bf16.mxu0 %v2053
        %2117 = vmatpush1.bf16.msra.mxu0 %v2052
        %2118 = vmatprep.subr.bf16.mxu0 %v2055
        %2119 = vmatpush1.bf16.msra.mxu0 %v2054
        %2120 = vmatprep.subr.bf16.mxu0 %v2057
        %2121 = vmatpush1.bf16.msra.mxu0 %v2056
        %2122 = vmatprep.subr.bf16.mxu0 %v2059
        %2123 = vmatpush1.bf16.msra.mxu0 %v2058
        %2124 = vmatprep.subr.bf16.mxu0 %v2061
        %2125 = vmatpush1.bf16.msra.mxu0 %v2060
        %2126 = vmatprep.subr.bf16.mxu0 %v2063
        %2127 = vmatpush1.bf16.msra.mxu0 %v2062
        %2128 = vmatprep.subr.bf16.mxu0 %v2065
        %2129 = vmatpush1.bf16.msra.mxu0 %v2064
        %2130 = vmatprep.subr.bf16.mxu0 %v2067
        %2131 = vmatpush1.bf16.msra.mxu0 %v2066
        %2132 = vmatprep.subr.bf16.mxu0 %v2069
        %2133 = vmatpush1.bf16.msra.mxu0 %v2068
        %2134 = vmatprep.subr.bf16.mxu0 %v2071
        %2135 = vmatpush1.bf16.msra.mxu0 %v2070
        %2136 = vmatprep.subr.bf16.mxu0 %v2073
        %2137 = vmatpush1.bf16.msra.mxu0 %v2072
        %2138 = vmatprep.subr.bf16.mxu0 %v2075
        %2139 = vmatpush1.bf16.msra.mxu0 %v2074
        %2140 = vmatprep.mubr.bf16.mxu0 %v1917
        %2141 = vmatmul.mubr.bf16.gmra.mrb[0].mxu0 %v1916
        %v2142 = vpop.f32.mrb[0].mxu0
        %v2143 = vadd.f32 0.0, %v2142
        %v2144 = vpop.f32.mrb[0].mxu0
        %v2145 = vadd.f32 0.0, %v2144
        %v2146 = vpop.f32.mrb[0].mxu0
        %v2147 = vadd.f32 0.0, %v2146
        %v2148 = vpop.f32.mrb[0].mxu0
        %v2149 = vadd.f32 0.0, %v2148
        %2150 = vmatprep.mubr.bf16.mxu0 %v1919
        %2151 = vmatmul.mubr.bf16.gmra.mrb[0].mxu0 %v1918
        %v2152 = vpop.f32.mrb[0].mxu0
        %v2153 = vadd.f32 0.0, %v2152
        %v2154 = vpop.f32.mrb[0].mxu0
        %v2155 = vadd.f32 0.0, %v2154
        %v2156 = vpop.f32.mrb[0].mxu0
        %v2157 = vadd.f32 0.0, %v2156
        %v2158 = vpop.f32.mrb[0].mxu0
        %v2159 = vadd.f32 0.0, %v2158
        %2160 = vmatprep.mubr.bf16.mxu0 %v1921
        %2161 = vmatmul.mubr.bf16.gmra.mrb[0].mxu0 %v1920
        %v2162 = vpop.f32.mrb[0].mxu0
        %v2163 = vadd.f32 0.0, %v2162
        %v2164 = vpop.f32.mrb[0].mxu0
        %v2165 = vadd.f32 0.0, %v2164
        %v2166 = vpop.f32.mrb[0].mxu0
        %v2167 = vadd.f32 0.0, %v2166
        %v2168 = vpop.f32.mrb[0].mxu0
        %v2169 = vadd.f32 0.0, %v2168
        %2170 = vmatprep.mubr.bf16.mxu0 %v1923
        %2171 = vmatmul.mubr.bf16.gmra.mrb[0].mxu0 %v1922
        %v2172 = vpop.f32.mrb[0].mxu0
        %v2173 = vadd.f32 0.0, %v2172
        %v2174 = vpop.f32.mrb[0].mxu0
        %v2175 = vadd.f32 0.0, %v2174
        %v2176 = vpop.f32.mrb[0].mxu0
        %v2177 = vadd.f32 0.0, %v2176
        %v2178 = vpop.f32.mrb[0].mxu0
        %v2179 = vadd.f32 0.0, %v2178
        %2180 = vmatprep.mubr.bf16.mxu0 %v1925
        %2181 = vmatmul.mubr.bf16.gmra.mrb[0].mxu0 %v1924
        %v2182 = vpop.f32.mrb[0].mxu0
        %v2183 = vadd.f32 0.0, %v2182
        %v2184 = vpop.f32.mrb[0].mxu0
        %v2185 = vadd.f32 0.0, %v2184
        %v2186 = vpop.f32.mrb[0].mxu0
        %v2187 = vadd.f32 0.0, %v2186
        %v2188 = vpop.f32.mrb[0].mxu0
        %v2189 = vadd.f32 0.0, %v2188
        %2190 = vmatprep.mubr.bf16.mxu0 %v1927
        %2191 = vmatmul.mubr.bf16.gmra.mrb[0].mxu0 %v1926
        %v2192 = vpop.f32.mrb[0].mxu0
        %v2193 = vadd.f32 0.0, %v2192
        %v2194 = vpop.f32.mrb[0].mxu0
        %v2195 = vadd.f32 0.0, %v2194
        %v2196 = vpop.f32.mrb[0].mxu0
        %v2197 = vadd.f32 0.0, %v2196
        %v2198 = vpop.f32.mrb[0].mxu0
        %v2199 = vadd.f32 0.0, %v2198
        %2200 = vmatprep.mubr.bf16.mxu0 %v1929
        %2201 = vmatmul.mubr.bf16.gmra.mrb[0].mxu0 %v1928
        %v2202 = vpop.f32.mrb[0].mxu0
        %v2203 = vadd.f32 0.0, %v2202
        %v2204 = vpop.f32.mrb[0].mxu0
        %v2205 = vadd.f32 0.0, %v2204
        %v2206 = vpop.f32.mrb[0].mxu0
        %v2207 = vadd.f32 0.0, %v2206
        %v2208 = vpop.f32.mrb[0].mxu0
        %v2209 = vadd.f32 0.0, %v2208
        %2210 = vmatprep.mubr.bf16.mxu0 %v1931
        %2211 = vmatmul.mubr.bf16.gmra.mrb[0].mxu0 %v1930
        %v2212 = vpop.f32.mrb[0].mxu0
        %v2213 = vadd.f32 0.0, %v2212
        %v2214 = vpop.f32.mrb[0].mxu0
        %v2215 = vadd.f32 0.0, %v2214
        %v2216 = vpop.f32.mrb[0].mxu0
        %v2217 = vadd.f32 0.0, %v2216
        %v2218 = vpop.f32.mrb[0].mxu0
        %v2219 = vadd.f32 0.0, %v2218
        %2220 = vdwg.mxu0
        %v2221 = vadd.f32 %v1658, %v2143
        %v2222 = vadd.f32 %v1660, %v2145
        %v2223 = vadd.f32 %v1662, %v2147
        %v2224 = vadd.f32 %v1664, %v2149
        %v2225 = vadd.f32 %v1668, %v2153
        %v2226 = vadd.f32 %v1670, %v2155
        %v2227 = vadd.f32 %v1672, %v2157
        %v2228 = vadd.f32 %v1674, %v2159
        %v2229 = vadd.f32 %v1678, %v2163
        %v2230 = vadd.f32 %v1680, %v2165
        %v2231 = vadd.f32 %v1682, %v2167
        %v2232 = vadd.f32 %v1684, %v2169
        %v2233 = vadd.f32 %v1688, %v2173
        %v2234 = vadd.f32 %v1690, %v2175
        %v2235 = vadd.f32 %v1692, %v2177
        %v2236 = vadd.f32 %v1694, %v2179
        %v2237 = vadd.f32 %v1698, %v2183
        %v2238 = vadd.f32 %v1700, %v2185
        %v2239 = vadd.f32 %v1702, %v2187
        %v2240 = vadd.f32 %v1704, %v2189
        %v2241 = vadd.f32 %v1708, %v2193
        %v2242 = vadd.f32 %v1710, %v2195
        %v2243 = vadd.f32 %v1712, %v2197
        %v2244 = vadd.f32 %v1714, %v2199
        %v2245 = vadd.f32 %v1718, %v2203
        %v2246 = vadd.f32 %v1720, %v2205
        %v2247 = vadd.f32 %v1722, %v2207
        %v2248 = vadd.f32 %v1724, %v2209
        %v2249 = vadd.f32 %v1728, %v2213
        %v2250 = vadd.f32 %v1730, %v2215
        %v2251 = vadd.f32 %v1732, %v2217
        %v2252 = vadd.f32 %v1734, %v2219
        %v2253 = vld [vmem:[%s620] sm:$0xff]
        %v2254 = vld [vmem:[%s620 + $0x10] sm:$0xff]
        %v2255 = vld [vmem:[%s620 + $0x20] sm:$0xff]
        %v2256 = vld [vmem:[%s620 + $0x30] sm:$0xff]
        %v2257 = vld [vmem:[%s620 + $0x40] sm:$0xff]
        %v2258 = vld [vmem:[%s620 + $0x50] sm:$0xff]
        %v2259 = vld [vmem:[%s620 + $0x60] sm:$0xff]
        %v2260 = vld [vmem:[%s620 + $0x70] sm:$0xff]
        %v2261 = vld [vmem:[%s620 + $0xa0] sm:$0xff]
        %v2262 = vld [vmem:[%s620 + $0xb0] sm:$0xff]
        %v2263 = vld [vmem:[%s620 + $0xc0] sm:$0xff]
        %v2264 = vld [vmem:[%s620 + $0xd0] sm:$0xff]
        %v2265 = vld [vmem:[%s620 + $0xe0] sm:$0xff]
        %v2266 = vld [vmem:[%s620 + $0xf0] sm:$0xff]
        %v2267 = vld [vmem:[%s620 + $0x100] sm:$0xff]
        %v2268 = vld [vmem:[%s620 + $0x110] sm:$0xff]
        %s2269 = scalar_lea.vmem %s1, 768
        %v2270 = vld [vmem:[%s2269] sm:$0xff]
        %v2271 = vld [vmem:[%s2269 + $0x8] sm:$0xff]
        %v2272 = vld [vmem:[%s2269 + $0x10] sm:$0xff]
        %v2273 = vld [vmem:[%s2269 + $0x18] sm:$0xff]
        %v2274 = vld [vmem:[%s2269 + $0x20] sm:$0xff]
        %v2275 = vld [vmem:[%s2269 + $0x28] sm:$0xff]
        %v2276 = vld [vmem:[%s2269 + $0x30] sm:$0xff]
        %v2277 = vld [vmem:[%s2269 + $0x38] sm:$0xff]
        %v2278 = vld [vmem:[%s2269 + $0x40] sm:$0xff]
        %v2279 = vld [vmem:[%s2269 + $0x48] sm:$0xff]
        %v2280 = vld [vmem:[%s2269 + $0x50] sm:$0xff]
        %v2281 = vld [vmem:[%s2269 + $0x58] sm:$0xff]
        %v2282 = vld [vmem:[%s2269 + $0x60] sm:$0xff]
        %v2283 = vld [vmem:[%s2269 + $0x68] sm:$0xff]
        %v2284 = vld [vmem:[%s2269 + $0x70] sm:$0xff]
        %v2285 = vld [vmem:[%s2269 + $0x78] sm:$0xff]
        %v2286 = vld [vmem:[%s2269 + $0x80] sm:$0xff]
        %v2287 = vld [vmem:[%s2269 + $0x88] sm:$0xff]
        %v2288 = vld [vmem:[%s2269 + $0x90] sm:$0xff]
        %v2289 = vld [vmem:[%s2269 + $0x98] sm:$0xff]
        %v2290 = vld [vmem:[%s2269 + $0xa0] sm:$0xff]
        %v2291 = vld [vmem:[%s2269 + $0xa8] sm:$0xff]
        %v2292 = vld [vmem:[%s2269 + $0xb0] sm:$0xff]
        %v2293 = vld [vmem:[%s2269 + $0xb8] sm:$0xff]
        %v2294 = vld [vmem:[%s2269 + $0xc0] sm:$0xff]
        %v2295 = vld [vmem:[%s2269 + $0xc8] sm:$0xff]
        %v2296 = vld [vmem:[%s2269 + $0xd0] sm:$0xff]
        %v2297 = vld [vmem:[%s2269 + $0xd8] sm:$0xff]
        %v2298 = vld [vmem:[%s2269 + $0xe0] sm:$0xff]
        %v2299 = vld [vmem:[%s2269 + $0xe8] sm:$0xff]
        %v2300 = vld [vmem:[%s2269 + $0xf0] sm:$0xff]
        %v2301 = vld [vmem:[%s2269 + $0xf8] sm:$0xff]
        %v2318 = vunpack.c.l.b16 %v2253
        %v2319 = vunpack.c.h.b16 %v2253
        %v2320 = vunpack.c.l.b16 %v2254
        %v2321 = vunpack.c.h.b16 %v2254
        %v2322 = vunpack.c.l.b16 %v2255
        %v2323 = vunpack.c.h.b16 %v2255
        %v2324 = vunpack.c.l.b16 %v2256
        %v2325 = vunpack.c.h.b16 %v2256
        %v2326 = vunpack.c.l.b16 %v2257
        %v2327 = vunpack.c.h.b16 %v2257
        %v2328 = vunpack.c.l.b16 %v2258
        %v2329 = vunpack.c.h.b16 %v2258
        %v2330 = vunpack.c.l.b16 %v2259
        %v2331 = vunpack.c.h.b16 %v2259
        %v2332 = vunpack.c.l.b16 %v2260
        %v2333 = vunpack.c.h.b16 %v2260
        %v2334 = vunpack.c.l.b16 %v2261
        %v2335 = vunpack.c.h.b16 %v2261
        %v2336 = vunpack.c.l.b16 %v2262
        %v2337 = vunpack.c.h.b16 %v2262
        %v2338 = vunpack.c.l.b16 %v2263
        %v2339 = vunpack.c.h.b16 %v2263
        %v2340 = vunpack.c.l.b16 %v2264
        %v2341 = vunpack.c.h.b16 %v2264
        %v2342 = vunpack.c.l.b16 %v2265
        %v2343 = vunpack.c.h.b16 %v2265
        %v2344 = vunpack.c.l.b16 %v2266
        %v2345 = vunpack.c.h.b16 %v2266
        %v2346 = vunpack.c.l.b16 %v2267
        %v2347 = vunpack.c.h.b16 %v2267
        %v2348 = vunpack.c.l.b16 %v2268
        %v2349 = vunpack.c.h.b16 %v2268
        %v2350 = vpack.c.b16 %v2320, %v2318
        %v2351 = vpack.c.b16 %v2321, %v2319
        %v2352 = vpack.c.b16 %v2324, %v2322
        %v2353 = vpack.c.b16 %v2325, %v2323
        %v2354 = vpack.c.b16 %v2328, %v2326
        %v2355 = vpack.c.b16 %v2329, %v2327
        %v2356 = vpack.c.b16 %v2332, %v2330
        %v2357 = vpack.c.b16 %v2333, %v2331
        %v2358 = vpack.c.b16 %v2336, %v2334
        %v2359 = vpack.c.b16 %v2337, %v2335
        %v2360 = vpack.c.b16 %v2340, %v2338
        %v2361 = vpack.c.b16 %v2341, %v2339
        %v2362 = vpack.c.b16 %v2344, %v2342
        %v2363 = vpack.c.b16 %v2345, %v2343
        %v2364 = vpack.c.b16 %v2348, %v2346
        %v2365 = vpack.c.b16 %v2349, %v2347
        %v2414 = vunpack.c.l.b16 %v2270
        %v2415 = vunpack.c.h.b16 %v2270
        %v2416 = vunpack.c.l.b16 %v2271
        %v2417 = vunpack.c.h.b16 %v2271
        %v2418 = vunpack.c.l.b16 %v2272
        %v2419 = vunpack.c.h.b16 %v2272
        %v2420 = vunpack.c.l.b16 %v2273
        %v2421 = vunpack.c.h.b16 %v2273
        %v2422 = vunpack.c.l.b16 %v2274
        %v2423 = vunpack.c.h.b16 %v2274
        %v2424 = vunpack.c.l.b16 %v2275
        %v2425 = vunpack.c.h.b16 %v2275
        %v2426 = vunpack.c.l.b16 %v2276
        %v2427 = vunpack.c.h.b16 %v2276
        %v2428 = vunpack.c.l.b16 %v2277
        %v2429 = vunpack.c.h.b16 %v2277
        %v2430 = vunpack.c.l.b16 %v2278
        %v2431 = vunpack.c.h.b16 %v2278
        %v2432 = vunpack.c.l.b16 %v2279
        %v2433 = vunpack.c.h.b16 %v2279
        %v2434 = vunpack.c.l.b16 %v2280
        %v2435 = vunpack.c.h.b16 %v2280
        %v2436 = vunpack.c.l.b16 %v2281
        %v2437 = vunpack.c.h.b16 %v2281
        %v2438 = vunpack.c.l.b16 %v2282
        %v2439 = vunpack.c.h.b16 %v2282
        %v2440 = vunpack.c.l.b16 %v2283
        %v2441 = vunpack.c.h.b16 %v2283
        %v2442 = vunpack.c.l.b16 %v2284
        %v2443 = vunpack.c.h.b16 %v2284
        %v2444 = vunpack.c.l.b16 %v2285
        %v2445 = vunpack.c.h.b16 %v2285
        %v2446 = vunpack.c.l.b16 %v2286
        %v2447 = vunpack.c.h.b16 %v2286
        %v2448 = vunpack.c.l.b16 %v2287
        %v2449 = vunpack.c.h.b16 %v2287
        %v2450 = vunpack.c.l.b16 %v2288
        %v2451 = vunpack.c.h.b16 %v2288
        %v2452 = vunpack.c.l.b16 %v2289
        %v2453 = vunpack.c.h.b16 %v2289
        %v2454 = vunpack.c.l.b16 %v2290
        %v2455 = vunpack.c.h.b16 %v2290
        %v2456 = vunpack.c.l.b16 %v2291
        %v2457 = vunpack.c.h.b16 %v2291
        %v2458 = vunpack.c.l.b16 %v2292
        %v2459 = vunpack.c.h.b16 %v2292
        %v2460 = vunpack.c.l.b16 %v2293
        %v2461 = vunpack.c.h.b16 %v2293
        %v2462 = vunpack.c.l.b16 %v2294
        %v2463 = vunpack.c.h.b16 %v2294
        %v2464 = vunpack.c.l.b16 %v2295
        %v2465 = vunpack.c.h.b16 %v2295
        %v2466 = vunpack.c.l.b16 %v2296
        %v2467 = vunpack.c.h.b16 %v2296
        %v2468 = vunpack.c.l.b16 %v2297
        %v2469 = vunpack.c.h.b16 %v2297
        %v2470 = vunpack.c.l.b16 %v2298
        %v2471 = vunpack.c.h.b16 %v2298
        %v2472 = vunpack.c.l.b16 %v2299
        %v2473 = vunpack.c.h.b16 %v2299
        %v2474 = vunpack.c.l.b16 %v2300
        %v2475 = vunpack.c.h.b16 %v2300
        %v2476 = vunpack.c.l.b16 %v2301
        %v2477 = vunpack.c.h.b16 %v2301
        %v2478 = vpack.c.b16 %v2416, %v2414
        %v2479 = vpack.c.b16 %v2417, %v2415
        %v2480 = vpack.c.b16 %v2420, %v2418
        %v2481 = vpack.c.b16 %v2421, %v2419
        %v2482 = vpack.c.b16 %v2424, %v2422
        %v2483 = vpack.c.b16 %v2425, %v2423
        %v2484 = vpack.c.b16 %v2428, %v2426
        %v2485 = vpack.c.b16 %v2429, %v2427
        %v2486 = vpack.c.b16 %v2432, %v2430
        %v2487 = vpack.c.b16 %v2433, %v2431
        %v2488 = vpack.c.b16 %v2436, %v2434
        %v2489 = vpack.c.b16 %v2437, %v2435
        %v2490 = vpack.c.b16 %v2440, %v2438
        %v2491 = vpack.c.b16 %v2441, %v2439
        %v2492 = vpack.c.b16 %v2444, %v2442
        %v2493 = vpack.c.b16 %v2445, %v2443
        %v2494 = vpack.c.b16 %v2448, %v2446
        %v2495 = vpack.c.b16 %v2449, %v2447
        %v2496 = vpack.c.b16 %v2452, %v2450
        %v2497 = vpack.c.b16 %v2453, %v2451
        %v2498 = vpack.c.b16 %v2456, %v2454
        %v2499 = vpack.c.b16 %v2457, %v2455
        %v2500 = vpack.c.b16 %v2460, %v2458
        %v2501 = vpack.c.b16 %v2461, %v2459
        %v2502 = vpack.c.b16 %v2464, %v2462
        %v2503 = vpack.c.b16 %v2465, %v2463
        %v2504 = vpack.c.b16 %v2468, %v2466
        %v2505 = vpack.c.b16 %v2469, %v2467
        %v2506 = vpack.c.b16 %v2472, %v2470
        %v2507 = vpack.c.b16 %v2473, %v2471
        %v2508 = vpack.c.b16 %v2476, %v2474
        %v2509 = vpack.c.b16 %v2477, %v2475
        %2542 = vmatprep.subr.bf16.mxu0 %v2479
        %2543 = vmatpush1.bf16.msra.mxu0 %v2478
        %2544 = vmatprep.subr.bf16.mxu0 %v2481
        %2545 = vmatpush1.bf16.msra.mxu0 %v2480
        %2546 = vmatprep.subr.bf16.mxu0 %v2483
        %2547 = vmatpush1.bf16.msra.mxu0 %v2482
        %2548 = vmatprep.subr.bf16.mxu0 %v2485
        %2549 = vmatpush1.bf16.msra.mxu0 %v2484
        %2550 = vmatprep.subr.bf16.mxu0 %v2487
        %2551 = vmatpush1.bf16.msra.mxu0 %v2486
        %2552 = vmatprep.subr.bf16.mxu0 %v2489
        %2553 = vmatpush1.bf16.msra.mxu0 %v2488
        %2554 = vmatprep.subr.bf16.mxu0 %v2491
        %2555 = vmatpush1.bf16.msra.mxu0 %v2490
        %2556 = vmatprep.subr.bf16.mxu0 %v2493
        %2557 = vmatpush1.bf16.msra.mxu0 %v2492
        %2558 = vmatprep.subr.bf16.mxu0 %v2495
        %2559 = vmatpush1.bf16.msra.mxu0 %v2494
        %2560 = vmatprep.subr.bf16.mxu0 %v2497
        %2561 = vmatpush1.bf16.msra.mxu0 %v2496
        %2562 = vmatprep.subr.bf16.mxu0 %v2499
        %2563 = vmatpush1.bf16.msra.mxu0 %v2498
        %2564 = vmatprep.subr.bf16.mxu0 %v2501
        %2565 = vmatpush1.bf16.msra.mxu0 %v2500
        %2566 = vmatprep.subr.bf16.mxu0 %v2503
        %2567 = vmatpush1.bf16.msra.mxu0 %v2502
        %2568 = vmatprep.subr.bf16.mxu0 %v2505
        %2569 = vmatpush1.bf16.msra.mxu0 %v2504
        %2570 = vmatprep.subr.bf16.mxu0 %v2507
        %2571 = vmatpush1.bf16.msra.mxu0 %v2506
        %2572 = vmatprep.subr.bf16.mxu0 %v2509
        %2573 = vmatpush1.bf16.msra.mxu0 %v2508
        %2574 = vmatprep.mubr.bf16.mxu0 %v2351
        %2575 = vmatmul.mubr.bf16.gmra.mrb[0].mxu0 %v2350
        %v2576 = vpop.f32.mrb[0].mxu0
        %v2577 = vadd.f32 0.0, %v2576
        %v2578 = vpop.f32.mrb[0].mxu0
        %v2579 = vadd.f32 0.0, %v2578
        %v2580 = vpop.f32.mrb[0].mxu0
        %v2581 = vadd.f32 0.0, %v2580
        %v2582 = vpop.f32.mrb[0].mxu0
        %v2583 = vadd.f32 0.0, %v2582
        %2584 = vmatprep.mubr.bf16.mxu0 %v2353
        %2585 = vmatmul.mubr.bf16.gmra.mrb[0].mxu0 %v2352
        %v2586 = vpop.f32.mrb[0].mxu0
        %v2587 = vadd.f32 0.0, %v2586
        %v2588 = vpop.f32.mrb[0].mxu0
        %v2589 = vadd.f32 0.0, %v2588
        %v2590 = vpop.f32.mrb[0].mxu0
        %v2591 = vadd.f32 0.0, %v2590
        %v2592 = vpop.f32.mrb[0].mxu0
        %v2593 = vadd.f32 0.0, %v2592
        %2594 = vmatprep.mubr.bf16.mxu0 %v2355
        %2595 = vmatmul.mubr.bf16.gmra.mrb[0].mxu0 %v2354
        %v2596 = vpop.f32.mrb[0].mxu0
        %v2597 = vadd.f32 0.0, %v2596
        %v2598 = vpop.f32.mrb[0].mxu0
        %v2599 = vadd.f32 0.0, %v2598
        %v2600 = vpop.f32.mrb[0].mxu0
        %v2601 = vadd.f32 0.0, %v2600
        %v2602 = vpop.f32.mrb[0].mxu0
        %v2603 = vadd.f32 0.0, %v2602
        %2604 = vmatprep.mubr.bf16.mxu0 %v2357
        %2605 = vmatmul.mubr.bf16.gmra.mrb[0].mxu0 %v2356
        %v2606 = vpop.f32.mrb[0].mxu0
        %v2607 = vadd.f32 0.0, %v2606
        %v2608 = vpop.f32.mrb[0].mxu0
        %v2609 = vadd.f32 0.0, %v2608
        %v2610 = vpop.f32.mrb[0].mxu0
        %v2611 = vadd.f32 0.0, %v2610
        %v2612 = vpop.f32.mrb[0].mxu0
        %v2613 = vadd.f32 0.0, %v2612
        %2614 = vmatprep.mubr.bf16.mxu0 %v2359
        %2615 = vmatmul.mubr.bf16.gmra.mrb[0].mxu0 %v2358
        %v2616 = vpop.f32.mrb[0].mxu0
        %v2617 = vadd.f32 0.0, %v2616
        %v2618 = vpop.f32.mrb[0].mxu0
        %v2619 = vadd.f32 0.0, %v2618
        %v2620 = vpop.f32.mrb[0].mxu0
        %v2621 = vadd.f32 0.0, %v2620
        %v2622 = vpop.f32.mrb[0].mxu0
        %v2623 = vadd.f32 0.0, %v2622
        %2624 = vmatprep.mubr.bf16.mxu0 %v2361
        %2625 = vmatmul.mubr.bf16.gmra.mrb[0].mxu0 %v2360
        %v2626 = vpop.f32.mrb[0].mxu0
        %v2627 = vadd.f32 0.0, %v2626
        %v2628 = vpop.f32.mrb[0].mxu0
        %v2629 = vadd.f32 0.0, %v2628
        %v2630 = vpop.f32.mrb[0].mxu0
        %v2631 = vadd.f32 0.0, %v2630
        %v2632 = vpop.f32.mrb[0].mxu0
        %v2633 = vadd.f32 0.0, %v2632
        %2634 = vmatprep.mubr.bf16.mxu0 %v2363
        %2635 = vmatmul.mubr.bf16.gmra.mrb[0].mxu0 %v2362
        %v2636 = vpop.f32.mrb[0].mxu0
        %v2637 = vadd.f32 0.0, %v2636
        %v2638 = vpop.f32.mrb[0].mxu0
        %v2639 = vadd.f32 0.0, %v2638
        %v2640 = vpop.f32.mrb[0].mxu0
        %v2641 = vadd.f32 0.0, %v2640
        %v2642 = vpop.f32.mrb[0].mxu0
        %v2643 = vadd.f32 0.0, %v2642
        %2644 = vmatprep.mubr.bf16.mxu0 %v2365
        %2645 = vmatmul.mubr.bf16.gmra.mrb[0].mxu0 %v2364
        %v2646 = vpop.f32.mrb[0].mxu0
        %v2647 = vadd.f32 0.0, %v2646
        %v2648 = vpop.f32.mrb[0].mxu0
        %v2649 = vadd.f32 0.0, %v2648
        %v2650 = vpop.f32.mrb[0].mxu0
        %v2651 = vadd.f32 0.0, %v2650
        %v2652 = vpop.f32.mrb[0].mxu0
        %v2653 = vadd.f32 0.0, %v2652
        %2654 = vdwg.mxu0
        %v2655 = vadd.f32 %v2221, %v2577
        %v2656 = vadd.f32 %v2222, %v2579
        %v2657 = vadd.f32 %v2223, %v2581
        %v2658 = vadd.f32 %v2224, %v2583
        %v2659 = vadd.f32 %v2225, %v2587
        %v2660 = vadd.f32 %v2226, %v2589
        %v2661 = vadd.f32 %v2227, %v2591
        %v2662 = vadd.f32 %v2228, %v2593
        %v2663 = vadd.f32 %v2229, %v2597
        %v2664 = vadd.f32 %v2230, %v2599
        %v2665 = vadd.f32 %v2231, %v2601
        %v2666 = vadd.f32 %v2232, %v2603
        %v2667 = vadd.f32 %v2233, %v2607
        %v2668 = vadd.f32 %v2234, %v2609
        %v2669 = vadd.f32 %v2235, %v2611
        %v2670 = vadd.f32 %v2236, %v2613
        %v2671 = vadd.f32 %v2237, %v2617
        %v2672 = vadd.f32 %v2238, %v2619
        %v2673 = vadd.f32 %v2239, %v2621
        %v2674 = vadd.f32 %v2240, %v2623
        %v2675 = vadd.f32 %v2241, %v2627
        %v2676 = vadd.f32 %v2242, %v2629
        %v2677 = vadd.f32 %v2243, %v2631
        %v2678 = vadd.f32 %v2244, %v2633
        %v2679 = vadd.f32 %v2245, %v2637
        %v2680 = vadd.f32 %v2246, %v2639
        %v2681 = vadd.f32 %v2247, %v2641
        %v2682 = vadd.f32 %v2248, %v2643
        %v2683 = vadd.f32 %v2249, %v2647
        %v2684 = vadd.f32 %v2250, %v2649
        %v2685 = vadd.f32 %v2251, %v2651
        %v2686 = vadd.f32 %v2252, %v2653
        %v2687 = vld [vmem:[%s620] sm:$0xff]
        %v2688 = vld [vmem:[%s620 + $0x8] sm:$0x11]
        %v2689 = vld [vmem:[%s620 + $0x10] sm:$0xff]
        %v2690 = vld [vmem:[%s620 + $0x18] sm:$0x11]
        %v2691 = vld [vmem:[%s620 + $0x20] sm:$0xff]
        %v2692 = vld [vmem:[%s620 + $0x28] sm:$0x11]
        %v2693 = vld [vmem:[%s620 + $0x30] sm:$0xff]
        %v2694 = vld [vmem:[%s620 + $0x38] sm:$0x11]
        %v2695 = vld [vmem:[%s620 + $0x40] sm:$0xff]
        %v2696 = vld [vmem:[%s620 + $0x48] sm:$0x11]
        %v2697 = vld [vmem:[%s620 + $0x50] sm:$0xff]
        %v2698 = vld [vmem:[%s620 + $0x58] sm:$0x11]
        %v2699 = vld [vmem:[%s620 + $0x60] sm:$0xff]
        %v2700 = vld [vmem:[%s620 + $0x68] sm:$0x11]
        %v2701 = vld [vmem:[%s620 + $0x70] sm:$0xff]
        %v2702 = vld [vmem:[%s620 + $0x78] sm:$0x11]
        %v2703 = vld [vmem:[%s620 + $0xa0] sm:$0xff]
        %v2704 = vld [vmem:[%s620 + $0xa8] sm:$0x11]
        %v2705 = vld [vmem:[%s620 + $0xb0] sm:$0xff]
        %v2706 = vld [vmem:[%s620 + $0xb8] sm:$0x11]
        %v2707 = vld [vmem:[%s620 + $0xc0] sm:$0xff]
        %v2708 = vld [vmem:[%s620 + $0xc8] sm:$0x11]
        %v2709 = vld [vmem:[%s620 + $0xd0] sm:$0xff]
        %v2710 = vld [vmem:[%s620 + $0xd8] sm:$0x11]
        %v2711 = vld [vmem:[%s620 + $0xe0] sm:$0xff]
        %v2712 = vld [vmem:[%s620 + $0xe8] sm:$0x11]
        %v2713 = vld [vmem:[%s620 + $0xf0] sm:$0xff]
        %v2714 = vld [vmem:[%s620 + $0xf8] sm:$0x11]
        %v2715 = vld [vmem:[%s620 + $0x100] sm:$0xff]
        %v2716 = vld [vmem:[%s620 + $0x108] sm:$0x11]
        %v2717 = vld [vmem:[%s620 + $0x110] sm:$0xff]
        %v2718 = vld [vmem:[%s620 + $0x118] sm:$0x11]
        %v2720 = vshrl.u32 %v2687, 16
        %v2722 = vrot.slane %v2720, 4
        %v2723 = vshll.u32 %v2687, 16
        %v2725 = vrot.slane %v2723, 5
        %v2726 = vor.u32 %v2722, %v2725
        %v2727 = vrot.slane %v2726, 4
        %v2729 = vshll.u32 %v2688, 16
        %v2731 = vrot.slane %v2729, 5
        %v2732 = vsel %vm788, %v2727, %v2731
        %v2734 = vshrl.u32 %v2689, 16
        %v2736 = vrot.slane %v2734, 4
        %v2737 = vshll.u32 %v2689, 16
        %v2739 = vrot.slane %v2737, 5
        %v2740 = vor.u32 %v2736, %v2739
        %v2741 = vrot.slane %v2740, 4
        %v2743 = vshll.u32 %v2690, 16
        %v2745 = vrot.slane %v2743, 5
        %v2746 = vsel %vm788, %v2741, %v2745
        %v2748 = vshrl.u32 %v2691, 16
        %v2750 = vrot.slane %v2748, 4
        %v2751 = vshll.u32 %v2691, 16
        %v2753 = vrot.slane %v2751, 5
        %v2754 = vor.u32 %v2750, %v2753
        %v2755 = vrot.slane %v2754, 4
        %v2757 = vshll.u32 %v2692, 16
        %v2759 = vrot.slane %v2757, 5
        %v2760 = vsel %vm788, %v2755, %v2759
        %v2762 = vshrl.u32 %v2693, 16
        %v2764 = vrot.slane %v2762, 4
        %v2765 = vshll.u32 %v2693, 16
        %v2767 = vrot.slane %v2765, 5
        %v2768 = vor.u32 %v2764, %v2767
        %v2769 = vrot.slane %v2768, 4
        %v2771 = vshll.u32 %v2694, 16
        %v2773 = vrot.slane %v2771, 5
        %v2774 = vsel %vm788, %v2769, %v2773
        %v2776 = vshrl.u32 %v2695, 16
        %v2778 = vrot.slane %v2776, 4
        %v2779 = vshll.u32 %v2695, 16
        %v2781 = vrot.slane %v2779, 5
        %v2782 = vor.u32 %v2778, %v2781
        %v2783 = vrot.slane %v2782, 4
        %v2785 = vshll.u32 %v2696, 16
        %v2787 = vrot.slane %v2785, 5
        %v2788 = vsel %vm788, %v2783, %v2787
        %v2790 = vshrl.u32 %v2697, 16
        %v2792 = vrot.slane %v2790, 4
        %v2793 = vshll.u32 %v2697, 16
        %v2795 = vrot.slane %v2793, 5
        %v2796 = vor.u32 %v2792, %v2795
        %v2797 = vrot.slane %v2796, 4
        %v2799 = vshll.u32 %v2698, 16
        %v2801 = vrot.slane %v2799, 5
        %v2802 = vsel %vm788, %v2797, %v2801
        %v2804 = vshrl.u32 %v2699, 16
        %v2806 = vrot.slane %v2804, 4
        %v2807 = vshll.u32 %v2699, 16
        %v2809 = vrot.slane %v2807, 5
        %v2810 = vor.u32 %v2806, %v2809
        %v2811 = vrot.slane %v2810, 4
        %v2813 = vshll.u32 %v2700, 16
        %v2815 = vrot.slane %v2813, 5
        %v2816 = vsel %vm788, %v2811, %v2815
        %v2818 = vshrl.u32 %v2701, 16
        %v2820 = vrot.slane %v2818, 4
        %v2821 = vshll.u32 %v2701, 16
        %v2823 = vrot.slane %v2821, 5
        %v2824 = vor.u32 %v2820, %v2823
        %v2825 = vrot.slane %v2824, 4
        %v2827 = vshll.u32 %v2702, 16
        %v2829 = vrot.slane %v2827, 5
        %v2830 = vsel %vm788, %v2825, %v2829
        %v2832 = vshrl.u32 %v2703, 16
        %v2834 = vrot.slane %v2832, 4
        %v2835 = vshll.u32 %v2703, 16
        %v2837 = vrot.slane %v2835, 5
        %v2838 = vor.u32 %v2834, %v2837
        %v2839 = vrot.slane %v2838, 4
        %v2841 = vshll.u32 %v2704, 16
        %v2843 = vrot.slane %v2841, 5
        %v2844 = vsel %vm788, %v2839, %v2843
        %v2846 = vshrl.u32 %v2705, 16
        %v2848 = vrot.slane %v2846, 4
        %v2849 = vshll.u32 %v2705, 16
        %v2851 = vrot.slane %v2849, 5
        %v2852 = vor.u32 %v2848, %v2851
        %v2853 = vrot.slane %v2852, 4
        %v2855 = vshll.u32 %v2706, 16
        %v2857 = vrot.slane %v2855, 5
        %v2858 = vsel %vm788, %v2853, %v2857
        %v2860 = vshrl.u32 %v2707, 16
        %v2862 = vrot.slane %v2860, 4
        %v2863 = vshll.u32 %v2707, 16
        %v2865 = vrot.slane %v2863, 5
        %v2866 = vor.u32 %v2862, %v2865
        %v2867 = vrot.slane %v2866, 4
        %v2869 = vshll.u32 %v2708, 16
        %v2871 = vrot.slane %v2869, 5
        %v2872 = vsel %vm788, %v2867, %v2871
        %v2874 = vshrl.u32 %v2709, 16
        %v2876 = vrot.slane %v2874, 4
        %v2877 = vshll.u32 %v2709, 16
        %v2879 = vrot.slane %v2877, 5
        %v2880 = vor.u32 %v2876, %v2879
        %v2881 = vrot.slane %v2880, 4
        %v2883 = vshll.u32 %v2710, 16
        %v2885 = vrot.slane %v2883, 5
        %v2886 = vsel %vm788, %v2881, %v2885
        %v2888 = vshrl.u32 %v2711, 16
        %v2890 = vrot.slane %v2888, 4
        %v2891 = vshll.u32 %v2711, 16
        %v2893 = vrot.slane %v2891, 5
        %v2894 = vor.u32 %v2890, %v2893
        %v2895 = vrot.slane %v2894, 4
        %v2897 = vshll.u32 %v2712, 16
        %v2899 = vrot.slane %v2897, 5
        %v2900 = vsel %vm788, %v2895, %v2899
        %v2902 = vshrl.u32 %v2713, 16
        %v2904 = vrot.slane %v2902, 4
        %v2905 = vshll.u32 %v2713, 16
        %v2907 = vrot.slane %v2905, 5
        %v2908 = vor.u32 %v2904, %v2907
        %v2909 = vrot.slane %v2908, 4
        %v2911 = vshll.u32 %v2714, 16
        %v2913 = vrot.slane %v2911, 5
        %v2914 = vsel %vm788, %v2909, %v2913
        %v2916 = vshrl.u32 %v2715, 16
        %v2918 = vrot.slane %v2916, 4
        %v2919 = vshll.u32 %v2715, 16
        %v2921 = vrot.slane %v2919, 5
        %v2922 = vor.u32 %v2918, %v2921
        %v2923 = vrot.slane %v2922, 4
        %v2925 = vshll.u32 %v2716, 16
        %v2927 = vrot.slane %v2925, 5
        %v2928 = vsel %vm788, %v2923, %v2927
        %v2930 = vshrl.u32 %v2717, 16
        %v2932 = vrot.slane %v2930, 4
        %v2933 = vshll.u32 %v2717, 16
        %v2935 = vrot.slane %v2933, 5
        %v2936 = vor.u32 %v2932, %v2935
        %v2937 = vrot.slane %v2936, 4
        %v2939 = vshll.u32 %v2718, 16
        %v2941 = vrot.slane %v2939, 5
        %v2942 = vsel %vm788, %v2937, %v2941
        %s2943 = scalar_lea.vmem %s1, 1024
        %v2944 = vld [vmem:[%s2943] sm:$0xff]
        %v2945 = vld [vmem:[%s2943 + $0x8] sm:$0xff]
        %v2946 = vld [vmem:[%s2943 + $0x10] sm:$0xff]
        %v2947 = vld [vmem:[%s2943 + $0x18] sm:$0xff]
        %v2948 = vld [vmem:[%s2943 + $0x20] sm:$0xff]
        %v2949 = vld [vmem:[%s2943 + $0x28] sm:$0xff]
        %v2950 = vld [vmem:[%s2943 + $0x30] sm:$0xff]
        %v2951 = vld [vmem:[%s2943 + $0x38] sm:$0xff]
        %v2952 = vld [vmem:[%s2943 + $0x40] sm:$0xff]
        %v2953 = vld [vmem:[%s2943 + $0x48] sm:$0xff]
        %v2954 = vld [vmem:[%s2943 + $0x50] sm:$0xff]
        %v2955 = vld [vmem:[%s2943 + $0x58] sm:$0xff]
        %v2956 = vld [vmem:[%s2943 + $0x60] sm:$0xff]
        %v2957 = vld [vmem:[%s2943 + $0x68] sm:$0xff]
        %v2958 = vld [vmem:[%s2943 + $0x70] sm:$0xff]
        %v2959 = vld [vmem:[%s2943 + $0x78] sm:$0xff]
        %v2960 = vld [vmem:[%s2943 + $0x80] sm:$0xff]
        %v2961 = vld [vmem:[%s2943 + $0x88] sm:$0xff]
        %v2962 = vld [vmem:[%s2943 + $0x90] sm:$0xff]
        %v2963 = vld [vmem:[%s2943 + $0x98] sm:$0xff]
        %v2964 = vld [vmem:[%s2943 + $0xa0] sm:$0xff]
        %v2965 = vld [vmem:[%s2943 + $0xa8] sm:$0xff]
        %v2966 = vld [vmem:[%s2943 + $0xb0] sm:$0xff]
        %v2967 = vld [vmem:[%s2943 + $0xb8] sm:$0xff]
        %v2968 = vld [vmem:[%s2943 + $0xc0] sm:$0xff]
        %v2969 = vld [vmem:[%s2943 + $0xc8] sm:$0xff]
        %v2970 = vld [vmem:[%s2943 + $0xd0] sm:$0xff]
        %v2971 = vld [vmem:[%s2943 + $0xd8] sm:$0xff]
        %v2972 = vld [vmem:[%s2943 + $0xe0] sm:$0xff]
        %v2973 = vld [vmem:[%s2943 + $0xe8] sm:$0xff]
        %v2974 = vld [vmem:[%s2943 + $0xf0] sm:$0xff]
        %v2975 = vld [vmem:[%s2943 + $0xf8] sm:$0xff]
        %v2976 = vunpack.c.l.b16 %v2732
        %v2977 = vunpack.c.h.b16 %v2732
        %v2978 = vunpack.c.l.b16 %v2746
        %v2979 = vunpack.c.h.b16 %v2746
        %v2980 = vunpack.c.l.b16 %v2760
        %v2981 = vunpack.c.h.b16 %v2760
        %v2982 = vunpack.c.l.b16 %v2774
        %v2983 = vunpack.c.h.b16 %v2774
        %v2984 = vunpack.c.l.b16 %v2788
        %v2985 = vunpack.c.h.b16 %v2788
        %v2986 = vunpack.c.l.b16 %v2802
        %v2987 = vunpack.c.h.b16 %v2802
        %v2988 = vunpack.c.l.b16 %v2816
        %v2989 = vunpack.c.h.b16 %v2816
        %v2990 = vunpack.c.l.b16 %v2830
        %v2991 = vunpack.c.h.b16 %v2830
        %v2992 = vunpack.c.l.b16 %v2844
        %v2993 = vunpack.c.h.b16 %v2844
        %v2994 = vunpack.c.l.b16 %v2858
        %v2995 = vunpack.c.h.b16 %v2858
        %v2996 = vunpack.c.l.b16 %v2872
        %v2997 = vunpack.c.h.b16 %v2872
        %v2998 = vunpack.c.l.b16 %v2886
        %v2999 = vunpack.c.h.b16 %v2886
        %v3000 = vunpack.c.l.b16 %v2900
        %v3001 = vunpack.c.h.b16 %v2900
        %v3002 = vunpack.c.l.b16 %v2914
        %v3003 = vunpack.c.h.b16 %v2914
        %v3004 = vunpack.c.l.b16 %v2928
        %v3005 = vunpack.c.h.b16 %v2928
        %v3006 = vunpack.c.l.b16 %v2942
        %v3007 = vunpack.c.h.b16 %v2942
        %v3008 = vpack.c.b16 %v2978, %v2976
        %v3009 = vpack.c.b16 %v2979, %v2977
        %v3010 = vpack.c.b16 %v2982, %v2980
        %v3011 = vpack.c.b16 %v2983, %v2981
        %v3012 = vpack.c.b16 %v2986, %v2984
        %v3013 = vpack.c.b16 %v2987, %v2985
        %v3014 = vpack.c.b16 %v2990, %v2988
        %v3015 = vpack.c.b16 %v2991, %v2989
        %v3016 = vpack.c.b16 %v2994, %v2992
        %v3017 = vpack.c.b16 %v2995, %v2993
        %v3018 = vpack.c.b16 %v2998, %v2996
        %v3019 = vpack.c.b16 %v2999, %v2997
        %v3020 = vpack.c.b16 %v3002, %v3000
        %v3021 = vpack.c.b16 %v3003, %v3001
        %v3022 = vpack.c.b16 %v3006, %v3004
        %v3023 = vpack.c.b16 %v3007, %v3005
        %v3072 = vunpack.c.l.b16 %v2944
        %v3073 = vunpack.c.h.b16 %v2944
        %v3074 = vunpack.c.l.b16 %v2945
        %v3075 = vunpack.c.h.b16 %v2945
        %v3076 = vunpack.c.l.b16 %v2946
        %v3077 = vunpack.c.h.b16 %v2946
        %v3078 = vunpack.c.l.b16 %v2947
        %v3079 = vunpack.c.h.b16 %v2947
        %v3080 = vunpack.c.l.b16 %v2948
        %v3081 = vunpack.c.h.b16 %v2948
        %v3082 = vunpack.c.l.b16 %v2949
        %v3083 = vunpack.c.h.b16 %v2949
        %v3084 = vunpack.c.l.b16 %v2950
        %v3085 = vunpack.c.h.b16 %v2950
        %v3086 = vunpack.c.l.b16 %v2951
        %v3087 = vunpack.c.h.b16 %v2951
        %v3088 = vunpack.c.l.b16 %v2952
        %v3089 = vunpack.c.h.b16 %v2952
        %v3090 = vunpack.c.l.b16 %v2953
        %v3091 = vunpack.c.h.b16 %v2953
        %v3092 = vunpack.c.l.b16 %v2954
        %v3093 = vunpack.c.h.b16 %v2954
        %v3094 = vunpack.c.l.b16 %v2955
        %v3095 = vunpack.c.h.b16 %v2955
        %v3096 = vunpack.c.l.b16 %v2956
        %v3097 = vunpack.c.h.b16 %v2956
        %v3098 = vunpack.c.l.b16 %v2957
        %v3099 = vunpack.c.h.b16 %v2957
        %v3100 = vunpack.c.l.b16 %v2958
        %v3101 = vunpack.c.h.b16 %v2958
        %v3102 = vunpack.c.l.b16 %v2959
        %v3103 = vunpack.c.h.b16 %v2959
        %v3104 = vunpack.c.l.b16 %v2960
        %v3105 = vunpack.c.h.b16 %v2960
        %v3106 = vunpack.c.l.b16 %v2961
        %v3107 = vunpack.c.h.b16 %v2961
        %v3108 = vunpack.c.l.b16 %v2962
        %v3109 = vunpack.c.h.b16 %v2962
        %v3110 = vunpack.c.l.b16 %v2963
        %v3111 = vunpack.c.h.b16 %v2963
        %v3112 = vunpack.c.l.b16 %v2964
        %v3113 = vunpack.c.h.b16 %v2964
        %v3114 = vunpack.c.l.b16 %v2965
        %v3115 = vunpack.c.h.b16 %v2965
        %v3116 = vunpack.c.l.b16 %v2966
        %v3117 = vunpack.c.h.b16 %v2966
        %v3118 = vunpack.c.l.b16 %v2967
        %v3119 = vunpack.c.h.b16 %v2967
        %v3120 = vunpack.c.l.b16 %v2968
        %v3121 = vunpack.c.h.b16 %v2968
        %v3122 = vunpack.c.l.b16 %v2969
        %v3123 = vunpack.c.h.b16 %v2969
        %v3124 = vunpack.c.l.b16 %v2970
        %v3125 = vunpack.c.h.b16 %v2970
        %v3126 = vunpack.c.l.b16 %v2971
        %v3127 = vunpack.c.h.b16 %v2971
        %v3128 = vunpack.c.l.b16 %v2972
        %v3129 = vunpack.c.h.b16 %v2972
        %v3130 = vunpack.c.l.b16 %v2973
        %v3131 = vunpack.c.h.b16 %v2973
        %v3132 = vunpack.c.l.b16 %v2974
        %v3133 = vunpack.c.h.b16 %v2974
        %v3134 = vunpack.c.l.b16 %v2975
        %v3135 = vunpack.c.h.b16 %v2975
        %v3136 = vpack.c.b16 %v3074, %v3072
        %v3137 = vpack.c.b16 %v3075, %v3073
        %v3138 = vpack.c.b16 %v3078, %v3076
        %v3139 = vpack.c.b16 %v3079, %v3077
        %v3140 = vpack.c.b16 %v3082, %v3080
        %v3141 = vpack.c.b16 %v3083, %v3081
        %v3142 = vpack.c.b16 %v3086, %v3084
        %v3143 = vpack.c.b16 %v3087, %v3085
        %v3144 = vpack.c.b16 %v3090, %v3088
        %v3145 = vpack.c.b16 %v3091, %v3089
        %v3146 = vpack.c.b16 %v3094, %v3092
        %v3147 = vpack.c.b16 %v3095, %v3093
        %v3148 = vpack.c.b16 %v3098, %v3096
        %v3149 = vpack.c.b16 %v3099, %v3097
        %v3150 = vpack.c.b16 %v3102, %v3100
        %v3151 = vpack.c.b16 %v3103, %v3101
        %v3152 = vpack.c.b16 %v3106, %v3104
        %v3153 = vpack.c.b16 %v3107, %v3105
        %v3154 = vpack.c.b16 %v3110, %v3108
        %v3155 = vpack.c.b16 %v3111, %v3109
        %v3156 = vpack.c.b16 %v3114, %v3112
        %v3157 = vpack.c.b16 %v3115, %v3113
        %v3158 = vpack.c.b16 %v3118, %v3116
        %v3159 = vpack.c.b16 %v3119, %v3117
        %v3160 = vpack.c.b16 %v3122, %v3120
        %v3161 = vpack.c.b16 %v3123, %v3121
        %v3162 = vpack.c.b16 %v3126, %v3124
        %v3163 = vpack.c.b16 %v3127, %v3125
        %v3164 = vpack.c.b16 %v3130, %v3128
        %v3165 = vpack.c.b16 %v3131, %v3129
        %v3166 = vpack.c.b16 %v3134, %v3132
        %v3167 = vpack.c.b16 %v3135, %v3133
        %3200 = vmatprep.subr.bf16.mxu0 %v3137
        %3201 = vmatpush1.bf16.msra.mxu0 %v3136
        %3202 = vmatprep.subr.bf16.mxu0 %v3139
        %3203 = vmatpush1.bf16.msra.mxu0 %v3138
        %3204 = vmatprep.subr.bf16.mxu0 %v3141
        %3205 = vmatpush1.bf16.msra.mxu0 %v3140
        %3206 = vmatprep.subr.bf16.mxu0 %v3143
        %3207 = vmatpush1.bf16.msra.mxu0 %v3142
        %3208 = vmatprep.subr.bf16.mxu0 %v3145
        %3209 = vmatpush1.bf16.msra.mxu0 %v3144
        %3210 = vmatprep.subr.bf16.mxu0 %v3147
        %3211 = vmatpush1.bf16.msra.mxu0 %v3146
        %3212 = vmatprep.subr.bf16.mxu0 %v3149
        %3213 = vmatpush1.bf16.msra.mxu0 %v3148
        %3214 = vmatprep.subr.bf16.mxu0 %v3151
        %3215 = vmatpush1.bf16.msra.mxu0 %v3150
        %3216 = vmatprep.subr.bf16.mxu0 %v3153
        %3217 = vmatpush1.bf16.msra.mxu0 %v3152
        %3218 = vmatprep.subr.bf16.mxu0 %v3155
        %3219 = vmatpush1.bf16.msra.mxu0 %v3154
        %3220 = vmatprep.subr.bf16.mxu0 %v3157
        %3221 = vmatpush1.bf16.msra.mxu0 %v3156
        %3222 = vmatprep.subr.bf16.mxu0 %v3159
        %3223 = vmatpush1.bf16.msra.mxu0 %v3158
        %3224 = vmatprep.subr.bf16.mxu0 %v3161
        %3225 = vmatpush1.bf16.msra.mxu0 %v3160
        %3226 = vmatprep.subr.bf16.mxu0 %v3163
        %3227 = vmatpush1.bf16.msra.mxu0 %v3162
        %3228 = vmatprep.subr.bf16.mxu0 %v3165
        %3229 = vmatpush1.bf16.msra.mxu0 %v3164
        %3230 = vmatprep.subr.bf16.mxu0 %v3167
        %3231 = vmatpush1.bf16.msra.mxu0 %v3166
        %3232 = vmatprep.mubr.bf16.mxu0 %v3009
        %3233 = vmatmul.mubr.bf16.gmra.mrb[0].mxu0 %v3008
        %v3234 = vpop.f32.mrb[0].mxu0
        %v3235 = vadd.f32 0.0, %v3234
        %v3236 = vpop.f32.mrb[0].mxu0
        %v3237 = vadd.f32 0.0, %v3236
        %v3238 = vpop.f32.mrb[0].mxu0
        %v3239 = vadd.f32 0.0, %v3238
        %v3240 = vpop.f32.mrb[0].mxu0
        %v3241 = vadd.f32 0.0, %v3240
        %3242 = vmatprep.mubr.bf16.mxu0 %v3011
        %3243 = vmatmul.mubr.bf16.gmra.mrb[0].mxu0 %v3010
        %v3244 = vpop.f32.mrb[0].mxu0
        %v3245 = vadd.f32 0.0, %v3244
        %v3246 = vpop.f32.mrb[0].mxu0
        %v3247 = vadd.f32 0.0, %v3246
        %v3248 = vpop.f32.mrb[0].mxu0
        %v3249 = vadd.f32 0.0, %v3248
        %v3250 = vpop.f32.mrb[0].mxu0
        %v3251 = vadd.f32 0.0, %v3250
        %3252 = vmatprep.mubr.bf16.mxu0 %v3013
        %3253 = vmatmul.mubr.bf16.gmra.mrb[0].mxu0 %v3012
        %v3254 = vpop.f32.mrb[0].mxu0
        %v3255 = vadd.f32 0.0, %v3254
        %v3256 = vpop.f32.mrb[0].mxu0
        %v3257 = vadd.f32 0.0, %v3256
        %v3258 = vpop.f32.mrb[0].mxu0
        %v3259 = vadd.f32 0.0, %v3258
        %v3260 = vpop.f32.mrb[0].mxu0
        %v3261 = vadd.f32 0.0, %v3260
        %3262 = vmatprep.mubr.bf16.mxu0 %v3015
        %3263 = vmatmul.mubr.bf16.gmra.mrb[0].mxu0 %v3014
        %v3264 = vpop.f32.mrb[0].mxu0
        %v3265 = vadd.f32 0.0, %v3264
        %v3266 = vpop.f32.mrb[0].mxu0
        %v3267 = vadd.f32 0.0, %v3266
        %v3268 = vpop.f32.mrb[0].mxu0
        %v3269 = vadd.f32 0.0, %v3268
        %v3270 = vpop.f32.mrb[0].mxu0
        %v3271 = vadd.f32 0.0, %v3270
        %3272 = vmatprep.mubr.bf16.mxu0 %v3017
        %3273 = vmatmul.mubr.bf16.gmra.mrb[0].mxu0 %v3016
        %v3274 = vpop.f32.mrb[0].mxu0
        %v3275 = vadd.f32 0.0, %v3274
        %v3276 = vpop.f32.mrb[0].mxu0
        %v3277 = vadd.f32 0.0, %v3276
        %v3278 = vpop.f32.mrb[0].mxu0
        %v3279 = vadd.f32 0.0, %v3278
        %v3280 = vpop.f32.mrb[0].mxu0
        %v3281 = vadd.f32 0.0, %v3280
        %3282 = vmatprep.mubr.bf16.mxu0 %v3019
        %3283 = vmatmul.mubr.bf16.gmra.mrb[0].mxu0 %v3018
        %v3284 = vpop.f32.mrb[0].mxu0
        %v3285 = vadd.f32 0.0, %v3284
        %v3286 = vpop.f32.mrb[0].mxu0
        %v3287 = vadd.f32 0.0, %v3286
        %v3288 = vpop.f32.mrb[0].mxu0
        %v3289 = vadd.f32 0.0, %v3288
        %v3290 = vpop.f32.mrb[0].mxu0
        %v3291 = vadd.f32 0.0, %v3290
        %3292 = vmatprep.mubr.bf16.mxu0 %v3021
        %3293 = vmatmul.mubr.bf16.gmra.mrb[0].mxu0 %v3020
        %v3294 = vpop.f32.mrb[0].mxu0
        %v3295 = vadd.f32 0.0, %v3294
        %v3296 = vpop.f32.mrb[0].mxu0
        %v3297 = vadd.f32 0.0, %v3296
        %v3298 = vpop.f32.mrb[0].mxu0
        %v3299 = vadd.f32 0.0, %v3298
        %v3300 = vpop.f32.mrb[0].mxu0
        %v3301 = vadd.f32 0.0, %v3300
        %3302 = vmatprep.mubr.bf16.mxu0 %v3023
        %3303 = vmatmul.mubr.bf16.gmra.mrb[0].mxu0 %v3022
        %v3304 = vpop.f32.mrb[0].mxu0
        %v3305 = vadd.f32 0.0, %v3304
        %v3306 = vpop.f32.mrb[0].mxu0
        %v3307 = vadd.f32 0.0, %v3306
        %v3308 = vpop.f32.mrb[0].mxu0
        %v3309 = vadd.f32 0.0, %v3308
        %v3310 = vpop.f32.mrb[0].mxu0
        %v3311 = vadd.f32 0.0, %v3310
        %3312 = vdwg.mxu0
        %v3313 = vadd.f32 %v2655, %v3235
        %v3314 = vadd.f32 %v2656, %v3237
        %v3315 = vadd.f32 %v2657, %v3239
        %v3316 = vadd.f32 %v2658, %v3241
        %v3317 = vadd.f32 %v2659, %v3245
        %v3318 = vadd.f32 %v2660, %v3247
        %v3319 = vadd.f32 %v2661, %v3249
        %v3320 = vadd.f32 %v2662, %v3251
        %v3321 = vadd.f32 %v2663, %v3255
        %v3322 = vadd.f32 %v2664, %v3257
        %v3323 = vadd.f32 %v2665, %v3259
        %v3324 = vadd.f32 %v2666, %v3261
        %v3325 = vadd.f32 %v2667, %v3265
        %v3326 = vadd.f32 %v2668, %v3267
        %v3327 = vadd.f32 %v2669, %v3269
        %v3328 = vadd.f32 %v2670, %v3271
        %v3329 = vadd.f32 %v2671, %v3275
        %v3330 = vadd.f32 %v2672, %v3277
        %v3331 = vadd.f32 %v2673, %v3279
        %v3332 = vadd.f32 %v2674, %v3281
        %v3333 = vadd.f32 %v2675, %v3285
        %v3334 = vadd.f32 %v2676, %v3287
        %v3335 = vadd.f32 %v2677, %v3289
        %v3336 = vadd.f32 %v2678, %v3291
        %v3337 = vadd.f32 %v2679, %v3295
        %v3338 = vadd.f32 %v2680, %v3297
        %v3339 = vadd.f32 %v2681, %v3299
        %v3340 = vadd.f32 %v2682, %v3301
        %v3341 = vadd.f32 %v2683, %v3305
        %v3342 = vadd.f32 %v2684, %v3307
        %v3343 = vadd.f32 %v2685, %v3309
        %v3344 = vadd.f32 %v2686, %v3311
        %v3345 = vld [vmem:[%s620] sm:$0xee]
        %v3346 = vld [vmem:[%s620 + $0x10] sm:$0xee]
        %v3347 = vld [vmem:[%s620 + $0x20] sm:$0xee]
        %v3348 = vld [vmem:[%s620 + $0x30] sm:$0xee]
        %v3349 = vld [vmem:[%s620 + $0x40] sm:$0xee]
        %v3350 = vld [vmem:[%s620 + $0x50] sm:$0xee]
        %v3351 = vld [vmem:[%s620 + $0x60] sm:$0xee]
        %v3352 = vld [vmem:[%s620 + $0x70] sm:$0xee]
        %v3353 = vld [vmem:[%s620 + $0xa0] sm:$0xee]
        %v3354 = vld [vmem:[%s620 + $0xb0] sm:$0xee]
        %v3355 = vld [vmem:[%s620 + $0xc0] sm:$0xee]
        %v3356 = vld [vmem:[%s620 + $0xd0] sm:$0xee]
        %v3357 = vld [vmem:[%s620 + $0xe0] sm:$0xee]
        %v3358 = vld [vmem:[%s620 + $0xf0] sm:$0xee]
        %v3359 = vld [vmem:[%s620 + $0x100] sm:$0xee]
        %v3360 = vld [vmem:[%s620 + $0x110] sm:$0xee]
        %v3393 = vrot.slane %v3345, 5
        %v3394 = vrot.slane %v3393, 4
        %v3395 = vrot.slane %v2688, 5
        %v3396 = vsel %vm1786, %v3394, %v3395
        %v3397 = vrot.slane %v3346, 5
        %v3398 = vrot.slane %v3397, 4
        %v3399 = vrot.slane %v2690, 5
        %v3400 = vsel %vm1786, %v3398, %v3399
        %v3401 = vrot.slane %v3347, 5
        %v3402 = vrot.slane %v3401, 4
        %v3403 = vrot.slane %v2692, 5
        %v3404 = vsel %vm1786, %v3402, %v3403
        %v3405 = vrot.slane %v3348, 5
        %v3406 = vrot.slane %v3405, 4
        %v3407 = vrot.slane %v2694, 5
        %v3408 = vsel %vm1786, %v3406, %v3407
        %v3409 = vrot.slane %v3349, 5
        %v3410 = vrot.slane %v3409, 4
        %v3411 = vrot.slane %v2696, 5
        %v3412 = vsel %vm1786, %v3410, %v3411
        %v3413 = vrot.slane %v3350, 5
        %v3414 = vrot.slane %v3413, 4
        %v3415 = vrot.slane %v2698, 5
        %v3416 = vsel %vm1786, %v3414, %v3415
        %v3417 = vrot.slane %v3351, 5
        %v3418 = vrot.slane %v3417, 4
        %v3419 = vrot.slane %v2700, 5
        %v3420 = vsel %vm1786, %v3418, %v3419
        %v3421 = vrot.slane %v3352, 5
        %v3422 = vrot.slane %v3421, 4
        %v3423 = vrot.slane %v2702, 5
        %v3424 = vsel %vm1786, %v3422, %v3423
        %v3425 = vrot.slane %v3353, 5
        %v3426 = vrot.slane %v3425, 4
        %v3427 = vrot.slane %v2704, 5
        %v3428 = vsel %vm1786, %v3426, %v3427
        %v3429 = vrot.slane %v3354, 5
        %v3430 = vrot.slane %v3429, 4
        %v3431 = vrot.slane %v2706, 5
        %v3432 = vsel %vm1786, %v3430, %v3431
        %v3433 = vrot.slane %v3355, 5
        %v3434 = vrot.slane %v3433, 4
        %v3435 = vrot.slane %v2708, 5
        %v3436 = vsel %vm1786, %v3434, %v3435
        %v3437 = vrot.slane %v3356, 5
        %v3438 = vrot.slane %v3437, 4
        %v3439 = vrot.slane %v2710, 5
        %v3440 = vsel %vm1786, %v3438, %v3439
        %v3441 = vrot.slane %v3357, 5
        %v3442 = vrot.slane %v3441, 4
        %v3443 = vrot.slane %v2712, 5
        %v3444 = vsel %vm1786, %v3442, %v3443
        %v3445 = vrot.slane %v3358, 5
        %v3446 = vrot.slane %v3445, 4
        %v3447 = vrot.slane %v2714, 5
        %v3448 = vsel %vm1786, %v3446, %v3447
        %v3449 = vrot.slane %v3359, 5
        %v3450 = vrot.slane %v3449, 4
        %v3451 = vrot.slane %v2716, 5
        %v3452 = vsel %vm1786, %v3450, %v3451
        %v3453 = vrot.slane %v3360, 5
        %v3454 = vrot.slane %v3453, 4
        %v3455 = vrot.slane %v2718, 5
        %v3456 = vsel %vm1786, %v3454, %v3455
        %s3457 = scalar_lea.vmem %s1, 1280
        %v3458 = vld [vmem:[%s3457] sm:$0xff]
        %v3459 = vld [vmem:[%s3457 + $0x8] sm:$0xff]
        %v3460 = vld [vmem:[%s3457 + $0x10] sm:$0xff]
        %v3461 = vld [vmem:[%s3457 + $0x18] sm:$0xff]
        %v3462 = vld [vmem:[%s3457 + $0x20] sm:$0xff]
        %v3463 = vld [vmem:[%s3457 + $0x28] sm:$0xff]
        %v3464 = vld [vmem:[%s3457 + $0x30] sm:$0xff]
        %v3465 = vld [vmem:[%s3457 + $0x38] sm:$0xff]
        %v3466 = vld [vmem:[%s3457 + $0x40] sm:$0xff]
        %v3467 = vld [vmem:[%s3457 + $0x48] sm:$0xff]
        %v3468 = vld [vmem:[%s3457 + $0x50] sm:$0xff]
        %v3469 = vld [vmem:[%s3457 + $0x58] sm:$0xff]
        %v3470 = vld [vmem:[%s3457 + $0x60] sm:$0xff]
        %v3471 = vld [vmem:[%s3457 + $0x68] sm:$0xff]
        %v3472 = vld [vmem:[%s3457 + $0x70] sm:$0xff]
        %v3473 = vld [vmem:[%s3457 + $0x78] sm:$0xff]
        %v3474 = vld [vmem:[%s3457 + $0x80] sm:$0xff]
        %v3475 = vld [vmem:[%s3457 + $0x88] sm:$0xff]
        %v3476 = vld [vmem:[%s3457 + $0x90] sm:$0xff]
        %v3477 = vld [vmem:[%s3457 + $0x98] sm:$0xff]
        %v3478 = vld [vmem:[%s3457 + $0xa0] sm:$0xff]
        %v3479 = vld [vmem:[%s3457 + $0xa8] sm:$0xff]
        %v3480 = vld [vmem:[%s3457 + $0xb0] sm:$0xff]
        %v3481 = vld [vmem:[%s3457 + $0xb8] sm:$0xff]
        %v3482 = vld [vmem:[%s3457 + $0xc0] sm:$0xff]
        %v3483 = vld [vmem:[%s3457 + $0xc8] sm:$0xff]
        %v3484 = vld [vmem:[%s3457 + $0xd0] sm:$0xff]
        %v3485 = vld [vmem:[%s3457 + $0xd8] sm:$0xff]
        %v3486 = vld [vmem:[%s3457 + $0xe0] sm:$0xff]
        %v3487 = vld [vmem:[%s3457 + $0xe8] sm:$0xff]
        %v3488 = vld [vmem:[%s3457 + $0xf0] sm:$0xff]
        %v3489 = vld [vmem:[%s3457 + $0xf8] sm:$0xff]
        %v3490 = vunpack.c.l.b16 %v3396
        %v3491 = vunpack.c.h.b16 %v3396
        %v3492 = vunpack.c.l.b16 %v3400
        %v3493 = vunpack.c.h.b16 %v3400
        %v3494 = vunpack.c.l.b16 %v3404
        %v3495 = vunpack.c.h.b16 %v3404
        %v3496 = vunpack.c.l.b16 %v3408
        %v3497 = vunpack.c.h.b16 %v3408
        %v3498 = vunpack.c.l.b16 %v3412
        %v3499 = vunpack.c.h.b16 %v3412
        %v3500 = vunpack.c.l.b16 %v3416
        %v3501 = vunpack.c.h.b16 %v3416
        %v3502 = vunpack.c.l.b16 %v3420
        %v3503 = vunpack.c.h.b16 %v3420
        %v3504 = vunpack.c.l.b16 %v3424
        %v3505 = vunpack.c.h.b16 %v3424
        %v3506 = vunpack.c.l.b16 %v3428
        %v3507 = vunpack.c.h.b16 %v3428
        %v3508 = vunpack.c.l.b16 %v3432
        %v3509 = vunpack.c.h.b16 %v3432
        %v3510 = vunpack.c.l.b16 %v3436
        %v3511 = vunpack.c.h.b16 %v3436
        %v3512 = vunpack.c.l.b16 %v3440
        %v3513 = vunpack.c.h.b16 %v3440
        %v3514 = vunpack.c.l.b16 %v3444
        %v3515 = vunpack.c.h.b16 %v3444
        %v3516 = vunpack.c.l.b16 %v3448
        %v3517 = vunpack.c.h.b16 %v3448
        %v3518 = vunpack.c.l.b16 %v3452
        %v3519 = vunpack.c.h.b16 %v3452
        %v3520 = vunpack.c.l.b16 %v3456
        %v3521 = vunpack.c.h.b16 %v3456
        %v3522 = vpack.c.b16 %v3492, %v3490
        %v3523 = vpack.c.b16 %v3493, %v3491
        %v3524 = vpack.c.b16 %v3496, %v3494
        %v3525 = vpack.c.b16 %v3497, %v3495
        %v3526 = vpack.c.b16 %v3500, %v3498
        %v3527 = vpack.c.b16 %v3501, %v3499
        %v3528 = vpack.c.b16 %v3504, %v3502
        %v3529 = vpack.c.b16 %v3505, %v3503
        %v3530 = vpack.c.b16 %v3508, %v3506
        %v3531 = vpack.c.b16 %v3509, %v3507
        %v3532 = vpack.c.b16 %v3512, %v3510
        %v3533 = vpack.c.b16 %v3513, %v3511
        %v3534 = vpack.c.b16 %v3516, %v3514
        %v3535 = vpack.c.b16 %v3517, %v3515
        %v3536 = vpack.c.b16 %v3520, %v3518
        %v3537 = vpack.c.b16 %v3521, %v3519
        %v3586 = vunpack.c.l.b16 %v3458
        %v3587 = vunpack.c.h.b16 %v3458
        %v3588 = vunpack.c.l.b16 %v3459
        %v3589 = vunpack.c.h.b16 %v3459
        %v3590 = vunpack.c.l.b16 %v3460
        %v3591 = vunpack.c.h.b16 %v3460
        %v3592 = vunpack.c.l.b16 %v3461
        %v3593 = vunpack.c.h.b16 %v3461
        %v3594 = vunpack.c.l.b16 %v3462
        %v3595 = vunpack.c.h.b16 %v3462
        %v3596 = vunpack.c.l.b16 %v3463
        %v3597 = vunpack.c.h.b16 %v3463
        %v3598 = vunpack.c.l.b16 %v3464
        %v3599 = vunpack.c.h.b16 %v3464
        %v3600 = vunpack.c.l.b16 %v3465
        %v3601 = vunpack.c.h.b16 %v3465
        %v3602 = vunpack.c.l.b16 %v3466
        %v3603 = vunpack.c.h.b16 %v3466
        %v3604 = vunpack.c.l.b16 %v3467
        %v3605 = vunpack.c.h.b16 %v3467
        %v3606 = vunpack.c.l.b16 %v3468
        %v3607 = vunpack.c.h.b16 %v3468
        %v3608 = vunpack.c.l.b16 %v3469
        %v3609 = vunpack.c.h.b16 %v3469
        %v3610 = vunpack.c.l.b16 %v3470
        %v3611 = vunpack.c.h.b16 %v3470
        %v3612 = vunpack.c.l.b16 %v3471
        %v3613 = vunpack.c.h.b16 %v3471
        %v3614 = vunpack.c.l.b16 %v3472
        %v3615 = vunpack.c.h.b16 %v3472
        %v3616 = vunpack.c.l.b16 %v3473
        %v3617 = vunpack.c.h.b16 %v3473
        %v3618 = vunpack.c.l.b16 %v3474
        %v3619 = vunpack.c.h.b16 %v3474
        %v3620 = vunpack.c.l.b16 %v3475
        %v3621 = vunpack.c.h.b16 %v3475
        %v3622 = vunpack.c.l.b16 %v3476
        %v3623 = vunpack.c.h.b16 %v3476
        %v3624 = vunpack.c.l.b16 %v3477
        %v3625 = vunpack.c.h.b16 %v3477
        %v3626 = vunpack.c.l.b16 %v3478
        %v3627 = vunpack.c.h.b16 %v3478
        %v3628 = vunpack.c.l.b16 %v3479
        %v3629 = vunpack.c.h.b16 %v3479
        %v3630 = vunpack.c.l.b16 %v3480
        %v3631 = vunpack.c.h.b16 %v3480
        %v3632 = vunpack.c.l.b16 %v3481
        %v3633 = vunpack.c.h.b16 %v3481
        %v3634 = vunpack.c.l.b16 %v3482
        %v3635 = vunpack.c.h.b16 %v3482
        %v3636 = vunpack.c.l.b16 %v3483
        %v3637 = vunpack.c.h.b16 %v3483
        %v3638 = vunpack.c.l.b16 %v3484
        %v3639 = vunpack.c.h.b16 %v3484
        %v3640 = vunpack.c.l.b16 %v3485
        %v3641 = vunpack.c.h.b16 %v3485
        %v3642 = vunpack.c.l.b16 %v3486
        %v3643 = vunpack.c.h.b16 %v3486
        %v3644 = vunpack.c.l.b16 %v3487
        %v3645 = vunpack.c.h.b16 %v3487
        %v3646 = vunpack.c.l.b16 %v3488
        %v3647 = vunpack.c.h.b16 %v3488
        %v3648 = vunpack.c.l.b16 %v3489
        %v3649 = vunpack.c.h.b16 %v3489
        %v3650 = vpack.c.b16 %v3588, %v3586
        %v3651 = vpack.c.b16 %v3589, %v3587
        %v3652 = vpack.c.b16 %v3592, %v3590
        %v3653 = vpack.c.b16 %v3593, %v3591
        %v3654 = vpack.c.b16 %v3596, %v3594
        %v3655 = vpack.c.b16 %v3597, %v3595
        %v3656 = vpack.c.b16 %v3600, %v3598
        %v3657 = vpack.c.b16 %v3601, %v3599
        %v3658 = vpack.c.b16 %v3604, %v3602
        %v3659 = vpack.c.b16 %v3605, %v3603
        %v3660 = vpack.c.b16 %v3608, %v3606
        %v3661 = vpack.c.b16 %v3609, %v3607
        %v3662 = vpack.c.b16 %v3612, %v3610
        %v3663 = vpack.c.b16 %v3613, %v3611
        %v3664 = vpack.c.b16 %v3616, %v3614
        %v3665 = vpack.c.b16 %v3617, %v3615
        %v3666 = vpack.c.b16 %v3620, %v3618
        %v3667 = vpack.c.b16 %v3621, %v3619
        %v3668 = vpack.c.b16 %v3624, %v3622
        %v3669 = vpack.c.b16 %v3625, %v3623
        %v3670 = vpack.c.b16 %v3628, %v3626
        %v3671 = vpack.c.b16 %v3629, %v3627
        %v3672 = vpack.c.b16 %v3632, %v3630
        %v3673 = vpack.c.b16 %v3633, %v3631
        %v3674 = vpack.c.b16 %v3636, %v3634
        %v3675 = vpack.c.b16 %v3637, %v3635
        %v3676 = vpack.c.b16 %v3640, %v3638
        %v3677 = vpack.c.b16 %v3641, %v3639
        %v3678 = vpack.c.b16 %v3644, %v3642
        %v3679 = vpack.c.b16 %v3645, %v3643
        %v3680 = vpack.c.b16 %v3648, %v3646
        %v3681 = vpack.c.b16 %v3649, %v3647
        %3714 = vmatprep.subr.bf16.mxu0 %v3651
        %3715 = vmatpush1.bf16.msra.mxu0 %v3650
        %3716 = vmatprep.subr.bf16.mxu0 %v3653
        %3717 = vmatpush1.bf16.msra.mxu0 %v3652
        %3718 = vmatprep.subr.bf16.mxu0 %v3655
        %3719 = vmatpush1.bf16.msra.mxu0 %v3654
        %3720 = vmatprep.subr.bf16.mxu0 %v3657
        %3721 = vmatpush1.bf16.msra.mxu0 %v3656
        %3722 = vmatprep.subr.bf16.mxu0 %v3659
        %3723 = vmatpush1.bf16.msra.mxu0 %v3658
        %3724 = vmatprep.subr.bf16.mxu0 %v3661
        %3725 = vmatpush1.bf16.msra.mxu0 %v3660
        %3726 = vmatprep.subr.bf16.mxu0 %v3663
        %3727 = vmatpush1.bf16.msra.mxu0 %v3662
        %3728 = vmatprep.subr.bf16.mxu0 %v3665
        %3729 = vmatpush1.bf16.msra.mxu0 %v3664
        %3730 = vmatprep.subr.bf16.mxu0 %v3667
        %3731 = vmatpush1.bf16.msra.mxu0 %v3666
        %3732 = vmatprep.subr.bf16.mxu0 %v3669
        %3733 = vmatpush1.bf16.msra.mxu0 %v3668
        %3734 = vmatprep.subr.bf16.mxu0 %v3671
        %3735 = vmatpush1.bf16.msra.mxu0 %v3670
        %3736 = vmatprep.subr.bf16.mxu0 %v3673
        %3737 = vmatpush1.bf16.msra.mxu0 %v3672
        %3738 = vmatprep.subr.bf16.mxu0 %v3675
        %3739 = vmatpush1.bf16.msra.mxu0 %v3674
        %3740 = vmatprep.subr.bf16.mxu0 %v3677
        %3741 = vmatpush1.bf16.msra.mxu0 %v3676
        %3742 = vmatprep.subr.bf16.mxu0 %v3679
        %3743 = vmatpush1.bf16.msra.mxu0 %v3678
        %3744 = vmatprep.subr.bf16.mxu0 %v3681
        %3745 = vmatpush1.bf16.msra.mxu0 %v3680
        %3746 = vmatprep.mubr.bf16.mxu0 %v3523
        %3747 = vmatmul.mubr.bf16.gmra.mrb[0].mxu0 %v3522
        %v3748 = vpop.f32.mrb[0].mxu0
        %v3749 = vadd.f32 0.0, %v3748
        %v3750 = vpop.f32.mrb[0].mxu0
        %v3751 = vadd.f32 0.0, %v3750
        %v3752 = vpop.f32.mrb[0].mxu0
        %v3753 = vadd.f32 0.0, %v3752
        %v3754 = vpop.f32.mrb[0].mxu0
        %v3755 = vadd.f32 0.0, %v3754
        %3756 = vmatprep.mubr.bf16.mxu0 %v3525
        %3757 = vmatmul.mubr.bf16.gmra.mrb[0].mxu0 %v3524
        %v3758 = vpop.f32.mrb[0].mxu0
        %v3759 = vadd.f32 0.0, %v3758
        %v3760 = vpop.f32.mrb[0].mxu0
        %v3761 = vadd.f32 0.0, %v3760
        %v3762 = vpop.f32.mrb[0].mxu0
        %v3763 = vadd.f32 0.0, %v3762
        %v3764 = vpop.f32.mrb[0].mxu0
        %v3765 = vadd.f32 0.0, %v3764
        %3766 = vmatprep.mubr.bf16.mxu0 %v3527
        %3767 = vmatmul.mubr.bf16.gmra.mrb[0].mxu0 %v3526
        %v3768 = vpop.f32.mrb[0].mxu0
        %v3769 = vadd.f32 0.0, %v3768
        %v3770 = vpop.f32.mrb[0].mxu0
        %v3771 = vadd.f32 0.0, %v3770
        %v3772 = vpop.f32.mrb[0].mxu0
        %v3773 = vadd.f32 0.0, %v3772
        %v3774 = vpop.f32.mrb[0].mxu0
        %v3775 = vadd.f32 0.0, %v3774
        %3776 = vmatprep.mubr.bf16.mxu0 %v3529
        %3777 = vmatmul.mubr.bf16.gmra.mrb[0].mxu0 %v3528
        %v3778 = vpop.f32.mrb[0].mxu0
        %v3779 = vadd.f32 0.0, %v3778
        %v3780 = vpop.f32.mrb[0].mxu0
        %v3781 = vadd.f32 0.0, %v3780
        %v3782 = vpop.f32.mrb[0].mxu0
        %v3783 = vadd.f32 0.0, %v3782
        %v3784 = vpop.f32.mrb[0].mxu0
        %v3785 = vadd.f32 0.0, %v3784
        %3786 = vmatprep.mubr.bf16.mxu0 %v3531
        %3787 = vmatmul.mubr.bf16.gmra.mrb[0].mxu0 %v3530
        %v3788 = vpop.f32.mrb[0].mxu0
        %v3789 = vadd.f32 0.0, %v3788
        %v3790 = vpop.f32.mrb[0].mxu0
        %v3791 = vadd.f32 0.0, %v3790
        %v3792 = vpop.f32.mrb[0].mxu0
        %v3793 = vadd.f32 0.0, %v3792
        %v3794 = vpop.f32.mrb[0].mxu0
        %v3795 = vadd.f32 0.0, %v3794
        %3796 = vmatprep.mubr.bf16.mxu0 %v3533
        %3797 = vmatmul.mubr.bf16.gmra.mrb[0].mxu0 %v3532
        %v3798 = vpop.f32.mrb[0].mxu0
        %v3799 = vadd.f32 0.0, %v3798
        %v3800 = vpop.f32.mrb[0].mxu0
        %v3801 = vadd.f32 0.0, %v3800
        %v3802 = vpop.f32.mrb[0].mxu0
        %v3803 = vadd.f32 0.0, %v3802
        %v3804 = vpop.f32.mrb[0].mxu0
        %v3805 = vadd.f32 0.0, %v3804
        %3806 = vmatprep.mubr.bf16.mxu0 %v3535
        %3807 = vmatmul.mubr.bf16.gmra.mrb[0].mxu0 %v3534
        %v3808 = vpop.f32.mrb[0].mxu0
        %v3809 = vadd.f32 0.0, %v3808
        %v3810 = vpop.f32.mrb[0].mxu0
        %v3811 = vadd.f32 0.0, %v3810
        %v3812 = vpop.f32.mrb[0].mxu0
        %v3813 = vadd.f32 0.0, %v3812
        %v3814 = vpop.f32.mrb[0].mxu0
        %v3815 = vadd.f32 0.0, %v3814
        %3816 = vmatprep.mubr.bf16.mxu0 %v3537
        %3817 = vmatmul.mubr.bf16.gmra.mrb[0].mxu0 %v3536
        %v3818 = vpop.f32.mrb[0].mxu0
        %v3819 = vadd.f32 0.0, %v3818
        %v3820 = vpop.f32.mrb[0].mxu0
        %v3821 = vadd.f32 0.0, %v3820
        %v3822 = vpop.f32.mrb[0].mxu0
        %v3823 = vadd.f32 0.0, %v3822
        %v3824 = vpop.f32.mrb[0].mxu0
        %v3825 = vadd.f32 0.0, %v3824
        %3826 = vdwg.mxu0
        %v3827 = vadd.f32 %v3313, %v3749
        %v3828 = vadd.f32 %v3314, %v3751
        %v3829 = vadd.f32 %v3315, %v3753
        %v3830 = vadd.f32 %v3316, %v3755
        %v3831 = vadd.f32 %v3317, %v3759
        %v3832 = vadd.f32 %v3318, %v3761
        %v3833 = vadd.f32 %v3319, %v3763
        %v3834 = vadd.f32 %v3320, %v3765
        %v3835 = vadd.f32 %v3321, %v3769
        %v3836 = vadd.f32 %v3322, %v3771
        %v3837 = vadd.f32 %v3323, %v3773
        %v3838 = vadd.f32 %v3324, %v3775
        %v3839 = vadd.f32 %v3325, %v3779
        %v3840 = vadd.f32 %v3326, %v3781
        %v3841 = vadd.f32 %v3327, %v3783
        %v3842 = vadd.f32 %v3328, %v3785
        %v3843 = vadd.f32 %v3329, %v3789
        %v3844 = vadd.f32 %v3330, %v3791
        %v3845 = vadd.f32 %v3331, %v3793
        %v3846 = vadd.f32 %v3332, %v3795
        %v3847 = vadd.f32 %v3333, %v3799
        %v3848 = vadd.f32 %v3334, %v3801
        %v3849 = vadd.f32 %v3335, %v3803
        %v3850 = vadd.f32 %v3336, %v3805
        %v3851 = vadd.f32 %v3337, %v3809
        %v3852 = vadd.f32 %v3338, %v3811
        %v3853 = vadd.f32 %v3339, %v3813
        %v3854 = vadd.f32 %v3340, %v3815
        %v3855 = vadd.f32 %v3341, %v3819
        %v3856 = vadd.f32 %v3342, %v3821
        %v3857 = vadd.f32 %v3343, %v3823
        %v3858 = vadd.f32 %v3344, %v3825
        %s3859 = scalar_lea.vmem [#allocation2], 32
        %v3860 = vld [vmem:[%s3859] sm:$0xff]
        %v3861 = vld [vmem:[%s3859 + $0x10] sm:$0xff]
        %v3862 = vld [vmem:[%s3859 + $0x20] sm:$0xff]
        %v3863 = vld [vmem:[%s3859 + $0x30] sm:$0xff]
        %v3864 = vld [vmem:[%s3859 + $0x40] sm:$0xff]
        %v3865 = vld [vmem:[%s3859 + $0x50] sm:$0xff]
        %v3866 = vld [vmem:[%s3859 + $0x60] sm:$0xff]
        %v3867 = vld [vmem:[%s3859 + $0x70] sm:$0xff]
        %v3868 = vld [vmem:[%s3859 + $0xa0] sm:$0xff]
        %v3869 = vld [vmem:[%s3859 + $0xb0] sm:$0xff]
        %v3870 = vld [vmem:[%s3859 + $0xc0] sm:$0xff]
        %v3871 = vld [vmem:[%s3859 + $0xd0] sm:$0xff]
        %v3872 = vld [vmem:[%s3859 + $0xe0] sm:$0xff]
        %v3873 = vld [vmem:[%s3859 + $0xf0] sm:$0xff]
        %v3874 = vld [vmem:[%s3859 + $0x100] sm:$0xff]
        %v3875 = vld [vmem:[%s3859 + $0x110] sm:$0xff]
        %s3876 = scalar_lea.vmem %s1, 1536
        %v3877 = vld [vmem:[%s3876] sm:$0xff]
        %v3878 = vld [vmem:[%s3876 + $0x8] sm:$0xff]
        %v3879 = vld [vmem:[%s3876 + $0x10] sm:$0xff]
        %v3880 = vld [vmem:[%s3876 + $0x18] sm:$0xff]
        %v3881 = vld [vmem:[%s3876 + $0x20] sm:$0xff]
        %v3882 = vld [vmem:[%s3876 + $0x28] sm:$0xff]
        %v3883 = vld [vmem:[%s3876 + $0x30] sm:$0xff]
        %v3884 = vld [vmem:[%s3876 + $0x38] sm:$0xff]
        %v3885 = vld [vmem:[%s3876 + $0x40] sm:$0xff]
        %v3886 = vld [vmem:[%s3876 + $0x48] sm:$0xff]
        %v3887 = vld [vmem:[%s3876 + $0x50] sm:$0xff]
        %v3888 = vld [vmem:[%s3876 + $0x58] sm:$0xff]
        %v3889 = vld [vmem:[%s3876 + $0x60] sm:$0xff]
        %v3890 = vld [vmem:[%s3876 + $0x68] sm:$0xff]
        %v3891 = vld [vmem:[%s3876 + $0x70] sm:$0xff]
        %v3892 = vld [vmem:[%s3876 + $0x78] sm:$0xff]
        %v3893 = vld [vmem:[%s3876 + $0x80] sm:$0xff]
        %v3894 = vld [vmem:[%s3876 + $0x88] sm:$0xff]
        %v3895 = vld [vmem:[%s3876 + $0x90] sm:$0xff]
        %v3896 = vld [vmem:[%s3876 + $0x98] sm:$0xff]
        %v3897 = vld [vmem:[%s3876 + $0xa0] sm:$0xff]
        %v3898 = vld [vmem:[%s3876 + $0xa8] sm:$0xff]
        %v3899 = vld [vmem:[%s3876 + $0xb0] sm:$0xff]
        %v3900 = vld [vmem:[%s3876 + $0xb8] sm:$0xff]
        %v3901 = vld [vmem:[%s3876 + $0xc0] sm:$0xff]
        %v3902 = vld [vmem:[%s3876 + $0xc8] sm:$0xff]
        %v3903 = vld [vmem:[%s3876 + $0xd0] sm:$0xff]
        %v3904 = vld [vmem:[%s3876 + $0xd8] sm:$0xff]
        %v3905 = vld [vmem:[%s3876 + $0xe0] sm:$0xff]
        %v3906 = vld [vmem:[%s3876 + $0xe8] sm:$0xff]
        %v3907 = vld [vmem:[%s3876 + $0xf0] sm:$0xff]
        %v3908 = vld [vmem:[%s3876 + $0xf8] sm:$0xff]
        %v3925 = vunpack.c.l.b16 %v3860
        %v3926 = vunpack.c.h.b16 %v3860
        %v3927 = vunpack.c.l.b16 %v3861
        %v3928 = vunpack.c.h.b16 %v3861
        %v3929 = vunpack.c.l.b16 %v3862
        %v3930 = vunpack.c.h.b16 %v3862
        %v3931 = vunpack.c.l.b16 %v3863
        %v3932 = vunpack.c.h.b16 %v3863
        %v3933 = vunpack.c.l.b16 %v3864
        %v3934 = vunpack.c.h.b16 %v3864
        %v3935 = vunpack.c.l.b16 %v3865
        %v3936 = vunpack.c.h.b16 %v3865
        %v3937 = vunpack.c.l.b16 %v3866
        %v3938 = vunpack.c.h.b16 %v3866
        %v3939 = vunpack.c.l.b16 %v3867
        %v3940 = vunpack.c.h.b16 %v3867
        %v3941 = vunpack.c.l.b16 %v3868
        %v3942 = vunpack.c.h.b16 %v3868
        %v3943 = vunpack.c.l.b16 %v3869
        %v3944 = vunpack.c.h.b16 %v3869
        %v3945 = vunpack.c.l.b16 %v3870
        %v3946 = vunpack.c.h.b16 %v3870
        %v3947 = vunpack.c.l.b16 %v3871
        %v3948 = vunpack.c.h.b16 %v3871
        %v3949 = vunpack.c.l.b16 %v3872
        %v3950 = vunpack.c.h.b16 %v3872
        %v3951 = vunpack.c.l.b16 %v3873
        %v3952 = vunpack.c.h.b16 %v3873
        %v3953 = vunpack.c.l.b16 %v3874
        %v3954 = vunpack.c.h.b16 %v3874
        %v3955 = vunpack.c.l.b16 %v3875
        %v3956 = vunpack.c.h.b16 %v3875
        %v3957 = vpack.c.b16 %v3927, %v3925
        %v3958 = vpack.c.b16 %v3928, %v3926
        %v3959 = vpack.c.b16 %v3931, %v3929
        %v3960 = vpack.c.b16 %v3932, %v3930
        %v3961 = vpack.c.b16 %v3935, %v3933
        %v3962 = vpack.c.b16 %v3936, %v3934
        %v3963 = vpack.c.b16 %v3939, %v3937
        %v3964 = vpack.c.b16 %v3940, %v3938
        %v3965 = vpack.c.b16 %v3943, %v3941
        %v3966 = vpack.c.b16 %v3944, %v3942
        %v3967 = vpack.c.b16 %v3947, %v3945
        %v3968 = vpack.c.b16 %v3948, %v3946
        %v3969 = vpack.c.b16 %v3951, %v3949
        %v3970 = vpack.c.b16 %v3952, %v3950
        %v3971 = vpack.c.b16 %v3955, %v3953
        %v3972 = vpack.c.b16 %v3956, %v3954
        %v4021 = vunpack.c.l.b16 %v3877
        %v4022 = vunpack.c.h.b16 %v3877
        %v4023 = vunpack.c.l.b16 %v3878
        %v4024 = vunpack.c.h.b16 %v3878
        %v4025 = vunpack.c.l.b16 %v3879
        %v4026 = vunpack.c.h.b16 %v3879
        %v4027 = vunpack.c.l.b16 %v3880
        %v4028 = vunpack.c.h.b16 %v3880
        %v4029 = vunpack.c.l.b16 %v3881
        %v4030 = vunpack.c.h.b16 %v3881
        %v4031 = vunpack.c.l.b16 %v3882
        %v4032 = vunpack.c.h.b16 %v3882
        %v4033 = vunpack.c.l.b16 %v3883
        %v4034 = vunpack.c.h.b16 %v3883
        %v4035 = vunpack.c.l.b16 %v3884
        %v4036 = vunpack.c.h.b16 %v3884
        %v4037 = vunpack.c.l.b16 %v3885
        %v4038 = vunpack.c.h.b16 %v3885
        %v4039 = vunpack.c.l.b16 %v3886
        %v4040 = vunpack.c.h.b16 %v3886
        %v4041 = vunpack.c.l.b16 %v3887
        %v4042 = vunpack.c.h.b16 %v3887
        %v4043 = vunpack.c.l.b16 %v3888
        %v4044 = vunpack.c.h.b16 %v3888
        %v4045 = vunpack.c.l.b16 %v3889
        %v4046 = vunpack.c.h.b16 %v3889
        %v4047 = vunpack.c.l.b16 %v3890
        %v4048 = vunpack.c.h.b16 %v3890
        %v4049 = vunpack.c.l.b16 %v3891
        %v4050 = vunpack.c.h.b16 %v3891
        %v4051 = vunpack.c.l.b16 %v3892
        %v4052 = vunpack.c.h.b16 %v3892
        %v4053 = vunpack.c.l.b16 %v3893
        %v4054 = vunpack.c.h.b16 %v3893
        %v4055 = vunpack.c.l.b16 %v3894
        %v4056 = vunpack.c.h.b16 %v3894
        %v4057 = vunpack.c.l.b16 %v3895
        %v4058 = vunpack.c.h.b16 %v3895
        %v4059 = vunpack.c.l.b16 %v3896
        %v4060 = vunpack.c.h.b16 %v3896
        %v4061 = vunpack.c.l.b16 %v3897
        %v4062 = vunpack.c.h.b16 %v3897
        %v4063 = vunpack.c.l.b16 %v3898
        %v4064 = vunpack.c.h.b16 %v3898
        %v4065 = vunpack.c.l.b16 %v3899
        %v4066 = vunpack.c.h.b16 %v3899
        %v4067 = vunpack.c.l.b16 %v3900
        %v4068 = vunpack.c.h.b16 %v3900
        %v4069 = vunpack.c.l.b16 %v3901
        %v4070 = vunpack.c.h.b16 %v3901
        %v4071 = vunpack.c.l.b16 %v3902
        %v4072 = vunpack.c.h.b16 %v3902
        %v4073 = vunpack.c.l.b16 %v3903
        %v4074 = vunpack.c.h.b16 %v3903
        %v4075 = vunpack.c.l.b16 %v3904
        %v4076 = vunpack.c.h.b16 %v3904
        %v4077 = vunpack.c.l.b16 %v3905
        %v4078 = vunpack.c.h.b16 %v3905
        %v4079 = vunpack.c.l.b16 %v3906
        %v4080 = vunpack.c.h.b16 %v3906
        %v4081 = vunpack.c.l.b16 %v3907
        %v4082 = vunpack.c.h.b16 %v3907
        %v4083 = vunpack.c.l.b16 %v3908
        %v4084 = vunpack.c.h.b16 %v3908
        %v4085 = vpack.c.b16 %v4023, %v4021
        %v4086 = vpack.c.b16 %v4024, %v4022
        %v4087 = vpack.c.b16 %v4027, %v4025
        %v4088 = vpack.c.b16 %v4028, %v4026
        %v4089 = vpack.c.b16 %v4031, %v4029
        %v4090 = vpack.c.b16 %v4032, %v4030
        %v4091 = vpack.c.b16 %v4035, %v4033
        %v4092 = vpack.c.b16 %v4036, %v4034
        %v4093 = vpack.c.b16 %v4039, %v4037
        %v4094 = vpack.c.b16 %v4040, %v4038
        %v4095 = vpack.c.b16 %v4043, %v4041
        %v4096 = vpack.c.b16 %v4044, %v4042
        %v4097 = vpack.c.b16 %v4047, %v4045
        %v4098 = vpack.c.b16 %v4048, %v4046
        %v4099 = vpack.c.b16 %v4051, %v4049
        %v4100 = vpack.c.b16 %v4052, %v4050
        %v4101 = vpack.c.b16 %v4055, %v4053
        %v4102 = vpack.c.b16 %v4056, %v4054
        %v4103 = vpack.c.b16 %v4059, %v4057
        %v4104 = vpack.c.b16 %v4060, %v4058
        %v4105 = vpack.c.b16 %v4063, %v4061
        %v4106 = vpack.c.b16 %v4064, %v4062
        %v4107 = vpack.c.b16 %v4067, %v4065
        %v4108 = vpack.c.b16 %v4068, %v4066
        %v4109 = vpack.c.b16 %v4071, %v4069
        %v4110 = vpack.c.b16 %v4072, %v4070
        %v4111 = vpack.c.b16 %v4075, %v4073
        %v4112 = vpack.c.b16 %v4076, %v4074
        %v4113 = vpack.c.b16 %v4079, %v4077
        %v4114 = vpack.c.b16 %v4080, %v4078
        %v4115 = vpack.c.b16 %v4083, %v4081
        %v4116 = vpack.c.b16 %v4084, %v4082
        %4149 = vmatprep.subr.bf16.mxu0 %v4086
        %4150 = vmatpush1.bf16.msra.mxu0 %v4085
        %4151 = vmatprep.subr.bf16.mxu0 %v4088
        %4152 = vmatpush1.bf16.msra.mxu0 %v4087
        %4153 = vmatprep.subr.bf16.mxu0 %v4090
        %4154 = vmatpush1.bf16.msra.mxu0 %v4089
        %4155 = vmatprep.subr.bf16.mxu0 %v4092
        %4156 = vmatpush1.bf16.msra.mxu0 %v4091
        %4157 = vmatprep.subr.bf16.mxu0 %v4094
        %4158 = vmatpush1.bf16.msra.mxu0 %v4093
        %4159 = vmatprep.subr.bf16.mxu0 %v4096
        %4160 = vmatpush1.bf16.msra.mxu0 %v4095
        %4161 = vmatprep.subr.bf16.mxu0 %v4098
        %4162 = vmatpush1.bf16.msra.mxu0 %v4097
        %4163 = vmatprep.subr.bf16.mxu0 %v4100
        %4164 = vmatpush1.bf16.msra.mxu0 %v4099
        %4165 = vmatprep.subr.bf16.mxu0 %v4102
        %4166 = vmatpush1.bf16.msra.mxu0 %v4101
        %4167 = vmatprep.subr.bf16.mxu0 %v4104
        %4168 = vmatpush1.bf16.msra.mxu0 %v4103
        %4169 = vmatprep.subr.bf16.mxu0 %v4106
        %4170 = vmatpush1.bf16.msra.mxu0 %v4105
        %4171 = vmatprep.subr.bf16.mxu0 %v4108
        %4172 = vmatpush1.bf16.msra.mxu0 %v4107
        %4173 = vmatprep.subr.bf16.mxu0 %v4110
        %4174 = vmatpush1.bf16.msra.mxu0 %v4109
        %4175 = vmatprep.subr.bf16.mxu0 %v4112
        %4176 = vmatpush1.bf16.msra.mxu0 %v4111
        %4177 = vmatprep.subr.bf16.mxu0 %v4114
        %4178 = vmatpush1.bf16.msra.mxu0 %v4113
        %4179 = vmatprep.subr.bf16.mxu0 %v4116
        %4180 = vmatpush1.bf16.msra.mxu0 %v4115
        %4181 = vmatprep.mubr.bf16.mxu0 %v3958
        %4182 = vmatmul.mubr.bf16.gmra.mrb[0].mxu0 %v3957
        %v4183 = vpop.f32.mrb[0].mxu0
        %v4184 = vadd.f32 0.0, %v4183
        %v4185 = vpop.f32.mrb[0].mxu0
        %v4186 = vadd.f32 0.0, %v4185
        %v4187 = vpop.f32.mrb[0].mxu0
        %v4188 = vadd.f32 0.0, %v4187
        %v4189 = vpop.f32.mrb[0].mxu0
        %v4190 = vadd.f32 0.0, %v4189
        %4191 = vmatprep.mubr.bf16.mxu0 %v3960
        %4192 = vmatmul.mubr.bf16.gmra.mrb[0].mxu0 %v3959
        %v4193 = vpop.f32.mrb[0].mxu0
        %v4194 = vadd.f32 0.0, %v4193
        %v4195 = vpop.f32.mrb[0].mxu0
        %v4196 = vadd.f32 0.0, %v4195
        %v4197 = vpop.f32.mrb[0].mxu0
        %v4198 = vadd.f32 0.0, %v4197
        %v4199 = vpop.f32.mrb[0].mxu0
        %v4200 = vadd.f32 0.0, %v4199
        %4201 = vmatprep.mubr.bf16.mxu0 %v3962
        %4202 = vmatmul.mubr.bf16.gmra.mrb[0].mxu0 %v3961
        %v4203 = vpop.f32.mrb[0].mxu0
        %v4204 = vadd.f32 0.0, %v4203
        %v4205 = vpop.f32.mrb[0].mxu0
        %v4206 = vadd.f32 0.0, %v4205
        %v4207 = vpop.f32.mrb[0].mxu0
        %v4208 = vadd.f32 0.0, %v4207
        %v4209 = vpop.f32.mrb[0].mxu0
        %v4210 = vadd.f32 0.0, %v4209
        %4211 = vmatprep.mubr.bf16.mxu0 %v3964
        %4212 = vmatmul.mubr.bf16.gmra.mrb[0].mxu0 %v3963
        %v4213 = vpop.f32.mrb[0].mxu0
        %v4214 = vadd.f32 0.0, %v4213
        %v4215 = vpop.f32.mrb[0].mxu0
        %v4216 = vadd.f32 0.0, %v4215
        %v4217 = vpop.f32.mrb[0].mxu0
        %v4218 = vadd.f32 0.0, %v4217
        %v4219 = vpop.f32.mrb[0].mxu0
        %v4220 = vadd.f32 0.0, %v4219
        %4221 = vmatprep.mubr.bf16.mxu0 %v3966
        %4222 = vmatmul.mubr.bf16.gmra.mrb[0].mxu0 %v3965
        %v4223 = vpop.f32.mrb[0].mxu0
        %v4224 = vadd.f32 0.0, %v4223
        %v4225 = vpop.f32.mrb[0].mxu0
        %v4226 = vadd.f32 0.0, %v4225
        %v4227 = vpop.f32.mrb[0].mxu0
        %v4228 = vadd.f32 0.0, %v4227
        %v4229 = vpop.f32.mrb[0].mxu0
        %v4230 = vadd.f32 0.0, %v4229
        %4231 = vmatprep.mubr.bf16.mxu0 %v3968
        %4232 = vmatmul.mubr.bf16.gmra.mrb[0].mxu0 %v3967
        %v4233 = vpop.f32.mrb[0].mxu0
        %v4234 = vadd.f32 0.0, %v4233
        %v4235 = vpop.f32.mrb[0].mxu0
        %v4236 = vadd.f32 0.0, %v4235
        %v4237 = vpop.f32.mrb[0].mxu0
        %v4238 = vadd.f32 0.0, %v4237
        %v4239 = vpop.f32.mrb[0].mxu0
        %v4240 = vadd.f32 0.0, %v4239
        %4241 = vmatprep.mubr.bf16.mxu0 %v3970
        %4242 = vmatmul.mubr.bf16.gmra.mrb[0].mxu0 %v3969
        %v4243 = vpop.f32.mrb[0].mxu0
        %v4244 = vadd.f32 0.0, %v4243
        %v4245 = vpop.f32.mrb[0].mxu0
        %v4246 = vadd.f32 0.0, %v4245
        %v4247 = vpop.f32.mrb[0].mxu0
        %v4248 = vadd.f32 0.0, %v4247
        %v4249 = vpop.f32.mrb[0].mxu0
        %v4250 = vadd.f32 0.0, %v4249
        %4251 = vmatprep.mubr.bf16.mxu0 %v3972
        %4252 = vmatmul.mubr.bf16.gmra.mrb[0].mxu0 %v3971
        %v4253 = vpop.f32.mrb[0].mxu0
        %v4254 = vadd.f32 0.0, %v4253
        %v4255 = vpop.f32.mrb[0].mxu0
        %v4256 = vadd.f32 0.0, %v4255
        %v4257 = vpop.f32.mrb[0].mxu0
        %v4258 = vadd.f32 0.0, %v4257
        %v4259 = vpop.f32.mrb[0].mxu0
        %v4260 = vadd.f32 0.0, %v4259
        %4261 = vdwg.mxu0
        %v4262 = vadd.f32 %v3827, %v4184
        %v4263 = vadd.f32 %v3828, %v4186
        %v4264 = vadd.f32 %v3829, %v4188
        %v4265 = vadd.f32 %v3830, %v4190
        %v4266 = vadd.f32 %v3831, %v4194
        %v4267 = vadd.f32 %v3832, %v4196
        %v4268 = vadd.f32 %v3833, %v4198
        %v4269 = vadd.f32 %v3834, %v4200
        %v4270 = vadd.f32 %v3835, %v4204
        %v4271 = vadd.f32 %v3836, %v4206
        %v4272 = vadd.f32 %v3837, %v4208
        %v4273 = vadd.f32 %v3838, %v4210
        %v4274 = vadd.f32 %v3839, %v4214
        %v4275 = vadd.f32 %v3840, %v4216
        %v4276 = vadd.f32 %v3841, %v4218
        %v4277 = vadd.f32 %v3842, %v4220
        %v4278 = vadd.f32 %v3843, %v4224
        %v4279 = vadd.f32 %v3844, %v4226
        %v4280 = vadd.f32 %v3845, %v4228
        %v4281 = vadd.f32 %v3846, %v4230
        %v4282 = vadd.f32 %v3847, %v4234
        %v4283 = vadd.f32 %v3848, %v4236
        %v4284 = vadd.f32 %v3849, %v4238
        %v4285 = vadd.f32 %v3850, %v4240
        %v4286 = vadd.f32 %v3851, %v4244
        %v4287 = vadd.f32 %v3852, %v4246
        %v4288 = vadd.f32 %v3853, %v4248
        %v4289 = vadd.f32 %v3854, %v4250
        %v4290 = vadd.f32 %v3855, %v4254
        %v4291 = vadd.f32 %v3856, %v4256
        %v4292 = vadd.f32 %v3857, %v4258
        %v4293 = vadd.f32 %v3858, %v4260
        %v4294 = vld [vmem:[%s3859] sm:$0xff]
        %v4295 = vld [vmem:[%s3859 + $0x8] sm:$0x11]
        %v4296 = vld [vmem:[%s3859 + $0x10] sm:$0xff]
        %v4297 = vld [vmem:[%s3859 + $0x18] sm:$0x11]
        %v4298 = vld [vmem:[%s3859 + $0x20] sm:$0xff]
        %v4299 = vld [vmem:[%s3859 + $0x28] sm:$0x11]
        %v4300 = vld [vmem:[%s3859 + $0x30] sm:$0xff]
        %v4301 = vld [vmem:[%s3859 + $0x38] sm:$0x11]
        %v4302 = vld [vmem:[%s3859 + $0x40] sm:$0xff]
        %v4303 = vld [vmem:[%s3859 + $0x48] sm:$0x11]
        %v4304 = vld [vmem:[%s3859 + $0x50] sm:$0xff]
        %v4305 = vld [vmem:[%s3859 + $0x58] sm:$0x11]
        %v4306 = vld [vmem:[%s3859 + $0x60] sm:$0xff]
        %v4307 = vld [vmem:[%s3859 + $0x68] sm:$0x11]
        %v4308 = vld [vmem:[%s3859 + $0x70] sm:$0xff]
        %v4309 = vld [vmem:[%s3859 + $0x78] sm:$0x11]
        %v4310 = vld [vmem:[%s3859 + $0xa0] sm:$0xff]
        %v4311 = vld [vmem:[%s3859 + $0xa8] sm:$0x11]
        %v4312 = vld [vmem:[%s3859 + $0xb0] sm:$0xff]
        %v4313 = vld [vmem:[%s3859 + $0xb8] sm:$0x11]
        %v4314 = vld [vmem:[%s3859 + $0xc0] sm:$0xff]
        %v4315 = vld [vmem:[%s3859 + $0xc8] sm:$0x11]
        %v4316 = vld [vmem:[%s3859 + $0xd0] sm:$0xff]
        %v4317 = vld [vmem:[%s3859 + $0xd8] sm:$0x11]
        %v4318 = vld [vmem:[%s3859 + $0xe0] sm:$0xff]
        %v4319 = vld [vmem:[%s3859 + $0xe8] sm:$0x11]
        %v4320 = vld [vmem:[%s3859 + $0xf0] sm:$0xff]
        %v4321 = vld [vmem:[%s3859 + $0xf8] sm:$0x11]
        %v4322 = vld [vmem:[%s3859 + $0x100] sm:$0xff]
        %v4323 = vld [vmem:[%s3859 + $0x108] sm:$0x11]
        %v4324 = vld [vmem:[%s3859 + $0x110] sm:$0xff]
        %v4325 = vld [vmem:[%s3859 + $0x118] sm:$0x11]
        %v4327 = vshrl.u32 %v4294, 16
        %v4329 = vrot.slane %v4327, 4
        %v4330 = vshll.u32 %v4294, 16
        %v4332 = vrot.slane %v4330, 5
        %v4333 = vor.u32 %v4329, %v4332
        %v4334 = vrot.slane %v4333, 4
        %v4336 = vshll.u32 %v4295, 16
        %v4338 = vrot.slane %v4336, 5
        %v4339 = vsel %vm788, %v4334, %v4338
        %v4341 = vshrl.u32 %v4296, 16
        %v4343 = vrot.slane %v4341, 4
        %v4344 = vshll.u32 %v4296, 16
        %v4346 = vrot.slane %v4344, 5
        %v4347 = vor.u32 %v4343, %v4346
        %v4348 = vrot.slane %v4347, 4
        %v4350 = vshll.u32 %v4297, 16
        %v4352 = vrot.slane %v4350, 5
        %v4353 = vsel %vm788, %v4348, %v4352
        %v4355 = vshrl.u32 %v4298, 16
        %v4357 = vrot.slane %v4355, 4
        %v4358 = vshll.u32 %v4298, 16
        %v4360 = vrot.slane %v4358, 5
        %v4361 = vor.u32 %v4357, %v4360
        %v4362 = vrot.slane %v4361, 4
        %v4364 = vshll.u32 %v4299, 16
        %v4366 = vrot.slane %v4364, 5
        %v4367 = vsel %vm788, %v4362, %v4366
        %v4369 = vshrl.u32 %v4300, 16
        %v4371 = vrot.slane %v4369, 4
        %v4372 = vshll.u32 %v4300, 16
        %v4374 = vrot.slane %v4372, 5
        %v4375 = vor.u32 %v4371, %v4374
        %v4376 = vrot.slane %v4375, 4
        %v4378 = vshll.u32 %v4301, 16
        %v4380 = vrot.slane %v4378, 5
        %v4381 = vsel %vm788, %v4376, %v4380
        %v4383 = vshrl.u32 %v4302, 16
        %v4385 = vrot.slane %v4383, 4
        %v4386 = vshll.u32 %v4302, 16
        %v4388 = vrot.slane %v4386, 5
        %v4389 = vor.u32 %v4385, %v4388
        %v4390 = vrot.slane %v4389, 4
        %v4392 = vshll.u32 %v4303, 16
        %v4394 = vrot.slane %v4392, 5
        %v4395 = vsel %vm788, %v4390, %v4394
        %v4397 = vshrl.u32 %v4304, 16
        %v4399 = vrot.slane %v4397, 4
        %v4400 = vshll.u32 %v4304, 16
        %v4402 = vrot.slane %v4400, 5
        %v4403 = vor.u32 %v4399, %v4402
        %v4404 = vrot.slane %v4403, 4
        %v4406 = vshll.u32 %v4305, 16
        %v4408 = vrot.slane %v4406, 5
        %v4409 = vsel %vm788, %v4404, %v4408
        %v4411 = vshrl.u32 %v4306, 16
        %v4413 = vrot.slane %v4411, 4
        %v4414 = vshll.u32 %v4306, 16
        %v4416 = vrot.slane %v4414, 5
        %v4417 = vor.u32 %v4413, %v4416
        %v4418 = vrot.slane %v4417, 4
        %v4420 = vshll.u32 %v4307, 16
        %v4422 = vrot.slane %v4420, 5
        %v4423 = vsel %vm788, %v4418, %v4422
        %v4425 = vshrl.u32 %v4308, 16
        %v4427 = vrot.slane %v4425, 4
        %v4428 = vshll.u32 %v4308, 16
        %v4430 = vrot.slane %v4428, 5
        %v4431 = vor.u32 %v4427, %v4430
        %v4432 = vrot.slane %v4431, 4
        %v4434 = vshll.u32 %v4309, 16
        %v4436 = vrot.slane %v4434, 5
        %v4437 = vsel %vm788, %v4432, %v4436
        %v4439 = vshrl.u32 %v4310, 16
        %v4441 = vrot.slane %v4439, 4
        %v4442 = vshll.u32 %v4310, 16
        %v4444 = vrot.slane %v4442, 5
        %v4445 = vor.u32 %v4441, %v4444
        %v4446 = vrot.slane %v4445, 4
        %v4448 = vshll.u32 %v4311, 16
        %v4450 = vrot.slane %v4448, 5
        %v4451 = vsel %vm788, %v4446, %v4450
        %v4453 = vshrl.u32 %v4312, 16
        %v4455 = vrot.slane %v4453, 4
        %v4456 = vshll.u32 %v4312, 16
        %v4458 = vrot.slane %v4456, 5
        %v4459 = vor.u32 %v4455, %v4458
        %v4460 = vrot.slane %v4459, 4
        %v4462 = vshll.u32 %v4313, 16
        %v4464 = vrot.slane %v4462, 5
        %v4465 = vsel %vm788, %v4460, %v4464
        %v4467 = vshrl.u32 %v4314, 16
        %v4469 = vrot.slane %v4467, 4
        %v4470 = vshll.u32 %v4314, 16
        %v4472 = vrot.slane %v4470, 5
        %v4473 = vor.u32 %v4469, %v4472
        %v4474 = vrot.slane %v4473, 4
        %v4476 = vshll.u32 %v4315, 16
        %v4478 = vrot.slane %v4476, 5
        %v4479 = vsel %vm788, %v4474, %v4478
        %v4481 = vshrl.u32 %v4316, 16
        %v4483 = vrot.slane %v4481, 4
        %v4484 = vshll.u32 %v4316, 16
        %v4486 = vrot.slane %v4484, 5
        %v4487 = vor.u32 %v4483, %v4486
        %v4488 = vrot.slane %v4487, 4
        %v4490 = vshll.u32 %v4317, 16
        %v4492 = vrot.slane %v4490, 5
        %v4493 = vsel %vm788, %v4488, %v4492
        %v4495 = vshrl.u32 %v4318, 16
        %v4497 = vrot.slane %v4495, 4
        %v4498 = vshll.u32 %v4318, 16
        %v4500 = vrot.slane %v4498, 5
        %v4501 = vor.u32 %v4497, %v4500
        %v4502 = vrot.slane %v4501, 4
        %v4504 = vshll.u32 %v4319, 16
        %v4506 = vrot.slane %v4504, 5
        %v4507 = vsel %vm788, %v4502, %v4506
        %v4509 = vshrl.u32 %v4320, 16
        %v4511 = vrot.slane %v4509, 4
        %v4512 = vshll.u32 %v4320, 16
        %v4514 = vrot.slane %v4512, 5
        %v4515 = vor.u32 %v4511, %v4514
        %v4516 = vrot.slane %v4515, 4
        %v4518 = vshll.u32 %v4321, 16
        %v4520 = vrot.slane %v4518, 5
        %v4521 = vsel %vm788, %v4516, %v4520
        %v4523 = vshrl.u32 %v4322, 16
        %v4525 = vrot.slane %v4523, 4
        %v4526 = vshll.u32 %v4322, 16
        %v4528 = vrot.slane %v4526, 5
        %v4529 = vor.u32 %v4525, %v4528
        %v4530 = vrot.slane %v4529, 4
        %v4532 = vshll.u32 %v4323, 16
        %v4534 = vrot.slane %v4532, 5
        %v4535 = vsel %vm788, %v4530, %v4534
        %v4537 = vshrl.u32 %v4324, 16
        %v4539 = vrot.slane %v4537, 4
        %v4540 = vshll.u32 %v4324, 16
        %v4542 = vrot.slane %v4540, 5
        %v4543 = vor.u32 %v4539, %v4542
        %v4544 = vrot.slane %v4543, 4
        %v4546 = vshll.u32 %v4325, 16
        %v4548 = vrot.slane %v4546, 5
        %v4549 = vsel %vm788, %v4544, %v4548
        %s4550 = scalar_lea.vmem %s1, 1792
        %v4551 = vld [vmem:[%s4550] sm:$0xff]
        %v4552 = vld [vmem:[%s4550 + $0x8] sm:$0xff]
        %v4553 = vld [vmem:[%s4550 + $0x10] sm:$0xff]
        %v4554 = vld [vmem:[%s4550 + $0x18] sm:$0xff]
        %v4555 = vld [vmem:[%s4550 + $0x20] sm:$0xff]
        %v4556 = vld [vmem:[%s4550 + $0x28] sm:$0xff]
        %v4557 = vld [vmem:[%s4550 + $0x30] sm:$0xff]
        %v4558 = vld [vmem:[%s4550 + $0x38] sm:$0xff]
        %v4559 = vld [vmem:[%s4550 + $0x40] sm:$0xff]
        %v4560 = vld [vmem:[%s4550 + $0x48] sm:$0xff]
        %v4561 = vld [vmem:[%s4550 + $0x50] sm:$0xff]
        %v4562 = vld [vmem:[%s4550 + $0x58] sm:$0xff]
        %v4563 = vld [vmem:[%s4550 + $0x60] sm:$0xff]
        %v4564 = vld [vmem:[%s4550 + $0x68] sm:$0xff]
        %v4565 = vld [vmem:[%s4550 + $0x70] sm:$0xff]
        %v4566 = vld [vmem:[%s4550 + $0x78] sm:$0xff]
        %v4567 = vld [vmem:[%s4550 + $0x80] sm:$0xff]
        %v4568 = vld [vmem:[%s4550 + $0x88] sm:$0xff]
        %v4569 = vld [vmem:[%s4550 + $0x90] sm:$0xff]
        %v4570 = vld [vmem:[%s4550 + $0x98] sm:$0xff]
        %v4571 = vld [vmem:[%s4550 + $0xa0] sm:$0xff]
        %v4572 = vld [vmem:[%s4550 + $0xa8] sm:$0xff]
        %v4573 = vld [vmem:[%s4550 + $0xb0] sm:$0xff]
        %v4574 = vld [vmem:[%s4550 + $0xb8] sm:$0xff]
        %v4575 = vld [vmem:[%s4550 + $0xc0] sm:$0xff]
        %v4576 = vld [vmem:[%s4550 + $0xc8] sm:$0xff]
        %v4577 = vld [vmem:[%s4550 + $0xd0] sm:$0xff]
        %v4578 = vld [vmem:[%s4550 + $0xd8] sm:$0xff]
        %v4579 = vld [vmem:[%s4550 + $0xe0] sm:$0xff]
        %v4580 = vld [vmem:[%s4550 + $0xe8] sm:$0xff]
        %v4581 = vld [vmem:[%s4550 + $0xf0] sm:$0xff]
        %v4582 = vld [vmem:[%s4550 + $0xf8] sm:$0xff]
        %v4583 = vunpack.c.l.b16 %v4339
        %v4584 = vunpack.c.h.b16 %v4339
        %v4585 = vunpack.c.l.b16 %v4353
        %v4586 = vunpack.c.h.b16 %v4353
        %v4587 = vunpack.c.l.b16 %v4367
        %v4588 = vunpack.c.h.b16 %v4367
        %v4589 = vunpack.c.l.b16 %v4381
        %v4590 = vunpack.c.h.b16 %v4381
        %v4591 = vunpack.c.l.b16 %v4395
        %v4592 = vunpack.c.h.b16 %v4395
        %v4593 = vunpack.c.l.b16 %v4409
        %v4594 = vunpack.c.h.b16 %v4409
        %v4595 = vunpack.c.l.b16 %v4423
        %v4596 = vunpack.c.h.b16 %v4423
        %v4597 = vunpack.c.l.b16 %v4437
        %v4598 = vunpack.c.h.b16 %v4437
        %v4599 = vunpack.c.l.b16 %v4451
        %v4600 = vunpack.c.h.b16 %v4451
        %v4601 = vunpack.c.l.b16 %v4465
        %v4602 = vunpack.c.h.b16 %v4465
        %v4603 = vunpack.c.l.b16 %v4479
        %v4604 = vunpack.c.h.b16 %v4479
        %v4605 = vunpack.c.l.b16 %v4493
        %v4606 = vunpack.c.h.b16 %v4493
        %v4607 = vunpack.c.l.b16 %v4507
        %v4608 = vunpack.c.h.b16 %v4507
        %v4609 = vunpack.c.l.b16 %v4521
        %v4610 = vunpack.c.h.b16 %v4521
        %v4611 = vunpack.c.l.b16 %v4535
        %v4612 = vunpack.c.h.b16 %v4535
        %v4613 = vunpack.c.l.b16 %v4549
        %v4614 = vunpack.c.h.b16 %v4549
        %v4615 = vpack.c.b16 %v4585, %v4583
        %v4616 = vpack.c.b16 %v4586, %v4584
        %v4617 = vpack.c.b16 %v4589, %v4587
        %v4618 = vpack.c.b16 %v4590, %v4588
        %v4619 = vpack.c.b16 %v4593, %v4591
        %v4620 = vpack.c.b16 %v4594, %v4592
        %v4621 = vpack.c.b16 %v4597, %v4595
        %v4622 = vpack.c.b16 %v4598, %v4596
        %v4623 = vpack.c.b16 %v4601, %v4599
        %v4624 = vpack.c.b16 %v4602, %v4600
        %v4625 = vpack.c.b16 %v4605, %v4603
        %v4626 = vpack.c.b16 %v4606, %v4604
        %v4627 = vpack.c.b16 %v4609, %v4607
        %v4628 = vpack.c.b16 %v4610, %v4608
        %v4629 = vpack.c.b16 %v4613, %v4611
        %v4630 = vpack.c.b16 %v4614, %v4612
        %v4679 = vunpack.c.l.b16 %v4551
        %v4680 = vunpack.c.h.b16 %v4551
        %v4681 = vunpack.c.l.b16 %v4552
        %v4682 = vunpack.c.h.b16 %v4552
        %v4683 = vunpack.c.l.b16 %v4553
        %v4684 = vunpack.c.h.b16 %v4553
        %v4685 = vunpack.c.l.b16 %v4554
        %v4686 = vunpack.c.h.b16 %v4554
        %v4687 = vunpack.c.l.b16 %v4555
        %v4688 = vunpack.c.h.b16 %v4555
        %v4689 = vunpack.c.l.b16 %v4556
        %v4690 = vunpack.c.h.b16 %v4556
        %v4691 = vunpack.c.l.b16 %v4557
        %v4692 = vunpack.c.h.b16 %v4557
        %v4693 = vunpack.c.l.b16 %v4558
        %v4694 = vunpack.c.h.b16 %v4558
        %v4695 = vunpack.c.l.b16 %v4559
        %v4696 = vunpack.c.h.b16 %v4559
        %v4697 = vunpack.c.l.b16 %v4560
        %v4698 = vunpack.c.h.b16 %v4560
        %v4699 = vunpack.c.l.b16 %v4561
        %v4700 = vunpack.c.h.b16 %v4561
        %v4701 = vunpack.c.l.b16 %v4562
        %v4702 = vunpack.c.h.b16 %v4562
        %v4703 = vunpack.c.l.b16 %v4563
        %v4704 = vunpack.c.h.b16 %v4563
        %v4705 = vunpack.c.l.b16 %v4564
        %v4706 = vunpack.c.h.b16 %v4564
        %v4707 = vunpack.c.l.b16 %v4565
        %v4708 = vunpack.c.h.b16 %v4565
        %v4709 = vunpack.c.l.b16 %v4566
        %v4710 = vunpack.c.h.b16 %v4566
        %v4711 = vunpack.c.l.b16 %v4567
        %v4712 = vunpack.c.h.b16 %v4567
        %v4713 = vunpack.c.l.b16 %v4568
        %v4714 = vunpack.c.h.b16 %v4568
        %v4715 = vunpack.c.l.b16 %v4569
        %v4716 = vunpack.c.h.b16 %v4569
        %v4717 = vunpack.c.l.b16 %v4570
        %v4718 = vunpack.c.h.b16 %v4570
        %v4719 = vunpack.c.l.b16 %v4571
        %v4720 = vunpack.c.h.b16 %v4571
        %v4721 = vunpack.c.l.b16 %v4572
        %v4722 = vunpack.c.h.b16 %v4572
        %v4723 = vunpack.c.l.b16 %v4573
        %v4724 = vunpack.c.h.b16 %v4573
        %v4725 = vunpack.c.l.b16 %v4574
        %v4726 = vunpack.c.h.b16 %v4574
        %v4727 = vunpack.c.l.b16 %v4575
        %v4728 = vunpack.c.h.b16 %v4575
        %v4729 = vunpack.c.l.b16 %v4576
        %v4730 = vunpack.c.h.b16 %v4576
        %v4731 = vunpack.c.l.b16 %v4577
        %v4732 = vunpack.c.h.b16 %v4577
        %v4733 = vunpack.c.l.b16 %v4578
        %v4734 = vunpack.c.h.b16 %v4578
        %v4735 = vunpack.c.l.b16 %v4579
        %v4736 = vunpack.c.h.b16 %v4579
        %v4737 = vunpack.c.l.b16 %v4580
        %v4738 = vunpack.c.h.b16 %v4580
        %v4739 = vunpack.c.l.b16 %v4581
        %v4740 = vunpack.c.h.b16 %v4581
        %v4741 = vunpack.c.l.b16 %v4582
        %v4742 = vunpack.c.h.b16 %v4582
        %v4743 = vpack.c.b16 %v4681, %v4679
        %v4744 = vpack.c.b16 %v4682, %v4680
        %v4745 = vpack.c.b16 %v4685, %v4683
        %v4746 = vpack.c.b16 %v4686, %v4684
        %v4747 = vpack.c.b16 %v4689, %v4687
        %v4748 = vpack.c.b16 %v4690, %v4688
        %v4749 = vpack.c.b16 %v4693, %v4691
        %v4750 = vpack.c.b16 %v4694, %v4692
        %v4751 = vpack.c.b16 %v4697, %v4695
        %v4752 = vpack.c.b16 %v4698, %v4696
        %v4753 = vpack.c.b16 %v4701, %v4699
        %v4754 = vpack.c.b16 %v4702, %v4700
        %v4755 = vpack.c.b16 %v4705, %v4703
        %v4756 = vpack.c.b16 %v4706, %v4704
        %v4757 = vpack.c.b16 %v4709, %v4707
        %v4758 = vpack.c.b16 %v4710, %v4708
        %v4759 = vpack.c.b16 %v4713, %v4711
        %v4760 = vpack.c.b16 %v4714, %v4712
        %v4761 = vpack.c.b16 %v4717, %v4715
        %v4762 = vpack.c.b16 %v4718, %v4716
        %v4763 = vpack.c.b16 %v4721, %v4719
        %v4764 = vpack.c.b16 %v4722, %v4720
        %v4765 = vpack.c.b16 %v4725, %v4723
        %v4766 = vpack.c.b16 %v4726, %v4724
        %v4767 = vpack.c.b16 %v4729, %v4727
        %v4768 = vpack.c.b16 %v4730, %v4728
        %v4769 = vpack.c.b16 %v4733, %v4731
        %v4770 = vpack.c.b16 %v4734, %v4732
        %v4771 = vpack.c.b16 %v4737, %v4735
        %v4772 = vpack.c.b16 %v4738, %v4736
        %v4773 = vpack.c.b16 %v4741, %v4739
        %v4774 = vpack.c.b16 %v4742, %v4740
        %4807 = vmatprep.subr.bf16.mxu0 %v4744
        %4808 = vmatpush1.bf16.msra.mxu0 %v4743
        %4809 = vmatprep.subr.bf16.mxu0 %v4746
        %4810 = vmatpush1.bf16.msra.mxu0 %v4745
        %4811 = vmatprep.subr.bf16.mxu0 %v4748
        %4812 = vmatpush1.bf16.msra.mxu0 %v4747
        %4813 = vmatprep.subr.bf16.mxu0 %v4750
        %4814 = vmatpush1.bf16.msra.mxu0 %v4749
        %4815 = vmatprep.subr.bf16.mxu0 %v4752
        %4816 = vmatpush1.bf16.msra.mxu0 %v4751
        %4817 = vmatprep.subr.bf16.mxu0 %v4754
        %4818 = vmatpush1.bf16.msra.mxu0 %v4753
        %4819 = vmatprep.subr.bf16.mxu0 %v4756
        %4820 = vmatpush1.bf16.msra.mxu0 %v4755
        %4821 = vmatprep.subr.bf16.mxu0 %v4758
        %4822 = vmatpush1.bf16.msra.mxu0 %v4757
        %4823 = vmatprep.subr.bf16.mxu0 %v4760
        %4824 = vmatpush1.bf16.msra.mxu0 %v4759
        %4825 = vmatprep.subr.bf16.mxu0 %v4762
        %4826 = vmatpush1.bf16.msra.mxu0 %v4761
        %4827 = vmatprep.subr.bf16.mxu0 %v4764
        %4828 = vmatpush1.bf16.msra.mxu0 %v4763
        %4829 = vmatprep.subr.bf16.mxu0 %v4766
        %4830 = vmatpush1.bf16.msra.mxu0 %v4765
        %4831 = vmatprep.subr.bf16.mxu0 %v4768
        %4832 = vmatpush1.bf16.msra.mxu0 %v4767
        %4833 = vmatprep.subr.bf16.mxu0 %v4770
        %4834 = vmatpush1.bf16.msra.mxu0 %v4769
        %4835 = vmatprep.subr.bf16.mxu0 %v4772
        %4836 = vmatpush1.bf16.msra.mxu0 %v4771
        %4837 = vmatprep.subr.bf16.mxu0 %v4774
        %4838 = vmatpush1.bf16.msra.mxu0 %v4773
        %4839 = vmatprep.mubr.bf16.mxu0 %v4616
        %4840 = vmatmul.mubr.bf16.gmra.mrb[0].mxu0 %v4615
        %v4841 = vpop.f32.mrb[0].mxu0
        %v4842 = vadd.f32 0.0, %v4841
        %v4843 = vpop.f32.mrb[0].mxu0
        %v4844 = vadd.f32 0.0, %v4843
        %v4845 = vpop.f32.mrb[0].mxu0
        %v4846 = vadd.f32 0.0, %v4845
        %v4847 = vpop.f32.mrb[0].mxu0
        %v4848 = vadd.f32 0.0, %v4847
        %4849 = vmatprep.mubr.bf16.mxu0 %v4618
        %4850 = vmatmul.mubr.bf16.gmra.mrb[0].mxu0 %v4617
        %v4851 = vpop.f32.mrb[0].mxu0
        %v4852 = vadd.f32 0.0, %v4851
        %v4853 = vpop.f32.mrb[0].mxu0
        %v4854 = vadd.f32 0.0, %v4853
        %v4855 = vpop.f32.mrb[0].mxu0
        %v4856 = vadd.f32 0.0, %v4855
        %v4857 = vpop.f32.mrb[0].mxu0
        %v4858 = vadd.f32 0.0, %v4857
        %4859 = vmatprep.mubr.bf16.mxu0 %v4620
        %4860 = vmatmul.mubr.bf16.gmra.mrb[0].mxu0 %v4619
        %v4861 = vpop.f32.mrb[0].mxu0
        %v4862 = vadd.f32 0.0, %v4861
        %v4863 = vpop.f32.mrb[0].mxu0
        %v4864 = vadd.f32 0.0, %v4863
        %v4865 = vpop.f32.mrb[0].mxu0
        %v4866 = vadd.f32 0.0, %v4865
        %v4867 = vpop.f32.mrb[0].mxu0
        %v4868 = vadd.f32 0.0, %v4867
        %4869 = vmatprep.mubr.bf16.mxu0 %v4622
        %4870 = vmatmul.mubr.bf16.gmra.mrb[0].mxu0 %v4621
        %v4871 = vpop.f32.mrb[0].mxu0
        %v4872 = vadd.f32 0.0, %v4871
        %v4873 = vpop.f32.mrb[0].mxu0
        %v4874 = vadd.f32 0.0, %v4873
        %v4875 = vpop.f32.mrb[0].mxu0
        %v4876 = vadd.f32 0.0, %v4875
        %v4877 = vpop.f32.mrb[0].mxu0
        %v4878 = vadd.f32 0.0, %v4877
        %4879 = vmatprep.mubr.bf16.mxu0 %v4624
        %4880 = vmatmul.mubr.bf16.gmra.mrb[0].mxu0 %v4623
        %v4881 = vpop.f32.mrb[0].mxu0
        %v4882 = vadd.f32 0.0, %v4881
        %v4883 = vpop.f32.mrb[0].mxu0
        %v4884 = vadd.f32 0.0, %v4883
        %v4885 = vpop.f32.mrb[0].mxu0
        %v4886 = vadd.f32 0.0, %v4885
        %v4887 = vpop.f32.mrb[0].mxu0
        %v4888 = vadd.f32 0.0, %v4887
        %4889 = vmatprep.mubr.bf16.mxu0 %v4626
        %4890 = vmatmul.mubr.bf16.gmra.mrb[0].mxu0 %v4625
        %v4891 = vpop.f32.mrb[0].mxu0
        %v4892 = vadd.f32 0.0, %v4891
        %v4893 = vpop.f32.mrb[0].mxu0
        %v4894 = vadd.f32 0.0, %v4893
        %v4895 = vpop.f32.mrb[0].mxu0
        %v4896 = vadd.f32 0.0, %v4895
        %v4897 = vpop.f32.mrb[0].mxu0
        %v4898 = vadd.f32 0.0, %v4897
        %4899 = vmatprep.mubr.bf16.mxu0 %v4628
        %4900 = vmatmul.mubr.bf16.gmra.mrb[0].mxu0 %v4627
        %v4901 = vpop.f32.mrb[0].mxu0
        %v4902 = vadd.f32 0.0, %v4901
        %v4903 = vpop.f32.mrb[0].mxu0
        %v4904 = vadd.f32 0.0, %v4903
        %v4905 = vpop.f32.mrb[0].mxu0
        %v4906 = vadd.f32 0.0, %v4905
        %v4907 = vpop.f32.mrb[0].mxu0
        %v4908 = vadd.f32 0.0, %v4907
        %4909 = vmatprep.mubr.bf16.mxu0 %v4630
        %4910 = vmatmul.mubr.bf16.gmra.mrb[0].mxu0 %v4629
        %v4911 = vpop.f32.mrb[0].mxu0
        %v4912 = vadd.f32 0.0, %v4911
        %v4913 = vpop.f32.mrb[0].mxu0
        %v4914 = vadd.f32 0.0, %v4913
        %v4915 = vpop.f32.mrb[0].mxu0
        %v4916 = vadd.f32 0.0, %v4915
        %v4917 = vpop.f32.mrb[0].mxu0
        %v4918 = vadd.f32 0.0, %v4917
        %4919 = vdwg.mxu0
        %v4920 = vadd.f32 %v4262, %v4842
        %v4921 = vadd.f32 %v4263, %v4844
        %v4922 = vadd.f32 %v4264, %v4846
        %v4923 = vadd.f32 %v4265, %v4848
        %v4924 = vadd.f32 %v4266, %v4852
        %v4925 = vadd.f32 %v4267, %v4854
        %v4926 = vadd.f32 %v4268, %v4856
        %v4927 = vadd.f32 %v4269, %v4858
        %v4928 = vadd.f32 %v4270, %v4862
        %v4929 = vadd.f32 %v4271, %v4864
        %v4930 = vadd.f32 %v4272, %v4866
        %v4931 = vadd.f32 %v4273, %v4868
        %v4932 = vadd.f32 %v4274, %v4872
        %v4933 = vadd.f32 %v4275, %v4874
        %v4934 = vadd.f32 %v4276, %v4876
        %v4935 = vadd.f32 %v4277, %v4878
        %v4936 = vadd.f32 %v4278, %v4882
        %v4937 = vadd.f32 %v4279, %v4884
        %v4938 = vadd.f32 %v4280, %v4886
        %v4939 = vadd.f32 %v4281, %v4888
        %v4940 = vadd.f32 %v4282, %v4892
        %v4941 = vadd.f32 %v4283, %v4894
        %v4942 = vadd.f32 %v4284, %v4896
        %v4943 = vadd.f32 %v4285, %v4898
        %v4944 = vadd.f32 %v4286, %v4902
        %v4945 = vadd.f32 %v4287, %v4904
        %v4946 = vadd.f32 %v4288, %v4906
        %v4947 = vadd.f32 %v4289, %v4908
        %v4948 = vadd.f32 %v4290, %v4912
        %v4949 = vadd.f32 %v4291, %v4914
        %v4950 = vadd.f32 %v4292, %v4916
        %v4951 = vadd.f32 %v4293, %v4918
        %v4952 = vld [vmem:[%s3859] sm:$0xee]
        %v4953 = vld [vmem:[%s3859 + $0x10] sm:$0xee]
        %v4954 = vld [vmem:[%s3859 + $0x20] sm:$0xee]
        %v4955 = vld [vmem:[%s3859 + $0x30] sm:$0xee]
        %v4956 = vld [vmem:[%s3859 + $0x40] sm:$0xee]
        %v4957 = vld [vmem:[%s3859 + $0x50] sm:$0xee]
        %v4958 = vld [vmem:[%s3859 + $0x60] sm:$0xee]
        %v4959 = vld [vmem:[%s3859 + $0x70] sm:$0xee]
        %v4960 = vld [vmem:[%s3859 + $0xa0] sm:$0xee]
        %v4961 = vld [vmem:[%s3859 + $0xb0] sm:$0xee]
        %v4962 = vld [vmem:[%s3859 + $0xc0] sm:$0xee]
        %v4963 = vld [vmem:[%s3859 + $0xd0] sm:$0xee]
        %v4964 = vld [vmem:[%s3859 + $0xe0] sm:$0xee]
        %v4965 = vld [vmem:[%s3859 + $0xf0] sm:$0xee]
        %v4966 = vld [vmem:[%s3859 + $0x100] sm:$0xee]
        %v4967 = vld [vmem:[%s3859 + $0x110] sm:$0xee]
        %v5000 = vrot.slane %v4952, 5
        %v5001 = vrot.slane %v5000, 4
        %v5002 = vrot.slane %v4295, 5
        %v5003 = vsel %vm1786, %v5001, %v5002
        %v5004 = vrot.slane %v4953, 5
        %v5005 = vrot.slane %v5004, 4
        %v5006 = vrot.slane %v4297, 5
        %v5007 = vsel %vm1786, %v5005, %v5006
        %v5008 = vrot.slane %v4954, 5
        %v5009 = vrot.slane %v5008, 4
        %v5010 = vrot.slane %v4299, 5
        %v5011 = vsel %vm1786, %v5009, %v5010
        %v5012 = vrot.slane %v4955, 5
        %v5013 = vrot.slane %v5012, 4
        %v5014 = vrot.slane %v4301, 5
        %v5015 = vsel %vm1786, %v5013, %v5014
        %v5016 = vrot.slane %v4956, 5
        %v5017 = vrot.slane %v5016, 4
        %v5018 = vrot.slane %v4303, 5
        %v5019 = vsel %vm1786, %v5017, %v5018
        %v5020 = vrot.slane %v4957, 5
        %v5021 = vrot.slane %v5020, 4
        %v5022 = vrot.slane %v4305, 5
        %v5023 = vsel %vm1786, %v5021, %v5022
        %v5024 = vrot.slane %v4958, 5
        %v5025 = vrot.slane %v5024, 4
        %v5026 = vrot.slane %v4307, 5
        %v5027 = vsel %vm1786, %v5025, %v5026
        %v5028 = vrot.slane %v4959, 5
        %v5029 = vrot.slane %v5028, 4
        %v5030 = vrot.slane %v4309, 5
        %v5031 = vsel %vm1786, %v5029, %v5030
        %v5032 = vrot.slane %v4960, 5
        %v5033 = vrot.slane %v5032, 4
        %v5034 = vrot.slane %v4311, 5
        %v5035 = vsel %vm1786, %v5033, %v5034
        %v5036 = vrot.slane %v4961, 5
        %v5037 = vrot.slane %v5036, 4
        %v5038 = vrot.slane %v4313, 5
        %v5039 = vsel %vm1786, %v5037, %v5038
        %v5040 = vrot.slane %v4962, 5
        %v5041 = vrot.slane %v5040, 4
        %v5042 = vrot.slane %v4315, 5
        %v5043 = vsel %vm1786, %v5041, %v5042
        %v5044 = vrot.slane %v4963, 5
        %v5045 = vrot.slane %v5044, 4
        %v5046 = vrot.slane %v4317, 5
        %v5047 = vsel %vm1786, %v5045, %v5046
        %v5048 = vrot.slane %v4964, 5
        %v5049 = vrot.slane %v5048, 4
        %v5050 = vrot.slane %v4319, 5
        %v5051 = vsel %vm1786, %v5049, %v5050
        %v5052 = vrot.slane %v4965, 5
        %v5053 = vrot.slane %v5052, 4
        %v5054 = vrot.slane %v4321, 5
        %v5055 = vsel %vm1786, %v5053, %v5054
        %v5056 = vrot.slane %v4966, 5
        %v5057 = vrot.slane %v5056, 4
        %v5058 = vrot.slane %v4323, 5
        %v5059 = vsel %vm1786, %v5057, %v5058
        %v5060 = vrot.slane %v4967, 5
        %v5061 = vrot.slane %v5060, 4
        %v5062 = vrot.slane %v4325, 5
        %v5063 = vsel %vm1786, %v5061, %v5062
        %s5064 = scalar_lea.vmem %s1, 2048
        %v5065 = vld [vmem:[%s5064] sm:$0xff]
        %v5066 = vld [vmem:[%s5064 + $0x8] sm:$0xff]
        %v5067 = vld [vmem:[%s5064 + $0x10] sm:$0xff]
        %v5068 = vld [vmem:[%s5064 + $0x18] sm:$0xff]
        %v5069 = vld [vmem:[%s5064 + $0x20] sm:$0xff]
        %v5070 = vld [vmem:[%s5064 + $0x28] sm:$0xff]
        %v5071 = vld [vmem:[%s5064 + $0x30] sm:$0xff]
        %v5072 = vld [vmem:[%s5064 + $0x38] sm:$0xff]
        %v5073 = vld [vmem:[%s5064 + $0x40] sm:$0xff]
        %v5074 = vld [vmem:[%s5064 + $0x48] sm:$0xff]
        %v5075 = vld [vmem:[%s5064 + $0x50] sm:$0xff]
        %v5076 = vld [vmem:[%s5064 + $0x58] sm:$0xff]
        %v5077 = vld [vmem:[%s5064 + $0x60] sm:$0xff]
        %v5078 = vld [vmem:[%s5064 + $0x68] sm:$0xff]
        %v5079 = vld [vmem:[%s5064 + $0x70] sm:$0xff]
        %v5080 = vld [vmem:[%s5064 + $0x78] sm:$0xff]
        %v5081 = vld [vmem:[%s5064 + $0x80] sm:$0xff]
        %v5082 = vld [vmem:[%s5064 + $0x88] sm:$0xff]
        %v5083 = vld [vmem:[%s5064 + $0x90] sm:$0xff]
        %v5084 = vld [vmem:[%s5064 + $0x98] sm:$0xff]
        %v5085 = vld [vmem:[%s5064 + $0xa0] sm:$0xff]
        %v5086 = vld [vmem:[%s5064 + $0xa8] sm:$0xff]
        %v5087 = vld [vmem:[%s5064 + $0xb0] sm:$0xff]
        %v5088 = vld [vmem:[%s5064 + $0xb8] sm:$0xff]
        %v5089 = vld [vmem:[%s5064 + $0xc0] sm:$0xff]
        %v5090 = vld [vmem:[%s5064 + $0xc8] sm:$0xff]
        %v5091 = vld [vmem:[%s5064 + $0xd0] sm:$0xff]
        %v5092 = vld [vmem:[%s5064 + $0xd8] sm:$0xff]
        %v5093 = vld [vmem:[%s5064 + $0xe0] sm:$0xff]
        %v5094 = vld [vmem:[%s5064 + $0xe8] sm:$0xff]
        %v5095 = vld [vmem:[%s5064 + $0xf0] sm:$0xff]
        %v5096 = vld [vmem:[%s5064 + $0xf8] sm:$0xff]
        %v5097 = vunpack.c.l.b16 %v5003
        %v5098 = vunpack.c.h.b16 %v5003
        %v5099 = vunpack.c.l.b16 %v5007
        %v5100 = vunpack.c.h.b16 %v5007
        %v5101 = vunpack.c.l.b16 %v5011
        %v5102 = vunpack.c.h.b16 %v5011
        %v5103 = vunpack.c.l.b16 %v5015
        %v5104 = vunpack.c.h.b16 %v5015
        %v5105 = vunpack.c.l.b16 %v5019
        %v5106 = vunpack.c.h.b16 %v5019
        %v5107 = vunpack.c.l.b16 %v5023
        %v5108 = vunpack.c.h.b16 %v5023
        %v5109 = vunpack.c.l.b16 %v5027
        %v5110 = vunpack.c.h.b16 %v5027
        %v5111 = vunpack.c.l.b16 %v5031
        %v5112 = vunpack.c.h.b16 %v5031
        %v5113 = vunpack.c.l.b16 %v5035
        %v5114 = vunpack.c.h.b16 %v5035
        %v5115 = vunpack.c.l.b16 %v5039
        %v5116 = vunpack.c.h.b16 %v5039
        %v5117 = vunpack.c.l.b16 %v5043
        %v5118 = vunpack.c.h.b16 %v5043
        %v5119 = vunpack.c.l.b16 %v5047
        %v5120 = vunpack.c.h.b16 %v5047
        %v5121 = vunpack.c.l.b16 %v5051
        %v5122 = vunpack.c.h.b16 %v5051
        %v5123 = vunpack.c.l.b16 %v5055
        %v5124 = vunpack.c.h.b16 %v5055
        %v5125 = vunpack.c.l.b16 %v5059
        %v5126 = vunpack.c.h.b16 %v5059
        %v5127 = vunpack.c.l.b16 %v5063
        %v5128 = vunpack.c.h.b16 %v5063
        %v5129 = vpack.c.b16 %v5099, %v5097
        %v5130 = vpack.c.b16 %v5100, %v5098
        %v5131 = vpack.c.b16 %v5103, %v5101
        %v5132 = vpack.c.b16 %v5104, %v5102
        %v5133 = vpack.c.b16 %v5107, %v5105
        %v5134 = vpack.c.b16 %v5108, %v5106
        %v5135 = vpack.c.b16 %v5111, %v5109
        %v5136 = vpack.c.b16 %v5112, %v5110
        %v5137 = vpack.c.b16 %v5115, %v5113
        %v5138 = vpack.c.b16 %v5116, %v5114
        %v5139 = vpack.c.b16 %v5119, %v5117
        %v5140 = vpack.c.b16 %v5120, %v5118
        %v5141 = vpack.c.b16 %v5123, %v5121
        %v5142 = vpack.c.b16 %v5124, %v5122
        %v5143 = vpack.c.b16 %v5127, %v5125
        %v5144 = vpack.c.b16 %v5128, %v5126
        %v5193 = vunpack.c.l.b16 %v5065
        %v5194 = vunpack.c.h.b16 %v5065
        %v5195 = vunpack.c.l.b16 %v5066
        %v5196 = vunpack.c.h.b16 %v5066
        %v5197 = vunpack.c.l.b16 %v5067
        %v5198 = vunpack.c.h.b16 %v5067
        %v5199 = vunpack.c.l.b16 %v5068
        %v5200 = vunpack.c.h.b16 %v5068
        %v5201 = vunpack.c.l.b16 %v5069
        %v5202 = vunpack.c.h.b16 %v5069
        %v5203 = vunpack.c.l.b16 %v5070
        %v5204 = vunpack.c.h.b16 %v5070
        %v5205 = vunpack.c.l.b16 %v5071
        %v5206 = vunpack.c.h.b16 %v5071
        %v5207 = vunpack.c.l.b16 %v5072
        %v5208 = vunpack.c.h.b16 %v5072
        %v5209 = vunpack.c.l.b16 %v5073
        %v5210 = vunpack.c.h.b16 %v5073
        %v5211 = vunpack.c.l.b16 %v5074
        %v5212 = vunpack.c.h.b16 %v5074
        %v5213 = vunpack.c.l.b16 %v5075
        %v5214 = vunpack.c.h.b16 %v5075
        %v5215 = vunpack.c.l.b16 %v5076
        %v5216 = vunpack.c.h.b16 %v5076
        %v5217 = vunpack.c.l.b16 %v5077
        %v5218 = vunpack.c.h.b16 %v5077
        %v5219 = vunpack.c.l.b16 %v5078
        %v5220 = vunpack.c.h.b16 %v5078
        %v5221 = vunpack.c.l.b16 %v5079
        %v5222 = vunpack.c.h.b16 %v5079
        %v5223 = vunpack.c.l.b16 %v5080
        %v5224 = vunpack.c.h.b16 %v5080
        %v5225 = vunpack.c.l.b16 %v5081
        %v5226 = vunpack.c.h.b16 %v5081
        %v5227 = vunpack.c.l.b16 %v5082
        %v5228 = vunpack.c.h.b16 %v5082
        %v5229 = vunpack.c.l.b16 %v5083
        %v5230 = vunpack.c.h.b16 %v5083
        %v5231 = vunpack.c.l.b16 %v5084
        %v5232 = vunpack.c.h.b16 %v5084
        %v5233 = vunpack.c.l.b16 %v5085
        %v5234 = vunpack.c.h.b16 %v5085
        %v5235 = vunpack.c.l.b16 %v5086
        %v5236 = vunpack.c.h.b16 %v5086
        %v5237 = vunpack.c.l.b16 %v5087
        %v5238 = vunpack.c.h.b16 %v5087
        %v5239 = vunpack.c.l.b16 %v5088
        %v5240 = vunpack.c.h.b16 %v5088
        %v5241 = vunpack.c.l.b16 %v5089
        %v5242 = vunpack.c.h.b16 %v5089
        %v5243 = vunpack.c.l.b16 %v5090
        %v5244 = vunpack.c.h.b16 %v5090
        %v5245 = vunpack.c.l.b16 %v5091
        %v5246 = vunpack.c.h.b16 %v5091
        %v5247 = vunpack.c.l.b16 %v5092
        %v5248 = vunpack.c.h.b16 %v5092
        %v5249 = vunpack.c.l.b16 %v5093
        %v5250 = vunpack.c.h.b16 %v5093
        %v5251 = vunpack.c.l.b16 %v5094
        %v5252 = vunpack.c.h.b16 %v5094
        %v5253 = vunpack.c.l.b16 %v5095
        %v5254 = vunpack.c.h.b16 %v5095
        %v5255 = vunpack.c.l.b16 %v5096
        %v5256 = vunpack.c.h.b16 %v5096
        %v5257 = vpack.c.b16 %v5195, %v5193
        %v5258 = vpack.c.b16 %v5196, %v5194
        %v5259 = vpack.c.b16 %v5199, %v5197
        %v5260 = vpack.c.b16 %v5200, %v5198
        %v5261 = vpack.c.b16 %v5203, %v5201
        %v5262 = vpack.c.b16 %v5204, %v5202
        %v5263 = vpack.c.b16 %v5207, %v5205
        %v5264 = vpack.c.b16 %v5208, %v5206
        %v5265 = vpack.c.b16 %v5211, %v5209
        %v5266 = vpack.c.b16 %v5212, %v5210
        %v5267 = vpack.c.b16 %v5215, %v5213
        %v5268 = vpack.c.b16 %v5216, %v5214
        %v5269 = vpack.c.b16 %v5219, %v5217
        %v5270 = vpack.c.b16 %v5220, %v5218
        %v5271 = vpack.c.b16 %v5223, %v5221
        %v5272 = vpack.c.b16 %v5224, %v5222
        %v5273 = vpack.c.b16 %v5227, %v5225
        %v5274 = vpack.c.b16 %v5228, %v5226
        %v5275 = vpack.c.b16 %v5231, %v5229
        %v5276 = vpack.c.b16 %v5232, %v5230
        %v5277 = vpack.c.b16 %v5235, %v5233
        %v5278 = vpack.c.b16 %v5236, %v5234
        %v5279 = vpack.c.b16 %v5239, %v5237
        %v5280 = vpack.c.b16 %v5240, %v5238
        %v5281 = vpack.c.b16 %v5243, %v5241
        %v5282 = vpack.c.b16 %v5244, %v5242
        %v5283 = vpack.c.b16 %v5247, %v5245
        %v5284 = vpack.c.b16 %v5248, %v5246
        %v5285 = vpack.c.b16 %v5251, %v5249
        %v5286 = vpack.c.b16 %v5252, %v5250
        %v5287 = vpack.c.b16 %v5255, %v5253
        %v5288 = vpack.c.b16 %v5256, %v5254
        %5321 = vmatprep.subr.bf16.mxu0 %v5258
        %5322 = vmatpush1.bf16.msra.mxu0 %v5257
        %5323 = vmatprep.subr.bf16.mxu0 %v5260
        %5324 = vmatpush1.bf16.msra.mxu0 %v5259
        %5325 = vmatprep.subr.bf16.mxu0 %v5262
        %5326 = vmatpush1.bf16.msra.mxu0 %v5261
        %5327 = vmatprep.subr.bf16.mxu0 %v5264
        %5328 = vmatpush1.bf16.msra.mxu0 %v5263
        %5329 = vmatprep.subr.bf16.mxu0 %v5266
        %5330 = vmatpush1.bf16.msra.mxu0 %v5265
        %5331 = vmatprep.subr.bf16.mxu0 %v5268
        %5332 = vmatpush1.bf16.msra.mxu0 %v5267
        %5333 = vmatprep.subr.bf16.mxu0 %v5270
        %5334 = vmatpush1.bf16.msra.mxu0 %v5269
        %5335 = vmatprep.subr.bf16.mxu0 %v5272
        %5336 = vmatpush1.bf16.msra.mxu0 %v5271
        %5337 = vmatprep.subr.bf16.mxu0 %v5274
        %5338 = vmatpush1.bf16.msra.mxu0 %v5273
        %5339 = vmatprep.subr.bf16.mxu0 %v5276
        %5340 = vmatpush1.bf16.msra.mxu0 %v5275
        %5341 = vmatprep.subr.bf16.mxu0 %v5278
        %5342 = vmatpush1.bf16.msra.mxu0 %v5277
        %5343 = vmatprep.subr.bf16.mxu0 %v5280
        %5344 = vmatpush1.bf16.msra.mxu0 %v5279
        %5345 = vmatprep.subr.bf16.mxu0 %v5282
        %5346 = vmatpush1.bf16.msra.mxu0 %v5281
        %5347 = vmatprep.subr.bf16.mxu0 %v5284
        %5348 = vmatpush1.bf16.msra.mxu0 %v5283
        %5349 = vmatprep.subr.bf16.mxu0 %v5286
        %5350 = vmatpush1.bf16.msra.mxu0 %v5285
        %5351 = vmatprep.subr.bf16.mxu0 %v5288
        %5352 = vmatpush1.bf16.msra.mxu0 %v5287
        %5353 = vmatprep.mubr.bf16.mxu0 %v5130
        %5354 = vmatmul.mubr.bf16.gmra.mrb[0].mxu0 %v5129
        %v5355 = vpop.f32.mrb[0].mxu0
        %v5356 = vadd.f32 0.0, %v5355
        %v5357 = vpop.f32.mrb[0].mxu0
        %v5358 = vadd.f32 0.0, %v5357
        %v5359 = vpop.f32.mrb[0].mxu0
        %v5360 = vadd.f32 0.0, %v5359
        %v5361 = vpop.f32.mrb[0].mxu0
        %v5362 = vadd.f32 0.0, %v5361
        %5363 = vmatprep.mubr.bf16.mxu0 %v5132
        %5364 = vmatmul.mubr.bf16.gmra.mrb[0].mxu0 %v5131
        %v5365 = vpop.f32.mrb[0].mxu0
        %v5366 = vadd.f32 0.0, %v5365
        %v5367 = vpop.f32.mrb[0].mxu0
        %v5368 = vadd.f32 0.0, %v5367
        %v5369 = vpop.f32.mrb[0].mxu0
        %v5370 = vadd.f32 0.0, %v5369
        %v5371 = vpop.f32.mrb[0].mxu0
        %v5372 = vadd.f32 0.0, %v5371
        %5373 = vmatprep.mubr.bf16.mxu0 %v5134
        %5374 = vmatmul.mubr.bf16.gmra.mrb[0].mxu0 %v5133
        %v5375 = vpop.f32.mrb[0].mxu0
        %v5376 = vadd.f32 0.0, %v5375
        %v5377 = vpop.f32.mrb[0].mxu0
        %v5378 = vadd.f32 0.0, %v5377
        %v5379 = vpop.f32.mrb[0].mxu0
        %v5380 = vadd.f32 0.0, %v5379
        %v5381 = vpop.f32.mrb[0].mxu0
        %v5382 = vadd.f32 0.0, %v5381
        %5383 = vmatprep.mubr.bf16.mxu0 %v5136
        %5384 = vmatmul.mubr.bf16.gmra.mrb[0].mxu0 %v5135
        %v5385 = vpop.f32.mrb[0].mxu0
        %v5386 = vadd.f32 0.0, %v5385
        %v5387 = vpop.f32.mrb[0].mxu0
        %v5388 = vadd.f32 0.0, %v5387
        %v5389 = vpop.f32.mrb[0].mxu0
        %v5390 = vadd.f32 0.0, %v5389
        %v5391 = vpop.f32.mrb[0].mxu0
        %v5392 = vadd.f32 0.0, %v5391
        %5393 = vmatprep.mubr.bf16.mxu0 %v5138
        %5394 = vmatmul.mubr.bf16.gmra.mrb[0].mxu0 %v5137
        %v5395 = vpop.f32.mrb[0].mxu0
        %v5396 = vadd.f32 0.0, %v5395
        %v5397 = vpop.f32.mrb[0].mxu0
        %v5398 = vadd.f32 0.0, %v5397
        %v5399 = vpop.f32.mrb[0].mxu0
        %v5400 = vadd.f32 0.0, %v5399
        %v5401 = vpop.f32.mrb[0].mxu0
        %v5402 = vadd.f32 0.0, %v5401
        %5403 = vmatprep.mubr.bf16.mxu0 %v5140
        %5404 = vmatmul.mubr.bf16.gmra.mrb[0].mxu0 %v5139
        %v5405 = vpop.f32.mrb[0].mxu0
        %v5406 = vadd.f32 0.0, %v5405
        %v5407 = vpop.f32.mrb[0].mxu0
        %v5408 = vadd.f32 0.0, %v5407
        %v5409 = vpop.f32.mrb[0].mxu0
        %v5410 = vadd.f32 0.0, %v5409
        %v5411 = vpop.f32.mrb[0].mxu0
        %v5412 = vadd.f32 0.0, %v5411
        %5413 = vmatprep.mubr.bf16.mxu0 %v5142
        %5414 = vmatmul.mubr.bf16.gmra.mrb[0].mxu0 %v5141
        %v5415 = vpop.f32.mrb[0].mxu0
        %v5416 = vadd.f32 0.0, %v5415
        %v5417 = vpop.f32.mrb[0].mxu0
        %v5418 = vadd.f32 0.0, %v5417
        %v5419 = vpop.f32.mrb[0].mxu0
        %v5420 = vadd.f32 0.0, %v5419
        %v5421 = vpop.f32.mrb[0].mxu0
        %v5422 = vadd.f32 0.0, %v5421
        %5423 = vmatprep.mubr.bf16.mxu0 %v5144
        %5424 = vmatmul.mubr.bf16.gmra.mrb[0].mxu0 %v5143
        %v5425 = vpop.f32.mrb[0].mxu0
        %v5426 = vadd.f32 0.0, %v5425
        %v5427 = vpop.f32.mrb[0].mxu0
        %v5428 = vadd.f32 0.0, %v5427
        %v5429 = vpop.f32.mrb[0].mxu0
        %v5430 = vadd.f32 0.0, %v5429
        %v5431 = vpop.f32.mrb[0].mxu0
        %v5432 = vadd.f32 0.0, %v5431
        %5433 = vdwg.mxu0
        %v5434 = vadd.f32 %v4920, %v5356
        %v5435 = vadd.f32 %v4921, %v5358
        %v5436 = vadd.f32 %v4922, %v5360
        %v5437 = vadd.f32 %v4923, %v5362
        %v5438 = vadd.f32 %v4924, %v5366
        %v5439 = vadd.f32 %v4925, %v5368
        %v5440 = vadd.f32 %v4926, %v5370
        %v5441 = vadd.f32 %v4927, %v5372
        %v5442 = vadd.f32 %v4928, %v5376
        %v5443 = vadd.f32 %v4929, %v5378
        %v5444 = vadd.f32 %v4930, %v5380
        %v5445 = vadd.f32 %v4931, %v5382
        %v5446 = vadd.f32 %v4932, %v5386
        %v5447 = vadd.f32 %v4933, %v5388
        %v5448 = vadd.f32 %v4934, %v5390
        %v5449 = vadd.f32 %v4935, %v5392
        %v5450 = vadd.f32 %v4936, %v5396
        %v5451 = vadd.f32 %v4937, %v5398
        %v5452 = vadd.f32 %v4938, %v5400
        %v5453 = vadd.f32 %v4939, %v5402
        %v5454 = vadd.f32 %v4940, %v5406
        %v5455 = vadd.f32 %v4941, %v5408
        %v5456 = vadd.f32 %v4942, %v5410
        %v5457 = vadd.f32 %v4943, %v5412
        %v5458 = vadd.f32 %v4944, %v5416
        %v5459 = vadd.f32 %v4945, %v5418
        %v5460 = vadd.f32 %v4946, %v5420
        %v5461 = vadd.f32 %v4947, %v5422
        %v5462 = vadd.f32 %v4948, %v5426
        %v5463 = vadd.f32 %v4949, %v5428
        %v5464 = vadd.f32 %v4950, %v5430
        %v5465 = vadd.f32 %v4951, %v5432
        %v5466 = vld [vmem:[%s2] sm:$0x3]
        %v5468 = vlaneseq
        %v5469 = vshrl.u32 %v5468, 7
        %v5470 = vsub.s32 0, %v5469
        %v5471 = vrot.slane %v5466, %v5470
        %v5472 = vlaneseq
        %v5473 = vshrl.u32 %v5472, 7
        %v5474 = vsub.s32 1, %v5473
        %v5475 = vrot.slane %v5466, %v5474
        %v5478 = vmul.f32 %v5434, %v5471
        %v5479 = vmul.f32 %v5435, %v5475
        %v5480 = vmul.f32 %v5436, %v5471
        %v5481 = vmul.f32 %v5437, %v5475
        %v5482 = vmul.f32 %v5438, %v5471
        %v5483 = vmul.f32 %v5439, %v5475
        %v5484 = vmul.f32 %v5440, %v5471
        %v5485 = vmul.f32 %v5441, %v5475
        %v5486 = vmul.f32 %v5442, %v5471
        %v5487 = vmul.f32 %v5443, %v5475
        %v5488 = vmul.f32 %v5444, %v5471
        %v5489 = vmul.f32 %v5445, %v5475
        %v5490 = vmul.f32 %v5446, %v5471
        %v5491 = vmul.f32 %v5447, %v5475
        %v5492 = vmul.f32 %v5448, %v5471
        %v5493 = vmul.f32 %v5449, %v5475
        %v5494 = vmul.f32 %v5450, %v5471
        %v5495 = vmul.f32 %v5451, %v5475
        %v5496 = vmul.f32 %v5452, %v5471
        %v5497 = vmul.f32 %v5453, %v5475
        %v5498 = vmul.f32 %v5454, %v5471
        %v5499 = vmul.f32 %v5455, %v5475
        %v5500 = vmul.f32 %v5456, %v5471
        %v5501 = vmul.f32 %v5457, %v5475
        %v5502 = vmul.f32 %v5458, %v5471
        %v5503 = vmul.f32 %v5459, %v5475
        %v5504 = vmul.f32 %v5460, %v5471
        %v5505 = vmul.f32 %v5461, %v5475
        %v5506 = vmul.f32 %v5462, %v5471
        %v5507 = vmul.f32 %v5463, %v5475
        %v5508 = vmul.f32 %v5464, %v5471
        %v5509 = vmul.f32 %v5465, %v5475
        %v5510 = vld [vmem:[%s3] sm:$0x3]
        %v5512 = vlaneseq
        %v5513 = vshrl.u32 %v5512, 7
        %v5514 = vsub.s32 0, %v5513
        %v5515 = vrot.slane %v5510, %v5514
        %v5516 = vlaneseq
        %v5517 = vshrl.u32 %v5516, 7
        %v5518 = vsub.s32 1, %v5517
        %v5519 = vrot.slane %v5510, %v5518
        %v5522 = vadd.f32 %v5478, %v5515
        %v5523 = vadd.f32 %v5479, %v5519
        %v5524 = vadd.f32 %v5480, %v5515
        %v5525 = vadd.f32 %v5481, %v5519
        %v5526 = vadd.f32 %v5482, %v5515
        %v5527 = vadd.f32 %v5483, %v5519
        %v5528 = vadd.f32 %v5484, %v5515
        %v5529 = vadd.f32 %v5485, %v5519
        %v5530 = vadd.f32 %v5486, %v5515
        %v5531 = vadd.f32 %v5487, %v5519
        %v5532 = vadd.f32 %v5488, %v5515
        %v5533 = vadd.f32 %v5489, %v5519
        %v5534 = vadd.f32 %v5490, %v5515
        %v5535 = vadd.f32 %v5491, %v5519
        %v5536 = vadd.f32 %v5492, %v5515
        %v5537 = vadd.f32 %v5493, %v5519
        %v5538 = vadd.f32 %v5494, %v5515
        %v5539 = vadd.f32 %v5495, %v5519
        %v5540 = vadd.f32 %v5496, %v5515
        %v5541 = vadd.f32 %v5497, %v5519
        %v5542 = vadd.f32 %v5498, %v5515
        %v5543 = vadd.f32 %v5499, %v5519
        %v5544 = vadd.f32 %v5500, %v5515
        %v5545 = vadd.f32 %v5501, %v5519
        %v5546 = vadd.f32 %v5502, %v5515
        %v5547 = vadd.f32 %v5503, %v5519
        %v5548 = vadd.f32 %v5504, %v5515
        %v5549 = vadd.f32 %v5505, %v5519
        %v5550 = vadd.f32 %v5506, %v5515
        %v5551 = vadd.f32 %v5507, %v5519
        %v5552 = vadd.f32 %v5508, %v5515
        %v5553 = vadd.f32 %v5509, %v5519
        %v5554 = vmax.f32 %v5522, 0.0
        %v5555 = vmax.f32 %v5523, 0.0
        %v5556 = vmax.f32 %v5524, 0.0
        %v5557 = vmax.f32 %v5525, 0.0
        %v5558 = vmax.f32 %v5526, 0.0
        %v5559 = vmax.f32 %v5527, 0.0
        %v5560 = vmax.f32 %v5528, 0.0
        %v5561 = vmax.f32 %v5529, 0.0
        %v5562 = vmax.f32 %v5530, 0.0
        %v5563 = vmax.f32 %v5531, 0.0
        %v5564 = vmax.f32 %v5532, 0.0
        %v5565 = vmax.f32 %v5533, 0.0
        %v5566 = vmax.f32 %v5534, 0.0
        %v5567 = vmax.f32 %v5535, 0.0
        %v5568 = vmax.f32 %v5536, 0.0
        %v5569 = vmax.f32 %v5537, 0.0
        %v5570 = vmax.f32 %v5538, 0.0
        %v5571 = vmax.f32 %v5539, 0.0
        %v5572 = vmax.f32 %v5540, 0.0
        %v5573 = vmax.f32 %v5541, 0.0
        %v5574 = vmax.f32 %v5542, 0.0
        %v5575 = vmax.f32 %v5543, 0.0
        %v5576 = vmax.f32 %v5544, 0.0
        %v5577 = vmax.f32 %v5545, 0.0
        %v5578 = vmax.f32 %v5546, 0.0
        %v5579 = vmax.f32 %v5547, 0.0
        %v5580 = vmax.f32 %v5548, 0.0
        %v5581 = vmax.f32 %v5549, 0.0
        %v5582 = vmax.f32 %v5550, 0.0
        %v5583 = vmax.f32 %v5551, 0.0
        %v5584 = vmax.f32 %v5552, 0.0
        %v5585 = vmax.f32 %v5553, 0.0
        %v5586 = vpack.c.bf16 %v5556, %v5554
        %v5587 = vpack.c.bf16 %v5557, %v5555
        %v5588 = vpack.c.bf16 %v5560, %v5558
        %v5589 = vpack.c.bf16 %v5561, %v5559
        %v5590 = vpack.c.bf16 %v5564, %v5562
        %v5591 = vpack.c.bf16 %v5565, %v5563
        %v5592 = vpack.c.bf16 %v5568, %v5566
        %v5593 = vpack.c.bf16 %v5569, %v5567
        %v5594 = vpack.c.bf16 %v5572, %v5570
        %v5595 = vpack.c.bf16 %v5573, %v5571
        %v5596 = vpack.c.bf16 %v5576, %v5574
        %v5597 = vpack.c.bf16 %v5577, %v5575
        %v5598 = vpack.c.bf16 %v5580, %v5578
        %v5599 = vpack.c.bf16 %v5581, %v5579
        %v5600 = vpack.c.bf16 %v5584, %v5582
        %v5601 = vpack.c.bf16 %v5585, %v5583
        %v5618 = vunpack.c.l.b16 %v5586
        %v5619 = vunpack.c.l.b16 %v5587
        %v5620 = vunpack.c.h.b16 %v5586
        %v5621 = vunpack.c.h.b16 %v5587
        %v5622 = vunpack.c.l.b16 %v5588
        %v5623 = vunpack.c.l.b16 %v5589
        %v5624 = vunpack.c.h.b16 %v5588
        %v5625 = vunpack.c.h.b16 %v5589
        %v5626 = vunpack.c.l.b16 %v5590
        %v5627 = vunpack.c.l.b16 %v5591
        %v5628 = vunpack.c.h.b16 %v5590
        %v5629 = vunpack.c.h.b16 %v5591
        %v5630 = vunpack.c.l.b16 %v5592
        %v5631 = vunpack.c.l.b16 %v5593
        %v5632 = vunpack.c.h.b16 %v5592
        %v5633 = vunpack.c.h.b16 %v5593
        %v5634 = vunpack.c.l.b16 %v5594
        %v5635 = vunpack.c.l.b16 %v5595
        %v5636 = vunpack.c.h.b16 %v5594
        %v5637 = vunpack.c.h.b16 %v5595
        %v5638 = vunpack.c.l.b16 %v5596
        %v5639 = vunpack.c.l.b16 %v5597
        %v5640 = vunpack.c.h.b16 %v5596
        %v5641 = vunpack.c.h.b16 %v5597
        %v5642 = vunpack.c.l.b16 %v5598
        %v5643 = vunpack.c.l.b16 %v5599
        %v5644 = vunpack.c.h.b16 %v5598
        %v5645 = vunpack.c.h.b16 %v5599
        %v5646 = vunpack.c.l.b16 %v5600
        %v5647 = vunpack.c.l.b16 %v5601
        %v5648 = vunpack.c.h.b16 %v5600
        %v5649 = vunpack.c.h.b16 %v5601
        %v5650 = vpack.c.b16 %v5619, %v5618
        %v5651 = vpack.c.b16 %v5621, %v5620
        %v5652 = vpack.c.b16 %v5623, %v5622
        %v5653 = vpack.c.b16 %v5625, %v5624
        %v5654 = vpack.c.b16 %v5627, %v5626
        %v5655 = vpack.c.b16 %v5629, %v5628
        %v5656 = vpack.c.b16 %v5631, %v5630
        %v5657 = vpack.c.b16 %v5633, %v5632
        %v5658 = vpack.c.b16 %v5635, %v5634
        %v5659 = vpack.c.b16 %v5637, %v5636
        %v5660 = vpack.c.b16 %v5639, %v5638
        %v5661 = vpack.c.b16 %v5641, %v5640
        %v5662 = vpack.c.b16 %v5643, %v5642
        %v5663 = vpack.c.b16 %v5645, %v5644
        %v5664 = vpack.c.b16 %v5647, %v5646
        %v5665 = vpack.c.b16 %v5649, %v5648
        %v5667 = vshrl.u32 %v5650, 16
        %v5669 = vrot.slane %v5667, 7
        %v5670 = vshll.u32 %v5650, 16
        %v5672 = vor.u32 %v5669, %v5670
        %v5673 = vrot.slane %v5669, 4
        %v5675 = vshrl.u32 %v5651, 16
        %v5677 = vrot.slane %v5675, 7
        %v5678 = vshll.u32 %v5651, 16
        %v5680 = vor.u32 %v5677, %v5678
        %v5681 = vrot.slane %v5677, 4
        %v5683 = vshrl.u32 %v5652, 16
        %v5685 = vrot.slane %v5683, 7
        %v5686 = vshll.u32 %v5652, 16
        %v5688 = vor.u32 %v5685, %v5686
        %v5689 = vrot.slane %v5685, 4
        %v5691 = vshrl.u32 %v5653, 16
        %v5693 = vrot.slane %v5691, 7
        %v5694 = vshll.u32 %v5653, 16
        %v5696 = vor.u32 %v5693, %v5694
        %v5697 = vrot.slane %v5693, 4
        %v5699 = vshrl.u32 %v5654, 16
        %v5701 = vrot.slane %v5699, 7
        %v5702 = vshll.u32 %v5654, 16
        %v5704 = vor.u32 %v5701, %v5702
        %v5705 = vrot.slane %v5701, 4
        %v5707 = vshrl.u32 %v5655, 16
        %v5709 = vrot.slane %v5707, 7
        %v5710 = vshll.u32 %v5655, 16
        %v5712 = vor.u32 %v5709, %v5710
        %v5713 = vrot.slane %v5709, 4
        %v5715 = vshrl.u32 %v5656, 16
        %v5717 = vrot.slane %v5715, 7
        %v5718 = vshll.u32 %v5656, 16
        %v5720 = vor.u32 %v5717, %v5718
        %v5721 = vrot.slane %v5717, 4
        %v5723 = vshrl.u32 %v5657, 16
        %v5725 = vrot.slane %v5723, 7
        %v5726 = vshll.u32 %v5657, 16
        %v5728 = vor.u32 %v5725, %v5726
        %v5729 = vrot.slane %v5725, 4
        %v5731 = vshrl.u32 %v5658, 16
        %v5733 = vrot.slane %v5731, 7
        %v5734 = vshll.u32 %v5658, 16
        %v5736 = vor.u32 %v5733, %v5734
        %v5737 = vrot.slane %v5733, 4
        %v5739 = vshrl.u32 %v5659, 16
        %v5741 = vrot.slane %v5739, 7
        %v5742 = vshll.u32 %v5659, 16
        %v5744 = vor.u32 %v5741, %v5742
        %v5745 = vrot.slane %v5741, 4
        %v5747 = vshrl.u32 %v5660, 16
        %v5749 = vrot.slane %v5747, 7
        %v5750 = vshll.u32 %v5660, 16
        %v5752 = vor.u32 %v5749, %v5750
        %v5753 = vrot.slane %v5749, 4
        %v5755 = vshrl.u32 %v5661, 16
        %v5757 = vrot.slane %v5755, 7
        %v5758 = vshll.u32 %v5661, 16
        %v5760 = vor.u32 %v5757, %v5758
        %v5761 = vrot.slane %v5757, 4
        %v5763 = vshrl.u32 %v5662, 16
        %v5765 = vrot.slane %v5763, 7
        %v5766 = vshll.u32 %v5662, 16
        %v5768 = vor.u32 %v5765, %v5766
        %v5769 = vrot.slane %v5765, 4
        %v5771 = vshrl.u32 %v5663, 16
        %v5773 = vrot.slane %v5771, 7
        %v5774 = vshll.u32 %v5663, 16
        %v5776 = vor.u32 %v5773, %v5774
        %v5777 = vrot.slane %v5773, 4
        %v5779 = vshrl.u32 %v5664, 16
        %v5781 = vrot.slane %v5779, 7
        %v5782 = vshll.u32 %v5664, 16
        %v5784 = vor.u32 %v5781, %v5782
        %v5785 = vrot.slane %v5781, 4
        %v5787 = vshrl.u32 %v5665, 16
        %v5789 = vrot.slane %v5787, 7
        %v5790 = vshll.u32 %v5665, 16
        %v5792 = vor.u32 %v5789, %v5790
        %v5793 = vrot.slane %v5789, 4
        %v5826 = vsel %vm625, %v5672, %v2687
        %5827 = vst [vmem:[%s620] sm:$0xff] %v5826
        %v5828 = vld [vmem:[%s620 + $0x8] sm:$0x11]
        %v5829 = vsel %vm318, %v5673, %v5828
        %5830 = vst [vmem:[%s620 + $0x8] sm:$0x11] %v5829
        %v5831 = vld [vmem:[%s620 + $0x10] sm:$0xff]
        %v5832 = vsel %vm625, %v5680, %v5831
        %5833 = vst [vmem:[%s620 + $0x10] sm:$0xff] %v5832
        %v5834 = vld [vmem:[%s620 + $0x18] sm:$0x11]
        %v5835 = vsel %vm318, %v5681, %v5834
        %5836 = vst [vmem:[%s620 + $0x18] sm:$0x11] %v5835
        %v5837 = vld [vmem:[%s620 + $0x20] sm:$0xff]
        %v5838 = vsel %vm625, %v5688, %v5837
        %5839 = vst [vmem:[%s620 + $0x20] sm:$0xff] %v5838
        %v5840 = vld [vmem:[%s620 + $0x28] sm:$0x11]
        %v5841 = vsel %vm318, %v5689, %v5840
        %5842 = vst [vmem:[%s620 + $0x28] sm:$0x11] %v5841
        %v5843 = vld [vmem:[%s620 + $0x30] sm:$0xff]
        %v5844 = vsel %vm625, %v5696, %v5843
        %5845 = vst [vmem:[%s620 + $0x30] sm:$0xff] %v5844
        %v5846 = vld [vmem:[%s620 + $0x38] sm:$0x11]
        %v5847 = vsel %vm318, %v5697, %v5846
        %5848 = vst [vmem:[%s620 + $0x38] sm:$0x11] %v5847
        %v5849 = vld [vmem:[%s620 + $0x40] sm:$0xff]
        %v5850 = vsel %vm625, %v5704, %v5849
        %5851 = vst [vmem:[%s620 + $0x40] sm:$0xff] %v5850
        %v5852 = vld [vmem:[%s620 + $0x48] sm:$0x11]
        %v5853 = vsel %vm318, %v5705, %v5852
        %5854 = vst [vmem:[%s620 + $0x48] sm:$0x11] %v5853
        %v5855 = vld [vmem:[%s620 + $0x50] sm:$0xff]
        %v5856 = vsel %vm625, %v5712, %v5855
        %5857 = vst [vmem:[%s620 + $0x50] sm:$0xff] %v5856
        %v5858 = vld [vmem:[%s620 + $0x58] sm:$0x11]
        %v5859 = vsel %vm318, %v5713, %v5858
        %5860 = vst [vmem:[%s620 + $0x58] sm:$0x11] %v5859
        %v5861 = vld [vmem:[%s620 + $0x60] sm:$0xff]
        %v5862 = vsel %vm625, %v5720, %v5861
        %5863 = vst [vmem:[%s620 + $0x60] sm:$0xff] %v5862
        %v5864 = vld [vmem:[%s620 + $0x68] sm:$0x11]
        %v5865 = vsel %vm318, %v5721, %v5864
        %5866 = vst [vmem:[%s620 + $0x68] sm:$0x11] %v5865
        %v5867 = vld [vmem:[%s620 + $0x70] sm:$0xff]
        %v5868 = vsel %vm625, %v5728, %v5867
        %5869 = vst [vmem:[%s620 + $0x70] sm:$0xff] %v5868
        %v5870 = vld [vmem:[%s620 + $0x78] sm:$0x11]
        %v5871 = vsel %vm318, %v5729, %v5870
        %5872 = vst [vmem:[%s620 + $0x78] sm:$0x11] %v5871
        %v5873 = vld [vmem:[%s620 + $0xa0] sm:$0xff]
        %v5874 = vsel %vm625, %v5736, %v5873
        %5875 = vst [vmem:[%s620 + $0xa0] sm:$0xff] %v5874
        %v5876 = vld [vmem:[%s620 + $0xa8] sm:$0x11]
        %v5877 = vsel %vm318, %v5737, %v5876
        %5878 = vst [vmem:[%s620 + $0xa8] sm:$0x11] %v5877
        %v5879 = vld [vmem:[%s620 + $0xb0] sm:$0xff]
        %v5880 = vsel %vm625, %v5744, %v5879
        %5881 = vst [vmem:[%s620 + $0xb0] sm:$0xff] %v5880
        %v5882 = vld [vmem:[%s620 + $0xb8] sm:$0x11]
        %v5883 = vsel %vm318, %v5745, %v5882
        %5884 = vst [vmem:[%s620 + $0xb8] sm:$0x11] %v5883
        %v5885 = vld [vmem:[%s620 + $0xc0] sm:$0xff]
        %v5886 = vsel %vm625, %v5752, %v5885
        %5887 = vst [vmem:[%s620 + $0xc0] sm:$0xff] %v5886
        %v5888 = vld [vmem:[%s620 + $0xc8] sm:$0x11]
        %v5889 = vsel %vm318, %v5753, %v5888
        %5890 = vst [vmem:[%s620 + $0xc8] sm:$0x11] %v5889
        %v5891 = vld [vmem:[%s620 + $0xd0] sm:$0xff]
        %v5892 = vsel %vm625, %v5760, %v5891
        %5893 = vst [vmem:[%s620 + $0xd0] sm:$0xff] %v5892
        %v5894 = vld [vmem:[%s620 + $0xd8] sm:$0x11]
        %v5895 = vsel %vm318, %v5761, %v5894
        %5896 = vst [vmem:[%s620 + $0xd8] sm:$0x11] %v5895
        %v5897 = vld [vmem:[%s620 + $0xe0] sm:$0xff]
        %v5898 = vsel %vm625, %v5768, %v5897
        %5899 = vst [vmem:[%s620 + $0xe0] sm:$0xff] %v5898
        %v5900 = vld [vmem:[%s620 + $0xe8] sm:$0x11]
        %v5901 = vsel %vm318, %v5769, %v5900
        %5902 = vst [vmem:[%s620 + $0xe8] sm:$0x11] %v5901
        %v5903 = vld [vmem:[%s620 + $0xf0] sm:$0xff]
        %v5904 = vsel %vm625, %v5776, %v5903
        %5905 = vst [vmem:[%s620 + $0xf0] sm:$0xff] %v5904
        %v5906 = vld [vmem:[%s620 + $0xf8] sm:$0x11]
        %v5907 = vsel %vm318, %v5777, %v5906
        %5908 = vst [vmem:[%s620 + $0xf8] sm:$0x11] %v5907
        %v5909 = vld [vmem:[%s620 + $0x100] sm:$0xff]
        %v5910 = vsel %vm625, %v5784, %v5909
        %5911 = vst [vmem:[%s620 + $0x100] sm:$0xff] %v5910
        %v5912 = vld [vmem:[%s620 + $0x108] sm:$0x11]
        %v5913 = vsel %vm318, %v5785, %v5912
        %5914 = vst [vmem:[%s620 + $0x108] sm:$0x11] %v5913
        %v5915 = vld [vmem:[%s620 + $0x110] sm:$0xff]
        %v5916 = vsel %vm625, %v5792, %v5915
        %5917 = vst [vmem:[%s620 + $0x110] sm:$0xff] %v5916
        %v5918 = vld [vmem:[%s620 + $0x118] sm:$0x11]
        %v5919 = vsel %vm318, %v5793, %v5918
        %5920 = vst [vmem:[%s620 + $0x118] sm:$0x11] %v5919
        %v5921 = vld [vmem:[#allocation2] sm:$0xff]
        %v5922 = vld [vmem:[#allocation2 + $0x10] sm:$0xff]
        %v5923 = vld [vmem:[#allocation2 + $0x20] sm:$0xff]
        %v5924 = vld [vmem:[#allocation2 + $0x30] sm:$0xff]
        %v5925 = vld [vmem:[#allocation2 + $0x40] sm:$0xff]
        %v5926 = vld [vmem:[#allocation2 + $0x50] sm:$0xff]
        %v5927 = vld [vmem:[#allocation2 + $0x60] sm:$0xff]
        %v5928 = vld [vmem:[#allocation2 + $0x70] sm:$0xff]
        %v5929 = vld [vmem:[#allocation2 + $0xa0] sm:$0xff]
        %v5930 = vld [vmem:[#allocation2 + $0xb0] sm:$0xff]
        %v5931 = vld [vmem:[#allocation2 + $0xc0] sm:$0xff]
        %v5932 = vld [vmem:[#allocation2 + $0xd0] sm:$0xff]
        %v5933 = vld [vmem:[#allocation2 + $0xe0] sm:$0xff]
        %v5934 = vld [vmem:[#allocation2 + $0xf0] sm:$0xff]
        %v5935 = vld [vmem:[#allocation2 + $0x100] sm:$0xff]
        %v5936 = vld [vmem:[#allocation2 + $0x110] sm:$0xff]
        %v5937 = vld [vmem:[#allocation3] sm:$0xff]
        %v5938 = vld [vmem:[#allocation3 + $0x8] sm:$0xff]
        %v5939 = vld [vmem:[#allocation3 + $0x10] sm:$0xff]
        %v5940 = vld [vmem:[#allocation3 + $0x18] sm:$0xff]
        %v5941 = vld [vmem:[#allocation3 + $0x20] sm:$0xff]
        %v5942 = vld [vmem:[#allocation3 + $0x28] sm:$0xff]
        %v5943 = vld [vmem:[#allocation3 + $0x30] sm:$0xff]
        %v5944 = vld [vmem:[#allocation3 + $0x38] sm:$0xff]
        %v5945 = vld [vmem:[#allocation3 + $0x40] sm:$0xff]
        %v5946 = vld [vmem:[#allocation3 + $0x48] sm:$0xff]
        %v5947 = vld [vmem:[#allocation3 + $0x50] sm:$0xff]
        %v5948 = vld [vmem:[#allocation3 + $0x58] sm:$0xff]
        %v5949 = vld [vmem:[#allocation3 + $0x60] sm:$0xff]
        %v5950 = vld [vmem:[#allocation3 + $0x68] sm:$0xff]
        %v5951 = vld [vmem:[#allocation3 + $0x70] sm:$0xff]
        %v5952 = vld [vmem:[#allocation3 + $0x78] sm:$0xff]
        %v5953 = vld [vmem:[#allocation3 + $0x80] sm:$0xff]
        %v5954 = vld [vmem:[#allocation3 + $0x88] sm:$0xff]
        %v5955 = vld [vmem:[#allocation3 + $0x90] sm:$0xff]
        %v5956 = vld [vmem:[#allocation3 + $0x98] sm:$0xff]
        %v5957 = vld [vmem:[#allocation3 + $0xa0] sm:$0xff]
        %v5958 = vld [vmem:[#allocation3 + $0xa8] sm:$0xff]
        %v5959 = vld [vmem:[#allocation3 + $0xb0] sm:$0xff]
        %v5960 = vld [vmem:[#allocation3 + $0xb8] sm:$0xff]
        %v5961 = vld [vmem:[#allocation3 + $0xc0] sm:$0xff]
        %v5962 = vld [vmem:[#allocation3 + $0xc8] sm:$0xff]
        %v5963 = vld [vmem:[#allocation3 + $0xd0] sm:$0xff]
        %v5964 = vld [vmem:[#allocation3 + $0xd8] sm:$0xff]
        %v5965 = vld [vmem:[#allocation3 + $0xe0] sm:$0xff]
        %v5966 = vld [vmem:[#allocation3 + $0xe8] sm:$0xff]
        %v5967 = vld [vmem:[#allocation3 + $0xf0] sm:$0xff]
        %v5968 = vld [vmem:[#allocation3 + $0xf8] sm:$0xff]
        %v5969 = vld [vmem:[#allocation2 + $0x8] sm:$0x11]
        %v5970 = vld [vmem:[#allocation2 + $0x18] sm:$0x11]
        %v5971 = vld [vmem:[#allocation2 + $0x28] sm:$0x11]
        %v5972 = vld [vmem:[#allocation2 + $0x38] sm:$0x11]
        %v5973 = vld [vmem:[#allocation2 + $0x48] sm:$0x11]
        %v5974 = vld [vmem:[#allocation2 + $0x58] sm:$0x11]
        %v5975 = vld [vmem:[#allocation2 + $0x68] sm:$0x11]
        %v5976 = vld [vmem:[#allocation2 + $0x78] sm:$0x11]
        %v5977 = vld [vmem:[#allocation2 + $0xa8] sm:$0x11]
        %v5978 = vld [vmem:[#allocation2 + $0xb8] sm:$0x11]
        %v5979 = vld [vmem:[#allocation2 + $0xc8] sm:$0x11]
        %v5980 = vld [vmem:[#allocation2 + $0xd8] sm:$0x11]
        %v5981 = vld [vmem:[#allocation2 + $0xe8] sm:$0x11]
        %v5982 = vld [vmem:[#allocation2 + $0xf8] sm:$0x11]
        %v5983 = vld [vmem:[#allocation2 + $0x108] sm:$0x11]
        %v5984 = vld [vmem:[#allocation2 + $0x118] sm:$0x11]
        %v5986 = vshrl.u32 %v5921, 16
        %v5988 = vrot.slane %v5986, 4
        %v5989 = vshll.u32 %v5921, 16
        %v5991 = vrot.slane %v5989, 5
        %v5992 = vor.u32 %v5988, %v5991
        %v5993 = vrot.slane %v5992, 4
        %v5995 = vshll.u32 %v5969, 16
        %v5997 = vrot.slane %v5995, 5
        %v5998 = vsel %vm788, %v5993, %v5997
        %v6000 = vshrl.u32 %v5922, 16
        %v6002 = vrot.slane %v6000, 4
        %v6003 = vshll.u32 %v5922, 16
        %v6005 = vrot.slane %v6003, 5
        %v6006 = vor.u32 %v6002, %v6005
        %v6007 = vrot.slane %v6006, 4
        %v6009 = vshll.u32 %v5970, 16
        %v6011 = vrot.slane %v6009, 5
        %v6012 = vsel %vm788, %v6007, %v6011
        %v6014 = vshrl.u32 %v5923, 16
        %v6016 = vrot.slane %v6014, 4
        %v6017 = vshll.u32 %v5923, 16
        %v6019 = vrot.slane %v6017, 5
        %v6020 = vor.u32 %v6016, %v6019
        %v6021 = vrot.slane %v6020, 4
        %v6023 = vshll.u32 %v5971, 16
        %v6025 = vrot.slane %v6023, 5
        %v6026 = vsel %vm788, %v6021, %v6025
        %v6028 = vshrl.u32 %v5924, 16
        %v6030 = vrot.slane %v6028, 4
        %v6031 = vshll.u32 %v5924, 16
        %v6033 = vrot.slane %v6031, 5
        %v6034 = vor.u32 %v6030, %v6033
        %v6035 = vrot.slane %v6034, 4
        %v6037 = vshll.u32 %v5972, 16
        %v6039 = vrot.slane %v6037, 5
        %v6040 = vsel %vm788, %v6035, %v6039
        %v6042 = vshrl.u32 %v5925, 16
        %v6044 = vrot.slane %v6042, 4
        %v6045 = vshll.u32 %v5925, 16
        %v6047 = vrot.slane %v6045, 5
        %v6048 = vor.u32 %v6044, %v6047
        %v6049 = vrot.slane %v6048, 4
        %v6051 = vshll.u32 %v5973, 16
        %v6053 = vrot.slane %v6051, 5
        %v6054 = vsel %vm788, %v6049, %v6053
        %v6056 = vshrl.u32 %v5926, 16
        %v6058 = vrot.slane %v6056, 4
        %v6059 = vshll.u32 %v5926, 16
        %v6061 = vrot.slane %v6059, 5
        %v6062 = vor.u32 %v6058, %v6061
        %v6063 = vrot.slane %v6062, 4
        %v6065 = vshll.u32 %v5974, 16
        %v6067 = vrot.slane %v6065, 5
        %v6068 = vsel %vm788, %v6063, %v6067
        %v6070 = vshrl.u32 %v5927, 16
        %v6072 = vrot.slane %v6070, 4
        %v6073 = vshll.u32 %v5927, 16
        %v6075 = vrot.slane %v6073, 5
        %v6076 = vor.u32 %v6072, %v6075
        %v6077 = vrot.slane %v6076, 4
        %v6079 = vshll.u32 %v5975, 16
        %v6081 = vrot.slane %v6079, 5
        %v6082 = vsel %vm788, %v6077, %v6081
        %v6084 = vshrl.u32 %v5928, 16
        %v6086 = vrot.slane %v6084, 4
        %v6087 = vshll.u32 %v5928, 16
        %v6089 = vrot.slane %v6087, 5
        %v6090 = vor.u32 %v6086, %v6089
        %v6091 = vrot.slane %v6090, 4
        %v6093 = vshll.u32 %v5976, 16
        %v6095 = vrot.slane %v6093, 5
        %v6096 = vsel %vm788, %v6091, %v6095
        %v6098 = vshrl.u32 %v5929, 16
        %v6100 = vrot.slane %v6098, 4
        %v6101 = vshll.u32 %v5929, 16
        %v6103 = vrot.slane %v6101, 5
        %v6104 = vor.u32 %v6100, %v6103
        %v6105 = vrot.slane %v6104, 4
        %v6107 = vshll.u32 %v5977, 16
        %v6109 = vrot.slane %v6107, 5
        %v6110 = vsel %vm788, %v6105, %v6109
        %v6112 = vshrl.u32 %v5930, 16
        %v6114 = vrot.slane %v6112, 4
        %v6115 = vshll.u32 %v5930, 16
        %v6117 = vrot.slane %v6115, 5
        %v6118 = vor.u32 %v6114, %v6117
        %v6119 = vrot.slane %v6118, 4
        %v6121 = vshll.u32 %v5978, 16
        %v6123 = vrot.slane %v6121, 5
        %v6124 = vsel %vm788, %v6119, %v6123
        %v6126 = vshrl.u32 %v5931, 16
        %v6128 = vrot.slane %v6126, 4
        %v6129 = vshll.u32 %v5931, 16
        %v6131 = vrot.slane %v6129, 5
        %v6132 = vor.u32 %v6128, %v6131
        %v6133 = vrot.slane %v6132, 4
        %v6135 = vshll.u32 %v5979, 16
        %v6137 = vrot.slane %v6135, 5
        %v6138 = vsel %vm788, %v6133, %v6137
        %v6140 = vshrl.u32 %v5932, 16
        %v6142 = vrot.slane %v6140, 4
        %v6143 = vshll.u32 %v5932, 16
        %v6145 = vrot.slane %v6143, 5
        %v6146 = vor.u32 %v6142, %v6145
        %v6147 = vrot.slane %v6146, 4
        %v6149 = vshll.u32 %v5980, 16
        %v6151 = vrot.slane %v6149, 5
        %v6152 = vsel %vm788, %v6147, %v6151
        %v6154 = vshrl.u32 %v5933, 16
        %v6156 = vrot.slane %v6154, 4
        %v6157 = vshll.u32 %v5933, 16
        %v6159 = vrot.slane %v6157, 5
        %v6160 = vor.u32 %v6156, %v6159
        %v6161 = vrot.slane %v6160, 4
        %v6163 = vshll.u32 %v5981, 16
        %v6165 = vrot.slane %v6163, 5
        %v6166 = vsel %vm788, %v6161, %v6165
        %v6168 = vshrl.u32 %v5934, 16
        %v6170 = vrot.slane %v6168, 4
        %v6171 = vshll.u32 %v5934, 16
        %v6173 = vrot.slane %v6171, 5
        %v6174 = vor.u32 %v6170, %v6173
        %v6175 = vrot.slane %v6174, 4
        %v6177 = vshll.u32 %v5982, 16
        %v6179 = vrot.slane %v6177, 5
        %v6180 = vsel %vm788, %v6175, %v6179
        %v6182 = vshrl.u32 %v5935, 16
        %v6184 = vrot.slane %v6182, 4
        %v6185 = vshll.u32 %v5935, 16
        %v6187 = vrot.slane %v6185, 5
        %v6188 = vor.u32 %v6184, %v6187
        %v6189 = vrot.slane %v6188, 4
        %v6191 = vshll.u32 %v5983, 16
        %v6193 = vrot.slane %v6191, 5
        %v6194 = vsel %vm788, %v6189, %v6193
        %v6196 = vshrl.u32 %v5936, 16
        %v6198 = vrot.slane %v6196, 4
        %v6199 = vshll.u32 %v5936, 16
        %v6201 = vrot.slane %v6199, 5
        %v6202 = vor.u32 %v6198, %v6201
        %v6203 = vrot.slane %v6202, 4
        %v6205 = vshll.u32 %v5984, 16
        %v6207 = vrot.slane %v6205, 5
        %v6208 = vsel %vm788, %v6203, %v6207
        %s6209 = scalar_lea.vmem [#allocation3], 256
        %v6210 = vld [vmem:[%s6209] sm:$0xff]
        %v6211 = vld [vmem:[%s6209 + $0x8] sm:$0xff]
        %v6212 = vld [vmem:[%s6209 + $0x10] sm:$0xff]
        %v6213 = vld [vmem:[%s6209 + $0x18] sm:$0xff]
        %v6214 = vld [vmem:[%s6209 + $0x20] sm:$0xff]
        %v6215 = vld [vmem:[%s6209 + $0x28] sm:$0xff]
        %v6216 = vld [vmem:[%s6209 + $0x30] sm:$0xff]
        %v6217 = vld [vmem:[%s6209 + $0x38] sm:$0xff]
        %v6218 = vld [vmem:[%s6209 + $0x40] sm:$0xff]
        %v6219 = vld [vmem:[%s6209 + $0x48] sm:$0xff]
        %v6220 = vld [vmem:[%s6209 + $0x50] sm:$0xff]
        %v6221 = vld [vmem:[%s6209 + $0x58] sm:$0xff]
        %v6222 = vld [vmem:[%s6209 + $0x60] sm:$0xff]
        %v6223 = vld [vmem:[%s6209 + $0x68] sm:$0xff]
        %v6224 = vld [vmem:[%s6209 + $0x70] sm:$0xff]
        %v6225 = vld [vmem:[%s6209 + $0x78] sm:$0xff]
        %v6226 = vld [vmem:[%s6209 + $0x80] sm:$0xff]
        %v6227 = vld [vmem:[%s6209 + $0x88] sm:$0xff]
        %v6228 = vld [vmem:[%s6209 + $0x90] sm:$0xff]
        %v6229 = vld [vmem:[%s6209 + $0x98] sm:$0xff]
        %v6230 = vld [vmem:[%s6209 + $0xa0] sm:$0xff]
        %v6231 = vld [vmem:[%s6209 + $0xa8] sm:$0xff]
        %v6232 = vld [vmem:[%s6209 + $0xb0] sm:$0xff]
        %v6233 = vld [vmem:[%s6209 + $0xb8] sm:$0xff]
        %v6234 = vld [vmem:[%s6209 + $0xc0] sm:$0xff]
        %v6235 = vld [vmem:[%s6209 + $0xc8] sm:$0xff]
        %v6236 = vld [vmem:[%s6209 + $0xd0] sm:$0xff]
        %v6237 = vld [vmem:[%s6209 + $0xd8] sm:$0xff]
        %v6238 = vld [vmem:[%s6209 + $0xe0] sm:$0xff]
        %v6239 = vld [vmem:[%s6209 + $0xe8] sm:$0xff]
        %v6240 = vld [vmem:[%s6209 + $0xf0] sm:$0xff]
        %v6241 = vld [vmem:[%s6209 + $0xf8] sm:$0xff]
        %v6242 = vunpack.c.l.b16 %v5998
        %v6243 = vunpack.c.h.b16 %v5998
        %v6244 = vunpack.c.l.b16 %v6012
        %v6245 = vunpack.c.h.b16 %v6012
        %v6246 = vunpack.c.l.b16 %v6026
        %v6247 = vunpack.c.h.b16 %v6026
        %v6248 = vunpack.c.l.b16 %v6040
        %v6249 = vunpack.c.h.b16 %v6040
        %v6250 = vunpack.c.l.b16 %v6054
        %v6251 = vunpack.c.h.b16 %v6054
        %v6252 = vunpack.c.l.b16 %v6068
        %v6253 = vunpack.c.h.b16 %v6068
        %v6254 = vunpack.c.l.b16 %v6082
        %v6255 = vunpack.c.h.b16 %v6082
        %v6256 = vunpack.c.l.b16 %v6096
        %v6257 = vunpack.c.h.b16 %v6096
        %v6258 = vunpack.c.l.b16 %v6110
        %v6259 = vunpack.c.h.b16 %v6110
        %v6260 = vunpack.c.l.b16 %v6124
        %v6261 = vunpack.c.h.b16 %v6124
        %v6262 = vunpack.c.l.b16 %v6138
        %v6263 = vunpack.c.h.b16 %v6138
        %v6264 = vunpack.c.l.b16 %v6152
        %v6265 = vunpack.c.h.b16 %v6152
        %v6266 = vunpack.c.l.b16 %v6166
        %v6267 = vunpack.c.h.b16 %v6166
        %v6268 = vunpack.c.l.b16 %v6180
        %v6269 = vunpack.c.h.b16 %v6180
        %v6270 = vunpack.c.l.b16 %v6194
        %v6271 = vunpack.c.h.b16 %v6194
        %v6272 = vunpack.c.l.b16 %v6208
        %v6273 = vunpack.c.h.b16 %v6208
        %v6274 = vpack.c.b16 %v6244, %v6242
        %v6275 = vpack.c.b16 %v6245, %v6243
        %v6276 = vpack.c.b16 %v6248, %v6246
        %v6277 = vpack.c.b16 %v6249, %v6247
        %v6278 = vpack.c.b16 %v6252, %v6250
        %v6279 = vpack.c.b16 %v6253, %v6251
        %v6280 = vpack.c.b16 %v6256, %v6254
        %v6281 = vpack.c.b16 %v6257, %v6255
        %v6282 = vpack.c.b16 %v6260, %v6258
        %v6283 = vpack.c.b16 %v6261, %v6259
        %v6284 = vpack.c.b16 %v6264, %v6262
        %v6285 = vpack.c.b16 %v6265, %v6263
        %v6286 = vpack.c.b16 %v6268, %v6266
        %v6287 = vpack.c.b16 %v6269, %v6267
        %v6288 = vpack.c.b16 %v6272, %v6270
        %v6289 = vpack.c.b16 %v6273, %v6271
        %v6338 = vunpack.c.l.b16 %v6210
        %v6339 = vunpack.c.h.b16 %v6210
        %v6340 = vunpack.c.l.b16 %v6211
        %v6341 = vunpack.c.h.b16 %v6211
        %v6342 = vunpack.c.l.b16 %v6212
        %v6343 = vunpack.c.h.b16 %v6212
        %v6344 = vunpack.c.l.b16 %v6213
        %v6345 = vunpack.c.h.b16 %v6213
        %v6346 = vunpack.c.l.b16 %v6214
        %v6347 = vunpack.c.h.b16 %v6214
        %v6348 = vunpack.c.l.b16 %v6215
        %v6349 = vunpack.c.h.b16 %v6215
        %v6350 = vunpack.c.l.b16 %v6216
        %v6351 = vunpack.c.h.b16 %v6216
        %v6352 = vunpack.c.l.b16 %v6217
        %v6353 = vunpack.c.h.b16 %v6217
        %v6354 = vunpack.c.l.b16 %v6218
        %v6355 = vunpack.c.h.b16 %v6218
        %v6356 = vunpack.c.l.b16 %v6219
        %v6357 = vunpack.c.h.b16 %v6219
        %v6358 = vunpack.c.l.b16 %v6220
        %v6359 = vunpack.c.h.b16 %v6220
        %v6360 = vunpack.c.l.b16 %v6221
        %v6361 = vunpack.c.h.b16 %v6221
        %v6362 = vunpack.c.l.b16 %v6222
        %v6363 = vunpack.c.h.b16 %v6222
        %v6364 = vunpack.c.l.b16 %v6223
        %v6365 = vunpack.c.h.b16 %v6223
        %v6366 = vunpack.c.l.b16 %v6224
        %v6367 = vunpack.c.h.b16 %v6224
        %v6368 = vunpack.c.l.b16 %v6225
        %v6369 = vunpack.c.h.b16 %v6225
        %v6370 = vunpack.c.l.b16 %v6226
        %v6371 = vunpack.c.h.b16 %v6226
        %v6372 = vunpack.c.l.b16 %v6227
        %v6373 = vunpack.c.h.b16 %v6227
        %v6374 = vunpack.c.l.b16 %v6228
        %v6375 = vunpack.c.h.b16 %v6228
        %v6376 = vunpack.c.l.b16 %v6229
        %v6377 = vunpack.c.h.b16 %v6229
        %v6378 = vunpack.c.l.b16 %v6230
        %v6379 = vunpack.c.h.b16 %v6230
        %v6380 = vunpack.c.l.b16 %v6231
        %v6381 = vunpack.c.h.b16 %v6231
        %v6382 = vunpack.c.l.b16 %v6232
        %v6383 = vunpack.c.h.b16 %v6232
        %v6384 = vunpack.c.l.b16 %v6233
        %v6385 = vunpack.c.h.b16 %v6233
        %v6386 = vunpack.c.l.b16 %v6234
        %v6387 = vunpack.c.h.b16 %v6234
        %v6388 = vunpack.c.l.b16 %v6235
        %v6389 = vunpack.c.h.b16 %v6235
        %v6390 = vunpack.c.l.b16 %v6236
        %v6391 = vunpack.c.h.b16 %v6236
        %v6392 = vunpack.c.l.b16 %v6237
        %v6393 = vunpack.c.h.b16 %v6237
        %v6394 = vunpack.c.l.b16 %v6238
        %v6395 = vunpack.c.h.b16 %v6238
        %v6396 = vunpack.c.l.b16 %v6239
        %v6397 = vunpack.c.h.b16 %v6239
        %v6398 = vunpack.c.l.b16 %v6240
        %v6399 = vunpack.c.h.b16 %v6240
        %v6400 = vunpack.c.l.b16 %v6241
        %v6401 = vunpack.c.h.b16 %v6241
        %v6402 = vpack.c.b16 %v6340, %v6338
        %v6403 = vpack.c.b16 %v6341, %v6339
        %v6404 = vpack.c.b16 %v6344, %v6342
        %v6405 = vpack.c.b16 %v6345, %v6343
        %v6406 = vpack.c.b16 %v6348, %v6346
        %v6407 = vpack.c.b16 %v6349, %v6347
        %v6408 = vpack.c.b16 %v6352, %v6350
        %v6409 = vpack.c.b16 %v6353, %v6351
        %v6410 = vpack.c.b16 %v6356, %v6354
        %v6411 = vpack.c.b16 %v6357, %v6355
        %v6412 = vpack.c.b16 %v6360, %v6358
        %v6413 = vpack.c.b16 %v6361, %v6359
        %v6414 = vpack.c.b16 %v6364, %v6362
        %v6415 = vpack.c.b16 %v6365, %v6363
        %v6416 = vpack.c.b16 %v6368, %v6366
        %v6417 = vpack.c.b16 %v6369, %v6367
        %v6418 = vpack.c.b16 %v6372, %v6370
        %v6419 = vpack.c.b16 %v6373, %v6371
        %v6420 = vpack.c.b16 %v6376, %v6374
        %v6421 = vpack.c.b16 %v6377, %v6375
        %v6422 = vpack.c.b16 %v6380, %v6378
        %v6423 = vpack.c.b16 %v6381, %v6379
        %v6424 = vpack.c.b16 %v6384, %v6382
        %v6425 = vpack.c.b16 %v6385, %v6383
        %v6426 = vpack.c.b16 %v6388, %v6386
        %v6427 = vpack.c.b16 %v6389, %v6387
        %v6428 = vpack.c.b16 %v6392, %v6390
        %v6429 = vpack.c.b16 %v6393, %v6391
        %v6430 = vpack.c.b16 %v6396, %v6394
        %v6431 = vpack.c.b16 %v6397, %v6395
        %v6432 = vpack.c.b16 %v6400, %v6398
        %v6433 = vpack.c.b16 %v6401, %v6399
        %6466 = vmatprep.subr.bf16.mxu0 %v6403
        %6467 = vmatpush1.bf16.msra.mxu0 %v6402
        %6468 = vmatprep.subr.bf16.mxu0 %v6405
        %6469 = vmatpush1.bf16.msra.mxu0 %v6404
        %6470 = vmatprep.subr.bf16.mxu0 %v6407
        %6471 = vmatpush1.bf16.msra.mxu0 %v6406
        %6472 = vmatprep.subr.bf16.mxu0 %v6409
        %6473 = vmatpush1.bf16.msra.mxu0 %v6408
        %6474 = vmatprep.subr.bf16.mxu0 %v6411
        %6475 = vmatpush1.bf16.msra.mxu0 %v6410
        %6476 = vmatprep.subr.bf16.mxu0 %v6413
        %6477 = vmatpush1.bf16.msra.mxu0 %v6412
        %6478 = vmatprep.subr.bf16.mxu0 %v6415
        %6479 = vmatpush1.bf16.msra.mxu0 %v6414
        %6480 = vmatprep.subr.bf16.mxu0 %v6417
        %6481 = vmatpush1.bf16.msra.mxu0 %v6416
        %6482 = vmatprep.subr.bf16.mxu0 %v6419
        %6483 = vmatpush1.bf16.msra.mxu0 %v6418
        %6484 = vmatprep.subr.bf16.mxu0 %v6421
        %6485 = vmatpush1.bf16.msra.mxu0 %v6420
        %6486 = vmatprep.subr.bf16.mxu0 %v6423
        %6487 = vmatpush1.bf16.msra.mxu0 %v6422
        %6488 = vmatprep.subr.bf16.mxu0 %v6425
        %6489 = vmatpush1.bf16.msra.mxu0 %v6424
        %6490 = vmatprep.subr.bf16.mxu0 %v6427
        %6491 = vmatpush1.bf16.msra.mxu0 %v6426
        %6492 = vmatprep.subr.bf16.mxu0 %v6429
        %6493 = vmatpush1.bf16.msra.mxu0 %v6428
        %6494 = vmatprep.subr.bf16.mxu0 %v6431
        %6495 = vmatpush1.bf16.msra.mxu0 %v6430
        %6496 = vmatprep.subr.bf16.mxu0 %v6433
        %6497 = vmatpush1.bf16.msra.mxu0 %v6432
        %6498 = vmatprep.mubr.bf16.mxu0 %v6275
        %6499 = vmatmul.mubr.bf16.gmra.mrb[0].mxu0 %v6274
        %v6500 = vpop.f32.mrb[0].mxu0
        %v6501 = vadd.f32 0.0, %v6500
        %v6502 = vpop.f32.mrb[0].mxu0
        %v6503 = vadd.f32 0.0, %v6502
        %v6504 = vpop.f32.mrb[0].mxu0
        %v6505 = vadd.f32 0.0, %v6504
        %v6506 = vpop.f32.mrb[0].mxu0
        %v6507 = vadd.f32 0.0, %v6506
        %6508 = vmatprep.mubr.bf16.mxu0 %v6277
        %6509 = vmatmul.mubr.bf16.gmra.mrb[0].mxu0 %v6276
        %v6510 = vpop.f32.mrb[0].mxu0
        %v6511 = vadd.f32 0.0, %v6510
        %v6512 = vpop.f32.mrb[0].mxu0
        %v6513 = vadd.f32 0.0, %v6512
        %v6514 = vpop.f32.mrb[0].mxu0
        %v6515 = vadd.f32 0.0, %v6514
        %v6516 = vpop.f32.mrb[0].mxu0
        %v6517 = vadd.f32 0.0, %v6516
        %6518 = vmatprep.mubr.bf16.mxu0 %v6279
        %6519 = vmatmul.mubr.bf16.gmra.mrb[0].mxu0 %v6278
        %v6520 = vpop.f32.mrb[0].mxu0
        %v6521 = vadd.f32 0.0, %v6520
        %v6522 = vpop.f32.mrb[0].mxu0
        %v6523 = vadd.f32 0.0, %v6522
        %v6524 = vpop.f32.mrb[0].mxu0
        %v6525 = vadd.f32 0.0, %v6524
        %v6526 = vpop.f32.mrb[0].mxu0
        %v6527 = vadd.f32 0.0, %v6526
        %6528 = vmatprep.mubr.bf16.mxu0 %v6281
        %6529 = vmatmul.mubr.bf16.gmra.mrb[0].mxu0 %v6280
        %v6530 = vpop.f32.mrb[0].mxu0
        %v6531 = vadd.f32 0.0, %v6530
        %v6532 = vpop.f32.mrb[0].mxu0
        %v6533 = vadd.f32 0.0, %v6532
        %v6534 = vpop.f32.mrb[0].mxu0
        %v6535 = vadd.f32 0.0, %v6534
        %v6536 = vpop.f32.mrb[0].mxu0
        %v6537 = vadd.f32 0.0, %v6536
        %6538 = vmatprep.mubr.bf16.mxu0 %v6283
        %6539 = vmatmul.mubr.bf16.gmra.mrb[0].mxu0 %v6282
        %v6540 = vpop.f32.mrb[0].mxu0
        %v6541 = vadd.f32 0.0, %v6540
        %v6542 = vpop.f32.mrb[0].mxu0
        %v6543 = vadd.f32 0.0, %v6542
        %v6544 = vpop.f32.mrb[0].mxu0
        %v6545 = vadd.f32 0.0, %v6544
        %v6546 = vpop.f32.mrb[0].mxu0
        %v6547 = vadd.f32 0.0, %v6546
        %6548 = vmatprep.mubr.bf16.mxu0 %v6285
        %6549 = vmatmul.mubr.bf16.gmra.mrb[0].mxu0 %v6284
        %v6550 = vpop.f32.mrb[0].mxu0
        %v6551 = vadd.f32 0.0, %v6550
        %v6552 = vpop.f32.mrb[0].mxu0
        %v6553 = vadd.f32 0.0, %v6552
        %v6554 = vpop.f32.mrb[0].mxu0
        %v6555 = vadd.f32 0.0, %v6554
        %v6556 = vpop.f32.mrb[0].mxu0
        %v6557 = vadd.f32 0.0, %v6556
        %6558 = vmatprep.mubr.bf16.mxu0 %v6287
        %6559 = vmatmul.mubr.bf16.gmra.mrb[0].mxu0 %v6286
        %v6560 = vpop.f32.mrb[0].mxu0
        %v6561 = vadd.f32 0.0, %v6560
        %v6562 = vpop.f32.mrb[0].mxu0
        %v6563 = vadd.f32 0.0, %v6562
        %v6564 = vpop.f32.mrb[0].mxu0
        %v6565 = vadd.f32 0.0, %v6564
        %v6566 = vpop.f32.mrb[0].mxu0
        %v6567 = vadd.f32 0.0, %v6566
        %6568 = vmatprep.mubr.bf16.mxu0 %v6289
        %6569 = vmatmul.mubr.bf16.gmra.mrb[0].mxu0 %v6288
        %v6570 = vpop.f32.mrb[0].mxu0
        %v6571 = vadd.f32 0.0, %v6570
        %v6572 = vpop.f32.mrb[0].mxu0
        %v6573 = vadd.f32 0.0, %v6572
        %v6574 = vpop.f32.mrb[0].mxu0
        %v6575 = vadd.f32 0.0, %v6574
        %v6576 = vpop.f32.mrb[0].mxu0
        %v6577 = vadd.f32 0.0, %v6576
        %6578 = vdwg.mxu0
        %v6595 = vunpack.c.l.b16 %v5921
        %v6596 = vunpack.c.h.b16 %v5921
        %v6597 = vunpack.c.l.b16 %v5922
        %v6598 = vunpack.c.h.b16 %v5922
        %v6599 = vunpack.c.l.b16 %v5923
        %v6600 = vunpack.c.h.b16 %v5923
        %v6601 = vunpack.c.l.b16 %v5924
        %v6602 = vunpack.c.h.b16 %v5924
        %v6603 = vunpack.c.l.b16 %v5925
        %v6604 = vunpack.c.h.b16 %v5925
        %v6605 = vunpack.c.l.b16 %v5926
        %v6606 = vunpack.c.h.b16 %v5926
        %v6607 = vunpack.c.l.b16 %v5927
        %v6608 = vunpack.c.h.b16 %v5927
        %v6609 = vunpack.c.l.b16 %v5928
        %v6610 = vunpack.c.h.b16 %v5928
        %v6611 = vunpack.c.l.b16 %v5929
        %v6612 = vunpack.c.h.b16 %v5929
        %v6613 = vunpack.c.l.b16 %v5930
        %v6614 = vunpack.c.h.b16 %v5930
        %v6615 = vunpack.c.l.b16 %v5931
        %v6616 = vunpack.c.h.b16 %v5931
        %v6617 = vunpack.c.l.b16 %v5932
        %v6618 = vunpack.c.h.b16 %v5932
        %v6619 = vunpack.c.l.b16 %v5933
        %v6620 = vunpack.c.h.b16 %v5933
        %v6621 = vunpack.c.l.b16 %v5934
        %v6622 = vunpack.c.h.b16 %v5934
        %v6623 = vunpack.c.l.b16 %v5935
        %v6624 = vunpack.c.h.b16 %v5935
        %v6625 = vunpack.c.l.b16 %v5936
        %v6626 = vunpack.c.h.b16 %v5936
        %v6627 = vpack.c.b16 %v6597, %v6595
        %v6628 = vpack.c.b16 %v6598, %v6596
        %v6629 = vpack.c.b16 %v6601, %v6599
        %v6630 = vpack.c.b16 %v6602, %v6600
        %v6631 = vpack.c.b16 %v6605, %v6603
        %v6632 = vpack.c.b16 %v6606, %v6604
        %v6633 = vpack.c.b16 %v6609, %v6607
        %v6634 = vpack.c.b16 %v6610, %v6608
        %v6635 = vpack.c.b16 %v6613, %v6611
        %v6636 = vpack.c.b16 %v6614, %v6612
        %v6637 = vpack.c.b16 %v6617, %v6615
        %v6638 = vpack.c.b16 %v6618, %v6616
        %v6639 = vpack.c.b16 %v6621, %v6619
        %v6640 = vpack.c.b16 %v6622, %v6620
        %v6641 = vpack.c.b16 %v6625, %v6623
        %v6642 = vpack.c.b16 %v6626, %v6624
        %v6691 = vunpack.c.l.b16 %v5937
        %v6692 = vunpack.c.h.b16 %v5937
        %v6693 = vunpack.c.l.b16 %v5938
        %v6694 = vunpack.c.h.b16 %v5938
        %v6695 = vunpack.c.l.b16 %v5939
        %v6696 = vunpack.c.h.b16 %v5939
        %v6697 = vunpack.c.l.b16 %v5940
        %v6698 = vunpack.c.h.b16 %v5940
        %v6699 = vunpack.c.l.b16 %v5941
        %v6700 = vunpack.c.h.b16 %v5941
        %v6701 = vunpack.c.l.b16 %v5942
        %v6702 = vunpack.c.h.b16 %v5942
        %v6703 = vunpack.c.l.b16 %v5943
        %v6704 = vunpack.c.h.b16 %v5943
        %v6705 = vunpack.c.l.b16 %v5944
        %v6706 = vunpack.c.h.b16 %v5944
        %v6707 = vunpack.c.l.b16 %v5945
        %v6708 = vunpack.c.h.b16 %v5945
        %v6709 = vunpack.c.l.b16 %v5946
        %v6710 = vunpack.c.h.b16 %v5946
        %v6711 = vunpack.c.l.b16 %v5947
        %v6712 = vunpack.c.h.b16 %v5947
        %v6713 = vunpack.c.l.b16 %v5948
        %v6714 = vunpack.c.h.b16 %v5948
        %v6715 = vunpack.c.l.b16 %v5949
        %v6716 = vunpack.c.h.b16 %v5949
        %v6717 = vunpack.c.l.b16 %v5950
        %v6718 = vunpack.c.h.b16 %v5950
        %v6719 = vunpack.c.l.b16 %v5951
        %v6720 = vunpack.c.h.b16 %v5951
        %v6721 = vunpack.c.l.b16 %v5952
        %v6722 = vunpack.c.h.b16 %v5952
        %v6723 = vunpack.c.l.b16 %v5953
        %v6724 = vunpack.c.h.b16 %v5953
        %v6725 = vunpack.c.l.b16 %v5954
        %v6726 = vunpack.c.h.b16 %v5954
        %v6727 = vunpack.c.l.b16 %v5955
        %v6728 = vunpack.c.h.b16 %v5955
        %v6729 = vunpack.c.l.b16 %v5956
        %v6730 = vunpack.c.h.b16 %v5956
        %v6731 = vunpack.c.l.b16 %v5957
        %v6732 = vunpack.c.h.b16 %v5957
        %v6733 = vunpack.c.l.b16 %v5958
        %v6734 = vunpack.c.h.b16 %v5958
        %v6735 = vunpack.c.l.b16 %v5959
        %v6736 = vunpack.c.h.b16 %v5959
        %v6737 = vunpack.c.l.b16 %v5960
        %v6738 = vunpack.c.h.b16 %v5960
        %v6739 = vunpack.c.l.b16 %v5961
        %v6740 = vunpack.c.h.b16 %v5961
        %v6741 = vunpack.c.l.b16 %v5962
        %v6742 = vunpack.c.h.b16 %v5962
        %v6743 = vunpack.c.l.b16 %v5963
        %v6744 = vunpack.c.h.b16 %v5963
        %v6745 = vunpack.c.l.b16 %v5964
        %v6746 = vunpack.c.h.b16 %v5964
        %v6747 = vunpack.c.l.b16 %v5965
        %v6748 = vunpack.c.h.b16 %v5965
        %v6749 = vunpack.c.l.b16 %v5966
        %v6750 = vunpack.c.h.b16 %v5966
        %v6751 = vunpack.c.l.b16 %v5967
        %v6752 = vunpack.c.h.b16 %v5967
        %v6753 = vunpack.c.l.b16 %v5968
        %v6754 = vunpack.c.h.b16 %v5968
        %v6755 = vpack.c.b16 %v6693, %v6691
        %v6756 = vpack.c.b16 %v6694, %v6692
        %v6757 = vpack.c.b16 %v6697, %v6695
        %v6758 = vpack.c.b16 %v6698, %v6696
        %v6759 = vpack.c.b16 %v6701, %v6699
        %v6760 = vpack.c.b16 %v6702, %v6700
        %v6761 = vpack.c.b16 %v6705, %v6703
        %v6762 = vpack.c.b16 %v6706, %v6704
        %v6763 = vpack.c.b16 %v6709, %v6707
        %v6764 = vpack.c.b16 %v6710, %v6708
        %v6765 = vpack.c.b16 %v6713, %v6711
        %v6766 = vpack.c.b16 %v6714, %v6712
        %v6767 = vpack.c.b16 %v6717, %v6715
        %v6768 = vpack.c.b16 %v6718, %v6716
        %v6769 = vpack.c.b16 %v6721, %v6719
        %v6770 = vpack.c.b16 %v6722, %v6720
        %v6771 = vpack.c.b16 %v6725, %v6723
        %v6772 = vpack.c.b16 %v6726, %v6724
        %v6773 = vpack.c.b16 %v6729, %v6727
        %v6774 = vpack.c.b16 %v6730, %v6728
        %v6775 = vpack.c.b16 %v6733, %v6731
        %v6776 = vpack.c.b16 %v6734, %v6732
        %v6777 = vpack.c.b16 %v6737, %v6735
        %v6778 = vpack.c.b16 %v6738, %v6736
        %v6779 = vpack.c.b16 %v6741, %v6739
        %v6780 = vpack.c.b16 %v6742, %v6740
        %v6781 = vpack.c.b16 %v6745, %v6743
        %v6782 = vpack.c.b16 %v6746, %v6744
        %v6783 = vpack.c.b16 %v6749, %v6747
        %v6784 = vpack.c.b16 %v6750, %v6748
        %v6785 = vpack.c.b16 %v6753, %v6751
        %v6786 = vpack.c.b16 %v6754, %v6752
        %6819 = vmatprep.subr.bf16.mxu0 %v6756
        %6820 = vmatpush1.bf16.msra.mxu0 %v6755
        %6821 = vmatprep.subr.bf16.mxu0 %v6758
        %6822 = vmatpush1.bf16.msra.mxu0 %v6757
        %6823 = vmatprep.subr.bf16.mxu0 %v6760
        %6824 = vmatpush1.bf16.msra.mxu0 %v6759
        %6825 = vmatprep.subr.bf16.mxu0 %v6762
        %6826 = vmatpush1.bf16.msra.mxu0 %v6761
        %6827 = vmatprep.subr.bf16.mxu0 %v6764
        %6828 = vmatpush1.bf16.msra.mxu0 %v6763
        %6829 = vmatprep.subr.bf16.mxu0 %v6766
        %6830 = vmatpush1.bf16.msra.mxu0 %v6765
        %6831 = vmatprep.subr.bf16.mxu0 %v6768
        %6832 = vmatpush1.bf16.msra.mxu0 %v6767
        %6833 = vmatprep.subr.bf16.mxu0 %v6770
        %6834 = vmatpush1.bf16.msra.mxu0 %v6769
        %6835 = vmatprep.subr.bf16.mxu0 %v6772
        %6836 = vmatpush1.bf16.msra.mxu0 %v6771
        %6837 = vmatprep.subr.bf16.mxu0 %v6774
        %6838 = vmatpush1.bf16.msra.mxu0 %v6773
        %6839 = vmatprep.subr.bf16.mxu0 %v6776
        %6840 = vmatpush1.bf16.msra.mxu0 %v6775
        %6841 = vmatprep.subr.bf16.mxu0 %v6778
        %6842 = vmatpush1.bf16.msra.mxu0 %v6777
        %6843 = vmatprep.subr.bf16.mxu0 %v6780
        %6844 = vmatpush1.bf16.msra.mxu0 %v6779
        %6845 = vmatprep.subr.bf16.mxu0 %v6782
        %6846 = vmatpush1.bf16.msra.mxu0 %v6781
        %6847 = vmatprep.subr.bf16.mxu0 %v6784
        %6848 = vmatpush1.bf16.msra.mxu0 %v6783
        %6849 = vmatprep.subr.bf16.mxu0 %v6786
        %6850 = vmatpush1.bf16.msra.mxu0 %v6785
        %6851 = vmatprep.mubr.bf16.mxu0 %v6628
        %6852 = vmatmul.mubr.bf16.gmra.mrb[0].mxu0 %v6627
        %v6853 = vpop.f32.mrb[0].mxu0
        %v6854 = vadd.f32 %v6501, %v6853
        %v6855 = vpop.f32.mrb[0].mxu0
        %v6856 = vadd.f32 %v6503, %v6855
        %v6857 = vpop.f32.mrb[0].mxu0
        %v6858 = vadd.f32 %v6505, %v6857
        %v6859 = vpop.f32.mrb[0].mxu0
        %v6860 = vadd.f32 %v6507, %v6859
        %6861 = vmatprep.mubr.bf16.mxu0 %v6630
        %6862 = vmatmul.mubr.bf16.gmra.mrb[0].mxu0 %v6629
        %v6863 = vpop.f32.mrb[0].mxu0
        %v6864 = vadd.f32 %v6511, %v6863
        %v6865 = vpop.f32.mrb[0].mxu0
        %v6866 = vadd.f32 %v6513, %v6865
        %v6867 = vpop.f32.mrb[0].mxu0
        %v6868 = vadd.f32 %v6515, %v6867
        %v6869 = vpop.f32.mrb[0].mxu0
        %v6870 = vadd.f32 %v6517, %v6869
        %6871 = vmatprep.mubr.bf16.mxu0 %v6632
        %6872 = vmatmul.mubr.bf16.gmra.mrb[0].mxu0 %v6631
        %v6873 = vpop.f32.mrb[0].mxu0
        %v6874 = vadd.f32 %v6521, %v6873
        %v6875 = vpop.f32.mrb[0].mxu0
        %v6876 = vadd.f32 %v6523, %v6875
        %v6877 = vpop.f32.mrb[0].mxu0
        %v6878 = vadd.f32 %v6525, %v6877
        %v6879 = vpop.f32.mrb[0].mxu0
        %v6880 = vadd.f32 %v6527, %v6879
        %6881 = vmatprep.mubr.bf16.mxu0 %v6634
        %6882 = vmatmul.mubr.bf16.gmra.mrb[0].mxu0 %v6633
        %v6883 = vpop.f32.mrb[0].mxu0
        %v6884 = vadd.f32 %v6531, %v6883
        %v6885 = vpop.f32.mrb[0].mxu0
        %v6886 = vadd.f32 %v6533, %v6885
        %v6887 = vpop.f32.mrb[0].mxu0
        %v6888 = vadd.f32 %v6535, %v6887
        %v6889 = vpop.f32.mrb[0].mxu0
        %v6890 = vadd.f32 %v6537, %v6889
        %6891 = vmatprep.mubr.bf16.mxu0 %v6636
        %6892 = vmatmul.mubr.bf16.gmra.mrb[0].mxu0 %v6635
        %v6893 = vpop.f32.mrb[0].mxu0
        %v6894 = vadd.f32 %v6541, %v6893
        %v6895 = vpop.f32.mrb[0].mxu0
        %v6896 = vadd.f32 %v6543, %v6895
        %v6897 = vpop.f32.mrb[0].mxu0
        %v6898 = vadd.f32 %v6545, %v6897
        %v6899 = vpop.f32.mrb[0].mxu0
        %v6900 = vadd.f32 %v6547, %v6899
        %6901 = vmatprep.mubr.bf16.mxu0 %v6638
        %6902 = vmatmul.mubr.bf16.gmra.mrb[0].mxu0 %v6637
        %v6903 = vpop.f32.mrb[0].mxu0
        %v6904 = vadd.f32 %v6551, %v6903
        %v6905 = vpop.f32.mrb[0].mxu0
        %v6906 = vadd.f32 %v6553, %v6905
        %v6907 = vpop.f32.mrb[0].mxu0
        %v6908 = vadd.f32 %v6555, %v6907
        %v6909 = vpop.f32.mrb[0].mxu0
        %v6910 = vadd.f32 %v6557, %v6909
        %6911 = vmatprep.mubr.bf16.mxu0 %v6640
        %6912 = vmatmul.mubr.bf16.gmra.mrb[0].mxu0 %v6639
        %v6913 = vpop.f32.mrb[0].mxu0
        %v6914 = vadd.f32 %v6561, %v6913
        %v6915 = vpop.f32.mrb[0].mxu0
        %v6916 = vadd.f32 %v6563, %v6915
        %v6917 = vpop.f32.mrb[0].mxu0
        %v6918 = vadd.f32 %v6565, %v6917
        %v6919 = vpop.f32.mrb[0].mxu0
        %v6920 = vadd.f32 %v6567, %v6919
        %6921 = vmatprep.mubr.bf16.mxu0 %v6642
        %6922 = vmatmul.mubr.bf16.gmra.mrb[0].mxu0 %v6641
        %v6923 = vpop.f32.mrb[0].mxu0
        %v6924 = vadd.f32 %v6571, %v6923
        %v6925 = vpop.f32.mrb[0].mxu0
        %v6926 = vadd.f32 %v6573, %v6925
        %v6927 = vpop.f32.mrb[0].mxu0
        %v6928 = vadd.f32 %v6575, %v6927
        %v6929 = vpop.f32.mrb[0].mxu0
        %v6930 = vadd.f32 %v6577, %v6929
        %6931 = vdwg.mxu0
        %v6932 = vld [vmem:[#allocation2] sm:$0xee]
        %v6933 = vld [vmem:[#allocation2 + $0x10] sm:$0xee]
        %v6934 = vld [vmem:[#allocation2 + $0x20] sm:$0xee]
        %v6935 = vld [vmem:[#allocation2 + $0x30] sm:$0xee]
        %v6936 = vld [vmem:[#allocation2 + $0x40] sm:$0xee]
        %v6937 = vld [vmem:[#allocation2 + $0x50] sm:$0xee]
        %v6938 = vld [vmem:[#allocation2 + $0x60] sm:$0xee]
        %v6939 = vld [vmem:[#allocation2 + $0x70] sm:$0xee]
        %v6940 = vld [vmem:[#allocation2 + $0xa0] sm:$0xee]
        %v6941 = vld [vmem:[#allocation2 + $0xb0] sm:$0xee]
        %v6942 = vld [vmem:[#allocation2 + $0xc0] sm:$0xee]
        %v6943 = vld [vmem:[#allocation2 + $0xd0] sm:$0xee]
        %v6944 = vld [vmem:[#allocation2 + $0xe0] sm:$0xee]
        %v6945 = vld [vmem:[#allocation2 + $0xf0] sm:$0xee]
        %v6946 = vld [vmem:[#allocation2 + $0x100] sm:$0xee]
        %v6947 = vld [vmem:[#allocation2 + $0x110] sm:$0xee]
        %v6980 = vrot.slane %v6932, 5
        %v6981 = vrot.slane %v6980, 4
        %v6982 = vrot.slane %v5969, 5
        %v6983 = vsel %vm1786, %v6981, %v6982
        %v6984 = vrot.slane %v6933, 5
        %v6985 = vrot.slane %v6984, 4
        %v6986 = vrot.slane %v5970, 5
        %v6987 = vsel %vm1786, %v6985, %v6986
        %v6988 = vrot.slane %v6934, 5
        %v6989 = vrot.slane %v6988, 4
        %v6990 = vrot.slane %v5971, 5
        %v6991 = vsel %vm1786, %v6989, %v6990
        %v6992 = vrot.slane %v6935, 5
        %v6993 = vrot.slane %v6992, 4
        %v6994 = vrot.slane %v5972, 5
        %v6995 = vsel %vm1786, %v6993, %v6994
        %v6996 = vrot.slane %v6936, 5
        %v6997 = vrot.slane %v6996, 4
        %v6998 = vrot.slane %v5973, 5
        %v6999 = vsel %vm1786, %v6997, %v6998
        %v7000 = vrot.slane %v6937, 5
        %v7001 = vrot.slane %v7000, 4
        %v7002 = vrot.slane %v5974, 5
        %v7003 = vsel %vm1786, %v7001, %v7002
        %v7004 = vrot.slane %v6938, 5
        %v7005 = vrot.slane %v7004, 4
        %v7006 = vrot.slane %v5975, 5
        %v7007 = vsel %vm1786, %v7005, %v7006
        %v7008 = vrot.slane %v6939, 5
        %v7009 = vrot.slane %v7008, 4
        %v7010 = vrot.slane %v5976, 5
        %v7011 = vsel %vm1786, %v7009, %v7010
        %v7012 = vrot.slane %v6940, 5
        %v7013 = vrot.slane %v7012, 4
        %v7014 = vrot.slane %v5977, 5
        %v7015 = vsel %vm1786, %v7013, %v7014
        %v7016 = vrot.slane %v6941, 5
        %v7017 = vrot.slane %v7016, 4
        %v7018 = vrot.slane %v5978, 5
        %v7019 = vsel %vm1786, %v7017, %v7018
        %v7020 = vrot.slane %v6942, 5
        %v7021 = vrot.slane %v7020, 4
        %v7022 = vrot.slane %v5979, 5
        %v7023 = vsel %vm1786, %v7021, %v7022
        %v7024 = vrot.slane %v6943, 5
        %v7025 = vrot.slane %v7024, 4
        %v7026 = vrot.slane %v5980, 5
        %v7027 = vsel %vm1786, %v7025, %v7026
        %v7028 = vrot.slane %v6944, 5
        %v7029 = vrot.slane %v7028, 4
        %v7030 = vrot.slane %v5981, 5
        %v7031 = vsel %vm1786, %v7029, %v7030
        %v7032 = vrot.slane %v6945, 5
        %v7033 = vrot.slane %v7032, 4
        %v7034 = vrot.slane %v5982, 5
        %v7035 = vsel %vm1786, %v7033, %v7034
        %v7036 = vrot.slane %v6946, 5
        %v7037 = vrot.slane %v7036, 4
        %v7038 = vrot.slane %v5983, 5
        %v7039 = vsel %vm1786, %v7037, %v7038
        %v7040 = vrot.slane %v6947, 5
        %v7041 = vrot.slane %v7040, 4
        %v7042 = vrot.slane %v5984, 5
        %v7043 = vsel %vm1786, %v7041, %v7042
        %s7044 = scalar_lea.vmem [#allocation3], 512
        %v7045 = vld [vmem:[%s7044] sm:$0xff]
        %v7046 = vld [vmem:[%s7044 + $0x8] sm:$0xff]
        %v7047 = vld [vmem:[%s7044 + $0x10] sm:$0xff]
        %v7048 = vld [vmem:[%s7044 + $0x18] sm:$0xff]
        %v7049 = vld [vmem:[%s7044 + $0x20] sm:$0xff]
        %v7050 = vld [vmem:[%s7044 + $0x28] sm:$0xff]
        %v7051 = vld [vmem:[%s7044 + $0x30] sm:$0xff]
        %v7052 = vld [vmem:[%s7044 + $0x38] sm:$0xff]
        %v7053 = vld [vmem:[%s7044 + $0x40] sm:$0xff]
        %v7054 = vld [vmem:[%s7044 + $0x48] sm:$0xff]
        %v7055 = vld [vmem:[%s7044 + $0x50] sm:$0xff]
        %v7056 = vld [vmem:[%s7044 + $0x58] sm:$0xff]
        %v7057 = vld [vmem:[%s7044 + $0x60] sm:$0xff]
        %v7058 = vld [vmem:[%s7044 + $0x68] sm:$0xff]
        %v7059 = vld [vmem:[%s7044 + $0x70] sm:$0xff]
        %v7060 = vld [vmem:[%s7044 + $0x78] sm:$0xff]
        %v7061 = vld [vmem:[%s7044 + $0x80] sm:$0xff]
        %v7062 = vld [vmem:[%s7044 + $0x88] sm:$0xff]
        %v7063 = vld [vmem:[%s7044 + $0x90] sm:$0xff]
        %v7064 = vld [vmem:[%s7044 + $0x98] sm:$0xff]
        %v7065 = vld [vmem:[%s7044 + $0xa0] sm:$0xff]
        %v7066 = vld [vmem:[%s7044 + $0xa8] sm:$0xff]
        %v7067 = vld [vmem:[%s7044 + $0xb0] sm:$0xff]
        %v7068 = vld [vmem:[%s7044 + $0xb8] sm:$0xff]
        %v7069 = vld [vmem:[%s7044 + $0xc0] sm:$0xff]
        %v7070 = vld [vmem:[%s7044 + $0xc8] sm:$0xff]
        %v7071 = vld [vmem:[%s7044 + $0xd0] sm:$0xff]
        %v7072 = vld [vmem:[%s7044 + $0xd8] sm:$0xff]
        %v7073 = vld [vmem:[%s7044 + $0xe0] sm:$0xff]
        %v7074 = vld [vmem:[%s7044 + $0xe8] sm:$0xff]
        %v7075 = vld [vmem:[%s7044 + $0xf0] sm:$0xff]
        %v7076 = vld [vmem:[%s7044 + $0xf8] sm:$0xff]
        %v7077 = vunpack.c.l.b16 %v6983
        %v7078 = vunpack.c.h.b16 %v6983
        %v7079 = vunpack.c.l.b16 %v6987
        %v7080 = vunpack.c.h.b16 %v6987
        %v7081 = vunpack.c.l.b16 %v6991
        %v7082 = vunpack.c.h.b16 %v6991
        %v7083 = vunpack.c.l.b16 %v6995
        %v7084 = vunpack.c.h.b16 %v6995
        %v7085 = vunpack.c.l.b16 %v6999
        %v7086 = vunpack.c.h.b16 %v6999
        %v7087 = vunpack.c.l.b16 %v7003
        %v7088 = vunpack.c.h.b16 %v7003
        %v7089 = vunpack.c.l.b16 %v7007
        %v7090 = vunpack.c.h.b16 %v7007
        %v7091 = vunpack.c.l.b16 %v7011
        %v7092 = vunpack.c.h.b16 %v7011
        %v7093 = vunpack.c.l.b16 %v7015
        %v7094 = vunpack.c.h.b16 %v7015
        %v7095 = vunpack.c.l.b16 %v7019
        %v7096 = vunpack.c.h.b16 %v7019
        %v7097 = vunpack.c.l.b16 %v7023
        %v7098 = vunpack.c.h.b16 %v7023
        %v7099 = vunpack.c.l.b16 %v7027
        %v7100 = vunpack.c.h.b16 %v7027
        %v7101 = vunpack.c.l.b16 %v7031
        %v7102 = vunpack.c.h.b16 %v7031
        %v7103 = vunpack.c.l.b16 %v7035
        %v7104 = vunpack.c.h.b16 %v7035
        %v7105 = vunpack.c.l.b16 %v7039
        %v7106 = vunpack.c.h.b16 %v7039
        %v7107 = vunpack.c.l.b16 %v7043
        %v7108 = vunpack.c.h.b16 %v7043
        %v7109 = vpack.c.b16 %v7079, %v7077
        %v7110 = vpack.c.b16 %v7080, %v7078
        %v7111 = vpack.c.b16 %v7083, %v7081
        %v7112 = vpack.c.b16 %v7084, %v7082
        %v7113 = vpack.c.b16 %v7087, %v7085
        %v7114 = vpack.c.b16 %v7088, %v7086
        %v7115 = vpack.c.b16 %v7091, %v7089
        %v7116 = vpack.c.b16 %v7092, %v7090
        %v7117 = vpack.c.b16 %v7095, %v7093
        %v7118 = vpack.c.b16 %v7096, %v7094
        %v7119 = vpack.c.b16 %v7099, %v7097
        %v7120 = vpack.c.b16 %v7100, %v7098
        %v7121 = vpack.c.b16 %v7103, %v7101
        %v7122 = vpack.c.b16 %v7104, %v7102
        %v7123 = vpack.c.b16 %v7107, %v7105
        %v7124 = vpack.c.b16 %v7108, %v7106
        %v7173 = vunpack.c.l.b16 %v7045
        %v7174 = vunpack.c.h.b16 %v7045
        %v7175 = vunpack.c.l.b16 %v7046
        %v7176 = vunpack.c.h.b16 %v7046
        %v7177 = vunpack.c.l.b16 %v7047
        %v7178 = vunpack.c.h.b16 %v7047
        %v7179 = vunpack.c.l.b16 %v7048
        %v7180 = vunpack.c.h.b16 %v7048
        %v7181 = vunpack.c.l.b16 %v7049
        %v7182 = vunpack.c.h.b16 %v7049
        %v7183 = vunpack.c.l.b16 %v7050
        %v7184 = vunpack.c.h.b16 %v7050
        %v7185 = vunpack.c.l.b16 %v7051
        %v7186 = vunpack.c.h.b16 %v7051
        %v7187 = vunpack.c.l.b16 %v7052
        %v7188 = vunpack.c.h.b16 %v7052
        %v7189 = vunpack.c.l.b16 %v7053
        %v7190 = vunpack.c.h.b16 %v7053
        %v7191 = vunpack.c.l.b16 %v7054
        %v7192 = vunpack.c.h.b16 %v7054
        %v7193 = vunpack.c.l.b16 %v7055
        %v7194 = vunpack.c.h.b16 %v7055
        %v7195 = vunpack.c.l.b16 %v7056
        %v7196 = vunpack.c.h.b16 %v7056
        %v7197 = vunpack.c.l.b16 %v7057
        %v7198 = vunpack.c.h.b16 %v7057
        %v7199 = vunpack.c.l.b16 %v7058
        %v7200 = vunpack.c.h.b16 %v7058
        %v7201 = vunpack.c.l.b16 %v7059
        %v7202 = vunpack.c.h.b16 %v7059
        %v7203 = vunpack.c.l.b16 %v7060
        %v7204 = vunpack.c.h.b16 %v7060
        %v7205 = vunpack.c.l.b16 %v7061
        %v7206 = vunpack.c.h.b16 %v7061
        %v7207 = vunpack.c.l.b16 %v7062
        %v7208 = vunpack.c.h.b16 %v7062
        %v7209 = vunpack.c.l.b16 %v7063
        %v7210 = vunpack.c.h.b16 %v7063
        %v7211 = vunpack.c.l.b16 %v7064
        %v7212 = vunpack.c.h.b16 %v7064
        %v7213 = vunpack.c.l.b16 %v7065
        %v7214 = vunpack.c.h.b16 %v7065
        %v7215 = vunpack.c.l.b16 %v7066
        %v7216 = vunpack.c.h.b16 %v7066
        %v7217 = vunpack.c.l.b16 %v7067
        %v7218 = vunpack.c.h.b16 %v7067
        %v7219 = vunpack.c.l.b16 %v7068
        %v7220 = vunpack.c.h.b16 %v7068
        %v7221 = vunpack.c.l.b16 %v7069
        %v7222 = vunpack.c.h.b16 %v7069
        %v7223 = vunpack.c.l.b16 %v7070
        %v7224 = vunpack.c.h.b16 %v7070
        %v7225 = vunpack.c.l.b16 %v7071
        %v7226 = vunpack.c.h.b16 %v7071
        %v7227 = vunpack.c.l.b16 %v7072
        %v7228 = vunpack.c.h.b16 %v7072
        %v7229 = vunpack.c.l.b16 %v7073
        %v7230 = vunpack.c.h.b16 %v7073
        %v7231 = vunpack.c.l.b16 %v7074
        %v7232 = vunpack.c.h.b16 %v7074
        %v7233 = vunpack.c.l.b16 %v7075
        %v7234 = vunpack.c.h.b16 %v7075
        %v7235 = vunpack.c.l.b16 %v7076
        %v7236 = vunpack.c.h.b16 %v7076
        %v7237 = vpack.c.b16 %v7175, %v7173
        %v7238 = vpack.c.b16 %v7176, %v7174
        %v7239 = vpack.c.b16 %v7179, %v7177
        %v7240 = vpack.c.b16 %v7180, %v7178
        %v7241 = vpack.c.b16 %v7183, %v7181
        %v7242 = vpack.c.b16 %v7184, %v7182
        %v7243 = vpack.c.b16 %v7187, %v7185
        %v7244 = vpack.c.b16 %v7188, %v7186
        %v7245 = vpack.c.b16 %v7191, %v7189
        %v7246 = vpack.c.b16 %v7192, %v7190
        %v7247 = vpack.c.b16 %v7195, %v7193
        %v7248 = vpack.c.b16 %v7196, %v7194
        %v7249 = vpack.c.b16 %v7199, %v7197
        %v7250 = vpack.c.b16 %v7200, %v7198
        %v7251 = vpack.c.b16 %v7203, %v7201
        %v7252 = vpack.c.b16 %v7204, %v7202
        %v7253 = vpack.c.b16 %v7207, %v7205
        %v7254 = vpack.c.b16 %v7208, %v7206
        %v7255 = vpack.c.b16 %v7211, %v7209
        %v7256 = vpack.c.b16 %v7212, %v7210
        %v7257 = vpack.c.b16 %v7215, %v7213
        %v7258 = vpack.c.b16 %v7216, %v7214
        %v7259 = vpack.c.b16 %v7219, %v7217
        %v7260 = vpack.c.b16 %v7220, %v7218
        %v7261 = vpack.c.b16 %v7223, %v7221
        %v7262 = vpack.c.b16 %v7224, %v7222
        %v7263 = vpack.c.b16 %v7227, %v7225
        %v7264 = vpack.c.b16 %v7228, %v7226
        %v7265 = vpack.c.b16 %v7231, %v7229
        %v7266 = vpack.c.b16 %v7232, %v7230
        %v7267 = vpack.c.b16 %v7235, %v7233
        %v7268 = vpack.c.b16 %v7236, %v7234
        %7301 = vmatprep.subr.bf16.mxu0 %v7238
        %7302 = vmatpush1.bf16.msra.mxu0 %v7237
        %7303 = vmatprep.subr.bf16.mxu0 %v7240
        %7304 = vmatpush1.bf16.msra.mxu0 %v7239
        %7305 = vmatprep.subr.bf16.mxu0 %v7242
        %7306 = vmatpush1.bf16.msra.mxu0 %v7241
        %7307 = vmatprep.subr.bf16.mxu0 %v7244
        %7308 = vmatpush1.bf16.msra.mxu0 %v7243
        %7309 = vmatprep.subr.bf16.mxu0 %v7246
        %7310 = vmatpush1.bf16.msra.mxu0 %v7245
        %7311 = vmatprep.subr.bf16.mxu0 %v7248
        %7312 = vmatpush1.bf16.msra.mxu0 %v7247
        %7313 = vmatprep.subr.bf16.mxu0 %v7250
        %7314 = vmatpush1.bf16.msra.mxu0 %v7249
        %7315 = vmatprep.subr.bf16.mxu0 %v7252
        %7316 = vmatpush1.bf16.msra.mxu0 %v7251
        %7317 = vmatprep.subr.bf16.mxu0 %v7254
        %7318 = vmatpush1.bf16.msra.mxu0 %v7253
        %7319 = vmatprep.subr.bf16.mxu0 %v7256
        %7320 = vmatpush1.bf16.msra.mxu0 %v7255
        %7321 = vmatprep.subr.bf16.mxu0 %v7258
        %7322 = vmatpush1.bf16.msra.mxu0 %v7257
        %7323 = vmatprep.subr.bf16.mxu0 %v7260
        %7324 = vmatpush1.bf16.msra.mxu0 %v7259
        %7325 = vmatprep.subr.bf16.mxu0 %v7262
        %7326 = vmatpush1.bf16.msra.mxu0 %v7261
        %7327 = vmatprep.subr.bf16.mxu0 %v7264
        %7328 = vmatpush1.bf16.msra.mxu0 %v7263
        %7329 = vmatprep.subr.bf16.mxu0 %v7266
        %7330 = vmatpush1.bf16.msra.mxu0 %v7265
        %7331 = vmatprep.subr.bf16.mxu0 %v7268
        %7332 = vmatpush1.bf16.msra.mxu0 %v7267
        %7333 = vmatprep.mubr.bf16.mxu0 %v7110
        %7334 = vmatmul.mubr.bf16.gmra.mrb[0].mxu0 %v7109
        %v7335 = vpop.f32.mrb[0].mxu0
        %v7336 = vadd.f32 0.0, %v7335
        %v7337 = vpop.f32.mrb[0].mxu0
        %v7338 = vadd.f32 0.0, %v7337
        %v7339 = vpop.f32.mrb[0].mxu0
        %v7340 = vadd.f32 0.0, %v7339
        %v7341 = vpop.f32.mrb[0].mxu0
        %v7342 = vadd.f32 0.0, %v7341
        %7343 = vmatprep.mubr.bf16.mxu0 %v7112
        %7344 = vmatmul.mubr.bf16.gmra.mrb[0].mxu0 %v7111
        %v7345 = vpop.f32.mrb[0].mxu0
        %v7346 = vadd.f32 0.0, %v7345
        %v7347 = vpop.f32.mrb[0].mxu0
        %v7348 = vadd.f32 0.0, %v7347
        %v7349 = vpop.f32.mrb[0].mxu0
        %v7350 = vadd.f32 0.0, %v7349
        %v7351 = vpop.f32.mrb[0].mxu0
        %v7352 = vadd.f32 0.0, %v7351
        %7353 = vmatprep.mubr.bf16.mxu0 %v7114
        %7354 = vmatmul.mubr.bf16.gmra.mrb[0].mxu0 %v7113
        %v7355 = vpop.f32.mrb[0].mxu0
        %v7356 = vadd.f32 0.0, %v7355
        %v7357 = vpop.f32.mrb[0].mxu0
        %v7358 = vadd.f32 0.0, %v7357
        %v7359 = vpop.f32.mrb[0].mxu0
        %v7360 = vadd.f32 0.0, %v7359
        %v7361 = vpop.f32.mrb[0].mxu0
        %v7362 = vadd.f32 0.0, %v7361
        %7363 = vmatprep.mubr.bf16.mxu0 %v7116
        %7364 = vmatmul.mubr.bf16.gmra.mrb[0].mxu0 %v7115
        %v7365 = vpop.f32.mrb[0].mxu0
        %v7366 = vadd.f32 0.0, %v7365
        %v7367 = vpop.f32.mrb[0].mxu0
        %v7368 = vadd.f32 0.0, %v7367
        %v7369 = vpop.f32.mrb[0].mxu0
        %v7370 = vadd.f32 0.0, %v7369
        %v7371 = vpop.f32.mrb[0].mxu0
        %v7372 = vadd.f32 0.0, %v7371
        %7373 = vmatprep.mubr.bf16.mxu0 %v7118
        %7374 = vmatmul.mubr.bf16.gmra.mrb[0].mxu0 %v7117
        %v7375 = vpop.f32.mrb[0].mxu0
        %v7376 = vadd.f32 0.0, %v7375
        %v7377 = vpop.f32.mrb[0].mxu0
        %v7378 = vadd.f32 0.0, %v7377
        %v7379 = vpop.f32.mrb[0].mxu0
        %v7380 = vadd.f32 0.0, %v7379
        %v7381 = vpop.f32.mrb[0].mxu0
        %v7382 = vadd.f32 0.0, %v7381
        %7383 = vmatprep.mubr.bf16.mxu0 %v7120
        %7384 = vmatmul.mubr.bf16.gmra.mrb[0].mxu0 %v7119
        %v7385 = vpop.f32.mrb[0].mxu0
        %v7386 = vadd.f32 0.0, %v7385
        %v7387 = vpop.f32.mrb[0].mxu0
        %v7388 = vadd.f32 0.0, %v7387
        %v7389 = vpop.f32.mrb[0].mxu0
        %v7390 = vadd.f32 0.0, %v7389
        %v7391 = vpop.f32.mrb[0].mxu0
        %v7392 = vadd.f32 0.0, %v7391
        %7393 = vmatprep.mubr.bf16.mxu0 %v7122
        %7394 = vmatmul.mubr.bf16.gmra.mrb[0].mxu0 %v7121
        %v7395 = vpop.f32.mrb[0].mxu0
        %v7396 = vadd.f32 0.0, %v7395
        %v7397 = vpop.f32.mrb[0].mxu0
        %v7398 = vadd.f32 0.0, %v7397
        %v7399 = vpop.f32.mrb[0].mxu0
        %v7400 = vadd.f32 0.0, %v7399
        %v7401 = vpop.f32.mrb[0].mxu0
        %v7402 = vadd.f32 0.0, %v7401
        %7403 = vmatprep.mubr.bf16.mxu0 %v7124
        %7404 = vmatmul.mubr.bf16.gmra.mrb[0].mxu0 %v7123
        %v7405 = vpop.f32.mrb[0].mxu0
        %v7406 = vadd.f32 0.0, %v7405
        %v7407 = vpop.f32.mrb[0].mxu0
        %v7408 = vadd.f32 0.0, %v7407
        %v7409 = vpop.f32.mrb[0].mxu0
        %v7410 = vadd.f32 0.0, %v7409
        %v7411 = vpop.f32.mrb[0].mxu0
        %v7412 = vadd.f32 0.0, %v7411
        %7413 = vdwg.mxu0
        %v7414 = vadd.f32 %v6854, %v7336
        %v7415 = vadd.f32 %v6856, %v7338
        %v7416 = vadd.f32 %v6858, %v7340
        %v7417 = vadd.f32 %v6860, %v7342
        %v7418 = vadd.f32 %v6864, %v7346
        %v7419 = vadd.f32 %v6866, %v7348
        %v7420 = vadd.f32 %v6868, %v7350
        %v7421 = vadd.f32 %v6870, %v7352
        %v7422 = vadd.f32 %v6874, %v7356
        %v7423 = vadd.f32 %v6876, %v7358
        %v7424 = vadd.f32 %v6878, %v7360
        %v7425 = vadd.f32 %v6880, %v7362
        %v7426 = vadd.f32 %v6884, %v7366
        %v7427 = vadd.f32 %v6886, %v7368
        %v7428 = vadd.f32 %v6888, %v7370
        %v7429 = vadd.f32 %v6890, %v7372
        %v7430 = vadd.f32 %v6894, %v7376
        %v7431 = vadd.f32 %v6896, %v7378
        %v7432 = vadd.f32 %v6898, %v7380
        %v7433 = vadd.f32 %v6900, %v7382
        %v7434 = vadd.f32 %v6904, %v7386
        %v7435 = vadd.f32 %v6906, %v7388
        %v7436 = vadd.f32 %v6908, %v7390
        %v7437 = vadd.f32 %v6910, %v7392
        %v7438 = vadd.f32 %v6914, %v7396
        %v7439 = vadd.f32 %v6916, %v7398
        %v7440 = vadd.f32 %v6918, %v7400
        %v7441 = vadd.f32 %v6920, %v7402
        %v7442 = vadd.f32 %v6924, %v7406
        %v7443 = vadd.f32 %v6926, %v7408
        %v7444 = vadd.f32 %v6928, %v7410
        %v7445 = vadd.f32 %v6930, %v7412
        %v7446 = vld [vmem:[%s620] sm:$0xff]
        %v7447 = vld [vmem:[%s620 + $0x10] sm:$0xff]
        %v7448 = vld [vmem:[%s620 + $0x20] sm:$0xff]
        %v7449 = vld [vmem:[%s620 + $0x30] sm:$0xff]
        %v7450 = vld [vmem:[%s620 + $0x40] sm:$0xff]
        %v7451 = vld [vmem:[%s620 + $0x50] sm:$0xff]
        %v7452 = vld [vmem:[%s620 + $0x60] sm:$0xff]
        %v7453 = vld [vmem:[%s620 + $0x70] sm:$0xff]
        %v7454 = vld [vmem:[%s620 + $0xa0] sm:$0xff]
        %v7455 = vld [vmem:[%s620 + $0xb0] sm:$0xff]
        %v7456 = vld [vmem:[%s620 + $0xc0] sm:$0xff]
        %v7457 = vld [vmem:[%s620 + $0xd0] sm:$0xff]
        %v7458 = vld [vmem:[%s620 + $0xe0] sm:$0xff]
        %v7459 = vld [vmem:[%s620 + $0xf0] sm:$0xff]
        %v7460 = vld [vmem:[%s620 + $0x100] sm:$0xff]
        %v7461 = vld [vmem:[%s620 + $0x110] sm:$0xff]
        %s7462 = scalar_lea.vmem [#allocation3], 768
        %v7463 = vld [vmem:[%s7462] sm:$0xff]
        %v7464 = vld [vmem:[%s7462 + $0x8] sm:$0xff]
        %v7465 = vld [vmem:[%s7462 + $0x10] sm:$0xff]
        %v7466 = vld [vmem:[%s7462 + $0x18] sm:$0xff]
        %v7467 = vld [vmem:[%s7462 + $0x20] sm:$0xff]
        %v7468 = vld [vmem:[%s7462 + $0x28] sm:$0xff]
        %v7469 = vld [vmem:[%s7462 + $0x30] sm:$0xff]
        %v7470 = vld [vmem:[%s7462 + $0x38] sm:$0xff]
        %v7471 = vld [vmem:[%s7462 + $0x40] sm:$0xff]
        %v7472 = vld [vmem:[%s7462 + $0x48] sm:$0xff]
        %v7473 = vld [vmem:[%s7462 + $0x50] sm:$0xff]
        %v7474 = vld [vmem:[%s7462 + $0x58] sm:$0xff]
        %v7475 = vld [vmem:[%s7462 + $0x60] sm:$0xff]
        %v7476 = vld [vmem:[%s7462 + $0x68] sm:$0xff]
        %v7477 = vld [vmem:[%s7462 + $0x70] sm:$0xff]
        %v7478 = vld [vmem:[%s7462 + $0x78] sm:$0xff]
        %v7479 = vld [vmem:[%s7462 + $0x80] sm:$0xff]
        %v7480 = vld [vmem:[%s7462 + $0x88] sm:$0xff]
        %v7481 = vld [vmem:[%s7462 + $0x90] sm:$0xff]
        %v7482 = vld [vmem:[%s7462 + $0x98] sm:$0xff]
        %v7483 = vld [vmem:[%s7462 + $0xa0] sm:$0xff]
        %v7484 = vld [vmem:[%s7462 + $0xa8] sm:$0xff]
        %v7485 = vld [vmem:[%s7462 + $0xb0] sm:$0xff]
        %v7486 = vld [vmem:[%s7462 + $0xb8] sm:$0xff]
        %v7487 = vld [vmem:[%s7462 + $0xc0] sm:$0xff]
        %v7488 = vld [vmem:[%s7462 + $0xc8] sm:$0xff]
        %v7489 = vld [vmem:[%s7462 + $0xd0] sm:$0xff]
        %v7490 = vld [vmem:[%s7462 + $0xd8] sm:$0xff]
        %v7491 = vld [vmem:[%s7462 + $0xe0] sm:$0xff]
        %v7492 = vld [vmem:[%s7462 + $0xe8] sm:$0xff]
        %v7493 = vld [vmem:[%s7462 + $0xf0] sm:$0xff]
        %v7494 = vld [vmem:[%s7462 + $0xf8] sm:$0xff]
        %v7511 = vunpack.c.l.b16 %v7446
        %v7512 = vunpack.c.h.b16 %v7446
        %v7513 = vunpack.c.l.b16 %v7447
        %v7514 = vunpack.c.h.b16 %v7447
        %v7515 = vunpack.c.l.b16 %v7448
        %v7516 = vunpack.c.h.b16 %v7448
        %v7517 = vunpack.c.l.b16 %v7449
        %v7518 = vunpack.c.h.b16 %v7449
        %v7519 = vunpack.c.l.b16 %v7450
        %v7520 = vunpack.c.h.b16 %v7450
        %v7521 = vunpack.c.l.b16 %v7451
        %v7522 = vunpack.c.h.b16 %v7451
        %v7523 = vunpack.c.l.b16 %v7452
        %v7524 = vunpack.c.h.b16 %v7452
        %v7525 = vunpack.c.l.b16 %v7453
        %v7526 = vunpack.c.h.b16 %v7453
        %v7527 = vunpack.c.l.b16 %v7454
        %v7528 = vunpack.c.h.b16 %v7454
        %v7529 = vunpack.c.l.b16 %v7455
        %v7530 = vunpack.c.h.b16 %v7455
        %v7531 = vunpack.c.l.b16 %v7456
        %v7532 = vunpack.c.h.b16 %v7456
        %v7533 = vunpack.c.l.b16 %v7457
        %v7534 = vunpack.c.h.b16 %v7457
        %v7535 = vunpack.c.l.b16 %v7458
        %v7536 = vunpack.c.h.b16 %v7458
        %v7537 = vunpack.c.l.b16 %v7459
        %v7538 = vunpack.c.h.b16 %v7459
        %v7539 = vunpack.c.l.b16 %v7460
        %v7540 = vunpack.c.h.b16 %v7460
        %v7541 = vunpack.c.l.b16 %v7461
        %v7542 = vunpack.c.h.b16 %v7461
        %v7543 = vpack.c.b16 %v7513, %v7511
        %v7544 = vpack.c.b16 %v7514, %v7512
        %v7545 = vpack.c.b16 %v7517, %v7515
        %v7546 = vpack.c.b16 %v7518, %v7516
        %v7547 = vpack.c.b16 %v7521, %v7519
        %v7548 = vpack.c.b16 %v7522, %v7520
        %v7549 = vpack.c.b16 %v7525, %v7523
        %v7550 = vpack.c.b16 %v7526, %v7524
        %v7551 = vpack.c.b16 %v7529, %v7527
        %v7552 = vpack.c.b16 %v7530, %v7528
        %v7553 = vpack.c.b16 %v7533, %v7531
        %v7554 = vpack.c.b16 %v7534, %v7532
        %v7555 = vpack.c.b16 %v7537, %v7535
        %v7556 = vpack.c.b16 %v7538, %v7536
        %v7557 = vpack.c.b16 %v7541, %v7539
        %v7558 = vpack.c.b16 %v7542, %v7540
        %v7607 = vunpack.c.l.b16 %v7463
        %v7608 = vunpack.c.h.b16 %v7463
        %v7609 = vunpack.c.l.b16 %v7464
        %v7610 = vunpack.c.h.b16 %v7464
        %v7611 = vunpack.c.l.b16 %v7465
        %v7612 = vunpack.c.h.b16 %v7465
        %v7613 = vunpack.c.l.b16 %v7466
        %v7614 = vunpack.c.h.b16 %v7466
        %v7615 = vunpack.c.l.b16 %v7467
        %v7616 = vunpack.c.h.b16 %v7467
        %v7617 = vunpack.c.l.b16 %v7468
        %v7618 = vunpack.c.h.b16 %v7468
        %v7619 = vunpack.c.l.b16 %v7469
        %v7620 = vunpack.c.h.b16 %v7469
        %v7621 = vunpack.c.l.b16 %v7470
        %v7622 = vunpack.c.h.b16 %v7470
        %v7623 = vunpack.c.l.b16 %v7471
        %v7624 = vunpack.c.h.b16 %v7471
        %v7625 = vunpack.c.l.b16 %v7472
        %v7626 = vunpack.c.h.b16 %v7472
        %v7627 = vunpack.c.l.b16 %v7473
        %v7628 = vunpack.c.h.b16 %v7473
        %v7629 = vunpack.c.l.b16 %v7474
        %v7630 = vunpack.c.h.b16 %v7474
        %v7631 = vunpack.c.l.b16 %v7475
        %v7632 = vunpack.c.h.b16 %v7475
        %v7633 = vunpack.c.l.b16 %v7476
        %v7634 = vunpack.c.h.b16 %v7476
        %v7635 = vunpack.c.l.b16 %v7477
        %v7636 = vunpack.c.h.b16 %v7477
        %v7637 = vunpack.c.l.b16 %v7478
        %v7638 = vunpack.c.h.b16 %v7478
        %v7639 = vunpack.c.l.b16 %v7479
        %v7640 = vunpack.c.h.b16 %v7479
        %v7641 = vunpack.c.l.b16 %v7480
        %v7642 = vunpack.c.h.b16 %v7480
        %v7643 = vunpack.c.l.b16 %v7481
        %v7644 = vunpack.c.h.b16 %v7481
        %v7645 = vunpack.c.l.b16 %v7482
        %v7646 = vunpack.c.h.b16 %v7482
        %v7647 = vunpack.c.l.b16 %v7483
        %v7648 = vunpack.c.h.b16 %v7483
        %v7649 = vunpack.c.l.b16 %v7484
        %v7650 = vunpack.c.h.b16 %v7484
        %v7651 = vunpack.c.l.b16 %v7485
        %v7652 = vunpack.c.h.b16 %v7485
        %v7653 = vunpack.c.l.b16 %v7486
        %v7654 = vunpack.c.h.b16 %v7486
        %v7655 = vunpack.c.l.b16 %v7487
        %v7656 = vunpack.c.h.b16 %v7487
        %v7657 = vunpack.c.l.b16 %v7488
        %v7658 = vunpack.c.h.b16 %v7488
        %v7659 = vunpack.c.l.b16 %v7489
        %v7660 = vunpack.c.h.b16 %v7489
        %v7661 = vunpack.c.l.b16 %v7490
        %v7662 = vunpack.c.h.b16 %v7490
        %v7663 = vunpack.c.l.b16 %v7491
        %v7664 = vunpack.c.h.b16 %v7491
        %v7665 = vunpack.c.l.b16 %v7492
        %v7666 = vunpack.c.h.b16 %v7492
        %v7667 = vunpack.c.l.b16 %v7493
        %v7668 = vunpack.c.h.b16 %v7493
        %v7669 = vunpack.c.l.b16 %v7494
        %v7670 = vunpack.c.h.b16 %v7494
        %v7671 = vpack.c.b16 %v7609, %v7607
        %v7672 = vpack.c.b16 %v7610, %v7608
        %v7673 = vpack.c.b16 %v7613, %v7611
        %v7674 = vpack.c.b16 %v7614, %v7612
        %v7675 = vpack.c.b16 %v7617, %v7615
        %v7676 = vpack.c.b16 %v7618, %v7616
        %v7677 = vpack.c.b16 %v7621, %v7619
        %v7678 = vpack.c.b16 %v7622, %v7620
        %v7679 = vpack.c.b16 %v7625, %v7623
        %v7680 = vpack.c.b16 %v7626, %v7624
        %v7681 = vpack.c.b16 %v7629, %v7627
        %v7682 = vpack.c.b16 %v7630, %v7628
        %v7683 = vpack.c.b16 %v7633, %v7631
        %v7684 = vpack.c.b16 %v7634, %v7632
        %v7685 = vpack.c.b16 %v7637, %v7635
        %v7686 = vpack.c.b16 %v7638, %v7636
        %v7687 = vpack.c.b16 %v7641, %v7639
        %v7688 = vpack.c.b16 %v7642, %v7640
        %v7689 = vpack.c.b16 %v7645, %v7643
        %v7690 = vpack.c.b16 %v7646, %v7644
        %v7691 = vpack.c.b16 %v7649, %v7647
        %v7692 = vpack.c.b16 %v7650, %v7648
        %v7693 = vpack.c.b16 %v7653, %v7651
        %v7694 = vpack.c.b16 %v7654, %v7652
        %v7695 = vpack.c.b16 %v7657, %v7655
        %v7696 = vpack.c.b16 %v7658, %v7656
        %v7697 = vpack.c.b16 %v7661, %v7659
        %v7698 = vpack.c.b16 %v7662, %v7660
        %v7699 = vpack.c.b16 %v7665, %v7663
        %v7700 = vpack.c.b16 %v7666, %v7664
        %v7701 = vpack.c.b16 %v7669, %v7667
        %v7702 = vpack.c.b16 %v7670, %v7668
        %7735 = vmatprep.subr.bf16.mxu0 %v7672
        %7736 = vmatpush1.bf16.msra.mxu0 %v7671
        %7737 = vmatprep.subr.bf16.mxu0 %v7674
        %7738 = vmatpush1.bf16.msra.mxu0 %v7673
        %7739 = vmatprep.subr.bf16.mxu0 %v7676
        %7740 = vmatpush1.bf16.msra.mxu0 %v7675
        %7741 = vmatprep.subr.bf16.mxu0 %v7678
        %7742 = vmatpush1.bf16.msra.mxu0 %v7677
        %7743 = vmatprep.subr.bf16.mxu0 %v7680
        %7744 = vmatpush1.bf16.msra.mxu0 %v7679
        %7745 = vmatprep.subr.bf16.mxu0 %v7682
        %7746 = vmatpush1.bf16.msra.mxu0 %v7681
        %7747 = vmatprep.subr.bf16.mxu0 %v7684
        %7748 = vmatpush1.bf16.msra.mxu0 %v7683
        %7749 = vmatprep.subr.bf16.mxu0 %v7686
        %7750 = vmatpush1.bf16.msra.mxu0 %v7685
        %7751 = vmatprep.subr.bf16.mxu0 %v7688
        %7752 = vmatpush1.bf16.msra.mxu0 %v7687
        %7753 = vmatprep.subr.bf16.mxu0 %v7690
        %7754 = vmatpush1.bf16.msra.mxu0 %v7689
        %7755 = vmatprep.subr.bf16.mxu0 %v7692
        %7756 = vmatpush1.bf16.msra.mxu0 %v7691
        %7757 = vmatprep.subr.bf16.mxu0 %v7694
        %7758 = vmatpush1.bf16.msra.mxu0 %v7693
        %7759 = vmatprep.subr.bf16.mxu0 %v7696
        %7760 = vmatpush1.bf16.msra.mxu0 %v7695
        %7761 = vmatprep.subr.bf16.mxu0 %v7698
        %7762 = vmatpush1.bf16.msra.mxu0 %v7697
        %7763 = vmatprep.subr.bf16.mxu0 %v7700
        %7764 = vmatpush1.bf16.msra.mxu0 %v7699
        %7765 = vmatprep.subr.bf16.mxu0 %v7702
        %7766 = vmatpush1.bf16.msra.mxu0 %v7701
        %7767 = vmatprep.mubr.bf16.mxu0 %v7544
        %7768 = vmatmul.mubr.bf16.gmra.mrb[0].mxu0 %v7543
        %v7769 = vpop.f32.mrb[0].mxu0
        %v7770 = vadd.f32 0.0, %v7769
        %v7771 = vpop.f32.mrb[0].mxu0
        %v7772 = vadd.f32 0.0, %v7771
        %v7773 = vpop.f32.mrb[0].mxu0
        %v7774 = vadd.f32 0.0, %v7773
        %v7775 = vpop.f32.mrb[0].mxu0
        %v7776 = vadd.f32 0.0, %v7775
        %7777 = vmatprep.mubr.bf16.mxu0 %v7546
        %7778 = vmatmul.mubr.bf16.gmra.mrb[0].mxu0 %v7545
        %v7779 = vpop.f32.mrb[0].mxu0
        %v7780 = vadd.f32 0.0, %v7779
        %v7781 = vpop.f32.mrb[0].mxu0
        %v7782 = vadd.f32 0.0, %v7781
        %v7783 = vpop.f32.mrb[0].mxu0
        %v7784 = vadd.f32 0.0, %v7783
        %v7785 = vpop.f32.mrb[0].mxu0
        %v7786 = vadd.f32 0.0, %v7785
        %7787 = vmatprep.mubr.bf16.mxu0 %v7548
        %7788 = vmatmul.mubr.bf16.gmra.mrb[0].mxu0 %v7547
        %v7789 = vpop.f32.mrb[0].mxu0
        %v7790 = vadd.f32 0.0, %v7789
        %v7791 = vpop.f32.mrb[0].mxu0
        %v7792 = vadd.f32 0.0, %v7791
        %v7793 = vpop.f32.mrb[0].mxu0
        %v7794 = vadd.f32 0.0, %v7793
        %v7795 = vpop.f32.mrb[0].mxu0
        %v7796 = vadd.f32 0.0, %v7795
        %7797 = vmatprep.mubr.bf16.mxu0 %v7550
        %7798 = vmatmul.mubr.bf16.gmra.mrb[0].mxu0 %v7549
        %v7799 = vpop.f32.mrb[0].mxu0
        %v7800 = vadd.f32 0.0, %v7799
        %v7801 = vpop.f32.mrb[0].mxu0
        %v7802 = vadd.f32 0.0, %v7801
        %v7803 = vpop.f32.mrb[0].mxu0
        %v7804 = vadd.f32 0.0, %v7803
        %v7805 = vpop.f32.mrb[0].mxu0
        %v7806 = vadd.f32 0.0, %v7805
        %7807 = vmatprep.mubr.bf16.mxu0 %v7552
        %7808 = vmatmul.mubr.bf16.gmra.mrb[0].mxu0 %v7551
        %v7809 = vpop.f32.mrb[0].mxu0
        %v7810 = vadd.f32 0.0, %v7809
        %v7811 = vpop.f32.mrb[0].mxu0
        %v7812 = vadd.f32 0.0, %v7811
        %v7813 = vpop.f32.mrb[0].mxu0
        %v7814 = vadd.f32 0.0, %v7813
        %v7815 = vpop.f32.mrb[0].mxu0
        %v7816 = vadd.f32 0.0, %v7815
        %7817 = vmatprep.mubr.bf16.mxu0 %v7554
        %7818 = vmatmul.mubr.bf16.gmra.mrb[0].mxu0 %v7553
        %v7819 = vpop.f32.mrb[0].mxu0
        %v7820 = vadd.f32 0.0, %v7819
        %v7821 = vpop.f32.mrb[0].mxu0
        %v7822 = vadd.f32 0.0, %v7821
        %v7823 = vpop.f32.mrb[0].mxu0
        %v7824 = vadd.f32 0.0, %v7823
        %v7825 = vpop.f32.mrb[0].mxu0
        %v7826 = vadd.f32 0.0, %v7825
        %7827 = vmatprep.mubr.bf16.mxu0 %v7556
        %7828 = vmatmul.mubr.bf16.gmra.mrb[0].mxu0 %v7555
        %v7829 = vpop.f32.mrb[0].mxu0
        %v7830 = vadd.f32 0.0, %v7829
        %v7831 = vpop.f32.mrb[0].mxu0
        %v7832 = vadd.f32 0.0, %v7831
        %v7833 = vpop.f32.mrb[0].mxu0
        %v7834 = vadd.f32 0.0, %v7833
        %v7835 = vpop.f32.mrb[0].mxu0
        %v7836 = vadd.f32 0.0, %v7835
        %7837 = vmatprep.mubr.bf16.mxu0 %v7558
        %7838 = vmatmul.mubr.bf16.gmra.mrb[0].mxu0 %v7557
        %v7839 = vpop.f32.mrb[0].mxu0
        %v7840 = vadd.f32 0.0, %v7839
        %v7841 = vpop.f32.mrb[0].mxu0
        %v7842 = vadd.f32 0.0, %v7841
        %v7843 = vpop.f32.mrb[0].mxu0
        %v7844 = vadd.f32 0.0, %v7843
        %v7845 = vpop.f32.mrb[0].mxu0
        %v7846 = vadd.f32 0.0, %v7845
        %7847 = vdwg.mxu0
        %v7848 = vadd.f32 %v7414, %v7770
        %v7849 = vadd.f32 %v7415, %v7772
        %v7850 = vadd.f32 %v7416, %v7774
        %v7851 = vadd.f32 %v7417, %v7776
        %v7852 = vadd.f32 %v7418, %v7780
        %v7853 = vadd.f32 %v7419, %v7782
        %v7854 = vadd.f32 %v7420, %v7784
        %v7855 = vadd.f32 %v7421, %v7786
        %v7856 = vadd.f32 %v7422, %v7790
        %v7857 = vadd.f32 %v7423, %v7792
        %v7858 = vadd.f32 %v7424, %v7794
        %v7859 = vadd.f32 %v7425, %v7796
        %v7860 = vadd.f32 %v7426, %v7800
        %v7861 = vadd.f32 %v7427, %v7802
        %v7862 = vadd.f32 %v7428, %v7804
        %v7863 = vadd.f32 %v7429, %v7806
        %v7864 = vadd.f32 %v7430, %v7810
        %v7865 = vadd.f32 %v7431, %v7812
        %v7866 = vadd.f32 %v7432, %v7814
        %v7867 = vadd.f32 %v7433, %v7816
        %v7868 = vadd.f32 %v7434, %v7820
        %v7869 = vadd.f32 %v7435, %v7822
        %v7870 = vadd.f32 %v7436, %v7824
        %v7871 = vadd.f32 %v7437, %v7826
        %v7872 = vadd.f32 %v7438, %v7830
        %v7873 = vadd.f32 %v7439, %v7832
        %v7874 = vadd.f32 %v7440, %v7834
        %v7875 = vadd.f32 %v7441, %v7836
        %v7876 = vadd.f32 %v7442, %v7840
        %v7877 = vadd.f32 %v7443, %v7842
        %v7878 = vadd.f32 %v7444, %v7844
        %v7879 = vadd.f32 %v7445, %v7846
        %v7880 = vld [vmem:[%s620] sm:$0xff]
        %v7881 = vld [vmem:[%s620 + $0x8] sm:$0x11]
        %v7882 = vld [vmem:[%s620 + $0x10] sm:$0xff]
        %v7883 = vld [vmem:[%s620 + $0x18] sm:$0x11]
        %v7884 = vld [vmem:[%s620 + $0x20] sm:$0xff]
        %v7885 = vld [vmem:[%s620 + $0x28] sm:$0x11]
        %v7886 = vld [vmem:[%s620 + $0x30] sm:$0xff]
        %v7887 = vld [vmem:[%s620 + $0x38] sm:$0x11]
        %v7888 = vld [vmem:[%s620 + $0x40] sm:$0xff]
        %v7889 = vld [vmem:[%s620 + $0x48] sm:$0x11]
        %v7890 = vld [vmem:[%s620 + $0x50] sm:$0xff]
        %v7891 = vld [vmem:[%s620 + $0x58] sm:$0x11]
        %v7892 = vld [vmem:[%s620 + $0x60] sm:$0xff]
        %v7893 = vld [vmem:[%s620 + $0x68] sm:$0x11]
        %v7894 = vld [vmem:[%s620 + $0x70] sm:$0xff]
        %v7895 = vld [vmem:[%s620 + $0x78] sm:$0x11]
        %v7896 = vld [vmem:[%s620 + $0xa0] sm:$0xff]
        %v7897 = vld [vmem:[%s620 + $0xa8] sm:$0x11]
        %v7898 = vld [vmem:[%s620 + $0xb0] sm:$0xff]
        %v7899 = vld [vmem:[%s620 + $0xb8] sm:$0x11]
        %v7900 = vld [vmem:[%s620 + $0xc0] sm:$0xff]
        %v7901 = vld [vmem:[%s620 + $0xc8] sm:$0x11]
        %v7902 = vld [vmem:[%s620 + $0xd0] sm:$0xff]
        %v7903 = vld [vmem:[%s620 + $0xd8] sm:$0x11]
        %v7904 = vld [vmem:[%s620 + $0xe0] sm:$0xff]
        %v7905 = vld [vmem:[%s620 + $0xe8] sm:$0x11]
        %v7906 = vld [vmem:[%s620 + $0xf0] sm:$0xff]
        %v7907 = vld [vmem:[%s620 + $0xf8] sm:$0x11]
        %v7908 = vld [vmem:[%s620 + $0x100] sm:$0xff]
        %v7909 = vld [vmem:[%s620 + $0x108] sm:$0x11]
        %v7910 = vld [vmem:[%s620 + $0x110] sm:$0xff]
        %v7911 = vld [vmem:[%s620 + $0x118] sm:$0x11]
        %v7913 = vshrl.u32 %v7880, 16
        %v7915 = vrot.slane %v7913, 4
        %v7916 = vshll.u32 %v7880, 16
        %v7918 = vrot.slane %v7916, 5
        %v7919 = vor.u32 %v7915, %v7918
        %v7920 = vrot.slane %v7919, 4
        %v7922 = vshll.u32 %v7881, 16
        %v7924 = vrot.slane %v7922, 5
        %v7925 = vsel %vm788, %v7920, %v7924
        %v7927 = vshrl.u32 %v7882, 16
        %v7929 = vrot.slane %v7927, 4
        %v7930 = vshll.u32 %v7882, 16
        %v7932 = vrot.slane %v7930, 5
        %v7933 = vor.u32 %v7929, %v7932
        %v7934 = vrot.slane %v7933, 4
        %v7936 = vshll.u32 %v7883, 16
        %v7938 = vrot.slane %v7936, 5
        %v7939 = vsel %vm788, %v7934, %v7938
        %v7941 = vshrl.u32 %v7884, 16
        %v7943 = vrot.slane %v7941, 4
        %v7944 = vshll.u32 %v7884, 16
        %v7946 = vrot.slane %v7944, 5
        %v7947 = vor.u32 %v7943, %v7946
        %v7948 = vrot.slane %v7947, 4
        %v7950 = vshll.u32 %v7885, 16
        %v7952 = vrot.slane %v7950, 5
        %v7953 = vsel %vm788, %v7948, %v7952
        %v7955 = vshrl.u32 %v7886, 16
        %v7957 = vrot.slane %v7955, 4
        %v7958 = vshll.u32 %v7886, 16
        %v7960 = vrot.slane %v7958, 5
        %v7961 = vor.u32 %v7957, %v7960
        %v7962 = vrot.slane %v7961, 4
        %v7964 = vshll.u32 %v7887, 16
        %v7966 = vrot.slane %v7964, 5
        %v7967 = vsel %vm788, %v7962, %v7966
        %v7969 = vshrl.u32 %v7888, 16
        %v7971 = vrot.slane %v7969, 4
        %v7972 = vshll.u32 %v7888, 16
        %v7974 = vrot.slane %v7972, 5
        %v7975 = vor.u32 %v7971, %v7974
        %v7976 = vrot.slane %v7975, 4
        %v7978 = vshll.u32 %v7889, 16
        %v7980 = vrot.slane %v7978, 5
        %v7981 = vsel %vm788, %v7976, %v7980
        %v7983 = vshrl.u32 %v7890, 16
        %v7985 = vrot.slane %v7983, 4
        %v7986 = vshll.u32 %v7890, 16
        %v7988 = vrot.slane %v7986, 5
        %v7989 = vor.u32 %v7985, %v7988
        %v7990 = vrot.slane %v7989, 4
        %v7992 = vshll.u32 %v7891, 16
        %v7994 = vrot.slane %v7992, 5
        %v7995 = vsel %vm788, %v7990, %v7994
        %v7997 = vshrl.u32 %v7892, 16
        %v7999 = vrot.slane %v7997, 4
        %v8000 = vshll.u32 %v7892, 16
        %v8002 = vrot.slane %v8000, 5
        %v8003 = vor.u32 %v7999, %v8002
        %v8004 = vrot.slane %v8003, 4
        %v8006 = vshll.u32 %v7893, 16
        %v8008 = vrot.slane %v8006, 5
        %v8009 = vsel %vm788, %v8004, %v8008
        %v8011 = vshrl.u32 %v7894, 16
        %v8013 = vrot.slane %v8011, 4
        %v8014 = vshll.u32 %v7894, 16
        %v8016 = vrot.slane %v8014, 5
        %v8017 = vor.u32 %v8013, %v8016
        %v8018 = vrot.slane %v8017, 4
        %v8020 = vshll.u32 %v7895, 16
        %v8022 = vrot.slane %v8020, 5
        %v8023 = vsel %vm788, %v8018, %v8022
        %v8025 = vshrl.u32 %v7896, 16
        %v8027 = vrot.slane %v8025, 4
        %v8028 = vshll.u32 %v7896, 16
        %v8030 = vrot.slane %v8028, 5
        %v8031 = vor.u32 %v8027, %v8030
        %v8032 = vrot.slane %v8031, 4
        %v8034 = vshll.u32 %v7897, 16
        %v8036 = vrot.slane %v8034, 5
        %v8037 = vsel %vm788, %v8032, %v8036
        %v8039 = vshrl.u32 %v7898, 16
        %v8041 = vrot.slane %v8039, 4
        %v8042 = vshll.u32 %v7898, 16
        %v8044 = vrot.slane %v8042, 5
        %v8045 = vor.u32 %v8041, %v8044
        %v8046 = vrot.slane %v8045, 4
        %v8048 = vshll.u32 %v7899, 16
        %v8050 = vrot.slane %v8048, 5
        %v8051 = vsel %vm788, %v8046, %v8050
        %v8053 = vshrl.u32 %v7900, 16
        %v8055 = vrot.slane %v8053, 4
        %v8056 = vshll.u32 %v7900, 16
        %v8058 = vrot.slane %v8056, 5
        %v8059 = vor.u32 %v8055, %v8058
        %v8060 = vrot.slane %v8059, 4
        %v8062 = vshll.u32 %v7901, 16
        %v8064 = vrot.slane %v8062, 5
        %v8065 = vsel %vm788, %v8060, %v8064
        %v8067 = vshrl.u32 %v7902, 16
        %v8069 = vrot.slane %v8067, 4
        %v8070 = vshll.u32 %v7902, 16
        %v8072 = vrot.slane %v8070, 5
        %v8073 = vor.u32 %v8069, %v8072
        %v8074 = vrot.slane %v8073, 4
        %v8076 = vshll.u32 %v7903, 16
        %v8078 = vrot.slane %v8076, 5
        %v8079 = vsel %vm788, %v8074, %v8078
        %v8081 = vshrl.u32 %v7904, 16
        %v8083 = vrot.slane %v8081, 4
        %v8084 = vshll.u32 %v7904, 16
        %v8086 = vrot.slane %v8084, 5
        %v8087 = vor.u32 %v8083, %v8086
        %v8088 = vrot.slane %v8087, 4
        %v8090 = vshll.u32 %v7905, 16
        %v8092 = vrot.slane %v8090, 5
        %v8093 = vsel %vm788, %v8088, %v8092
        %v8095 = vshrl.u32 %v7906, 16
        %v8097 = vrot.slane %v8095, 4
        %v8098 = vshll.u32 %v7906, 16
        %v8100 = vrot.slane %v8098, 5
        %v8101 = vor.u32 %v8097, %v8100
        %v8102 = vrot.slane %v8101, 4
        %v8104 = vshll.u32 %v7907, 16
        %v8106 = vrot.slane %v8104, 5
        %v8107 = vsel %vm788, %v8102, %v8106
        %v8109 = vshrl.u32 %v7908, 16
        %v8111 = vrot.slane %v8109, 4
        %v8112 = vshll.u32 %v7908, 16
        %v8114 = vrot.slane %v8112, 5
        %v8115 = vor.u32 %v8111, %v8114
        %v8116 = vrot.slane %v8115, 4
        %v8118 = vshll.u32 %v7909, 16
        %v8120 = vrot.slane %v8118, 5
        %v8121 = vsel %vm788, %v8116, %v8120
        %v8123 = vshrl.u32 %v7910, 16
        %v8125 = vrot.slane %v8123, 4
        %v8126 = vshll.u32 %v7910, 16
        %v8128 = vrot.slane %v8126, 5
        %v8129 = vor.u32 %v8125, %v8128
        %v8130 = vrot.slane %v8129, 4
        %v8132 = vshll.u32 %v7911, 16
        %v8134 = vrot.slane %v8132, 5
        %v8135 = vsel %vm788, %v8130, %v8134
        %s8136 = scalar_lea.vmem [#allocation3], 1024
        %v8137 = vld [vmem:[%s8136] sm:$0xff]
        %v8138 = vld [vmem:[%s8136 + $0x8] sm:$0xff]
        %v8139 = vld [vmem:[%s8136 + $0x10] sm:$0xff]
        %v8140 = vld [vmem:[%s8136 + $0x18] sm:$0xff]
        %v8141 = vld [vmem:[%s8136 + $0x20] sm:$0xff]
        %v8142 = vld [vmem:[%s8136 + $0x28] sm:$0xff]
        %v8143 = vld [vmem:[%s8136 + $0x30] sm:$0xff]
        %v8144 = vld [vmem:[%s8136 + $0x38] sm:$0xff]
        %v8145 = vld [vmem:[%s8136 + $0x40] sm:$0xff]
        %v8146 = vld [vmem:[%s8136 + $0x48] sm:$0xff]
        %v8147 = vld [vmem:[%s8136 + $0x50] sm:$0xff]
        %v8148 = vld [vmem:[%s8136 + $0x58] sm:$0xff]
        %v8149 = vld [vmem:[%s8136 + $0x60] sm:$0xff]
        %v8150 = vld [vmem:[%s8136 + $0x68] sm:$0xff]
        %v8151 = vld [vmem:[%s8136 + $0x70] sm:$0xff]
        %v8152 = vld [vmem:[%s8136 + $0x78] sm:$0xff]
        %v8153 = vld [vmem:[%s8136 + $0x80] sm:$0xff]
        %v8154 = vld [vmem:[%s8136 + $0x88] sm:$0xff]
        %v8155 = vld [vmem:[%s8136 + $0x90] sm:$0xff]
        %v8156 = vld [vmem:[%s8136 + $0x98] sm:$0xff]
        %v8157 = vld [vmem:[%s8136 + $0xa0] sm:$0xff]
        %v8158 = vld [vmem:[%s8136 + $0xa8] sm:$0xff]
        %v8159 = vld [vmem:[%s8136 + $0xb0] sm:$0xff]
        %v8160 = vld [vmem:[%s8136 + $0xb8] sm:$0xff]
        %v8161 = vld [vmem:[%s8136 + $0xc0] sm:$0xff]
        %v8162 = vld [vmem:[%s8136 + $0xc8] sm:$0xff]
        %v8163 = vld [vmem:[%s8136 + $0xd0] sm:$0xff]
        %v8164 = vld [vmem:[%s8136 + $0xd8] sm:$0xff]
        %v8165 = vld [vmem:[%s8136 + $0xe0] sm:$0xff]
        %v8166 = vld [vmem:[%s8136 + $0xe8] sm:$0xff]
        %v8167 = vld [vmem:[%s8136 + $0xf0] sm:$0xff]
        %v8168 = vld [vmem:[%s8136 + $0xf8] sm:$0xff]
        %v8169 = vunpack.c.l.b16 %v7925
        %v8170 = vunpack.c.h.b16 %v7925
        %v8171 = vunpack.c.l.b16 %v7939
        %v8172 = vunpack.c.h.b16 %v7939
        %v8173 = vunpack.c.l.b16 %v7953
        %v8174 = vunpack.c.h.b16 %v7953
        %v8175 = vunpack.c.l.b16 %v7967
        %v8176 = vunpack.c.h.b16 %v7967
        %v8177 = vunpack.c.l.b16 %v7981
        %v8178 = vunpack.c.h.b16 %v7981
        %v8179 = vunpack.c.l.b16 %v7995
        %v8180 = vunpack.c.h.b16 %v7995
        %v8181 = vunpack.c.l.b16 %v8009
        %v8182 = vunpack.c.h.b16 %v8009
        %v8183 = vunpack.c.l.b16 %v8023
        %v8184 = vunpack.c.h.b16 %v8023
        %v8185 = vunpack.c.l.b16 %v8037
        %v8186 = vunpack.c.h.b16 %v8037
        %v8187 = vunpack.c.l.b16 %v8051
        %v8188 = vunpack.c.h.b16 %v8051
        %v8189 = vunpack.c.l.b16 %v8065
        %v8190 = vunpack.c.h.b16 %v8065
        %v8191 = vunpack.c.l.b16 %v8079
        %v8192 = vunpack.c.h.b16 %v8079
        %v8193 = vunpack.c.l.b16 %v8093
        %v8194 = vunpack.c.h.b16 %v8093
        %v8195 = vunpack.c.l.b16 %v8107
        %v8196 = vunpack.c.h.b16 %v8107
        %v8197 = vunpack.c.l.b16 %v8121
        %v8198 = vunpack.c.h.b16 %v8121
        %v8199 = vunpack.c.l.b16 %v8135
        %v8200 = vunpack.c.h.b16 %v8135
        %v8201 = vpack.c.b16 %v8171, %v8169
        %v8202 = vpack.c.b16 %v8172, %v8170
        %v8203 = vpack.c.b16 %v8175, %v8173
        %v8204 = vpack.c.b16 %v8176, %v8174
        %v8205 = vpack.c.b16 %v8179, %v8177
        %v8206 = vpack.c.b16 %v8180, %v8178
        %v8207 = vpack.c.b16 %v8183, %v8181
        %v8208 = vpack.c.b16 %v8184, %v8182
        %v8209 = vpack.c.b16 %v8187, %v8185
        %v8210 = vpack.c.b16 %v8188, %v8186
        %v8211 = vpack.c.b16 %v8191, %v8189
        %v8212 = vpack.c.b16 %v8192, %v8190
        %v8213 = vpack.c.b16 %v8195, %v8193
        %v8214 = vpack.c.b16 %v8196, %v8194
        %v8215 = vpack.c.b16 %v8199, %v8197
        %v8216 = vpack.c.b16 %v8200, %v8198
        %v8265 = vunpack.c.l.b16 %v8137
        %v8266 = vunpack.c.h.b16 %v8137
        %v8267 = vunpack.c.l.b16 %v8138
        %v8268 = vunpack.c.h.b16 %v8138
        %v8269 = vunpack.c.l.b16 %v8139
        %v8270 = vunpack.c.h.b16 %v8139
        %v8271 = vunpack.c.l.b16 %v8140
        %v8272 = vunpack.c.h.b16 %v8140
        %v8273 = vunpack.c.l.b16 %v8141
        %v8274 = vunpack.c.h.b16 %v8141
        %v8275 = vunpack.c.l.b16 %v8142
        %v8276 = vunpack.c.h.b16 %v8142
        %v8277 = vunpack.c.l.b16 %v8143
        %v8278 = vunpack.c.h.b16 %v8143
        %v8279 = vunpack.c.l.b16 %v8144
        %v8280 = vunpack.c.h.b16 %v8144
        %v8281 = vunpack.c.l.b16 %v8145
        %v8282 = vunpack.c.h.b16 %v8145
        %v8283 = vunpack.c.l.b16 %v8146
        %v8284 = vunpack.c.h.b16 %v8146
        %v8285 = vunpack.c.l.b16 %v8147
        %v8286 = vunpack.c.h.b16 %v8147
        %v8287 = vunpack.c.l.b16 %v8148
        %v8288 = vunpack.c.h.b16 %v8148
        %v8289 = vunpack.c.l.b16 %v8149
        %v8290 = vunpack.c.h.b16 %v8149
        %v8291 = vunpack.c.l.b16 %v8150
        %v8292 = vunpack.c.h.b16 %v8150
        %v8293 = vunpack.c.l.b16 %v8151
        %v8294 = vunpack.c.h.b16 %v8151
        %v8295 = vunpack.c.l.b16 %v8152
        %v8296 = vunpack.c.h.b16 %v8152
        %v8297 = vunpack.c.l.b16 %v8153
        %v8298 = vunpack.c.h.b16 %v8153
        %v8299 = vunpack.c.l.b16 %v8154
        %v8300 = vunpack.c.h.b16 %v8154
        %v8301 = vunpack.c.l.b16 %v8155
        %v8302 = vunpack.c.h.b16 %v8155
        %v8303 = vunpack.c.l.b16 %v8156
        %v8304 = vunpack.c.h.b16 %v8156
        %v8305 = vunpack.c.l.b16 %v8157
        %v8306 = vunpack.c.h.b16 %v8157
        %v8307 = vunpack.c.l.b16 %v8158
        %v8308 = vunpack.c.h.b16 %v8158
        %v8309 = vunpack.c.l.b16 %v8159
        %v8310 = vunpack.c.h.b16 %v8159
        %v8311 = vunpack.c.l.b16 %v8160
        %v8312 = vunpack.c.h.b16 %v8160
        %v8313 = vunpack.c.l.b16 %v8161
        %v8314 = vunpack.c.h.b16 %v8161
        %v8315 = vunpack.c.l.b16 %v8162
        %v8316 = vunpack.c.h.b16 %v8162
        %v8317 = vunpack.c.l.b16 %v8163
        %v8318 = vunpack.c.h.b16 %v8163
        %v8319 = vunpack.c.l.b16 %v8164
        %v8320 = vunpack.c.h.b16 %v8164
        %v8321 = vunpack.c.l.b16 %v8165
        %v8322 = vunpack.c.h.b16 %v8165
        %v8323 = vunpack.c.l.b16 %v8166
        %v8324 = vunpack.c.h.b16 %v8166
        %v8325 = vunpack.c.l.b16 %v8167
        %v8326 = vunpack.c.h.b16 %v8167
        %v8327 = vunpack.c.l.b16 %v8168
        %v8328 = vunpack.c.h.b16 %v8168
        %v8329 = vpack.c.b16 %v8267, %v8265
        %v8330 = vpack.c.b16 %v8268, %v8266
        %v8331 = vpack.c.b16 %v8271, %v8269
        %v8332 = vpack.c.b16 %v8272, %v8270
        %v8333 = vpack.c.b16 %v8275, %v8273
        %v8334 = vpack.c.b16 %v8276, %v8274
        %v8335 = vpack.c.b16 %v8279, %v8277
        %v8336 = vpack.c.b16 %v8280, %v8278
        %v8337 = vpack.c.b16 %v8283, %v8281
        %v8338 = vpack.c.b16 %v8284, %v8282
        %v8339 = vpack.c.b16 %v8287, %v8285
        %v8340 = vpack.c.b16 %v8288, %v8286
        %v8341 = vpack.c.b16 %v8291, %v8289
        %v8342 = vpack.c.b16 %v8292, %v8290
        %v8343 = vpack.c.b16 %v8295, %v8293
        %v8344 = vpack.c.b16 %v8296, %v8294
        %v8345 = vpack.c.b16 %v8299, %v8297
        %v8346 = vpack.c.b16 %v8300, %v8298
        %v8347 = vpack.c.b16 %v8303, %v8301
        %v8348 = vpack.c.b16 %v8304, %v8302
        %v8349 = vpack.c.b16 %v8307, %v8305
        %v8350 = vpack.c.b16 %v8308, %v8306
        %v8351 = vpack.c.b16 %v8311, %v8309
        %v8352 = vpack.c.b16 %v8312, %v8310
        %v8353 = vpack.c.b16 %v8315, %v8313
        %v8354 = vpack.c.b16 %v8316, %v8314
        %v8355 = vpack.c.b16 %v8319, %v8317
        %v8356 = vpack.c.b16 %v8320, %v8318
        %v8357 = vpack.c.b16 %v8323, %v8321
        %v8358 = vpack.c.b16 %v8324, %v8322
        %v8359 = vpack.c.b16 %v8327, %v8325
        %v8360 = vpack.c.b16 %v8328, %v8326
        %8393 = vmatprep.subr.bf16.mxu0 %v8330
        %8394 = vmatpush1.bf16.msra.mxu0 %v8329
        %8395 = vmatprep.subr.bf16.mxu0 %v8332
        %8396 = vmatpush1.bf16.msra.mxu0 %v8331
        %8397 = vmatprep.subr.bf16.mxu0 %v8334
        %8398 = vmatpush1.bf16.msra.mxu0 %v8333
        %8399 = vmatprep.subr.bf16.mxu0 %v8336
        %8400 = vmatpush1.bf16.msra.mxu0 %v8335
        %8401 = vmatprep.subr.bf16.mxu0 %v8338
        %8402 = vmatpush1.bf16.msra.mxu0 %v8337
        %8403 = vmatprep.subr.bf16.mxu0 %v8340
        %8404 = vmatpush1.bf16.msra.mxu0 %v8339
        %8405 = vmatprep.subr.bf16.mxu0 %v8342
        %8406 = vmatpush1.bf16.msra.mxu0 %v8341
        %8407 = vmatprep.subr.bf16.mxu0 %v8344
        %8408 = vmatpush1.bf16.msra.mxu0 %v8343
        %8409 = vmatprep.subr.bf16.mxu0 %v8346
        %8410 = vmatpush1.bf16.msra.mxu0 %v8345
        %8411 = vmatprep.subr.bf16.mxu0 %v8348
        %8412 = vmatpush1.bf16.msra.mxu0 %v8347
        %8413 = vmatprep.subr.bf16.mxu0 %v8350
        %8414 = vmatpush1.bf16.msra.mxu0 %v8349
        %8415 = vmatprep.subr.bf16.mxu0 %v8352
        %8416 = vmatpush1.bf16.msra.mxu0 %v8351
        %8417 = vmatprep.subr.bf16.mxu0 %v8354
        %8418 = vmatpush1.bf16.msra.mxu0 %v8353
        %8419 = vmatprep.subr.bf16.mxu0 %v8356
        %8420 = vmatpush1.bf16.msra.mxu0 %v8355
        %8421 = vmatprep.subr.bf16.mxu0 %v8358
        %8422 = vmatpush1.bf16.msra.mxu0 %v8357
        %8423 = vmatprep.subr.bf16.mxu0 %v8360
        %8424 = vmatpush1.bf16.msra.mxu0 %v8359
        %8425 = vmatprep.mubr.bf16.mxu0 %v8202
        %8426 = vmatmul.mubr.bf16.gmra.mrb[0].mxu0 %v8201
        %v8427 = vpop.f32.mrb[0].mxu0
        %v8428 = vadd.f32 0.0, %v8427
        %v8429 = vpop.f32.mrb[0].mxu0
        %v8430 = vadd.f32 0.0, %v8429
        %v8431 = vpop.f32.mrb[0].mxu0
        %v8432 = vadd.f32 0.0, %v8431
        %v8433 = vpop.f32.mrb[0].mxu0
        %v8434 = vadd.f32 0.0, %v8433
        %8435 = vmatprep.mubr.bf16.mxu0 %v8204
        %8436 = vmatmul.mubr.bf16.gmra.mrb[0].mxu0 %v8203
        %v8437 = vpop.f32.mrb[0].mxu0
        %v8438 = vadd.f32 0.0, %v8437
        %v8439 = vpop.f32.mrb[0].mxu0
        %v8440 = vadd.f32 0.0, %v8439
        %v8441 = vpop.f32.mrb[0].mxu0
        %v8442 = vadd.f32 0.0, %v8441
        %v8443 = vpop.f32.mrb[0].mxu0
        %v8444 = vadd.f32 0.0, %v8443
        %8445 = vmatprep.mubr.bf16.mxu0 %v8206
        %8446 = vmatmul.mubr.bf16.gmra.mrb[0].mxu0 %v8205
        %v8447 = vpop.f32.mrb[0].mxu0
        %v8448 = vadd.f32 0.0, %v8447
        %v8449 = vpop.f32.mrb[0].mxu0
        %v8450 = vadd.f32 0.0, %v8449
        %v8451 = vpop.f32.mrb[0].mxu0
        %v8452 = vadd.f32 0.0, %v8451
        %v8453 = vpop.f32.mrb[0].mxu0
        %v8454 = vadd.f32 0.0, %v8453
        %8455 = vmatprep.mubr.bf16.mxu0 %v8208
        %8456 = vmatmul.mubr.bf16.gmra.mrb[0].mxu0 %v8207
        %v8457 = vpop.f32.mrb[0].mxu0
        %v8458 = vadd.f32 0.0, %v8457
        %v8459 = vpop.f32.mrb[0].mxu0
        %v8460 = vadd.f32 0.0, %v8459
        %v8461 = vpop.f32.mrb[0].mxu0
        %v8462 = vadd.f32 0.0, %v8461
        %v8463 = vpop.f32.mrb[0].mxu0
        %v8464 = vadd.f32 0.0, %v8463
        %8465 = vmatprep.mubr.bf16.mxu0 %v8210
        %8466 = vmatmul.mubr.bf16.gmra.mrb[0].mxu0 %v8209
        %v8467 = vpop.f32.mrb[0].mxu0
        %v8468 = vadd.f32 0.0, %v8467
        %v8469 = vpop.f32.mrb[0].mxu0
        %v8470 = vadd.f32 0.0, %v8469
        %v8471 = vpop.f32.mrb[0].mxu0
        %v8472 = vadd.f32 0.0, %v8471
        %v8473 = vpop.f32.mrb[0].mxu0
        %v8474 = vadd.f32 0.0, %v8473
        %8475 = vmatprep.mubr.bf16.mxu0 %v8212
        %8476 = vmatmul.mubr.bf16.gmra.mrb[0].mxu0 %v8211
        %v8477 = vpop.f32.mrb[0].mxu0
        %v8478 = vadd.f32 0.0, %v8477
        %v8479 = vpop.f32.mrb[0].mxu0
        %v8480 = vadd.f32 0.0, %v8479
        %v8481 = vpop.f32.mrb[0].mxu0
        %v8482 = vadd.f32 0.0, %v8481
        %v8483 = vpop.f32.mrb[0].mxu0
        %v8484 = vadd.f32 0.0, %v8483
        %8485 = vmatprep.mubr.bf16.mxu0 %v8214
        %8486 = vmatmul.mubr.bf16.gmra.mrb[0].mxu0 %v8213
        %v8487 = vpop.f32.mrb[0].mxu0
        %v8488 = vadd.f32 0.0, %v8487
        %v8489 = vpop.f32.mrb[0].mxu0
        %v8490 = vadd.f32 0.0, %v8489
        %v8491 = vpop.f32.mrb[0].mxu0
        %v8492 = vadd.f32 0.0, %v8491
        %v8493 = vpop.f32.mrb[0].mxu0
        %v8494 = vadd.f32 0.0, %v8493
        %8495 = vmatprep.mubr.bf16.mxu0 %v8216
        %8496 = vmatmul.mubr.bf16.gmra.mrb[0].mxu0 %v8215
        %v8497 = vpop.f32.mrb[0].mxu0
        %v8498 = vadd.f32 0.0, %v8497
        %v8499 = vpop.f32.mrb[0].mxu0
        %v8500 = vadd.f32 0.0, %v8499
        %v8501 = vpop.f32.mrb[0].mxu0
        %v8502 = vadd.f32 0.0, %v8501
        %v8503 = vpop.f32.mrb[0].mxu0
        %v8504 = vadd.f32 0.0, %v8503
        %8505 = vdwg.mxu0
        %v8506 = vadd.f32 %v7848, %v8428
        %v8507 = vadd.f32 %v7849, %v8430
        %v8508 = vadd.f32 %v7850, %v8432
        %v8509 = vadd.f32 %v7851, %v8434
        %v8510 = vadd.f32 %v7852, %v8438
        %v8511 = vadd.f32 %v7853, %v8440
        %v8512 = vadd.f32 %v7854, %v8442
        %v8513 = vadd.f32 %v7855, %v8444
        %v8514 = vadd.f32 %v7856, %v8448
        %v8515 = vadd.f32 %v7857, %v8450
        %v8516 = vadd.f32 %v7858, %v8452
        %v8517 = vadd.f32 %v7859, %v8454
        %v8518 = vadd.f32 %v7860, %v8458
        %v8519 = vadd.f32 %v7861, %v8460
        %v8520 = vadd.f32 %v7862, %v8462
        %v8521 = vadd.f32 %v7863, %v8464
        %v8522 = vadd.f32 %v7864, %v8468
        %v8523 = vadd.f32 %v7865, %v8470
        %v8524 = vadd.f32 %v7866, %v8472
        %v8525 = vadd.f32 %v7867, %v8474
        %v8526 = vadd.f32 %v7868, %v8478
        %v8527 = vadd.f32 %v7869, %v8480
        %v8528 = vadd.f32 %v7870, %v8482
        %v8529 = vadd.f32 %v7871, %v8484
        %v8530 = vadd.f32 %v7872, %v8488
        %v8531 = vadd.f32 %v7873, %v8490
        %v8532 = vadd.f32 %v7874, %v8492
        %v8533 = vadd.f32 %v7875, %v8494
        %v8534 = vadd.f32 %v7876, %v8498
        %v8535 = vadd.f32 %v7877, %v8500
        %v8536 = vadd.f32 %v7878, %v8502
        %v8537 = vadd.f32 %v7879, %v8504
        %v8538 = vld [vmem:[%s620] sm:$0xee]
        %v8539 = vld [vmem:[%s620 + $0x10] sm:$0xee]
        %v8540 = vld [vmem:[%s620 + $0x20] sm:$0xee]
        %v8541 = vld [vmem:[%s620 + $0x30] sm:$0xee]
        %v8542 = vld [vmem:[%s620 + $0x40] sm:$0xee]
        %v8543 = vld [vmem:[%s620 + $0x50] sm:$0xee]
        %v8544 = vld [vmem:[%s620 + $0x60] sm:$0xee]
        %v8545 = vld [vmem:[%s620 + $0x70] sm:$0xee]
        %v8546 = vld [vmem:[%s620 + $0xa0] sm:$0xee]
        %v8547 = vld [vmem:[%s620 + $0xb0] sm:$0xee]
        %v8548 = vld [vmem:[%s620 + $0xc0] sm:$0xee]
        %v8549 = vld [vmem:[%s620 + $0xd0] sm:$0xee]
        %v8550 = vld [vmem:[%s620 + $0xe0] sm:$0xee]
        %v8551 = vld [vmem:[%s620 + $0xf0] sm:$0xee]
        %v8552 = vld [vmem:[%s620 + $0x100] sm:$0xee]
        %v8553 = vld [vmem:[%s620 + $0x110] sm:$0xee]
        %v8586 = vrot.slane %v8538, 5
        %v8587 = vrot.slane %v8586, 4
        %v8588 = vrot.slane %v7881, 5
        %v8589 = vsel %vm1786, %v8587, %v8588
        %v8590 = vrot.slane %v8539, 5
        %v8591 = vrot.slane %v8590, 4
        %v8592 = vrot.slane %v7883, 5
        %v8593 = vsel %vm1786, %v8591, %v8592
        %v8594 = vrot.slane %v8540, 5
        %v8595 = vrot.slane %v8594, 4
        %v8596 = vrot.slane %v7885, 5
        %v8597 = vsel %vm1786, %v8595, %v8596
        %v8598 = vrot.slane %v8541, 5
        %v8599 = vrot.slane %v8598, 4
        %v8600 = vrot.slane %v7887, 5
        %v8601 = vsel %vm1786, %v8599, %v8600
        %v8602 = vrot.slane %v8542, 5
        %v8603 = vrot.slane %v8602, 4
        %v8604 = vrot.slane %v7889, 5
        %v8605 = vsel %vm1786, %v8603, %v8604
        %v8606 = vrot.slane %v8543, 5
        %v8607 = vrot.slane %v8606, 4
        %v8608 = vrot.slane %v7891, 5
        %v8609 = vsel %vm1786, %v8607, %v8608
        %v8610 = vrot.slane %v8544, 5
        %v8611 = vrot.slane %v8610, 4
        %v8612 = vrot.slane %v7893, 5
        %v8613 = vsel %vm1786, %v8611, %v8612
        %v8614 = vrot.slane %v8545, 5
        %v8615 = vrot.slane %v8614, 4
        %v8616 = vrot.slane %v7895, 5
        %v8617 = vsel %vm1786, %v8615, %v8616
        %v8618 = vrot.slane %v8546, 5
        %v8619 = vrot.slane %v8618, 4
        %v8620 = vrot.slane %v7897, 5
        %v8621 = vsel %vm1786, %v8619, %v8620
        %v8622 = vrot.slane %v8547, 5
        %v8623 = vrot.slane %v8622, 4
        %v8624 = vrot.slane %v7899, 5
        %v8625 = vsel %vm1786, %v8623, %v8624
        %v8626 = vrot.slane %v8548, 5
        %v8627 = vrot.slane %v8626, 4
        %v8628 = vrot.slane %v7901, 5
        %v8629 = vsel %vm1786, %v8627, %v8628
        %v8630 = vrot.slane %v8549, 5
        %v8631 = vrot.slane %v8630, 4
        %v8632 = vrot.slane %v7903, 5
        %v8633 = vsel %vm1786, %v8631, %v8632
        %v8634 = vrot.slane %v8550, 5
        %v8635 = vrot.slane %v8634, 4
        %v8636 = vrot.slane %v7905, 5
        %v8637 = vsel %vm1786, %v8635, %v8636
        %v8638 = vrot.slane %v8551, 5
        %v8639 = vrot.slane %v8638, 4
        %v8640 = vrot.slane %v7907, 5
        %v8641 = vsel %vm1786, %v8639, %v8640
        %v8642 = vrot.slane %v8552, 5
        %v8643 = vrot.slane %v8642, 4
        %v8644 = vrot.slane %v7909, 5
        %v8645 = vsel %vm1786, %v8643, %v8644
        %v8646 = vrot.slane %v8553, 5
        %v8647 = vrot.slane %v8646, 4
        %v8648 = vrot.slane %v7911, 5
        %v8649 = vsel %vm1786, %v8647, %v8648
        %s8650 = scalar_lea.vmem [#allocation3], 1280
        %v8651 = vld [vmem:[%s8650] sm:$0xff]
        %v8652 = vld [vmem:[%s8650 + $0x8] sm:$0xff]
        %v8653 = vld [vmem:[%s8650 + $0x10] sm:$0xff]
        %v8654 = vld [vmem:[%s8650 + $0x18] sm:$0xff]
        %v8655 = vld [vmem:[%s8650 + $0x20] sm:$0xff]
        %v8656 = vld [vmem:[%s8650 + $0x28] sm:$0xff]
        %v8657 = vld [vmem:[%s8650 + $0x30] sm:$0xff]
        %v8658 = vld [vmem:[%s8650 + $0x38] sm:$0xff]
        %v8659 = vld [vmem:[%s8650 + $0x40] sm:$0xff]
        %v8660 = vld [vmem:[%s8650 + $0x48] sm:$0xff]
        %v8661 = vld [vmem:[%s8650 + $0x50] sm:$0xff]
        %v8662 = vld [vmem:[%s8650 + $0x58] sm:$0xff]
        %v8663 = vld [vmem:[%s8650 + $0x60] sm:$0xff]
        %v8664 = vld [vmem:[%s8650 + $0x68] sm:$0xff]
        %v8665 = vld [vmem:[%s8650 + $0x70] sm:$0xff]
        %v8666 = vld [vmem:[%s8650 + $0x78] sm:$0xff]
        %v8667 = vld [vmem:[%s8650 + $0x80] sm:$0xff]
        %v8668 = vld [vmem:[%s8650 + $0x88] sm:$0xff]
        %v8669 = vld [vmem:[%s8650 + $0x90] sm:$0xff]
        %v8670 = vld [vmem:[%s8650 + $0x98] sm:$0xff]
        %v8671 = vld [vmem:[%s8650 + $0xa0] sm:$0xff]
        %v8672 = vld [vmem:[%s8650 + $0xa8] sm:$0xff]
        %v8673 = vld [vmem:[%s8650 + $0xb0] sm:$0xff]
        %v8674 = vld [vmem:[%s8650 + $0xb8] sm:$0xff]
        %v8675 = vld [vmem:[%s8650 + $0xc0] sm:$0xff]
        %v8676 = vld [vmem:[%s8650 + $0xc8] sm:$0xff]
        %v8677 = vld [vmem:[%s8650 + $0xd0] sm:$0xff]
        %v8678 = vld [vmem:[%s8650 + $0xd8] sm:$0xff]
        %v8679 = vld [vmem:[%s8650 + $0xe0] sm:$0xff]
        %v8680 = vld [vmem:[%s8650 + $0xe8] sm:$0xff]
        %v8681 = vld [vmem:[%s8650 + $0xf0] sm:$0xff]
        %v8682 = vld [vmem:[%s8650 + $0xf8] sm:$0xff]
        %v8683 = vunpack.c.l.b16 %v8589
        %v8684 = vunpack.c.h.b16 %v8589
        %v8685 = vunpack.c.l.b16 %v8593
        %v8686 = vunpack.c.h.b16 %v8593
        %v8687 = vunpack.c.l.b16 %v8597
        %v8688 = vunpack.c.h.b16 %v8597
        %v8689 = vunpack.c.l.b16 %v8601
        %v8690 = vunpack.c.h.b16 %v8601
        %v8691 = vunpack.c.l.b16 %v8605
        %v8692 = vunpack.c.h.b16 %v8605
        %v8693 = vunpack.c.l.b16 %v8609
        %v8694 = vunpack.c.h.b16 %v8609
        %v8695 = vunpack.c.l.b16 %v8613
        %v8696 = vunpack.c.h.b16 %v8613
        %v8697 = vunpack.c.l.b16 %v8617
        %v8698 = vunpack.c.h.b16 %v8617
        %v8699 = vunpack.c.l.b16 %v8621
        %v8700 = vunpack.c.h.b16 %v8621
        %v8701 = vunpack.c.l.b16 %v8625
        %v8702 = vunpack.c.h.b16 %v8625
        %v8703 = vunpack.c.l.b16 %v8629
        %v8704 = vunpack.c.h.b16 %v8629
        %v8705 = vunpack.c.l.b16 %v8633
        %v8706 = vunpack.c.h.b16 %v8633
        %v8707 = vunpack.c.l.b16 %v8637
        %v8708 = vunpack.c.h.b16 %v8637
        %v8709 = vunpack.c.l.b16 %v8641
        %v8710 = vunpack.c.h.b16 %v8641
        %v8711 = vunpack.c.l.b16 %v8645
        %v8712 = vunpack.c.h.b16 %v8645
        %v8713 = vunpack.c.l.b16 %v8649
        %v8714 = vunpack.c.h.b16 %v8649
        %v8715 = vpack.c.b16 %v8685, %v8683
        %v8716 = vpack.c.b16 %v8686, %v8684
        %v8717 = vpack.c.b16 %v8689, %v8687
        %v8718 = vpack.c.b16 %v8690, %v8688
        %v8719 = vpack.c.b16 %v8693, %v8691
        %v8720 = vpack.c.b16 %v8694, %v8692
        %v8721 = vpack.c.b16 %v8697, %v8695
        %v8722 = vpack.c.b16 %v8698, %v8696
        %v8723 = vpack.c.b16 %v8701, %v8699
        %v8724 = vpack.c.b16 %v8702, %v8700
        %v8725 = vpack.c.b16 %v8705, %v8703
        %v8726 = vpack.c.b16 %v8706, %v8704
        %v8727 = vpack.c.b16 %v8709, %v8707
        %v8728 = vpack.c.b16 %v8710, %v8708
        %v8729 = vpack.c.b16 %v8713, %v8711
        %v8730 = vpack.c.b16 %v8714, %v8712
        %v8779 = vunpack.c.l.b16 %v8651
        %v8780 = vunpack.c.h.b16 %v8651
        %v8781 = vunpack.c.l.b16 %v8652
        %v8782 = vunpack.c.h.b16 %v8652
        %v8783 = vunpack.c.l.b16 %v8653
        %v8784 = vunpack.c.h.b16 %v8653
        %v8785 = vunpack.c.l.b16 %v8654
        %v8786 = vunpack.c.h.b16 %v8654
        %v8787 = vunpack.c.l.b16 %v8655
        %v8788 = vunpack.c.h.b16 %v8655
        %v8789 = vunpack.c.l.b16 %v8656
        %v8790 = vunpack.c.h.b16 %v8656
        %v8791 = vunpack.c.l.b16 %v8657
        %v8792 = vunpack.c.h.b16 %v8657
        %v8793 = vunpack.c.l.b16 %v8658
        %v8794 = vunpack.c.h.b16 %v8658
        %v8795 = vunpack.c.l.b16 %v8659
        %v8796 = vunpack.c.h.b16 %v8659
        %v8797 = vunpack.c.l.b16 %v8660
        %v8798 = vunpack.c.h.b16 %v8660
        %v8799 = vunpack.c.l.b16 %v8661
        %v8800 = vunpack.c.h.b16 %v8661
        %v8801 = vunpack.c.l.b16 %v8662
        %v8802 = vunpack.c.h.b16 %v8662
        %v8803 = vunpack.c.l.b16 %v8663
        %v8804 = vunpack.c.h.b16 %v8663
        %v8805 = vunpack.c.l.b16 %v8664
        %v8806 = vunpack.c.h.b16 %v8664
        %v8807 = vunpack.c.l.b16 %v8665
        %v8808 = vunpack.c.h.b16 %v8665
        %v8809 = vunpack.c.l.b16 %v8666
        %v8810 = vunpack.c.h.b16 %v8666
        %v8811 = vunpack.c.l.b16 %v8667
        %v8812 = vunpack.c.h.b16 %v8667
        %v8813 = vunpack.c.l.b16 %v8668
        %v8814 = vunpack.c.h.b16 %v8668
        %v8815 = vunpack.c.l.b16 %v8669
        %v8816 = vunpack.c.h.b16 %v8669
        %v8817 = vunpack.c.l.b16 %v8670
        %v8818 = vunpack.c.h.b16 %v8670
        %v8819 = vunpack.c.l.b16 %v8671
        %v8820 = vunpack.c.h.b16 %v8671
        %v8821 = vunpack.c.l.b16 %v8672
        %v8822 = vunpack.c.h.b16 %v8672
        %v8823 = vunpack.c.l.b16 %v8673
        %v8824 = vunpack.c.h.b16 %v8673
        %v8825 = vunpack.c.l.b16 %v8674
        %v8826 = vunpack.c.h.b16 %v8674
        %v8827 = vunpack.c.l.b16 %v8675
        %v8828 = vunpack.c.h.b16 %v8675
        %v8829 = vunpack.c.l.b16 %v8676
        %v8830 = vunpack.c.h.b16 %v8676
        %v8831 = vunpack.c.l.b16 %v8677
        %v8832 = vunpack.c.h.b16 %v8677
        %v8833 = vunpack.c.l.b16 %v8678
        %v8834 = vunpack.c.h.b16 %v8678
        %v8835 = vunpack.c.l.b16 %v8679
        %v8836 = vunpack.c.h.b16 %v8679
        %v8837 = vunpack.c.l.b16 %v8680
        %v8838 = vunpack.c.h.b16 %v8680
        %v8839 = vunpack.c.l.b16 %v8681
        %v8840 = vunpack.c.h.b16 %v8681
        %v8841 = vunpack.c.l.b16 %v8682
        %v8842 = vunpack.c.h.b16 %v8682
        %v8843 = vpack.c.b16 %v8781, %v8779
        %v8844 = vpack.c.b16 %v8782, %v8780
        %v8845 = vpack.c.b16 %v8785, %v8783
        %v8846 = vpack.c.b16 %v8786, %v8784
        %v8847 = vpack.c.b16 %v8789, %v8787
        %v8848 = vpack.c.b16 %v8790, %v8788
        %v8849 = vpack.c.b16 %v8793, %v8791
        %v8850 = vpack.c.b16 %v8794, %v8792
        %v8851 = vpack.c.b16 %v8797, %v8795
        %v8852 = vpack.c.b16 %v8798, %v8796
        %v8853 = vpack.c.b16 %v8801, %v8799
        %v8854 = vpack.c.b16 %v8802, %v8800
        %v8855 = vpack.c.b16 %v8805, %v8803
        %v8856 = vpack.c.b16 %v8806, %v8804
        %v8857 = vpack.c.b16 %v8809, %v8807
        %v8858 = vpack.c.b16 %v8810, %v8808
        %v8859 = vpack.c.b16 %v8813, %v8811
        %v8860 = vpack.c.b16 %v8814, %v8812
        %v8861 = vpack.c.b16 %v8817, %v8815
        %v8862 = vpack.c.b16 %v8818, %v8816
        %v8863 = vpack.c.b16 %v8821, %v8819
        %v8864 = vpack.c.b16 %v8822, %v8820
        %v8865 = vpack.c.b16 %v8825, %v8823
        %v8866 = vpack.c.b16 %v8826, %v8824
        %v8867 = vpack.c.b16 %v8829, %v8827
        %v8868 = vpack.c.b16 %v8830, %v8828
        %v8869 = vpack.c.b16 %v8833, %v8831
        %v8870 = vpack.c.b16 %v8834, %v8832
        %v8871 = vpack.c.b16 %v8837, %v8835
        %v8872 = vpack.c.b16 %v8838, %v8836
        %v8873 = vpack.c.b16 %v8841, %v8839
        %v8874 = vpack.c.b16 %v8842, %v8840
        %8907 = vmatprep.subr.bf16.mxu0 %v8844
        %8908 = vmatpush1.bf16.msra.mxu0 %v8843
        %8909 = vmatprep.subr.bf16.mxu0 %v8846
        %8910 = vmatpush1.bf16.msra.mxu0 %v8845
        %8911 = vmatprep.subr.bf16.mxu0 %v8848
        %8912 = vmatpush1.bf16.msra.mxu0 %v8847
        %8913 = vmatprep.subr.bf16.mxu0 %v8850
        %8914 = vmatpush1.bf16.msra.mxu0 %v8849
        %8915 = vmatprep.subr.bf16.mxu0 %v8852
        %8916 = vmatpush1.bf16.msra.mxu0 %v8851
        %8917 = vmatprep.subr.bf16.mxu0 %v8854
        %8918 = vmatpush1.bf16.msra.mxu0 %v8853
        %8919 = vmatprep.subr.bf16.mxu0 %v8856
        %8920 = vmatpush1.bf16.msra.mxu0 %v8855
        %8921 = vmatprep.subr.bf16.mxu0 %v8858
        %8922 = vmatpush1.bf16.msra.mxu0 %v8857
        %8923 = vmatprep.subr.bf16.mxu0 %v8860
        %8924 = vmatpush1.bf16.msra.mxu0 %v8859
        %8925 = vmatprep.subr.bf16.mxu0 %v8862
        %8926 = vmatpush1.bf16.msra.mxu0 %v8861
        %8927 = vmatprep.subr.bf16.mxu0 %v8864
        %8928 = vmatpush1.bf16.msra.mxu0 %v8863
        %8929 = vmatprep.subr.bf16.mxu0 %v8866
        %8930 = vmatpush1.bf16.msra.mxu0 %v8865
        %8931 = vmatprep.subr.bf16.mxu0 %v8868
        %8932 = vmatpush1.bf16.msra.mxu0 %v8867
        %8933 = vmatprep.subr.bf16.mxu0 %v8870
        %8934 = vmatpush1.bf16.msra.mxu0 %v8869
        %8935 = vmatprep.subr.bf16.mxu0 %v8872
        %8936 = vmatpush1.bf16.msra.mxu0 %v8871
        %8937 = vmatprep.subr.bf16.mxu0 %v8874
        %8938 = vmatpush1.bf16.msra.mxu0 %v8873
        %8939 = vmatprep.mubr.bf16.mxu0 %v8716
        %8940 = vmatmul.mubr.bf16.gmra.mrb[0].mxu0 %v8715
        %v8941 = vpop.f32.mrb[0].mxu0
        %v8942 = vadd.f32 0.0, %v8941
        %v8943 = vpop.f32.mrb[0].mxu0
        %v8944 = vadd.f32 0.0, %v8943
        %v8945 = vpop.f32.mrb[0].mxu0
        %v8946 = vadd.f32 0.0, %v8945
        %v8947 = vpop.f32.mrb[0].mxu0
        %v8948 = vadd.f32 0.0, %v8947
        %8949 = vmatprep.mubr.bf16.mxu0 %v8718
        %8950 = vmatmul.mubr.bf16.gmra.mrb[0].mxu0 %v8717
        %v8951 = vpop.f32.mrb[0].mxu0
        %v8952 = vadd.f32 0.0, %v8951
        %v8953 = vpop.f32.mrb[0].mxu0
        %v8954 = vadd.f32 0.0, %v8953
        %v8955 = vpop.f32.mrb[0].mxu0
        %v8956 = vadd.f32 0.0, %v8955
        %v8957 = vpop.f32.mrb[0].mxu0
        %v8958 = vadd.f32 0.0, %v8957
        %8959 = vmatprep.mubr.bf16.mxu0 %v8720
        %8960 = vmatmul.mubr.bf16.gmra.mrb[0].mxu0 %v8719
        %v8961 = vpop.f32.mrb[0].mxu0
        %v8962 = vadd.f32 0.0, %v8961
        %v8963 = vpop.f32.mrb[0].mxu0
        %v8964 = vadd.f32 0.0, %v8963
        %v8965 = vpop.f32.mrb[0].mxu0
        %v8966 = vadd.f32 0.0, %v8965
        %v8967 = vpop.f32.mrb[0].mxu0
        %v8968 = vadd.f32 0.0, %v8967
        %8969 = vmatprep.mubr.bf16.mxu0 %v8722
        %8970 = vmatmul.mubr.bf16.gmra.mrb[0].mxu0 %v8721
        %v8971 = vpop.f32.mrb[0].mxu0
        %v8972 = vadd.f32 0.0, %v8971
        %v8973 = vpop.f32.mrb[0].mxu0
        %v8974 = vadd.f32 0.0, %v8973
        %v8975 = vpop.f32.mrb[0].mxu0
        %v8976 = vadd.f32 0.0, %v8975
        %v8977 = vpop.f32.mrb[0].mxu0
        %v8978 = vadd.f32 0.0, %v8977
        %8979 = vmatprep.mubr.bf16.mxu0 %v8724
        %8980 = vmatmul.mubr.bf16.gmra.mrb[0].mxu0 %v8723
        %v8981 = vpop.f32.mrb[0].mxu0
        %v8982 = vadd.f32 0.0, %v8981
        %v8983 = vpop.f32.mrb[0].mxu0
        %v8984 = vadd.f32 0.0, %v8983
        %v8985 = vpop.f32.mrb[0].mxu0
        %v8986 = vadd.f32 0.0, %v8985
        %v8987 = vpop.f32.mrb[0].mxu0
        %v8988 = vadd.f32 0.0, %v8987
        %8989 = vmatprep.mubr.bf16.mxu0 %v8726
        %8990 = vmatmul.mubr.bf16.gmra.mrb[0].mxu0 %v8725
        %v8991 = vpop.f32.mrb[0].mxu0
        %v8992 = vadd.f32 0.0, %v8991
        %v8993 = vpop.f32.mrb[0].mxu0
        %v8994 = vadd.f32 0.0, %v8993
        %v8995 = vpop.f32.mrb[0].mxu0
        %v8996 = vadd.f32 0.0, %v8995
        %v8997 = vpop.f32.mrb[0].mxu0
        %v8998 = vadd.f32 0.0, %v8997
        %8999 = vmatprep.mubr.bf16.mxu0 %v8728
        %9000 = vmatmul.mubr.bf16.gmra.mrb[0].mxu0 %v8727
        %v9001 = vpop.f32.mrb[0].mxu0
        %v9002 = vadd.f32 0.0, %v9001
        %v9003 = vpop.f32.mrb[0].mxu0
        %v9004 = vadd.f32 0.0, %v9003
        %v9005 = vpop.f32.mrb[0].mxu0
        %v9006 = vadd.f32 0.0, %v9005
        %v9007 = vpop.f32.mrb[0].mxu0
        %v9008 = vadd.f32 0.0, %v9007
        %9009 = vmatprep.mubr.bf16.mxu0 %v8730
        %9010 = vmatmul.mubr.bf16.gmra.mrb[0].mxu0 %v8729
        %v9011 = vpop.f32.mrb[0].mxu0
        %v9012 = vadd.f32 0.0, %v9011
        %v9013 = vpop.f32.mrb[0].mxu0
        %v9014 = vadd.f32 0.0, %v9013
        %v9015 = vpop.f32.mrb[0].mxu0
        %v9016 = vadd.f32 0.0, %v9015
        %v9017 = vpop.f32.mrb[0].mxu0
        %v9018 = vadd.f32 0.0, %v9017
        %9019 = vdwg.mxu0
        %v9020 = vadd.f32 %v8506, %v8942
        %v9021 = vadd.f32 %v8507, %v8944
        %v9022 = vadd.f32 %v8508, %v8946
        %v9023 = vadd.f32 %v8509, %v8948
        %v9024 = vadd.f32 %v8510, %v8952
        %v9025 = vadd.f32 %v8511, %v8954
        %v9026 = vadd.f32 %v8512, %v8956
        %v9027 = vadd.f32 %v8513, %v8958
        %v9028 = vadd.f32 %v8514, %v8962
        %v9029 = vadd.f32 %v8515, %v8964
        %v9030 = vadd.f32 %v8516, %v8966
        %v9031 = vadd.f32 %v8517, %v8968
        %v9032 = vadd.f32 %v8518, %v8972
        %v9033 = vadd.f32 %v8519, %v8974
        %v9034 = vadd.f32 %v8520, %v8976
        %v9035 = vadd.f32 %v8521, %v8978
        %v9036 = vadd.f32 %v8522, %v8982
        %v9037 = vadd.f32 %v8523, %v8984
        %v9038 = vadd.f32 %v8524, %v8986
        %v9039 = vadd.f32 %v8525, %v8988
        %v9040 = vadd.f32 %v8526, %v8992
        %v9041 = vadd.f32 %v8527, %v8994
        %v9042 = vadd.f32 %v8528, %v8996
        %v9043 = vadd.f32 %v8529, %v8998
        %v9044 = vadd.f32 %v8530, %v9002
        %v9045 = vadd.f32 %v8531, %v9004
        %v9046 = vadd.f32 %v8532, %v9006
        %v9047 = vadd.f32 %v8533, %v9008
        %v9048 = vadd.f32 %v8534, %v9012
        %v9049 = vadd.f32 %v8535, %v9014
        %v9050 = vadd.f32 %v8536, %v9016
        %v9051 = vadd.f32 %v8537, %v9018
        %v9052 = vld [vmem:[%s3859] sm:$0xff]
        %v9053 = vld [vmem:[%s3859 + $0x10] sm:$0xff]
        %v9054 = vld [vmem:[%s3859 + $0x20] sm:$0xff]
        %v9055 = vld [vmem:[%s3859 + $0x30] sm:$0xff]
        %v9056 = vld [vmem:[%s3859 + $0x40] sm:$0xff]
        %v9057 = vld [vmem:[%s3859 + $0x50] sm:$0xff]
        %v9058 = vld [vmem:[%s3859 + $0x60] sm:$0xff]
        %v9059 = vld [vmem:[%s3859 + $0x70] sm:$0xff]
        %v9060 = vld [vmem:[%s3859 + $0xa0] sm:$0xff]
        %v9061 = vld [vmem:[%s3859 + $0xb0] sm:$0xff]
        %v9062 = vld [vmem:[%s3859 + $0xc0] sm:$0xff]
        %v9063 = vld [vmem:[%s3859 + $0xd0] sm:$0xff]
        %v9064 = vld [vmem:[%s3859 + $0xe0] sm:$0xff]
        %v9065 = vld [vmem:[%s3859 + $0xf0] sm:$0xff]
        %v9066 = vld [vmem:[%s3859 + $0x100] sm:$0xff]
        %v9067 = vld [vmem:[%s3859 + $0x110] sm:$0xff]
        %s9068 = scalar_lea.vmem [#allocation3], 1536
        %v9069 = vld [vmem:[%s9068] sm:$0xff]
        %v9070 = vld [vmem:[%s9068 + $0x8] sm:$0xff]
        %v9071 = vld [vmem:[%s9068 + $0x10] sm:$0xff]
        %v9072 = vld [vmem:[%s9068 + $0x18] sm:$0xff]
        %v9073 = vld [vmem:[%s9068 + $0x20] sm:$0xff]
        %v9074 = vld [vmem:[%s9068 + $0x28] sm:$0xff]
        %v9075 = vld [vmem:[%s9068 + $0x30] sm:$0xff]
        %v9076 = vld [vmem:[%s9068 + $0x38] sm:$0xff]
        %v9077 = vld [vmem:[%s9068 + $0x40] sm:$0xff]
        %v9078 = vld [vmem:[%s9068 + $0x48] sm:$0xff]
        %v9079 = vld [vmem:[%s9068 + $0x50] sm:$0xff]
        %v9080 = vld [vmem:[%s9068 + $0x58] sm:$0xff]
        %v9081 = vld [vmem:[%s9068 + $0x60] sm:$0xff]
        %v9082 = vld [vmem:[%s9068 + $0x68] sm:$0xff]
        %v9083 = vld [vmem:[%s9068 + $0x70] sm:$0xff]
        %v9084 = vld [vmem:[%s9068 + $0x78] sm:$0xff]
        %v9085 = vld [vmem:[%s9068 + $0x80] sm:$0xff]
        %v9086 = vld [vmem:[%s9068 + $0x88] sm:$0xff]
        %v9087 = vld [vmem:[%s9068 + $0x90] sm:$0xff]
        %v9088 = vld [vmem:[%s9068 + $0x98] sm:$0xff]
        %v9089 = vld [vmem:[%s9068 + $0xa0] sm:$0xff]
        %v9090 = vld [vmem:[%s9068 + $0xa8] sm:$0xff]
        %v9091 = vld [vmem:[%s9068 + $0xb0] sm:$0xff]
        %v9092 = vld [vmem:[%s9068 + $0xb8] sm:$0xff]
        %v9093 = vld [vmem:[%s9068 + $0xc0] sm:$0xff]
        %v9094 = vld [vmem:[%s9068 + $0xc8] sm:$0xff]
        %v9095 = vld [vmem:[%s9068 + $0xd0] sm:$0xff]
        %v9096 = vld [vmem:[%s9068 + $0xd8] sm:$0xff]
        %v9097 = vld [vmem:[%s9068 + $0xe0] sm:$0xff]
        %v9098 = vld [vmem:[%s9068 + $0xe8] sm:$0xff]
        %v9099 = vld [vmem:[%s9068 + $0xf0] sm:$0xff]
        %v9100 = vld [vmem:[%s9068 + $0xf8] sm:$0xff]
        %v9117 = vunpack.c.l.b16 %v9052
        %v9118 = vunpack.c.h.b16 %v9052
        %v9119 = vunpack.c.l.b16 %v9053
        %v9120 = vunpack.c.h.b16 %v9053
        %v9121 = vunpack.c.l.b16 %v9054
        %v9122 = vunpack.c.h.b16 %v9054
        %v9123 = vunpack.c.l.b16 %v9055
        %v9124 = vunpack.c.h.b16 %v9055
        %v9125 = vunpack.c.l.b16 %v9056
        %v9126 = vunpack.c.h.b16 %v9056
        %v9127 = vunpack.c.l.b16 %v9057
        %v9128 = vunpack.c.h.b16 %v9057
        %v9129 = vunpack.c.l.b16 %v9058
        %v9130 = vunpack.c.h.b16 %v9058
        %v9131 = vunpack.c.l.b16 %v9059
        %v9132 = vunpack.c.h.b16 %v9059
        %v9133 = vunpack.c.l.b16 %v9060
        %v9134 = vunpack.c.h.b16 %v9060
        %v9135 = vunpack.c.l.b16 %v9061
        %v9136 = vunpack.c.h.b16 %v9061
        %v9137 = vunpack.c.l.b16 %v9062
        %v9138 = vunpack.c.h.b16 %v9062
        %v9139 = vunpack.c.l.b16 %v9063
        %v9140 = vunpack.c.h.b16 %v9063
        %v9141 = vunpack.c.l.b16 %v9064
        %v9142 = vunpack.c.h.b16 %v9064
        %v9143 = vunpack.c.l.b16 %v9065
        %v9144 = vunpack.c.h.b16 %v9065
        %v9145 = vunpack.c.l.b16 %v9066
        %v9146 = vunpack.c.h.b16 %v9066
        %v9147 = vunpack.c.l.b16 %v9067
        %v9148 = vunpack.c.h.b16 %v9067
        %v9149 = vpack.c.b16 %v9119, %v9117
        %v9150 = vpack.c.b16 %v9120, %v9118
        %v9151 = vpack.c.b16 %v9123, %v9121
        %v9152 = vpack.c.b16 %v9124, %v9122
        %v9153 = vpack.c.b16 %v9127, %v9125
        %v9154 = vpack.c.b16 %v9128, %v9126
        %v9155 = vpack.c.b16 %v9131, %v9129
        %v9156 = vpack.c.b16 %v9132, %v9130
        %v9157 = vpack.c.b16 %v9135, %v9133
        %v9158 = vpack.c.b16 %v9136, %v9134
        %v9159 = vpack.c.b16 %v9139, %v9137
        %v9160 = vpack.c.b16 %v9140, %v9138
        %v9161 = vpack.c.b16 %v9143, %v9141
        %v9162 = vpack.c.b16 %v9144, %v9142
        %v9163 = vpack.c.b16 %v9147, %v9145
        %v9164 = vpack.c.b16 %v9148, %v9146
        %v9213 = vunpack.c.l.b16 %v9069
        %v9214 = vunpack.c.h.b16 %v9069
        %v9215 = vunpack.c.l.b16 %v9070
        %v9216 = vunpack.c.h.b16 %v9070
        %v9217 = vunpack.c.l.b16 %v9071
        %v9218 = vunpack.c.h.b16 %v9071
        %v9219 = vunpack.c.l.b16 %v9072
        %v9220 = vunpack.c.h.b16 %v9072
        %v9221 = vunpack.c.l.b16 %v9073
        %v9222 = vunpack.c.h.b16 %v9073
        %v9223 = vunpack.c.l.b16 %v9074
        %v9224 = vunpack.c.h.b16 %v9074
        %v9225 = vunpack.c.l.b16 %v9075
        %v9226 = vunpack.c.h.b16 %v9075
        %v9227 = vunpack.c.l.b16 %v9076
        %v9228 = vunpack.c.h.b16 %v9076
        %v9229 = vunpack.c.l.b16 %v9077
        %v9230 = vunpack.c.h.b16 %v9077
        %v9231 = vunpack.c.l.b16 %v9078
        %v9232 = vunpack.c.h.b16 %v9078
        %v9233 = vunpack.c.l.b16 %v9079
        %v9234 = vunpack.c.h.b16 %v9079
        %v9235 = vunpack.c.l.b16 %v9080
        %v9236 = vunpack.c.h.b16 %v9080
        %v9237 = vunpack.c.l.b16 %v9081
        %v9238 = vunpack.c.h.b16 %v9081
        %v9239 = vunpack.c.l.b16 %v9082
        %v9240 = vunpack.c.h.b16 %v9082
        %v9241 = vunpack.c.l.b16 %v9083
        %v9242 = vunpack.c.h.b16 %v9083
        %v9243 = vunpack.c.l.b16 %v9084
        %v9244 = vunpack.c.h.b16 %v9084
        %v9245 = vunpack.c.l.b16 %v9085
        %v9246 = vunpack.c.h.b16 %v9085
        %v9247 = vunpack.c.l.b16 %v9086
        %v9248 = vunpack.c.h.b16 %v9086
        %v9249 = vunpack.c.l.b16 %v9087
        %v9250 = vunpack.c.h.b16 %v9087
        %v9251 = vunpack.c.l.b16 %v9088
        %v9252 = vunpack.c.h.b16 %v9088
        %v9253 = vunpack.c.l.b16 %v9089
        %v9254 = vunpack.c.h.b16 %v9089
        %v9255 = vunpack.c.l.b16 %v9090
        %v9256 = vunpack.c.h.b16 %v9090
        %v9257 = vunpack.c.l.b16 %v9091
        %v9258 = vunpack.c.h.b16 %v9091
        %v9259 = vunpack.c.l.b16 %v9092
        %v9260 = vunpack.c.h.b16 %v9092
        %v9261 = vunpack.c.l.b16 %v9093
        %v9262 = vunpack.c.h.b16 %v9093
        %v9263 = vunpack.c.l.b16 %v9094
        %v9264 = vunpack.c.h.b16 %v9094
        %v9265 = vunpack.c.l.b16 %v9095
        %v9266 = vunpack.c.h.b16 %v9095
        %v9267 = vunpack.c.l.b16 %v9096
        %v9268 = vunpack.c.h.b16 %v9096
        %v9269 = vunpack.c.l.b16 %v9097
        %v9270 = vunpack.c.h.b16 %v9097
        %v9271 = vunpack.c.l.b16 %v9098
        %v9272 = vunpack.c.h.b16 %v9098
        %v9273 = vunpack.c.l.b16 %v9099
        %v9274 = vunpack.c.h.b16 %v9099
        %v9275 = vunpack.c.l.b16 %v9100
        %v9276 = vunpack.c.h.b16 %v9100
        %v9277 = vpack.c.b16 %v9215, %v9213
        %v9278 = vpack.c.b16 %v9216, %v9214
        %v9279 = vpack.c.b16 %v9219, %v9217
        %v9280 = vpack.c.b16 %v9220, %v9218
        %v9281 = vpack.c.b16 %v9223, %v9221
        %v9282 = vpack.c.b16 %v9224, %v9222
        %v9283 = vpack.c.b16 %v9227, %v9225
        %v9284 = vpack.c.b16 %v9228, %v9226
        %v9285 = vpack.c.b16 %v9231, %v9229
        %v9286 = vpack.c.b16 %v9232, %v9230
        %v9287 = vpack.c.b16 %v9235, %v9233
        %v9288 = vpack.c.b16 %v9236, %v9234
        %v9289 = vpack.c.b16 %v9239, %v9237
        %v9290 = vpack.c.b16 %v9240, %v9238
        %v9291 = vpack.c.b16 %v9243, %v9241
        %v9292 = vpack.c.b16 %v9244, %v9242
        %v9293 = vpack.c.b16 %v9247, %v9245
        %v9294 = vpack.c.b16 %v9248, %v9246
        %v9295 = vpack.c.b16 %v9251, %v9249
        %v9296 = vpack.c.b16 %v9252, %v9250
        %v9297 = vpack.c.b16 %v9255, %v9253
        %v9298 = vpack.c.b16 %v9256, %v9254
        %v9299 = vpack.c.b16 %v9259, %v9257
        %v9300 = vpack.c.b16 %v9260, %v9258
        %v9301 = vpack.c.b16 %v9263, %v9261
        %v9302 = vpack.c.b16 %v9264, %v9262
        %v9303 = vpack.c.b16 %v9267, %v9265
        %v9304 = vpack.c.b16 %v9268, %v9266
        %v9305 = vpack.c.b16 %v9271, %v9269
        %v9306 = vpack.c.b16 %v9272, %v9270
        %v9307 = vpack.c.b16 %v9275, %v9273
        %v9308 = vpack.c.b16 %v9276, %v9274
        %9341 = vmatprep.subr.bf16.mxu0 %v9278
        %9342 = vmatpush1.bf16.msra.mxu0 %v9277
        %9343 = vmatprep.subr.bf16.mxu0 %v9280
        %9344 = vmatpush1.bf16.msra.mxu0 %v9279
        %9345 = vmatprep.subr.bf16.mxu0 %v9282
        %9346 = vmatpush1.bf16.msra.mxu0 %v9281
        %9347 = vmatprep.subr.bf16.mxu0 %v9284
        %9348 = vmatpush1.bf16.msra.mxu0 %v9283
        %9349 = vmatprep.subr.bf16.mxu0 %v9286
        %9350 = vmatpush1.bf16.msra.mxu0 %v9285
        %9351 = vmatprep.subr.bf16.mxu0 %v9288
        %9352 = vmatpush1.bf16.msra.mxu0 %v9287
        %9353 = vmatprep.subr.bf16.mxu0 %v9290
        %9354 = vmatpush1.bf16.msra.mxu0 %v9289
        %9355 = vmatprep.subr.bf16.mxu0 %v9292
        %9356 = vmatpush1.bf16.msra.mxu0 %v9291
        %9357 = vmatprep.subr.bf16.mxu0 %v9294
        %9358 = vmatpush1.bf16.msra.mxu0 %v9293
        %9359 = vmatprep.subr.bf16.mxu0 %v9296
        %9360 = vmatpush1.bf16.msra.mxu0 %v9295
        %9361 = vmatprep.subr.bf16.mxu0 %v9298
        %9362 = vmatpush1.bf16.msra.mxu0 %v9297
        %9363 = vmatprep.subr.bf16.mxu0 %v9300
        %9364 = vmatpush1.bf16.msra.mxu0 %v9299
        %9365 = vmatprep.subr.bf16.mxu0 %v9302
        %9366 = vmatpush1.bf16.msra.mxu0 %v9301
        %9367 = vmatprep.subr.bf16.mxu0 %v9304
        %9368 = vmatpush1.bf16.msra.mxu0 %v9303
        %9369 = vmatprep.subr.bf16.mxu0 %v9306
        %9370 = vmatpush1.bf16.msra.mxu0 %v9305
        %9371 = vmatprep.subr.bf16.mxu0 %v9308
        %9372 = vmatpush1.bf16.msra.mxu0 %v9307
        %9373 = vmatprep.mubr.bf16.mxu0 %v9150
        %9374 = vmatmul.mubr.bf16.gmra.mrb[0].mxu0 %v9149
        %v9375 = vpop.f32.mrb[0].mxu0
        %v9376 = vadd.f32 0.0, %v9375
        %v9377 = vpop.f32.mrb[0].mxu0
        %v9378 = vadd.f32 0.0, %v9377
        %v9379 = vpop.f32.mrb[0].mxu0
        %v9380 = vadd.f32 0.0, %v9379
        %v9381 = vpop.f32.mrb[0].mxu0
        %v9382 = vadd.f32 0.0, %v9381
        %9383 = vmatprep.mubr.bf16.mxu0 %v9152
        %9384 = vmatmul.mubr.bf16.gmra.mrb[0].mxu0 %v9151
        %v9385 = vpop.f32.mrb[0].mxu0
        %v9386 = vadd.f32 0.0, %v9385
        %v9387 = vpop.f32.mrb[0].mxu0
        %v9388 = vadd.f32 0.0, %v9387
        %v9389 = vpop.f32.mrb[0].mxu0
        %v9390 = vadd.f32 0.0, %v9389
        %v9391 = vpop.f32.mrb[0].mxu0
        %v9392 = vadd.f32 0.0, %v9391
        %9393 = vmatprep.mubr.bf16.mxu0 %v9154
        %9394 = vmatmul.mubr.bf16.gmra.mrb[0].mxu0 %v9153
        %v9395 = vpop.f32.mrb[0].mxu0
        %v9396 = vadd.f32 0.0, %v9395
        %v9397 = vpop.f32.mrb[0].mxu0
        %v9398 = vadd.f32 0.0, %v9397
        %v9399 = vpop.f32.mrb[0].mxu0
        %v9400 = vadd.f32 0.0, %v9399
        %v9401 = vpop.f32.mrb[0].mxu0
        %v9402 = vadd.f32 0.0, %v9401
        %9403 = vmatprep.mubr.bf16.mxu0 %v9156
        %9404 = vmatmul.mubr.bf16.gmra.mrb[0].mxu0 %v9155
        %v9405 = vpop.f32.mrb[0].mxu0
        %v9406 = vadd.f32 0.0, %v9405
        %v9407 = vpop.f32.mrb[0].mxu0
        %v9408 = vadd.f32 0.0, %v9407
        %v9409 = vpop.f32.mrb[0].mxu0
        %v9410 = vadd.f32 0.0, %v9409
        %v9411 = vpop.f32.mrb[0].mxu0
        %v9412 = vadd.f32 0.0, %v9411
        %9413 = vmatprep.mubr.bf16.mxu0 %v9158
        %9414 = vmatmul.mubr.bf16.gmra.mrb[0].mxu0 %v9157
        %v9415 = vpop.f32.mrb[0].mxu0
        %v9416 = vadd.f32 0.0, %v9415
        %v9417 = vpop.f32.mrb[0].mxu0
        %v9418 = vadd.f32 0.0, %v9417
        %v9419 = vpop.f32.mrb[0].mxu0
        %v9420 = vadd.f32 0.0, %v9419
        %v9421 = vpop.f32.mrb[0].mxu0
        %v9422 = vadd.f32 0.0, %v9421
        %9423 = vmatprep.mubr.bf16.mxu0 %v9160
        %9424 = vmatmul.mubr.bf16.gmra.mrb[0].mxu0 %v9159
        %v9425 = vpop.f32.mrb[0].mxu0
        %v9426 = vadd.f32 0.0, %v9425
        %v9427 = vpop.f32.mrb[0].mxu0
        %v9428 = vadd.f32 0.0, %v9427
        %v9429 = vpop.f32.mrb[0].mxu0
        %v9430 = vadd.f32 0.0, %v9429
        %v9431 = vpop.f32.mrb[0].mxu0
        %v9432 = vadd.f32 0.0, %v9431
        %9433 = vmatprep.mubr.bf16.mxu0 %v9162
        %9434 = vmatmul.mubr.bf16.gmra.mrb[0].mxu0 %v9161
        %v9435 = vpop.f32.mrb[0].mxu0
        %v9436 = vadd.f32 0.0, %v9435
        %v9437 = vpop.f32.mrb[0].mxu0
        %v9438 = vadd.f32 0.0, %v9437
        %v9439 = vpop.f32.mrb[0].mxu0
        %v9440 = vadd.f32 0.0, %v9439
        %v9441 = vpop.f32.mrb[0].mxu0
        %v9442 = vadd.f32 0.0, %v9441
        %9443 = vmatprep.mubr.bf16.mxu0 %v9164
        %9444 = vmatmul.mubr.bf16.gmra.mrb[0].mxu0 %v9163
        %v9445 = vpop.f32.mrb[0].mxu0
        %v9446 = vadd.f32 0.0, %v9445
        %v9447 = vpop.f32.mrb[0].mxu0
        %v9448 = vadd.f32 0.0, %v9447
        %v9449 = vpop.f32.mrb[0].mxu0
        %v9450 = vadd.f32 0.0, %v9449
        %v9451 = vpop.f32.mrb[0].mxu0
        %v9452 = vadd.f32 0.0, %v9451
        %9453 = vdwg.mxu0
        %v9454 = vadd.f32 %v9020, %v9376
        %v9455 = vadd.f32 %v9021, %v9378
        %v9456 = vadd.f32 %v9022, %v9380
        %v9457 = vadd.f32 %v9023, %v9382
        %v9458 = vadd.f32 %v9024, %v9386
        %v9459 = vadd.f32 %v9025, %v9388
        %v9460 = vadd.f32 %v9026, %v9390
        %v9461 = vadd.f32 %v9027, %v9392
        %v9462 = vadd.f32 %v9028, %v9396
        %v9463 = vadd.f32 %v9029, %v9398
        %v9464 = vadd.f32 %v9030, %v9400
        %v9465 = vadd.f32 %v9031, %v9402
        %v9466 = vadd.f32 %v9032, %v9406
        %v9467 = vadd.f32 %v9033, %v9408
        %v9468 = vadd.f32 %v9034, %v9410
        %v9469 = vadd.f32 %v9035, %v9412
        %v9470 = vadd.f32 %v9036, %v9416
        %v9471 = vadd.f32 %v9037, %v9418
        %v9472 = vadd.f32 %v9038, %v9420
        %v9473 = vadd.f32 %v9039, %v9422
        %v9474 = vadd.f32 %v9040, %v9426
        %v9475 = vadd.f32 %v9041, %v9428
        %v9476 = vadd.f32 %v9042, %v9430
        %v9477 = vadd.f32 %v9043, %v9432
        %v9478 = vadd.f32 %v9044, %v9436
        %v9479 = vadd.f32 %v9045, %v9438
        %v9480 = vadd.f32 %v9046, %v9440
        %v9481 = vadd.f32 %v9047, %v9442
        %v9482 = vadd.f32 %v9048, %v9446
        %v9483 = vadd.f32 %v9049, %v9448
        %v9484 = vadd.f32 %v9050, %v9450
        %v9485 = vadd.f32 %v9051, %v9452
        %v9486 = vld [vmem:[%s3859] sm:$0xff]
        %v9487 = vld [vmem:[%s3859 + $0x8] sm:$0x11]
        %v9488 = vld [vmem:[%s3859 + $0x10] sm:$0xff]
        %v9489 = vld [vmem:[%s3859 + $0x18] sm:$0x11]
        %v9490 = vld [vmem:[%s3859 + $0x20] sm:$0xff]
        %v9491 = vld [vmem:[%s3859 + $0x28] sm:$0x11]
        %v9492 = vld [vmem:[%s3859 + $0x30] sm:$0xff]
        %v9493 = vld [vmem:[%s3859 + $0x38] sm:$0x11]
        %v9494 = vld [vmem:[%s3859 + $0x40] sm:$0xff]
        %v9495 = vld [vmem:[%s3859 + $0x48] sm:$0x11]
        %v9496 = vld [vmem:[%s3859 + $0x50] sm:$0xff]
        %v9497 = vld [vmem:[%s3859 + $0x58] sm:$0x11]
        %v9498 = vld [vmem:[%s3859 + $0x60] sm:$0xff]
        %v9499 = vld [vmem:[%s3859 + $0x68] sm:$0x11]
        %v9500 = vld [vmem:[%s3859 + $0x70] sm:$0xff]
        %v9501 = vld [vmem:[%s3859 + $0x78] sm:$0x11]
        %v9502 = vld [vmem:[%s3859 + $0xa0] sm:$0xff]
        %v9503 = vld [vmem:[%s3859 + $0xa8] sm:$0x11]
        %v9504 = vld [vmem:[%s3859 + $0xb0] sm:$0xff]
        %v9505 = vld [vmem:[%s3859 + $0xb8] sm:$0x11]
        %v9506 = vld [vmem:[%s3859 + $0xc0] sm:$0xff]
        %v9507 = vld [vmem:[%s3859 + $0xc8] sm:$0x11]
        %v9508 = vld [vmem:[%s3859 + $0xd0] sm:$0xff]
        %v9509 = vld [vmem:[%s3859 + $0xd8] sm:$0x11]
        %v9510 = vld [vmem:[%s3859 + $0xe0] sm:$0xff]
        %v9511 = vld [vmem:[%s3859 + $0xe8] sm:$0x11]
        %v9512 = vld [vmem:[%s3859 + $0xf0] sm:$0xff]
        %v9513 = vld [vmem:[%s3859 + $0xf8] sm:$0x11]
        %v9514 = vld [vmem:[%s3859 + $0x100] sm:$0xff]
        %v9515 = vld [vmem:[%s3859 + $0x108] sm:$0x11]
        %v9516 = vld [vmem:[%s3859 + $0x110] sm:$0xff]
        %v9517 = vld [vmem:[%s3859 + $0x118] sm:$0x11]
        %v9519 = vshrl.u32 %v9486, 16
        %v9521 = vrot.slane %v9519, 4
        %v9522 = vshll.u32 %v9486, 16
        %v9524 = vrot.slane %v9522, 5
        %v9525 = vor.u32 %v9521, %v9524
        %v9526 = vrot.slane %v9525, 4
        %v9528 = vshll.u32 %v9487, 16
        %v9530 = vrot.slane %v9528, 5
        %v9531 = vsel %vm788, %v9526, %v9530
        %v9533 = vshrl.u32 %v9488, 16
        %v9535 = vrot.slane %v9533, 4
        %v9536 = vshll.u32 %v9488, 16
        %v9538 = vrot.slane %v9536, 5
        %v9539 = vor.u32 %v9535, %v9538
        %v9540 = vrot.slane %v9539, 4
        %v9542 = vshll.u32 %v9489, 16
        %v9544 = vrot.slane %v9542, 5
        %v9545 = vsel %vm788, %v9540, %v9544
        %v9547 = vshrl.u32 %v9490, 16
        %v9549 = vrot.slane %v9547, 4
        %v9550 = vshll.u32 %v9490, 16
        %v9552 = vrot.slane %v9550, 5
        %v9553 = vor.u32 %v9549, %v9552
        %v9554 = vrot.slane %v9553, 4
        %v9556 = vshll.u32 %v9491, 16
        %v9558 = vrot.slane %v9556, 5
        %v9559 = vsel %vm788, %v9554, %v9558
        %v9561 = vshrl.u32 %v9492, 16
        %v9563 = vrot.slane %v9561, 4
        %v9564 = vshll.u32 %v9492, 16
        %v9566 = vrot.slane %v9564, 5
        %v9567 = vor.u32 %v9563, %v9566
        %v9568 = vrot.slane %v9567, 4
        %v9570 = vshll.u32 %v9493, 16
        %v9572 = vrot.slane %v9570, 5
        %v9573 = vsel %vm788, %v9568, %v9572
        %v9575 = vshrl.u32 %v9494, 16
        %v9577 = vrot.slane %v9575, 4
        %v9578 = vshll.u32 %v9494, 16
        %v9580 = vrot.slane %v9578, 5
        %v9581 = vor.u32 %v9577, %v9580
        %v9582 = vrot.slane %v9581, 4
        %v9584 = vshll.u32 %v9495, 16
        %v9586 = vrot.slane %v9584, 5
        %v9587 = vsel %vm788, %v9582, %v9586
        %v9589 = vshrl.u32 %v9496, 16
        %v9591 = vrot.slane %v9589, 4
        %v9592 = vshll.u32 %v9496, 16
        %v9594 = vrot.slane %v9592, 5
        %v9595 = vor.u32 %v9591, %v9594
        %v9596 = vrot.slane %v9595, 4
        %v9598 = vshll.u32 %v9497, 16
        %v9600 = vrot.slane %v9598, 5
        %v9601 = vsel %vm788, %v9596, %v9600
        %v9603 = vshrl.u32 %v9498, 16
        %v9605 = vrot.slane %v9603, 4
        %v9606 = vshll.u32 %v9498, 16
        %v9608 = vrot.slane %v9606, 5
        %v9609 = vor.u32 %v9605, %v9608
        %v9610 = vrot.slane %v9609, 4
        %v9612 = vshll.u32 %v9499, 16
        %v9614 = vrot.slane %v9612, 5
        %v9615 = vsel %vm788, %v9610, %v9614
        %v9617 = vshrl.u32 %v9500, 16
        %v9619 = vrot.slane %v9617, 4
        %v9620 = vshll.u32 %v9500, 16
        %v9622 = vrot.slane %v9620, 5
        %v9623 = vor.u32 %v9619, %v9622
        %v9624 = vrot.slane %v9623, 4
        %v9626 = vshll.u32 %v9501, 16
        %v9628 = vrot.slane %v9626, 5
        %v9629 = vsel %vm788, %v9624, %v9628
        %v9631 = vshrl.u32 %v9502, 16
        %v9633 = vrot.slane %v9631, 4
        %v9634 = vshll.u32 %v9502, 16
        %v9636 = vrot.slane %v9634, 5
        %v9637 = vor.u32 %v9633, %v9636
        %v9638 = vrot.slane %v9637, 4
        %v9640 = vshll.u32 %v9503, 16
        %v9642 = vrot.slane %v9640, 5
        %v9643 = vsel %vm788, %v9638, %v9642
        %v9645 = vshrl.u32 %v9504, 16
        %v9647 = vrot.slane %v9645, 4
        %v9648 = vshll.u32 %v9504, 16
        %v9650 = vrot.slane %v9648, 5
        %v9651 = vor.u32 %v9647, %v9650
        %v9652 = vrot.slane %v9651, 4
        %v9654 = vshll.u32 %v9505, 16
        %v9656 = vrot.slane %v9654, 5
        %v9657 = vsel %vm788, %v9652, %v9656
        %v9659 = vshrl.u32 %v9506, 16
        %v9661 = vrot.slane %v9659, 4
        %v9662 = vshll.u32 %v9506, 16
        %v9664 = vrot.slane %v9662, 5
        %v9665 = vor.u32 %v9661, %v9664
        %v9666 = vrot.slane %v9665, 4
        %v9668 = vshll.u32 %v9507, 16
        %v9670 = vrot.slane %v9668, 5
        %v9671 = vsel %vm788, %v9666, %v9670
        %v9673 = vshrl.u32 %v9508, 16
        %v9675 = vrot.slane %v9673, 4
        %v9676 = vshll.u32 %v9508, 16
        %v9678 = vrot.slane %v9676, 5
        %v9679 = vor.u32 %v9675, %v9678
        %v9680 = vrot.slane %v9679, 4
        %v9682 = vshll.u32 %v9509, 16
        %v9684 = vrot.slane %v9682, 5
        %v9685 = vsel %vm788, %v9680, %v9684
        %v9687 = vshrl.u32 %v9510, 16
        %v9689 = vrot.slane %v9687, 4
        %v9690 = vshll.u32 %v9510, 16
        %v9692 = vrot.slane %v9690, 5
        %v9693 = vor.u32 %v9689, %v9692
        %v9694 = vrot.slane %v9693, 4
        %v9696 = vshll.u32 %v9511, 16
        %v9698 = vrot.slane %v9696, 5
        %v9699 = vsel %vm788, %v9694, %v9698
        %v9701 = vshrl.u32 %v9512, 16
        %v9703 = vrot.slane %v9701, 4
        %v9704 = vshll.u32 %v9512, 16
        %v9706 = vrot.slane %v9704, 5
        %v9707 = vor.u32 %v9703, %v9706
        %v9708 = vrot.slane %v9707, 4
        %v9710 = vshll.u32 %v9513, 16
        %v9712 = vrot.slane %v9710, 5
        %v9713 = vsel %vm788, %v9708, %v9712
        %v9715 = vshrl.u32 %v9514, 16
        %v9717 = vrot.slane %v9715, 4
        %v9718 = vshll.u32 %v9514, 16
        %v9720 = vrot.slane %v9718, 5
        %v9721 = vor.u32 %v9717, %v9720
        %v9722 = vrot.slane %v9721, 4
        %v9724 = vshll.u32 %v9515, 16
        %v9726 = vrot.slane %v9724, 5
        %v9727 = vsel %vm788, %v9722, %v9726
        %v9729 = vshrl.u32 %v9516, 16
        %v9731 = vrot.slane %v9729, 4
        %v9732 = vshll.u32 %v9516, 16
        %v9734 = vrot.slane %v9732, 5
        %v9735 = vor.u32 %v9731, %v9734
        %v9736 = vrot.slane %v9735, 4
        %v9738 = vshll.u32 %v9517, 16
        %v9740 = vrot.slane %v9738, 5
        %v9741 = vsel %vm788, %v9736, %v9740
        %s9742 = scalar_lea.vmem [#allocation3], 1792
        %v9743 = vld [vmem:[%s9742] sm:$0xff]
        %v9744 = vld [vmem:[%s9742 + $0x8] sm:$0xff]
        %v9745 = vld [vmem:[%s9742 + $0x10] sm:$0xff]
        %v9746 = vld [vmem:[%s9742 + $0x18] sm:$0xff]
        %v9747 = vld [vmem:[%s9742 + $0x20] sm:$0xff]
        %v9748 = vld [vmem:[%s9742 + $0x28] sm:$0xff]
        %v9749 = vld [vmem:[%s9742 + $0x30] sm:$0xff]
        %v9750 = vld [vmem:[%s9742 + $0x38] sm:$0xff]
        %v9751 = vld [vmem:[%s9742 + $0x40] sm:$0xff]
        %v9752 = vld [vmem:[%s9742 + $0x48] sm:$0xff]
        %v9753 = vld [vmem:[%s9742 + $0x50] sm:$0xff]
        %v9754 = vld [vmem:[%s9742 + $0x58] sm:$0xff]
        %v9755 = vld [vmem:[%s9742 + $0x60] sm:$0xff]
        %v9756 = vld [vmem:[%s9742 + $0x68] sm:$0xff]
        %v9757 = vld [vmem:[%s9742 + $0x70] sm:$0xff]
        %v9758 = vld [vmem:[%s9742 + $0x78] sm:$0xff]
        %v9759 = vld [vmem:[%s9742 + $0x80] sm:$0xff]
        %v9760 = vld [vmem:[%s9742 + $0x88] sm:$0xff]
        %v9761 = vld [vmem:[%s9742 + $0x90] sm:$0xff]
        %v9762 = vld [vmem:[%s9742 + $0x98] sm:$0xff]
        %v9763 = vld [vmem:[%s9742 + $0xa0] sm:$0xff]
        %v9764 = vld [vmem:[%s9742 + $0xa8] sm:$0xff]
        %v9765 = vld [vmem:[%s9742 + $0xb0] sm:$0xff]
        %v9766 = vld [vmem:[%s9742 + $0xb8] sm:$0xff]
        %v9767 = vld [vmem:[%s9742 + $0xc0] sm:$0xff]
        %v9768 = vld [vmem:[%s9742 + $0xc8] sm:$0xff]
        %v9769 = vld [vmem:[%s9742 + $0xd0] sm:$0xff]
        %v9770 = vld [vmem:[%s9742 + $0xd8] sm:$0xff]
        %v9771 = vld [vmem:[%s9742 + $0xe0] sm:$0xff]
        %v9772 = vld [vmem:[%s9742 + $0xe8] sm:$0xff]
        %v9773 = vld [vmem:[%s9742 + $0xf0] sm:$0xff]
        %v9774 = vld [vmem:[%s9742 + $0xf8] sm:$0xff]
        %v9775 = vunpack.c.l.b16 %v9531
        %v9776 = vunpack.c.h.b16 %v9531
        %v9777 = vunpack.c.l.b16 %v9545
        %v9778 = vunpack.c.h.b16 %v9545
        %v9779 = vunpack.c.l.b16 %v9559
        %v9780 = vunpack.c.h.b16 %v9559
        %v9781 = vunpack.c.l.b16 %v9573
        %v9782 = vunpack.c.h.b16 %v9573
        %v9783 = vunpack.c.l.b16 %v9587
        %v9784 = vunpack.c.h.b16 %v9587
        %v9785 = vunpack.c.l.b16 %v9601
        %v9786 = vunpack.c.h.b16 %v9601
        %v9787 = vunpack.c.l.b16 %v9615
        %v9788 = vunpack.c.h.b16 %v9615
        %v9789 = vunpack.c.l.b16 %v9629
        %v9790 = vunpack.c.h.b16 %v9629
        %v9791 = vunpack.c.l.b16 %v9643
        %v9792 = vunpack.c.h.b16 %v9643
        %v9793 = vunpack.c.l.b16 %v9657
        %v9794 = vunpack.c.h.b16 %v9657
        %v9795 = vunpack.c.l.b16 %v9671
        %v9796 = vunpack.c.h.b16 %v9671
        %v9797 = vunpack.c.l.b16 %v9685
        %v9798 = vunpack.c.h.b16 %v9685
        %v9799 = vunpack.c.l.b16 %v9699
        %v9800 = vunpack.c.h.b16 %v9699
        %v9801 = vunpack.c.l.b16 %v9713
        %v9802 = vunpack.c.h.b16 %v9713
        %v9803 = vunpack.c.l.b16 %v9727
        %v9804 = vunpack.c.h.b16 %v9727
        %v9805 = vunpack.c.l.b16 %v9741
        %v9806 = vunpack.c.h.b16 %v9741
        %v9807 = vpack.c.b16 %v9777, %v9775
        %v9808 = vpack.c.b16 %v9778, %v9776
        %v9809 = vpack.c.b16 %v9781, %v9779
        %v9810 = vpack.c.b16 %v9782, %v9780
        %v9811 = vpack.c.b16 %v9785, %v9783
        %v9812 = vpack.c.b16 %v9786, %v9784
        %v9813 = vpack.c.b16 %v9789, %v9787
        %v9814 = vpack.c.b16 %v9790, %v9788
        %v9815 = vpack.c.b16 %v9793, %v9791
        %v9816 = vpack.c.b16 %v9794, %v9792
        %v9817 = vpack.c.b16 %v9797, %v9795
        %v9818 = vpack.c.b16 %v9798, %v9796
        %v9819 = vpack.c.b16 %v9801, %v9799
        %v9820 = vpack.c.b16 %v9802, %v9800
        %v9821 = vpack.c.b16 %v9805, %v9803
        %v9822 = vpack.c.b16 %v9806, %v9804
        %v9871 = vunpack.c.l.b16 %v9743
        %v9872 = vunpack.c.h.b16 %v9743
        %v9873 = vunpack.c.l.b16 %v9744
        %v9874 = vunpack.c.h.b16 %v9744
        %v9875 = vunpack.c.l.b16 %v9745
        %v9876 = vunpack.c.h.b16 %v9745
        %v9877 = vunpack.c.l.b16 %v9746
        %v9878 = vunpack.c.h.b16 %v9746
        %v9879 = vunpack.c.l.b16 %v9747
        %v9880 = vunpack.c.h.b16 %v9747
        %v9881 = vunpack.c.l.b16 %v9748
        %v9882 = vunpack.c.h.b16 %v9748
        %v9883 = vunpack.c.l.b16 %v9749
        %v9884 = vunpack.c.h.b16 %v9749
        %v9885 = vunpack.c.l.b16 %v9750
        %v9886 = vunpack.c.h.b16 %v9750
        %v9887 = vunpack.c.l.b16 %v9751
        %v9888 = vunpack.c.h.b16 %v9751
        %v9889 = vunpack.c.l.b16 %v9752
        %v9890 = vunpack.c.h.b16 %v9752
        %v9891 = vunpack.c.l.b16 %v9753
        %v9892 = vunpack.c.h.b16 %v9753
        %v9893 = vunpack.c.l.b16 %v9754
        %v9894 = vunpack.c.h.b16 %v9754
        %v9895 = vunpack.c.l.b16 %v9755
        %v9896 = vunpack.c.h.b16 %v9755
        %v9897 = vunpack.c.l.b16 %v9756
        %v9898 = vunpack.c.h.b16 %v9756
        %v9899 = vunpack.c.l.b16 %v9757
        %v9900 = vunpack.c.h.b16 %v9757
        %v9901 = vunpack.c.l.b16 %v9758
        %v9902 = vunpack.c.h.b16 %v9758
        %v9903 = vunpack.c.l.b16 %v9759
        %v9904 = vunpack.c.h.b16 %v9759
        %v9905 = vunpack.c.l.b16 %v9760
        %v9906 = vunpack.c.h.b16 %v9760
        %v9907 = vunpack.c.l.b16 %v9761
        %v9908 = vunpack.c.h.b16 %v9761
        %v9909 = vunpack.c.l.b16 %v9762
        %v9910 = vunpack.c.h.b16 %v9762
        %v9911 = vunpack.c.l.b16 %v9763
        %v9912 = vunpack.c.h.b16 %v9763
        %v9913 = vunpack.c.l.b16 %v9764
        %v9914 = vunpack.c.h.b16 %v9764
        %v9915 = vunpack.c.l.b16 %v9765
        %v9916 = vunpack.c.h.b16 %v9765
        %v9917 = vunpack.c.l.b16 %v9766
        %v9918 = vunpack.c.h.b16 %v9766
        %v9919 = vunpack.c.l.b16 %v9767
        %v9920 = vunpack.c.h.b16 %v9767
        %v9921 = vunpack.c.l.b16 %v9768
        %v9922 = vunpack.c.h.b16 %v9768
        %v9923 = vunpack.c.l.b16 %v9769
        %v9924 = vunpack.c.h.b16 %v9769
        %v9925 = vunpack.c.l.b16 %v9770
        %v9926 = vunpack.c.h.b16 %v9770
        %v9927 = vunpack.c.l.b16 %v9771
        %v9928 = vunpack.c.h.b16 %v9771
        %v9929 = vunpack.c.l.b16 %v9772
        %v9930 = vunpack.c.h.b16 %v9772
        %v9931 = vunpack.c.l.b16 %v9773
        %v9932 = vunpack.c.h.b16 %v9773
        %v9933 = vunpack.c.l.b16 %v9774
        %v9934 = vunpack.c.h.b16 %v9774
        %v9935 = vpack.c.b16 %v9873, %v9871
        %v9936 = vpack.c.b16 %v9874, %v9872
        %v9937 = vpack.c.b16 %v9877, %v9875
        %v9938 = vpack.c.b16 %v9878, %v9876
        %v9939 = vpack.c.b16 %v9881, %v9879
        %v9940 = vpack.c.b16 %v9882, %v9880
        %v9941 = vpack.c.b16 %v9885, %v9883
        %v9942 = vpack.c.b16 %v9886, %v9884
        %v9943 = vpack.c.b16 %v9889, %v9887
        %v9944 = vpack.c.b16 %v9890, %v9888
        %v9945 = vpack.c.b16 %v9893, %v9891
        %v9946 = vpack.c.b16 %v9894, %v9892
        %v9947 = vpack.c.b16 %v9897, %v9895
        %v9948 = vpack.c.b16 %v9898, %v9896
        %v9949 = vpack.c.b16 %v9901, %v9899
        %v9950 = vpack.c.b16 %v9902, %v9900
        %v9951 = vpack.c.b16 %v9905, %v9903
        %v9952 = vpack.c.b16 %v9906, %v9904
        %v9953 = vpack.c.b16 %v9909, %v9907
        %v9954 = vpack.c.b16 %v9910, %v9908
        %v9955 = vpack.c.b16 %v9913, %v9911
        %v9956 = vpack.c.b16 %v9914, %v9912
        %v9957 = vpack.c.b16 %v9917, %v9915
        %v9958 = vpack.c.b16 %v9918, %v9916
        %v9959 = vpack.c.b16 %v9921, %v9919
        %v9960 = vpack.c.b16 %v9922, %v9920
        %v9961 = vpack.c.b16 %v9925, %v9923
        %v9962 = vpack.c.b16 %v9926, %v9924
        %v9963 = vpack.c.b16 %v9929, %v9927
        %v9964 = vpack.c.b16 %v9930, %v9928
        %v9965 = vpack.c.b16 %v9933, %v9931
        %v9966 = vpack.c.b16 %v9934, %v9932
        %9999 = vmatprep.subr.bf16.mxu0 %v9936
        %10000 = vmatpush1.bf16.msra.mxu0 %v9935
        %10001 = vmatprep.subr.bf16.mxu0 %v9938
        %10002 = vmatpush1.bf16.msra.mxu0 %v9937
        %10003 = vmatprep.subr.bf16.mxu0 %v9940
        %10004 = vmatpush1.bf16.msra.mxu0 %v9939
        %10005 = vmatprep.subr.bf16.mxu0 %v9942
        %10006 = vmatpush1.bf16.msra.mxu0 %v9941
        %10007 = vmatprep.subr.bf16.mxu0 %v9944
        %10008 = vmatpush1.bf16.msra.mxu0 %v9943
        %10009 = vmatprep.subr.bf16.mxu0 %v9946
        %10010 = vmatpush1.bf16.msra.mxu0 %v9945
        %10011 = vmatprep.subr.bf16.mxu0 %v9948
        %10012 = vmatpush1.bf16.msra.mxu0 %v9947
        %10013 = vmatprep.subr.bf16.mxu0 %v9950
        %10014 = vmatpush1.bf16.msra.mxu0 %v9949
        %10015 = vmatprep.subr.bf16.mxu0 %v9952
        %10016 = vmatpush1.bf16.msra.mxu0 %v9951
        %10017 = vmatprep.subr.bf16.mxu0 %v9954
        %10018 = vmatpush1.bf16.msra.mxu0 %v9953
        %10019 = vmatprep.subr.bf16.mxu0 %v9956
        %10020 = vmatpush1.bf16.msra.mxu0 %v9955
        %10021 = vmatprep.subr.bf16.mxu0 %v9958
        %10022 = vmatpush1.bf16.msra.mxu0 %v9957
        %10023 = vmatprep.subr.bf16.mxu0 %v9960
        %10024 = vmatpush1.bf16.msra.mxu0 %v9959
        %10025 = vmatprep.subr.bf16.mxu0 %v9962
        %10026 = vmatpush1.bf16.msra.mxu0 %v9961
        %10027 = vmatprep.subr.bf16.mxu0 %v9964
        %10028 = vmatpush1.bf16.msra.mxu0 %v9963
        %10029 = vmatprep.subr.bf16.mxu0 %v9966
        %10030 = vmatpush1.bf16.msra.mxu0 %v9965
        %10031 = vmatprep.mubr.bf16.mxu0 %v9808
        %10032 = vmatmul.mubr.bf16.gmra.mrb[0].mxu0 %v9807
        %v10033 = vpop.f32.mrb[0].mxu0
        %v10034 = vadd.f32 0.0, %v10033
        %v10035 = vpop.f32.mrb[0].mxu0
        %v10036 = vadd.f32 0.0, %v10035
        %v10037 = vpop.f32.mrb[0].mxu0
        %v10038 = vadd.f32 0.0, %v10037
        %v10039 = vpop.f32.mrb[0].mxu0
        %v10040 = vadd.f32 0.0, %v10039
        %10041 = vmatprep.mubr.bf16.mxu0 %v9810
        %10042 = vmatmul.mubr.bf16.gmra.mrb[0].mxu0 %v9809
        %v10043 = vpop.f32.mrb[0].mxu0
        %v10044 = vadd.f32 0.0, %v10043
        %v10045 = vpop.f32.mrb[0].mxu0
        %v10046 = vadd.f32 0.0, %v10045
        %v10047 = vpop.f32.mrb[0].mxu0
        %v10048 = vadd.f32 0.0, %v10047
        %v10049 = vpop.f32.mrb[0].mxu0
        %v10050 = vadd.f32 0.0, %v10049
        %10051 = vmatprep.mubr.bf16.mxu0 %v9812
        %10052 = vmatmul.mubr.bf16.gmra.mrb[0].mxu0 %v9811
        %v10053 = vpop.f32.mrb[0].mxu0
        %v10054 = vadd.f32 0.0, %v10053
        %v10055 = vpop.f32.mrb[0].mxu0
        %v10056 = vadd.f32 0.0, %v10055
        %v10057 = vpop.f32.mrb[0].mxu0
        %v10058 = vadd.f32 0.0, %v10057
        %v10059 = vpop.f32.mrb[0].mxu0
        %v10060 = vadd.f32 0.0, %v10059
        %10061 = vmatprep.mubr.bf16.mxu0 %v9814
        %10062 = vmatmul.mubr.bf16.gmra.mrb[0].mxu0 %v9813
        %v10063 = vpop.f32.mrb[0].mxu0
        %v10064 = vadd.f32 0.0, %v10063
        %v10065 = vpop.f32.mrb[0].mxu0
        %v10066 = vadd.f32 0.0, %v10065
        %v10067 = vpop.f32.mrb[0].mxu0
        %v10068 = vadd.f32 0.0, %v10067
        %v10069 = vpop.f32.mrb[0].mxu0
        %v10070 = vadd.f32 0.0, %v10069
        %10071 = vmatprep.mubr.bf16.mxu0 %v9816
        %10072 = vmatmul.mubr.bf16.gmra.mrb[0].mxu0 %v9815
        %v10073 = vpop.f32.mrb[0].mxu0
        %v10074 = vadd.f32 0.0, %v10073
        %v10075 = vpop.f32.mrb[0].mxu0
        %v10076 = vadd.f32 0.0, %v10075
        %v10077 = vpop.f32.mrb[0].mxu0
        %v10078 = vadd.f32 0.0, %v10077
        %v10079 = vpop.f32.mrb[0].mxu0
        %v10080 = vadd.f32 0.0, %v10079
        %10081 = vmatprep.mubr.bf16.mxu0 %v9818
        %10082 = vmatmul.mubr.bf16.gmra.mrb[0].mxu0 %v9817
        %v10083 = vpop.f32.mrb[0].mxu0
        %v10084 = vadd.f32 0.0, %v10083
        %v10085 = vpop.f32.mrb[0].mxu0
        %v10086 = vadd.f32 0.0, %v10085
        %v10087 = vpop.f32.mrb[0].mxu0
        %v10088 = vadd.f32 0.0, %v10087
        %v10089 = vpop.f32.mrb[0].mxu0
        %v10090 = vadd.f32 0.0, %v10089
        %10091 = vmatprep.mubr.bf16.mxu0 %v9820
        %10092 = vmatmul.mubr.bf16.gmra.mrb[0].mxu0 %v9819
        %v10093 = vpop.f32.mrb[0].mxu0
        %v10094 = vadd.f32 0.0, %v10093
        %v10095 = vpop.f32.mrb[0].mxu0
        %v10096 = vadd.f32 0.0, %v10095
        %v10097 = vpop.f32.mrb[0].mxu0
        %v10098 = vadd.f32 0.0, %v10097
        %v10099 = vpop.f32.mrb[0].mxu0
        %v10100 = vadd.f32 0.0, %v10099
        %10101 = vmatprep.mubr.bf16.mxu0 %v9822
        %10102 = vmatmul.mubr.bf16.gmra.mrb[0].mxu0 %v9821
        %v10103 = vpop.f32.mrb[0].mxu0
        %v10104 = vadd.f32 0.0, %v10103
        %v10105 = vpop.f32.mrb[0].mxu0
        %v10106 = vadd.f32 0.0, %v10105
        %v10107 = vpop.f32.mrb[0].mxu0
        %v10108 = vadd.f32 0.0, %v10107
        %v10109 = vpop.f32.mrb[0].mxu0
        %v10110 = vadd.f32 0.0, %v10109
        %10111 = vdwg.mxu0
        %v10112 = vadd.f32 %v9454, %v10034
        %v10113 = vadd.f32 %v9455, %v10036
        %v10114 = vadd.f32 %v9456, %v10038
        %v10115 = vadd.f32 %v9457, %v10040
        %v10116 = vadd.f32 %v9458, %v10044
        %v10117 = vadd.f32 %v9459, %v10046
        %v10118 = vadd.f32 %v9460, %v10048
        %v10119 = vadd.f32 %v9461, %v10050
        %v10120 = vadd.f32 %v9462, %v10054
        %v10121 = vadd.f32 %v9463, %v10056
        %v10122 = vadd.f32 %v9464, %v10058
        %v10123 = vadd.f32 %v9465, %v10060
        %v10124 = vadd.f32 %v9466, %v10064
        %v10125 = vadd.f32 %v9467, %v10066
        %v10126 = vadd.f32 %v9468, %v10068
        %v10127 = vadd.f32 %v9469, %v10070
        %v10128 = vadd.f32 %v9470, %v10074
        %v10129 = vadd.f32 %v9471, %v10076
        %v10130 = vadd.f32 %v9472, %v10078
        %v10131 = vadd.f32 %v9473, %v10080
        %v10132 = vadd.f32 %v9474, %v10084
        %v10133 = vadd.f32 %v9475, %v10086
        %v10134 = vadd.f32 %v9476, %v10088
        %v10135 = vadd.f32 %v9477, %v10090
        %v10136 = vadd.f32 %v9478, %v10094
        %v10137 = vadd.f32 %v9479, %v10096
        %v10138 = vadd.f32 %v9480, %v10098
        %v10139 = vadd.f32 %v9481, %v10100
        %v10140 = vadd.f32 %v9482, %v10104
        %v10141 = vadd.f32 %v9483, %v10106
        %v10142 = vadd.f32 %v9484, %v10108
        %v10143 = vadd.f32 %v9485, %v10110
        %v10144 = vld [vmem:[%s3859] sm:$0xee]
        %v10145 = vld [vmem:[%s3859 + $0x10] sm:$0xee]
        %v10146 = vld [vmem:[%s3859 + $0x20] sm:$0xee]
        %v10147 = vld [vmem:[%s3859 + $0x30] sm:$0xee]
        %v10148 = vld [vmem:[%s3859 + $0x40] sm:$0xee]
        %v10149 = vld [vmem:[%s3859 + $0x50] sm:$0xee]
        %v10150 = vld [vmem:[%s3859 + $0x60] sm:$0xee]
        %v10151 = vld [vmem:[%s3859 + $0x70] sm:$0xee]
        %v10152 = vld [vmem:[%s3859 + $0xa0] sm:$0xee]
        %v10153 = vld [vmem:[%s3859 + $0xb0] sm:$0xee]
        %v10154 = vld [vmem:[%s3859 + $0xc0] sm:$0xee]
        %v10155 = vld [vmem:[%s3859 + $0xd0] sm:$0xee]
        %v10156 = vld [vmem:[%s3859 + $0xe0] sm:$0xee]
        %v10157 = vld [vmem:[%s3859 + $0xf0] sm:$0xee]
        %v10158 = vld [vmem:[%s3859 + $0x100] sm:$0xee]
        %v10159 = vld [vmem:[%s3859 + $0x110] sm:$0xee]
        %v10192 = vrot.slane %v10144, 5
        %v10193 = vrot.slane %v10192, 4
        %v10194 = vrot.slane %v9487, 5
        %v10195 = vsel %vm1786, %v10193, %v10194
        %v10196 = vrot.slane %v10145, 5
        %v10197 = vrot.slane %v10196, 4
        %v10198 = vrot.slane %v9489, 5
        %v10199 = vsel %vm1786, %v10197, %v10198
        %v10200 = vrot.slane %v10146, 5
        %v10201 = vrot.slane %v10200, 4
        %v10202 = vrot.slane %v9491, 5
        %v10203 = vsel %vm1786, %v10201, %v10202
        %v10204 = vrot.slane %v10147, 5
        %v10205 = vrot.slane %v10204, 4
        %v10206 = vrot.slane %v9493, 5
        %v10207 = vsel %vm1786, %v10205, %v10206
        %v10208 = vrot.slane %v10148, 5
        %v10209 = vrot.slane %v10208, 4
        %v10210 = vrot.slane %v9495, 5
        %v10211 = vsel %vm1786, %v10209, %v10210
        %v10212 = vrot.slane %v10149, 5
        %v10213 = vrot.slane %v10212, 4
        %v10214 = vrot.slane %v9497, 5
        %v10215 = vsel %vm1786, %v10213, %v10214
        %v10216 = vrot.slane %v10150, 5
        %v10217 = vrot.slane %v10216, 4
        %v10218 = vrot.slane %v9499, 5
        %v10219 = vsel %vm1786, %v10217, %v10218
        %v10220 = vrot.slane %v10151, 5
        %v10221 = vrot.slane %v10220, 4
        %v10222 = vrot.slane %v9501, 5
        %v10223 = vsel %vm1786, %v10221, %v10222
        %v10224 = vrot.slane %v10152, 5
        %v10225 = vrot.slane %v10224, 4
        %v10226 = vrot.slane %v9503, 5
        %v10227 = vsel %vm1786, %v10225, %v10226
        %v10228 = vrot.slane %v10153, 5
        %v10229 = vrot.slane %v10228, 4
        %v10230 = vrot.slane %v9505, 5
        %v10231 = vsel %vm1786, %v10229, %v10230
        %v10232 = vrot.slane %v10154, 5
        %v10233 = vrot.slane %v10232, 4
        %v10234 = vrot.slane %v9507, 5
        %v10235 = vsel %vm1786, %v10233, %v10234
        %v10236 = vrot.slane %v10155, 5
        %v10237 = vrot.slane %v10236, 4
        %v10238 = vrot.slane %v9509, 5
        %v10239 = vsel %vm1786, %v10237, %v10238
        %v10240 = vrot.slane %v10156, 5
        %v10241 = vrot.slane %v10240, 4
        %v10242 = vrot.slane %v9511, 5
        %v10243 = vsel %vm1786, %v10241, %v10242
        %v10244 = vrot.slane %v10157, 5
        %v10245 = vrot.slane %v10244, 4
        %v10246 = vrot.slane %v9513, 5
        %v10247 = vsel %vm1786, %v10245, %v10246
        %v10248 = vrot.slane %v10158, 5
        %v10249 = vrot.slane %v10248, 4
        %v10250 = vrot.slane %v9515, 5
        %v10251 = vsel %vm1786, %v10249, %v10250
        %v10252 = vrot.slane %v10159, 5
        %v10253 = vrot.slane %v10252, 4
        %v10254 = vrot.slane %v9517, 5
        %v10255 = vsel %vm1786, %v10253, %v10254
        %s10256 = scalar_lea.vmem [#allocation3], 2048
        %v10257 = vld [vmem:[%s10256] sm:$0xff]
        %v10258 = vld [vmem:[%s10256 + $0x8] sm:$0xff]
        %v10259 = vld [vmem:[%s10256 + $0x10] sm:$0xff]
        %v10260 = vld [vmem:[%s10256 + $0x18] sm:$0xff]
        %v10261 = vld [vmem:[%s10256 + $0x20] sm:$0xff]
        %v10262 = vld [vmem:[%s10256 + $0x28] sm:$0xff]
        %v10263 = vld [vmem:[%s10256 + $0x30] sm:$0xff]
        %v10264 = vld [vmem:[%s10256 + $0x38] sm:$0xff]
        %v10265 = vld [vmem:[%s10256 + $0x40] sm:$0xff]
        %v10266 = vld [vmem:[%s10256 + $0x48] sm:$0xff]
        %v10267 = vld [vmem:[%s10256 + $0x50] sm:$0xff]
        %v10268 = vld [vmem:[%s10256 + $0x58] sm:$0xff]
        %v10269 = vld [vmem:[%s10256 + $0x60] sm:$0xff]
        %v10270 = vld [vmem:[%s10256 + $0x68] sm:$0xff]
        %v10271 = vld [vmem:[%s10256 + $0x70] sm:$0xff]
        %v10272 = vld [vmem:[%s10256 + $0x78] sm:$0xff]
        %v10273 = vld [vmem:[%s10256 + $0x80] sm:$0xff]
        %v10274 = vld [vmem:[%s10256 + $0x88] sm:$0xff]
        %v10275 = vld [vmem:[%s10256 + $0x90] sm:$0xff]
        %v10276 = vld [vmem:[%s10256 + $0x98] sm:$0xff]
        %v10277 = vld [vmem:[%s10256 + $0xa0] sm:$0xff]
        %v10278 = vld [vmem:[%s10256 + $0xa8] sm:$0xff]
        %v10279 = vld [vmem:[%s10256 + $0xb0] sm:$0xff]
        %v10280 = vld [vmem:[%s10256 + $0xb8] sm:$0xff]
        %v10281 = vld [vmem:[%s10256 + $0xc0] sm:$0xff]
        %v10282 = vld [vmem:[%s10256 + $0xc8] sm:$0xff]
        %v10283 = vld [vmem:[%s10256 + $0xd0] sm:$0xff]
        %v10284 = vld [vmem:[%s10256 + $0xd8] sm:$0xff]
        %v10285 = vld [vmem:[%s10256 + $0xe0] sm:$0xff]
        %v10286 = vld [vmem:[%s10256 + $0xe8] sm:$0xff]
        %v10287 = vld [vmem:[%s10256 + $0xf0] sm:$0xff]
        %v10288 = vld [vmem:[%s10256 + $0xf8] sm:$0xff]
        %v10289 = vunpack.c.l.b16 %v10195
        %v10290 = vunpack.c.h.b16 %v10195
        %v10291 = vunpack.c.l.b16 %v10199
        %v10292 = vunpack.c.h.b16 %v10199
        %v10293 = vunpack.c.l.b16 %v10203
        %v10294 = vunpack.c.h.b16 %v10203
        %v10295 = vunpack.c.l.b16 %v10207
        %v10296 = vunpack.c.h.b16 %v10207
        %v10297 = vunpack.c.l.b16 %v10211
        %v10298 = vunpack.c.h.b16 %v10211
        %v10299 = vunpack.c.l.b16 %v10215
        %v10300 = vunpack.c.h.b16 %v10215
        %v10301 = vunpack.c.l.b16 %v10219
        %v10302 = vunpack.c.h.b16 %v10219
        %v10303 = vunpack.c.l.b16 %v10223
        %v10304 = vunpack.c.h.b16 %v10223
        %v10305 = vunpack.c.l.b16 %v10227
        %v10306 = vunpack.c.h.b16 %v10227
        %v10307 = vunpack.c.l.b16 %v10231
        %v10308 = vunpack.c.h.b16 %v10231
        %v10309 = vunpack.c.l.b16 %v10235
        %v10310 = vunpack.c.h.b16 %v10235
        %v10311 = vunpack.c.l.b16 %v10239
        %v10312 = vunpack.c.h.b16 %v10239
        %v10313 = vunpack.c.l.b16 %v10243
        %v10314 = vunpack.c.h.b16 %v10243
        %v10315 = vunpack.c.l.b16 %v10247
        %v10316 = vunpack.c.h.b16 %v10247
        %v10317 = vunpack.c.l.b16 %v10251
        %v10318 = vunpack.c.h.b16 %v10251
        %v10319 = vunpack.c.l.b16 %v10255
        %v10320 = vunpack.c.h.b16 %v10255
        %v10321 = vpack.c.b16 %v10291, %v10289
        %v10322 = vpack.c.b16 %v10292, %v10290
        %v10323 = vpack.c.b16 %v10295, %v10293
        %v10324 = vpack.c.b16 %v10296, %v10294
        %v10325 = vpack.c.b16 %v10299, %v10297
        %v10326 = vpack.c.b16 %v10300, %v10298
        %v10327 = vpack.c.b16 %v10303, %v10301
        %v10328 = vpack.c.b16 %v10304, %v10302
        %v10329 = vpack.c.b16 %v10307, %v10305
        %v10330 = vpack.c.b16 %v10308, %v10306
        %v10331 = vpack.c.b16 %v10311, %v10309
        %v10332 = vpack.c.b16 %v10312, %v10310
        %v10333 = vpack.c.b16 %v10315, %v10313
        %v10334 = vpack.c.b16 %v10316, %v10314
        %v10335 = vpack.c.b16 %v10319, %v10317
        %v10336 = vpack.c.b16 %v10320, %v10318
        %v10385 = vunpack.c.l.b16 %v10257
        %v10386 = vunpack.c.h.b16 %v10257
        %v10387 = vunpack.c.l.b16 %v10258
        %v10388 = vunpack.c.h.b16 %v10258
        %v10389 = vunpack.c.l.b16 %v10259
        %v10390 = vunpack.c.h.b16 %v10259
        %v10391 = vunpack.c.l.b16 %v10260
        %v10392 = vunpack.c.h.b16 %v10260
        %v10393 = vunpack.c.l.b16 %v10261
        %v10394 = vunpack.c.h.b16 %v10261
        %v10395 = vunpack.c.l.b16 %v10262
        %v10396 = vunpack.c.h.b16 %v10262
        %v10397 = vunpack.c.l.b16 %v10263
        %v10398 = vunpack.c.h.b16 %v10263
        %v10399 = vunpack.c.l.b16 %v10264
        %v10400 = vunpack.c.h.b16 %v10264
        %v10401 = vunpack.c.l.b16 %v10265
        %v10402 = vunpack.c.h.b16 %v10265
        %v10403 = vunpack.c.l.b16 %v10266
        %v10404 = vunpack.c.h.b16 %v10266
        %v10405 = vunpack.c.l.b16 %v10267
        %v10406 = vunpack.c.h.b16 %v10267
        %v10407 = vunpack.c.l.b16 %v10268
        %v10408 = vunpack.c.h.b16 %v10268
        %v10409 = vunpack.c.l.b16 %v10269
        %v10410 = vunpack.c.h.b16 %v10269
        %v10411 = vunpack.c.l.b16 %v10270
        %v10412 = vunpack.c.h.b16 %v10270
        %v10413 = vunpack.c.l.b16 %v10271
        %v10414 = vunpack.c.h.b16 %v10271
        %v10415 = vunpack.c.l.b16 %v10272
        %v10416 = vunpack.c.h.b16 %v10272
        %v10417 = vunpack.c.l.b16 %v10273
        %v10418 = vunpack.c.h.b16 %v10273
        %v10419 = vunpack.c.l.b16 %v10274
        %v10420 = vunpack.c.h.b16 %v10274
        %v10421 = vunpack.c.l.b16 %v10275
        %v10422 = vunpack.c.h.b16 %v10275
        %v10423 = vunpack.c.l.b16 %v10276
        %v10424 = vunpack.c.h.b16 %v10276
        %v10425 = vunpack.c.l.b16 %v10277
        %v10426 = vunpack.c.h.b16 %v10277
        %v10427 = vunpack.c.l.b16 %v10278
        %v10428 = vunpack.c.h.b16 %v10278
        %v10429 = vunpack.c.l.b16 %v10279
        %v10430 = vunpack.c.h.b16 %v10279
        %v10431 = vunpack.c.l.b16 %v10280
        %v10432 = vunpack.c.h.b16 %v10280
        %v10433 = vunpack.c.l.b16 %v10281
        %v10434 = vunpack.c.h.b16 %v10281
        %v10435 = vunpack.c.l.b16 %v10282
        %v10436 = vunpack.c.h.b16 %v10282
        %v10437 = vunpack.c.l.b16 %v10283
        %v10438 = vunpack.c.h.b16 %v10283
        %v10439 = vunpack.c.l.b16 %v10284
        %v10440 = vunpack.c.h.b16 %v10284
        %v10441 = vunpack.c.l.b16 %v10285
        %v10442 = vunpack.c.h.b16 %v10285
        %v10443 = vunpack.c.l.b16 %v10286
        %v10444 = vunpack.c.h.b16 %v10286
        %v10445 = vunpack.c.l.b16 %v10287
        %v10446 = vunpack.c.h.b16 %v10287
        %v10447 = vunpack.c.l.b16 %v10288
        %v10448 = vunpack.c.h.b16 %v10288
        %v10449 = vpack.c.b16 %v10387, %v10385
        %v10450 = vpack.c.b16 %v10388, %v10386
        %v10451 = vpack.c.b16 %v10391, %v10389
        %v10452 = vpack.c.b16 %v10392, %v10390
        %v10453 = vpack.c.b16 %v10395, %v10393
        %v10454 = vpack.c.b16 %v10396, %v10394
        %v10455 = vpack.c.b16 %v10399, %v10397
        %v10456 = vpack.c.b16 %v10400, %v10398
        %v10457 = vpack.c.b16 %v10403, %v10401
        %v10458 = vpack.c.b16 %v10404, %v10402
        %v10459 = vpack.c.b16 %v10407, %v10405
        %v10460 = vpack.c.b16 %v10408, %v10406
        %v10461 = vpack.c.b16 %v10411, %v10409
        %v10462 = vpack.c.b16 %v10412, %v10410
        %v10463 = vpack.c.b16 %v10415, %v10413
        %v10464 = vpack.c.b16 %v10416, %v10414
        %v10465 = vpack.c.b16 %v10419, %v10417
        %v10466 = vpack.c.b16 %v10420, %v10418
        %v10467 = vpack.c.b16 %v10423, %v10421
        %v10468 = vpack.c.b16 %v10424, %v10422
        %v10469 = vpack.c.b16 %v10427, %v10425
        %v10470 = vpack.c.b16 %v10428, %v10426
        %v10471 = vpack.c.b16 %v10431, %v10429
        %v10472 = vpack.c.b16 %v10432, %v10430
        %v10473 = vpack.c.b16 %v10435, %v10433
        %v10474 = vpack.c.b16 %v10436, %v10434
        %v10475 = vpack.c.b16 %v10439, %v10437
        %v10476 = vpack.c.b16 %v10440, %v10438
        %v10477 = vpack.c.b16 %v10443, %v10441
        %v10478 = vpack.c.b16 %v10444, %v10442
        %v10479 = vpack.c.b16 %v10447, %v10445
        %v10480 = vpack.c.b16 %v10448, %v10446
        %10513 = vmatprep.subr.bf16.mxu0 %v10450
        %10514 = vmatpush1.bf16.msra.mxu0 %v10449
        %10515 = vmatprep.subr.bf16.mxu0 %v10452
        %10516 = vmatpush1.bf16.msra.mxu0 %v10451
        %10517 = vmatprep.subr.bf16.mxu0 %v10454
        %10518 = vmatpush1.bf16.msra.mxu0 %v10453
        %10519 = vmatprep.subr.bf16.mxu0 %v10456
        %10520 = vmatpush1.bf16.msra.mxu0 %v10455
        %10521 = vmatprep.subr.bf16.mxu0 %v10458
        %10522 = vmatpush1.bf16.msra.mxu0 %v10457
        %10523 = vmatprep.subr.bf16.mxu0 %v10460
        %10524 = vmatpush1.bf16.msra.mxu0 %v10459
        %10525 = vmatprep.subr.bf16.mxu0 %v10462
        %10526 = vmatpush1.bf16.msra.mxu0 %v10461
        %10527 = vmatprep.subr.bf16.mxu0 %v10464
        %10528 = vmatpush1.bf16.msra.mxu0 %v10463
        %10529 = vmatprep.subr.bf16.mxu0 %v10466
        %10530 = vmatpush1.bf16.msra.mxu0 %v10465
        %10531 = vmatprep.subr.bf16.mxu0 %v10468
        %10532 = vmatpush1.bf16.msra.mxu0 %v10467
        %10533 = vmatprep.subr.bf16.mxu0 %v10470
        %10534 = vmatpush1.bf16.msra.mxu0 %v10469
        %10535 = vmatprep.subr.bf16.mxu0 %v10472
        %10536 = vmatpush1.bf16.msra.mxu0 %v10471
        %10537 = vmatprep.subr.bf16.mxu0 %v10474
        %10538 = vmatpush1.bf16.msra.mxu0 %v10473
        %10539 = vmatprep.subr.bf16.mxu0 %v10476
        %10540 = vmatpush1.bf16.msra.mxu0 %v10475
        %10541 = vmatprep.subr.bf16.mxu0 %v10478
        %10542 = vmatpush1.bf16.msra.mxu0 %v10477
        %10543 = vmatprep.subr.bf16.mxu0 %v10480
        %10544 = vmatpush1.bf16.msra.mxu0 %v10479
        %10545 = vmatprep.mubr.bf16.mxu0 %v10322
        %10546 = vmatmul.mubr.bf16.gmra.mrb[0].mxu0 %v10321
        %v10547 = vpop.f32.mrb[0].mxu0
        %v10548 = vadd.f32 0.0, %v10547
        %v10549 = vpop.f32.mrb[0].mxu0
        %v10550 = vadd.f32 0.0, %v10549
        %v10551 = vpop.f32.mrb[0].mxu0
        %v10552 = vadd.f32 0.0, %v10551
        %v10553 = vpop.f32.mrb[0].mxu0
        %v10554 = vadd.f32 0.0, %v10553
        %10555 = vmatprep.mubr.bf16.mxu0 %v10324
        %10556 = vmatmul.mubr.bf16.gmra.mrb[0].mxu0 %v10323
        %v10557 = vpop.f32.mrb[0].mxu0
        %v10558 = vadd.f32 0.0, %v10557
        %v10559 = vpop.f32.mrb[0].mxu0
        %v10560 = vadd.f32 0.0, %v10559
        %v10561 = vpop.f32.mrb[0].mxu0
        %v10562 = vadd.f32 0.0, %v10561
        %v10563 = vpop.f32.mrb[0].mxu0
        %v10564 = vadd.f32 0.0, %v10563
        %10565 = vmatprep.mubr.bf16.mxu0 %v10326
        %10566 = vmatmul.mubr.bf16.gmra.mrb[0].mxu0 %v10325
        %v10567 = vpop.f32.mrb[0].mxu0
        %v10568 = vadd.f32 0.0, %v10567
        %v10569 = vpop.f32.mrb[0].mxu0
        %v10570 = vadd.f32 0.0, %v10569
        %v10571 = vpop.f32.mrb[0].mxu0
        %v10572 = vadd.f32 0.0, %v10571
        %v10573 = vpop.f32.mrb[0].mxu0
        %v10574 = vadd.f32 0.0, %v10573
        %10575 = vmatprep.mubr.bf16.mxu0 %v10328
        %10576 = vmatmul.mubr.bf16.gmra.mrb[0].mxu0 %v10327
        %v10577 = vpop.f32.mrb[0].mxu0
        %v10578 = vadd.f32 0.0, %v10577
        %v10579 = vpop.f32.mrb[0].mxu0
        %v10580 = vadd.f32 0.0, %v10579
        %v10581 = vpop.f32.mrb[0].mxu0
        %v10582 = vadd.f32 0.0, %v10581
        %v10583 = vpop.f32.mrb[0].mxu0
        %v10584 = vadd.f32 0.0, %v10583
        %10585 = vmatprep.mubr.bf16.mxu0 %v10330
        %10586 = vmatmul.mubr.bf16.gmra.mrb[0].mxu0 %v10329
        %v10587 = vpop.f32.mrb[0].mxu0
        %v10588 = vadd.f32 0.0, %v10587
        %v10589 = vpop.f32.mrb[0].mxu0
        %v10590 = vadd.f32 0.0, %v10589
        %v10591 = vpop.f32.mrb[0].mxu0
        %v10592 = vadd.f32 0.0, %v10591
        %v10593 = vpop.f32.mrb[0].mxu0
        %v10594 = vadd.f32 0.0, %v10593
        %10595 = vmatprep.mubr.bf16.mxu0 %v10332
        %10596 = vmatmul.mubr.bf16.gmra.mrb[0].mxu0 %v10331
        %v10597 = vpop.f32.mrb[0].mxu0
        %v10598 = vadd.f32 0.0, %v10597
        %v10599 = vpop.f32.mrb[0].mxu0
        %v10600 = vadd.f32 0.0, %v10599
        %v10601 = vpop.f32.mrb[0].mxu0
        %v10602 = vadd.f32 0.0, %v10601
        %v10603 = vpop.f32.mrb[0].mxu0
        %v10604 = vadd.f32 0.0, %v10603
        %10605 = vmatprep.mubr.bf16.mxu0 %v10334
        %10606 = vmatmul.mubr.bf16.gmra.mrb[0].mxu0 %v10333
        %v10607 = vpop.f32.mrb[0].mxu0
        %v10608 = vadd.f32 0.0, %v10607
        %v10609 = vpop.f32.mrb[0].mxu0
        %v10610 = vadd.f32 0.0, %v10609
        %v10611 = vpop.f32.mrb[0].mxu0
        %v10612 = vadd.f32 0.0, %v10611
        %v10613 = vpop.f32.mrb[0].mxu0
        %v10614 = vadd.f32 0.0, %v10613
        %10615 = vmatprep.mubr.bf16.mxu0 %v10336
        %10616 = vmatmul.mubr.bf16.gmra.mrb[0].mxu0 %v10335
        %v10617 = vpop.f32.mrb[0].mxu0
        %v10618 = vadd.f32 0.0, %v10617
        %v10619 = vpop.f32.mrb[0].mxu0
        %v10620 = vadd.f32 0.0, %v10619
        %v10621 = vpop.f32.mrb[0].mxu0
        %v10622 = vadd.f32 0.0, %v10621
        %v10623 = vpop.f32.mrb[0].mxu0
        %v10624 = vadd.f32 0.0, %v10623
        %10625 = vdwg.mxu0
        %v10626 = vadd.f32 %v10112, %v10548
        %v10627 = vadd.f32 %v10113, %v10550
        %v10628 = vadd.f32 %v10114, %v10552
        %v10629 = vadd.f32 %v10115, %v10554
        %v10630 = vadd.f32 %v10116, %v10558
        %v10631 = vadd.f32 %v10117, %v10560
        %v10632 = vadd.f32 %v10118, %v10562
        %v10633 = vadd.f32 %v10119, %v10564
        %v10634 = vadd.f32 %v10120, %v10568
        %v10635 = vadd.f32 %v10121, %v10570
        %v10636 = vadd.f32 %v10122, %v10572
        %v10637 = vadd.f32 %v10123, %v10574
        %v10638 = vadd.f32 %v10124, %v10578
        %v10639 = vadd.f32 %v10125, %v10580
        %v10640 = vadd.f32 %v10126, %v10582
        %v10641 = vadd.f32 %v10127, %v10584
        %v10642 = vadd.f32 %v10128, %v10588
        %v10643 = vadd.f32 %v10129, %v10590
        %v10644 = vadd.f32 %v10130, %v10592
        %v10645 = vadd.f32 %v10131, %v10594
        %v10646 = vadd.f32 %v10132, %v10598
        %v10647 = vadd.f32 %v10133, %v10600
        %v10648 = vadd.f32 %v10134, %v10602
        %v10649 = vadd.f32 %v10135, %v10604
        %v10650 = vadd.f32 %v10136, %v10608
        %v10651 = vadd.f32 %v10137, %v10610
        %v10652 = vadd.f32 %v10138, %v10612
        %v10653 = vadd.f32 %v10139, %v10614
        %v10654 = vadd.f32 %v10140, %v10618
        %v10655 = vadd.f32 %v10141, %v10620
        %v10656 = vadd.f32 %v10142, %v10622
        %v10657 = vadd.f32 %v10143, %v10624
        %v10658 = vld [vmem:[%s5] sm:$0x3]
        %v10660 = vlaneseq
        %v10661 = vshrl.u32 %v10660, 7
        %v10662 = vsub.s32 0, %v10661
        %v10663 = vrot.slane %v10658, %v10662
        %v10664 = vlaneseq
        %v10665 = vshrl.u32 %v10664, 7
        %v10666 = vsub.s32 1, %v10665
        %v10667 = vrot.slane %v10658, %v10666
        %v10670 = vmul.f32 %v10626, %v10663
        %v10671 = vmul.f32 %v10627, %v10667
        %v10672 = vmul.f32 %v10628, %v10663
        %v10673 = vmul.f32 %v10629, %v10667
        %v10674 = vmul.f32 %v10630, %v10663
        %v10675 = vmul.f32 %v10631, %v10667
        %v10676 = vmul.f32 %v10632, %v10663
        %v10677 = vmul.f32 %v10633, %v10667
        %v10678 = vmul.f32 %v10634, %v10663
        %v10679 = vmul.f32 %v10635, %v10667
        %v10680 = vmul.f32 %v10636, %v10663
        %v10681 = vmul.f32 %v10637, %v10667
        %v10682 = vmul.f32 %v10638, %v10663
        %v10683 = vmul.f32 %v10639, %v10667
        %v10684 = vmul.f32 %v10640, %v10663
        %v10685 = vmul.f32 %v10641, %v10667
        %v10686 = vmul.f32 %v10642, %v10663
        %v10687 = vmul.f32 %v10643, %v10667
        %v10688 = vmul.f32 %v10644, %v10663
        %v10689 = vmul.f32 %v10645, %v10667
        %v10690 = vmul.f32 %v10646, %v10663
        %v10691 = vmul.f32 %v10647, %v10667
        %v10692 = vmul.f32 %v10648, %v10663
        %v10693 = vmul.f32 %v10649, %v10667
        %v10694 = vmul.f32 %v10650, %v10663
        %v10695 = vmul.f32 %v10651, %v10667
        %v10696 = vmul.f32 %v10652, %v10663
        %v10697 = vmul.f32 %v10653, %v10667
        %v10698 = vmul.f32 %v10654, %v10663
        %v10699 = vmul.f32 %v10655, %v10667
        %v10700 = vmul.f32 %v10656, %v10663
        %v10701 = vmul.f32 %v10657, %v10667
        %v10702 = vld [vmem:[%s6] sm:$0x3]
        %v10704 = vlaneseq
        %v10705 = vshrl.u32 %v10704, 7
        %v10706 = vsub.s32 0, %v10705
        %v10707 = vrot.slane %v10702, %v10706
        %v10708 = vlaneseq
        %v10709 = vshrl.u32 %v10708, 7
        %v10710 = vsub.s32 1, %v10709
        %v10711 = vrot.slane %v10702, %v10710
        %v10714 = vadd.f32 %v10670, %v10707
        %v10715 = vadd.f32 %v10671, %v10711
        %v10716 = vadd.f32 %v10672, %v10707
        %v10717 = vadd.f32 %v10673, %v10711
        %v10718 = vadd.f32 %v10674, %v10707
        %v10719 = vadd.f32 %v10675, %v10711
        %v10720 = vadd.f32 %v10676, %v10707
        %v10721 = vadd.f32 %v10677, %v10711
        %v10722 = vadd.f32 %v10678, %v10707
        %v10723 = vadd.f32 %v10679, %v10711
        %v10724 = vadd.f32 %v10680, %v10707
        %v10725 = vadd.f32 %v10681, %v10711
        %v10726 = vadd.f32 %v10682, %v10707
        %v10727 = vadd.f32 %v10683, %v10711
        %v10728 = vadd.f32 %v10684, %v10707
        %v10729 = vadd.f32 %v10685, %v10711
        %v10730 = vadd.f32 %v10686, %v10707
        %v10731 = vadd.f32 %v10687, %v10711
        %v10732 = vadd.f32 %v10688, %v10707
        %v10733 = vadd.f32 %v10689, %v10711
        %v10734 = vadd.f32 %v10690, %v10707
        %v10735 = vadd.f32 %v10691, %v10711
        %v10736 = vadd.f32 %v10692, %v10707
        %v10737 = vadd.f32 %v10693, %v10711
        %v10738 = vadd.f32 %v10694, %v10707
        %v10739 = vadd.f32 %v10695, %v10711
        %v10740 = vadd.f32 %v10696, %v10707
        %v10741 = vadd.f32 %v10697, %v10711
        %v10742 = vadd.f32 %v10698, %v10707
        %v10743 = vadd.f32 %v10699, %v10711
        %v10744 = vadd.f32 %v10700, %v10707
        %v10745 = vadd.f32 %v10701, %v10711
        %v10746 = vmax.f32 %v10714, 0.0
        %v10747 = vmax.f32 %v10715, 0.0
        %v10748 = vmax.f32 %v10716, 0.0
        %v10749 = vmax.f32 %v10717, 0.0
        %v10750 = vmax.f32 %v10718, 0.0
        %v10751 = vmax.f32 %v10719, 0.0
        %v10752 = vmax.f32 %v10720, 0.0
        %v10753 = vmax.f32 %v10721, 0.0
        %v10754 = vmax.f32 %v10722, 0.0
        %v10755 = vmax.f32 %v10723, 0.0
        %v10756 = vmax.f32 %v10724, 0.0
        %v10757 = vmax.f32 %v10725, 0.0
        %v10758 = vmax.f32 %v10726, 0.0
        %v10759 = vmax.f32 %v10727, 0.0
        %v10760 = vmax.f32 %v10728, 0.0
        %v10761 = vmax.f32 %v10729, 0.0
        %v10762 = vmax.f32 %v10730, 0.0
        %v10763 = vmax.f32 %v10731, 0.0
        %v10764 = vmax.f32 %v10732, 0.0
        %v10765 = vmax.f32 %v10733, 0.0
        %v10766 = vmax.f32 %v10734, 0.0
        %v10767 = vmax.f32 %v10735, 0.0
        %v10768 = vmax.f32 %v10736, 0.0
        %v10769 = vmax.f32 %v10737, 0.0
        %v10770 = vmax.f32 %v10738, 0.0
        %v10771 = vmax.f32 %v10739, 0.0
        %v10772 = vmax.f32 %v10740, 0.0
        %v10773 = vmax.f32 %v10741, 0.0
        %v10774 = vmax.f32 %v10742, 0.0
        %v10775 = vmax.f32 %v10743, 0.0
        %v10776 = vmax.f32 %v10744, 0.0
        %v10777 = vmax.f32 %v10745, 0.0
        %10778 = vst [vmem:[%s300] sm:$0xff] %v10746
        %10779 = vst [vmem:[%s300 + $0x8] sm:$0xff] %v10747
        %10780 = vst [vmem:[%s300 + $0x10] sm:$0xff] %v10748
        %10781 = vst [vmem:[%s300 + $0x18] sm:$0xff] %v10749
        %10782 = vst [vmem:[%s300 + $0x20] sm:$0xff] %v10750
        %10783 = vst [vmem:[%s300 + $0x28] sm:$0xff] %v10751
        %10784 = vst [vmem:[%s300 + $0x30] sm:$0xff] %v10752
        %10785 = vst [vmem:[%s300 + $0x38] sm:$0xff] %v10753
        %10786 = vst [vmem:[%s300 + $0x40] sm:$0xff] %v10754
        %10787 = vst [vmem:[%s300 + $0x48] sm:$0xff] %v10755
        %10788 = vst [vmem:[%s300 + $0x50] sm:$0xff] %v10756
        %10789 = vst [vmem:[%s300 + $0x58] sm:$0xff] %v10757
        %10790 = vst [vmem:[%s300 + $0x60] sm:$0xff] %v10758
        %10791 = vst [vmem:[%s300 + $0x68] sm:$0xff] %v10759
        %10792 = vst [vmem:[%s300 + $0x70] sm:$0xff] %v10760
        %10793 = vst [vmem:[%s300 + $0x78] sm:$0xff] %v10761
        %10794 = vst [vmem:[%s300 + $0x80] sm:$0xff] %v10762
        %10795 = vst [vmem:[%s300 + $0x88] sm:$0xff] %v10763
        %10796 = vst [vmem:[%s300 + $0x90] sm:$0xff] %v10764
        %10797 = vst [vmem:[%s300 + $0x98] sm:$0xff] %v10765
        %10798 = vst [vmem:[%s300 + $0xa0] sm:$0xff] %v10766
        %10799 = vst [vmem:[%s300 + $0xa8] sm:$0xff] %v10767
        %10800 = vst [vmem:[%s300 + $0xb0] sm:$0xff] %v10768
        %10801 = vst [vmem:[%s300 + $0xb8] sm:$0xff] %v10769
        %10802 = vst [vmem:[%s300 + $0xc0] sm:$0xff] %v10770
        %10803 = vst [vmem:[%s300 + $0xc8] sm:$0xff] %v10771
        %10804 = vst [vmem:[%s300 + $0xd0] sm:$0xff] %v10772
        %10805 = vst [vmem:[%s300 + $0xd8] sm:$0xff] %v10773
        %10806 = vst [vmem:[%s300 + $0xe0] sm:$0xff] %v10774
        %10807 = vst [vmem:[%s300 + $0xe8] sm:$0xff] %v10775
        %10808 = vst [vmem:[%s300 + $0xf0] sm:$0xff] %v10776
        %10809 = vst [vmem:[%s300 + $0xf8] sm:$0xff] %v10777
        %s10810 = smul.u32 2, %s19
        %p10811 = scmp.lt.s32.totalorder %s10810, 3
        %s10812 = scalar_select %p10811, %s10810, 3
        %s10813 = smul.addr %s10812, 16
        %s10814 = smul.addr %s10813, 8
        %s10815 = scalar_lea.vmem %s7, %s10814
        // Predicated region
        $region53: #{double_conv_block.1} parent=47 // pred_check
          %p10816 = pneg %p189
        $region54: #{double_conv_block.1} parent=47 // pred_check_branch
          %10818 = sbr.rel (%p10816) target = $region56
        $region55: #{double_conv_block.1} parent=47 // pred_region
          %s10819 = smul.u32 2, %s19
        $region56: #{double_conv_block.1} parent=47 // pred_fallthru
          _
      $region48: #{double_conv_block.1} parent=5 // pred_fallthru
        _
      %p10820 = scmp.le.s32.totalorder 2, %s14
      // Predicated region
      $region57: #{double_conv_block.1} parent=5 // pred_check
        %p10821 = pneg %p10820
      $region58: #{double_conv_block.1} parent=5 // pred_check_branch
        %10823 = sbr.rel (%p10821) target = $region60
      $region59: #{double_conv_block.1} parent=5 // pred_region
        %s10824 = ssub.s32 %s14, 2
        // Predicated region
        $region61: #{double_conv_block.1} parent=59 // pred_check
          %p10825 = pneg %p195
        $region62: #{double_conv_block.1} parent=59 // pred_check_branch
          %10827 = sbr.rel (%p10825) target = $region64
        $region63: #{double_conv_block.1} parent=59 // pred_region
          %s10828 = smul.u32 2, %s20
          %p10829 = scmp.lt.s32.totalorder %s10828, 3
          %s10830 = scalar_select %p10829, %s10828, 3
          %s10831 = smul.addr %s10830, 16
          %s10832 = smul.addr %s10831, 8
          %s10833 = scalar_lea.vmem %s7, %s10832
        $region64: #{double_conv_block.1} parent=59 // pred_fallthru
          _
      $region60: #{double_conv_block.1} parent=5 // pred_fallthru
        _
    $region6: #{double_conv_block.1} parent=1 // loop_footer
      %s18 = sadd.s32 1, %s14
    $region7: #{double_conv_block.1} parent=1 // loop_footer_branch
      %13 = sbr.rel target = $region3
    $region8: #{double_conv_block.1} parent=1 // loop_exit
      _
    %10834 = vsyncpa [#allocation4], 1
    %s10835 = scalar_lea.sflag [#allocation4], 1
    %10836 = vsyncpa %s10835, 1

</llo_original>
